<compile_context>
chip_gen: v7x
topology: tpu7x:2x2x1
jax: 0.10.0
libtpu: 0.0.40
codegen_flags: <defaults>
</compile_context>

<pallas_src>
import math

import numpy as np
import jax
import jax.numpy as jnp
from jax.experimental import pallas as pl
from jax.experimental.pallas import tpu as pltpu

# ---------------------------------------------------------------------------
# Small synthetic dimensions (original: 3x224x224 images, 768-dim GPT2, 50258
# vocab -- scaled down, structure preserved).
# ---------------------------------------------------------------------------
B = 2            # batch
IMG_C, IMG_H, IMG_W = 3, 32, 32
PATCH = 16
P = (IMG_H // PATCH) * (IMG_W // PATCH)          # 4 patches per image
PATCH_DIM = IMG_C * PATCH * PATCH                # 768
ENC_DIM = 128                                    # encoder feature dim
PROJ_HIDDEN = 256                                # projector hidden dim
DEC_DIM = 128                                    # decoder hidden dim
N_VIS = 8                                        # visual prefix tokens
T = 8                                            # text sequence length
S = N_VIS + T                                    # full decoder sequence
VOCAB = 512                                      # vocab size (orig 50258)
MLP_DIM = 4 * DEC_DIM                            # decoder MLP hidden

# ---------------------------------------------------------------------------
# Flattened-sequence row layout (static, b-major everywhere):
#   rows [0, B*N_VIS)   : visual tokens, batch-major / v-minor
#   rows [B*N_VIS, B*S) : text tokens,   batch-major / t-minor
# Attention is made batch-aware / causal via an additive bias built from these
# per-row (batch, position) tables, so the kernel runs one flat (B*S, D)
# attention instead of a per-batch grid loop (fine at toy scale, see TODO).
# ---------------------------------------------------------------------------
_ROW_BATCH = np.concatenate([np.repeat(np.arange(B), N_VIS),
                             np.repeat(np.arange(B), T)]).astype(np.int32)       # (B*S,)
_ROW_POS = np.concatenate([np.tile(np.arange(N_VIS), B),
                           np.tile(N_VIS + np.arange(T), B)]).astype(np.int32)   # (B*S,)
_SAME_BATCH = (_ROW_BATCH[:, None] == _ROW_BATCH[None, :])                        # (B*S, B*S)
_CAUSAL = (_ROW_POS[None, :] <= _ROW_POS[:, None])                                # (B*S, B*S)


# ---------------------------------------------------------------------------
# Fused forward kernel: encoder -> projector -> embed -> decoder block -> head.
# Early weights are whole-array VMEM blocks; late weights (wte / fc1 / fc2 / head)
# are DMA'd from HBM at entry and waited just before use.
# ---------------------------------------------------------------------------
def _fused_forward_kernel(
        ids_ref,                                                   # SMEM (B*T,)
        patches_ref, bias_ref, wpe_rows_ref,
        w_patch_ref, b_patch_ref, w_p1_ref, b_p1_ref, w_p2_ref, b_p2_ref,
        wte_hbm_ref,                                               # ANY (VOCAB, D) f32
        ln1g_ref, ln1b_ref, wqkv_ref, bqkv_ref, wo_ref, bo_ref,
        ln2g_ref, ln2b_ref,
        wfc1_hbm_ref, b_fc1_ref, wfc2_hbm_ref, b_fc2_ref,          # ANY / VMEM / ANY / VMEM
        lnfg_ref, lnfb_ref, whead_hbm_ref, bhead_ref,              # ANY head weight
        logits_ref,                                                # out (B*T, VOCAB)
        tok_buf, fc1_buf, fc2_buf, head_buf, gather_sem, w_sem):   # scratch
    f32 = jnp.float32
    bf16 = jnp.bfloat16
    D = DEC_DIM

    # ---- issue all embedding-gather / late-weight DMAs up front (overlap compute) ----
    gather_cps = []
    for i in range(B * T):                                         # static unroll, tiny
        cp = pltpu.make_async_copy(
            wte_hbm_ref.at[pl.ds(ids_ref[i], 1)],                  # data-dependent row
            tok_buf.at[pl.ds(i, 1)],
            gather_sem.at[i])
        cp.start()
        gather_cps.append(cp)
    fc1_cp = pltpu.make_async_copy(wfc1_hbm_ref, fc1_buf, w_sem.at[0]); fc1_cp.start()
    fc2_cp = pltpu.make_async_copy(wfc2_hbm_ref, fc2_buf, w_sem.at[1]); fc2_cp.start()
    head_cp = pltpu.make_async_copy(whead_hbm_ref, head_buf, w_sem.at[2]); head_cp.start()

    def mm(a, w):
        # bf16 MXU matmul with f32 accumulation.
        return jnp.dot(a.astype(bf16), w.astype(bf16), preferred_element_type=f32)

    def layernorm(h, g_ref, b_ref):
        mu = jnp.mean(h, axis=-1, keepdims=True)
        var = jnp.mean(jnp.square(h - mu), axis=-1, keepdims=True)
        return (h - mu) * jax.lax.rsqrt(var + 1e-5) * g_ref[...] + b_ref[...]

    # --- encoder: patch embedding + mean pool over P patches (VPU reduce, no matmul) ---
    feat = mm(patches_ref[...], w_patch_ref[...]) + b_patch_ref[...]      # (B*P, ENC_DIM)
    vis_feat = jnp.mean(feat.reshape(B, P, ENC_DIM), axis=1)              # (B, ENC_DIM)

    # --- projector MLP (Linear - GELU - Linear), fused ---
    # TODO(synk): jax.nn.gelu tanh approximation vs PyTorch nn.GELU exact erf.
    h = jax.nn.gelu(mm(vis_feat, w_p1_ref[...]) + b_p1_ref[...])          # (B, PROJ_HIDDEN)
    vis_full = mm(h, w_p2_ref[...]) + b_p2_ref[...]                       # (B, N_VIS*D)
    vis_rows = vis_full.reshape(B, N_VIS, D).reshape(B * N_VIS, D)        # b-major rows

    # --- wait for gathered token embeddings, assemble flat [visual ; text] sequence ---
    for cp in gather_cps:
        cp.wait()
    x = jnp.concatenate([vis_rows, tok_buf[...]], axis=0) + wpe_rows_ref[...]   # (B*S, D)

    # --- GPT2-style decoder block (flat batch; block-diag causal+pad bias) ---
    hh = layernorm(x, ln1g_ref, ln1b_ref)
    qkv = mm(hh, wqkv_ref[...]) + bqkv_ref[...]                           # (B*S, 3D)
    q = qkv[:, :D].astype(bf16)
    k = qkv[:, D:2 * D].astype(bf16)
    v_ = qkv[:, 2 * D:].astype(bf16)
    scores = jax.lax.dot_general(q, k, (((1,), (1,)), ((), ())),
                                 preferred_element_type=f32)              # (B*S, B*S)
    scores = scores * (1.0 / math.sqrt(D)) + bias_ref[...]
    m = jnp.max(scores, axis=-1, keepdims=True)
    pexp = jnp.exp(scores - m)
    denom = jnp.sum(pexp, axis=-1, keepdims=True)
    pattn = (pexp * pl.reciprocal(denom, approx=True)).astype(bf16)       # EUP divide
    attn = jnp.dot(pattn, v_, preferred_element_type=f32)
    x = x + mm(attn, wo_ref[...]) + bo_ref[...]

    hh = layernorm(x, ln2g_ref, ln2b_ref)
    fc1_cp.wait()
    hh = jax.nn.gelu(mm(hh, fc1_buf[...]) + b_fc1_ref[...])
    fc2_cp.wait()
    x = x + mm(hh, fc2_buf[...]) + b_fc2_ref[...]

    x = layernorm(x, lnfg_ref, lnfb_ref)                                  # (B*S, D)

    # --- vocab head on the text rows only (lane-dense (B*T, VOCAB) output) ---
    txt = x[B * N_VIS:, :]                                                # (B*T, D)
    head_cp.wait()
    logits_ref[...] = (mm(txt, head_buf[...]) + bhead_ref[...]).astype(logits_ref.dtype)


def fused_forward(patches, ids_flat, attn_bias, wpe_rows, p):
    inputs = (ids_flat, patches, attn_bias, wpe_rows,
              p["w_patch"], p["b_patch"], p["w_proj1"], p["b_proj1"],
              p["w_proj2"], p["b_proj2"], p["wte"],
              p["ln1_g"], p["ln1_b"], p["w_qkv"], p["b_qkv"],
              p["w_o"], p["b_o"], p["ln2_g"], p["ln2_b"],
              p["w_fc1"], p["b_fc1"], p["w_fc2"], p["b_fc2"],
              p["lnf_g"], p["lnf_b"], p["w_head"], p["b_head"])
    smem = pl.BlockSpec(memory_space=pltpu.MemorySpace.SMEM)
    vmem = pl.BlockSpec(memory_space=pltpu.MemorySpace.VMEM)
    hbm = pl.BlockSpec(memory_space=pl.ANY)
    in_specs = [smem, vmem, vmem, vmem,                       # ids, patches, bias, wpe
                vmem, vmem, vmem, vmem, vmem, vmem,           # encoder + projector
                hbm,                                          # wte (row-gather DMA)
                vmem, vmem, vmem, vmem, vmem, vmem, vmem, vmem,   # ln1/qkv/o/ln2
                hbm, vmem, hbm, vmem,                         # fc1(w),fc1(b),fc2(w),fc2(b)
                vmem, vmem,                                   # lnf
                hbm, vmem]                                    # head(w), head(b)
    return pl.pallas_call(
        _fused_forward_kernel,
        out_shape=jax.ShapeDtypeStruct((B * T, VOCAB), jnp.float32),
        in_specs=in_specs,
        out_specs=vmem,
        scratch_shapes=[
            pltpu.VMEM((B * T, DEC_DIM), jnp.float32),        # gathered token embeds
            pltpu.VMEM((DEC_DIM, MLP_DIM), jnp.bfloat16),     # fc1 weight buffer
            pltpu.VMEM((MLP_DIM, DEC_DIM), jnp.bfloat16),     # fc2 weight buffer
            pltpu.VMEM((DEC_DIM, VOCAB), jnp.bfloat16),       # head weight buffer
            pltpu.SemaphoreType.DMA((B * T,)),
            pltpu.SemaphoreType.DMA((3,)),
        ],
    )(*inputs)


# ---------------------------------------------------------------------------
# Parameter initialization (deterministic, synthetic).  Matmul weights bf16
# (wte kept f32 for clean row-gather DMA), biases / layernorm / wpe f32.
# ---------------------------------------------------------------------------
def init_params(key):
    ks = list(jax.random.split(key, 16))

    def dense(k, fan_in, fan_out):
        w = (jax.random.normal(k, (fan_in, fan_out), jnp.float32)
             / math.sqrt(fan_in)).astype(jnp.bfloat16)
        b = jnp.zeros((1, fan_out), jnp.float32)
        return w, b

    p = {}
    # encoder (patch embedding stand-in for the frozen swin/ctranspath backbone)
    p["w_patch"], p["b_patch"] = dense(ks[0], PATCH_DIM, ENC_DIM)
    # projector MLP
    p["w_proj1"], p["b_proj1"] = dense(ks[1], ENC_DIM, PROJ_HIDDEN)
    p["w_proj2"], p["b_proj2"] = dense(ks[2], PROJ_HIDDEN, N_VIS * DEC_DIM)
    # decoder embeddings
    p["wte"] = jax.random.normal(ks[3], (VOCAB, DEC_DIM), jnp.float32) * 0.02
    p["wpe"] = jax.random.normal(ks[4], (S, DEC_DIM), jnp.float32) * 0.02
    # decoder transformer block
    p["ln1_g"] = jnp.ones((1, DEC_DIM), jnp.float32)
    p["ln1_b"] = jnp.zeros((1, DEC_DIM), jnp.float32)
    p["w_qkv"], p["b_qkv"] = dense(ks[5], DEC_DIM, 3 * DEC_DIM)
    p["w_o"], p["b_o"] = dense(ks[6], DEC_DIM, DEC_DIM)
    p["ln2_g"] = jnp.ones((1, DEC_DIM), jnp.float32)
    p["ln2_b"] = jnp.zeros((1, DEC_DIM), jnp.float32)
    p["w_fc1"], p["b_fc1"] = dense(ks[7], DEC_DIM, MLP_DIM)
    p["w_fc2"], p["b_fc2"] = dense(ks[8], MLP_DIM, DEC_DIM)
    p["lnf_g"] = jnp.ones((1, DEC_DIM), jnp.float32)
    p["lnf_b"] = jnp.zeros((1, DEC_DIM), jnp.float32)
    # decoder head (Linear(DEC_DIM, VOCAB))
    p["w_head"], p["b_head"] = dense(ks[9], DEC_DIM, VOCAB)
    return p


# ---------------------------------------------------------------------------
# Wrapper-side glue (layout plumbing only).
# ---------------------------------------------------------------------------
def extract_patches(img):
    # img: NCHW -> (B*P, PATCH*PATCH*C) patch vectors (batch-major, spatial, channel-minor).
    b, c, h, w = img.shape
    ph, pw = h // PATCH, w // PATCH
    x = img.reshape(b, c, ph, PATCH, pw, PATCH)
    x = jnp.transpose(x, (0, 2, 4, 3, 5, 1))       # (B, ph, pw, PATCH, PATCH, C)
    return x.reshape(b * ph * pw, PATCH * PATCH * c)


def build_attn_bias(attention_mask):
    # Additive (B*S, B*S) bias: same-batch AND causal AND key-not-padded -> 0, else -1e9.
    key_valid = jnp.concatenate(
        [jnp.ones((B * N_VIS,), jnp.bool_), attention_mask.reshape(-1) > 0])
    allow_static = jnp.asarray(_SAME_BATCH & _CAUSAL)
    allow = jnp.logical_and(allow_static, key_valid[None, :])
    return jnp.where(allow, 0.0, -1e9).astype(jnp.float32)


@jax.jit
def prompt_model_forward(params, img, input_ids, attention_mask):
    patches = extract_patches(img)                                   # (B*P, PATCH_DIM)
    ids_flat = input_ids.reshape(B * T).astype(jnp.int32)            # (B*T,) -> SMEM
    attn_bias = build_attn_bias(attention_mask)                      # (B*S, B*S)
    wpe_rows = params["wpe"][_ROW_POS]                               # (B*S, DEC_DIM)

    logits_flat = fused_forward(patches, ids_flat, attn_bias, wpe_rows, params)
    logits = logits_flat.reshape(B, T, VOCAB)
    return {"input_ids": input_ids, "last_layer_logits": logits}


# ---------------------------------------------------------------------------
# Main
# ---------------------------------------------------------------------------
if __name__ == "__main__":
    key = jax.random.PRNGKey(0)
    k_params, k_img, k_ids = jax.random.split(key, 3)

    params = init_params(k_params)

    # Original module asserts (3, 224, 224); scaled down to (3, 32, 32) here.
    img = jax.random.normal(k_img, (B, IMG_C, IMG_H, IMG_W), jnp.float32)
    input_ids = jax.random.randint(k_ids, (B, T), 0, VOCAB, dtype=jnp.int32)
    attention_mask = jnp.ones((B, T), jnp.int32).at[1, -2:].set(0)   # pad last 2 of sample 1

    out = prompt_model_forward(params, img, input_ids, attention_mask)
    jax.block_until_ready(out["last_layer_logits"])

    assert out["last_layer_logits"].shape == (B, T, VOCAB)
    assert out["input_ids"].shape == (B, T)
    assert bool(jnp.all(jnp.isfinite(out["last_layer_logits"])))
    print("KERNEL_OK")
</pallas_src>

<mosaic_0001>
module attributes {stable_mosaic.version = 11 : i64} {
  func.func @_fused_forward_kernel(%arg0: memref<16xi32, #tpu.memory_space<smem>>, %arg1: memref<8x768xf32, #tpu.memory_space<vmem>>, %arg2: memref<32x32xf32, #tpu.memory_space<vmem>>, %arg3: memref<32x128xf32, #tpu.memory_space<vmem>>, %arg4: memref<768x128xbf16, #tpu.memory_space<vmem>>, %arg5: memref<1x128xf32, #tpu.memory_space<vmem>>, %arg6: memref<128x256xbf16, #tpu.memory_space<vmem>>, %arg7: memref<1x256xf32, #tpu.memory_space<vmem>>, %arg8: memref<256x1024xbf16, #tpu.memory_space<vmem>>, %arg9: memref<1x1024xf32, #tpu.memory_space<vmem>>, %arg10: memref<512x128xf32, #tpu.memory_space<any>>, %arg11: memref<1x128xf32, #tpu.memory_space<vmem>>, %arg12: memref<1x128xf32, #tpu.memory_space<vmem>>, %arg13: memref<128x384xbf16, #tpu.memory_space<vmem>>, %arg14: memref<1x384xf32, #tpu.memory_space<vmem>>, %arg15: memref<128x128xbf16, #tpu.memory_space<vmem>>, %arg16: memref<1x128xf32, #tpu.memory_space<vmem>>, %arg17: memref<1x128xf32, #tpu.memory_space<vmem>>, %arg18: memref<1x128xf32, #tpu.memory_space<vmem>>, %arg19: memref<128x512xbf16, #tpu.memory_space<any>>, %arg20: memref<1x512xf32, #tpu.memory_space<vmem>>, %arg21: memref<512x128xbf16, #tpu.memory_space<any>>, %arg22: memref<1x128xf32, #tpu.memory_space<vmem>>, %arg23: memref<1x128xf32, #tpu.memory_space<vmem>>, %arg24: memref<1x128xf32, #tpu.memory_space<vmem>>, %arg25: memref<128x512xbf16, #tpu.memory_space<any>>, %arg26: memref<1x512xf32, #tpu.memory_space<vmem>>, %arg27: memref<16x512xf32, #tpu.memory_space<vmem>>, %arg28: memref<16x128xf32, #tpu.memory_space<vmem>>, %arg29: memref<128x512xbf16, #tpu.memory_space<vmem>>, %arg30: memref<512x128xbf16, #tpu.memory_space<vmem>>, %arg31: memref<128x512xbf16, #tpu.memory_space<vmem>>, %arg32: memref<16x!tpu.dma_semaphore, #tpu.memory_space<semaphore_mem>>, %arg33: memref<3x!tpu.dma_semaphore, #tpu.memory_space<semaphore_mem>>) attributes {dimension_semantics = [], scalar_prefetch = 0 : i64, scratch_operands = 6 : i64, tpu.core_type = #tpu.core_type<tc>} {
    %c0 = arith.constant 0 : index
    %0 = memref.load %arg0[%c0] : memref<16xi32, #tpu.memory_space<smem>>
    %c0_i32 = arith.constant 0 : i32
    %c0_i32_0 = arith.constant 0 : i32
    %1 = tpu.memref_slice %arg10[%0, %c0_i32_0] : memref<512x128xf32, #tpu.memory_space<any>> -> memref<1x128xf32, #tpu.memory_space<any>>
    %c0_i32_1 = arith.constant 0 : i32
    %c0_i32_2 = arith.constant 0 : i32
    %2 = tpu.memref_slice %arg28[%c0_i32_1, %c0_i32_2] : memref<16x128xf32, #tpu.memory_space<vmem>> -> memref<1x128xf32, #tpu.memory_space<vmem>>
    %3 = tpu.memref_slice %arg32[%c0_i32] : memref<16x!tpu.dma_semaphore, #tpu.memory_space<semaphore_mem>> -> memref<1x!tpu.dma_semaphore, #tpu.memory_space<semaphore_mem>>
    %4 = tpu.memref_squeeze %3 : memref<1x!tpu.dma_semaphore, #tpu.memory_space<semaphore_mem>> -> memref<!tpu.dma_semaphore, #tpu.memory_space<semaphore_mem>>
    tpu.enqueue_dma source(%1 : memref<1x128xf32, #tpu.memory_space<any>>) target(%2 : memref<1x128xf32, #tpu.memory_space<vmem>>) target_semaphore(%4 : memref<!tpu.dma_semaphore, #tpu.memory_space<semaphore_mem>>)
    %c1 = arith.constant 1 : index
    %5 = memref.load %arg0[%c1] : memref<16xi32, #tpu.memory_space<smem>>
    %c1_i32 = arith.constant 1 : i32
    %c0_i32_3 = arith.constant 0 : i32
    %6 = tpu.memref_slice %arg10[%5, %c0_i32_3] : memref<512x128xf32, #tpu.memory_space<any>> -> memref<1x128xf32, #tpu.memory_space<any>>
    %c1_i32_4 = arith.constant 1 : i32
    %c0_i32_5 = arith.constant 0 : i32
    %7 = tpu.memref_slice %arg28[%c1_i32_4, %c0_i32_5] : memref<16x128xf32, #tpu.memory_space<vmem>> -> memref<1x128xf32, #tpu.memory_space<vmem>>
    %8 = tpu.memref_slice %arg32[%c1_i32] : memref<16x!tpu.dma_semaphore, #tpu.memory_space<semaphore_mem>> -> memref<1x!tpu.dma_semaphore, #tpu.memory_space<semaphore_mem>>
    %9 = tpu.memref_squeeze %8 : memref<1x!tpu.dma_semaphore, #tpu.memory_space<semaphore_mem>> -> memref<!tpu.dma_semaphore, #tpu.memory_space<semaphore_mem>>
    tpu.enqueue_dma source(%6 : memref<1x128xf32, #tpu.memory_space<any>>) target(%7 : memref<1x128xf32, #tpu.memory_space<vmem>>) target_semaphore(%9 : memref<!tpu.dma_semaphore, #tpu.memory_space<semaphore_mem>>)
    %c2 = arith.constant 2 : index
    %10 = memref.load %arg0[%c2] : memref<16xi32, #tpu.memory_space<smem>>
    %c2_i32 = arith.constant 2 : i32
    %c0_i32_6 = arith.constant 0 : i32
    %11 = tpu.memref_slice %arg10[%10, %c0_i32_6] : memref<512x128xf32, #tpu.memory_space<any>> -> memref<1x128xf32, #tpu.memory_space<any>>
    %c2_i32_7 = arith.constant 2 : i32
    %c0_i32_8 = arith.constant 0 : i32
    %12 = tpu.memref_slice %arg28[%c2_i32_7, %c0_i32_8] : memref<16x128xf32, #tpu.memory_space<vmem>> -> memref<1x128xf32, #tpu.memory_space<vmem>>
    %13 = tpu.memref_slice %arg32[%c2_i32] : memref<16x!tpu.dma_semaphore, #tpu.memory_space<semaphore_mem>> -> memref<1x!tpu.dma_semaphore, #tpu.memory_space<semaphore_mem>>
    %14 = tpu.memref_squeeze %13 : memref<1x!tpu.dma_semaphore, #tpu.memory_space<semaphore_mem>> -> memref<!tpu.dma_semaphore, #tpu.memory_space<semaphore_mem>>
    tpu.enqueue_dma source(%11 : memref<1x128xf32, #tpu.memory_space<any>>) target(%12 : memref<1x128xf32, #tpu.memory_space<vmem>>) target_semaphore(%14 : memref<!tpu.dma_semaphore, #tpu.memory_space<semaphore_mem>>)
    %c3 = arith.constant 3 : index
    %15 = memref.load %arg0[%c3] : memref<16xi32, #tpu.memory_space<smem>>
    %c3_i32 = arith.constant 3 : i32
    %c0_i32_9 = arith.constant 0 : i32
    %16 = tpu.memref_slice %arg10[%15, %c0_i32_9] : memref<512x128xf32, #tpu.memory_space<any>> -> memref<1x128xf32, #tpu.memory_space<any>>
    %c3_i32_10 = arith.constant 3 : i32
    %c0_i32_11 = arith.constant 0 : i32
    %17 = tpu.memref_slice %arg28[%c3_i32_10, %c0_i32_11] : memref<16x128xf32, #tpu.memory_space<vmem>> -> memref<1x128xf32, #tpu.memory_space<vmem>>
    %18 = tpu.memref_slice %arg32[%c3_i32] : memref<16x!tpu.dma_semaphore, #tpu.memory_space<semaphore_mem>> -> memref<1x!tpu.dma_semaphore, #tpu.memory_space<semaphore_mem>>
    %19 = tpu.memref_squeeze %18 : memref<1x!tpu.dma_semaphore, #tpu.memory_space<semaphore_mem>> -> memref<!tpu.dma_semaphore, #tpu.memory_space<semaphore_mem>>
    tpu.enqueue_dma source(%16 : memref<1x128xf32, #tpu.memory_space<any>>) target(%17 : memref<1x128xf32, #tpu.memory_space<vmem>>) target_semaphore(%19 : memref<!tpu.dma_semaphore, #tpu.memory_space<semaphore_mem>>)
    %c4 = arith.constant 4 : index
    %20 = memref.load %arg0[%c4] : memref<16xi32, #tpu.memory_space<smem>>
    %c4_i32 = arith.constant 4 : i32
    %c0_i32_12 = arith.constant 0 : i32
    %21 = tpu.memref_slice %arg10[%20, %c0_i32_12] : memref<512x128xf32, #tpu.memory_space<any>> -> memref<1x128xf32, #tpu.memory_space<any>>
    %c4_i32_13 = arith.constant 4 : i32
    %c0_i32_14 = arith.constant 0 : i32
    %22 = tpu.memref_slice %arg28[%c4_i32_13, %c0_i32_14] : memref<16x128xf32, #tpu.memory_space<vmem>> -> memref<1x128xf32, #tpu.memory_space<vmem>>
    %23 = tpu.memref_slice %arg32[%c4_i32] : memref<16x!tpu.dma_semaphore, #tpu.memory_space<semaphore_mem>> -> memref<1x!tpu.dma_semaphore, #tpu.memory_space<semaphore_mem>>
    %24 = tpu.memref_squeeze %23 : memref<1x!tpu.dma_semaphore, #tpu.memory_space<semaphore_mem>> -> memref<!tpu.dma_semaphore, #tpu.memory_space<semaphore_mem>>
    tpu.enqueue_dma source(%21 : memref<1x128xf32, #tpu.memory_space<any>>) target(%22 : memref<1x128xf32, #tpu.memory_space<vmem>>) target_semaphore(%24 : memref<!tpu.dma_semaphore, #tpu.memory_space<semaphore_mem>>)
    %c5 = arith.constant 5 : index
    %25 = memref.load %arg0[%c5] : memref<16xi32, #tpu.memory_space<smem>>
    %c5_i32 = arith.constant 5 : i32
    %c0_i32_15 = arith.constant 0 : i32
    %26 = tpu.memref_slice %arg10[%25, %c0_i32_15] : memref<512x128xf32, #tpu.memory_space<any>> -> memref<1x128xf32, #tpu.memory_space<any>>
    %c5_i32_16 = arith.constant 5 : i32
    %c0_i32_17 = arith.constant 0 : i32
    %27 = tpu.memref_slice %arg28[%c5_i32_16, %c0_i32_17] : memref<16x128xf32, #tpu.memory_space<vmem>> -> memref<1x128xf32, #tpu.memory_space<vmem>>
    %28 = tpu.memref_slice %arg32[%c5_i32] : memref<16x!tpu.dma_semaphore, #tpu.memory_space<semaphore_mem>> -> memref<1x!tpu.dma_semaphore, #tpu.memory_space<semaphore_mem>>
    %29 = tpu.memref_squeeze %28 : memref<1x!tpu.dma_semaphore, #tpu.memory_space<semaphore_mem>> -> memref<!tpu.dma_semaphore, #tpu.memory_space<semaphore_mem>>
    tpu.enqueue_dma source(%26 : memref<1x128xf32, #tpu.memory_space<any>>) target(%27 : memref<1x128xf32, #tpu.memory_space<vmem>>) target_semaphore(%29 : memref<!tpu.dma_semaphore, #tpu.memory_space<semaphore_mem>>)
    %c6 = arith.constant 6 : index
    %30 = memref.load %arg0[%c6] : memref<16xi32, #tpu.memory_space<smem>>
    %c6_i32 = arith.constant 6 : i32
    %c0_i32_18 = arith.constant 0 : i32
    %31 = tpu.memref_slice %arg10[%30, %c0_i32_18] : memref<512x128xf32, #tpu.memory_space<any>> -> memref<1x128xf32, #tpu.memory_space<any>>
    %c6_i32_19 = arith.constant 6 : i32
    %c0_i32_20 = arith.constant 0 : i32
    %32 = tpu.memref_slice %arg28[%c6_i32_19, %c0_i32_20] : memref<16x128xf32, #tpu.memory_space<vmem>> -> memref<1x128xf32, #tpu.memory_space<vmem>>
    %33 = tpu.memref_slice %arg32[%c6_i32] : memref<16x!tpu.dma_semaphore, #tpu.memory_space<semaphore_mem>> -> memref<1x!tpu.dma_semaphore, #tpu.memory_space<semaphore_mem>>
    %34 = tpu.memref_squeeze %33 : memref<1x!tpu.dma_semaphore, #tpu.memory_space<semaphore_mem>> -> memref<!tpu.dma_semaphore, #tpu.memory_space<semaphore_mem>>
    tpu.enqueue_dma source(%31 : memref<1x128xf32, #tpu.memory_space<any>>) target(%32 : memref<1x128xf32, #tpu.memory_space<vmem>>) target_semaphore(%34 : memref<!tpu.dma_semaphore, #tpu.memory_space<semaphore_mem>>)
    %c7 = arith.constant 7 : index
    %35 = memref.load %arg0[%c7] : memref<16xi32, #tpu.memory_space<smem>>
    %c7_i32 = arith.constant 7 : i32
    %c0_i32_21 = arith.constant 0 : i32
    %36 = tpu.memref_slice %arg10[%35, %c0_i32_21] : memref<512x128xf32, #tpu.memory_space<any>> -> memref<1x128xf32, #tpu.memory_space<any>>
    %c7_i32_22 = arith.constant 7 : i32
    %c0_i32_23 = arith.constant 0 : i32
    %37 = tpu.memref_slice %arg28[%c7_i32_22, %c0_i32_23] : memref<16x128xf32, #tpu.memory_space<vmem>> -> memref<1x128xf32, #tpu.memory_space<vmem>>
    %38 = tpu.memref_slice %arg32[%c7_i32] : memref<16x!tpu.dma_semaphore, #tpu.memory_space<semaphore_mem>> -> memref<1x!tpu.dma_semaphore, #tpu.memory_space<semaphore_mem>>
    %39 = tpu.memref_squeeze %38 : memref<1x!tpu.dma_semaphore, #tpu.memory_space<semaphore_mem>> -> memref<!tpu.dma_semaphore, #tpu.memory_space<semaphore_mem>>
    tpu.enqueue_dma source(%36 : memref<1x128xf32, #tpu.memory_space<any>>) target(%37 : memref<1x128xf32, #tpu.memory_space<vmem>>) target_semaphore(%39 : memref<!tpu.dma_semaphore, #tpu.memory_space<semaphore_mem>>)
    %c8 = arith.constant 8 : index
    %40 = memref.load %arg0[%c8] : memref<16xi32, #tpu.memory_space<smem>>
    %c8_i32 = arith.constant 8 : i32
    %c0_i32_24 = arith.constant 0 : i32
    %41 = tpu.memref_slice %arg10[%40, %c0_i32_24] : memref<512x128xf32, #tpu.memory_space<any>> -> memref<1x128xf32, #tpu.memory_space<any>>
    %c8_i32_25 = arith.constant 8 : i32
    %c0_i32_26 = arith.constant 0 : i32
    %42 = tpu.memref_slice %arg28[%c8_i32_25, %c0_i32_26] : memref<16x128xf32, #tpu.memory_space<vmem>> -> memref<1x128xf32, #tpu.memory_space<vmem>>
    %43 = tpu.memref_slice %arg32[%c8_i32] : memref<16x!tpu.dma_semaphore, #tpu.memory_space<semaphore_mem>> -> memref<1x!tpu.dma_semaphore, #tpu.memory_space<semaphore_mem>>
    %44 = tpu.memref_squeeze %43 : memref<1x!tpu.dma_semaphore, #tpu.memory_space<semaphore_mem>> -> memref<!tpu.dma_semaphore, #tpu.memory_space<semaphore_mem>>
    tpu.enqueue_dma source(%41 : memref<1x128xf32, #tpu.memory_space<any>>) target(%42 : memref<1x128xf32, #tpu.memory_space<vmem>>) target_semaphore(%44 : memref<!tpu.dma_semaphore, #tpu.memory_space<semaphore_mem>>)
    %c9 = arith.constant 9 : index
    %45 = memref.load %arg0[%c9] : memref<16xi32, #tpu.memory_space<smem>>
    %c9_i32 = arith.constant 9 : i32
    %c0_i32_27 = arith.constant 0 : i32
    %46 = tpu.memref_slice %arg10[%45, %c0_i32_27] : memref<512x128xf32, #tpu.memory_space<any>> -> memref<1x128xf32, #tpu.memory_space<any>>
    %c9_i32_28 = arith.constant 9 : i32
    %c0_i32_29 = arith.constant 0 : i32
    %47 = tpu.memref_slice %arg28[%c9_i32_28, %c0_i32_29] : memref<16x128xf32, #tpu.memory_space<vmem>> -> memref<1x128xf32, #tpu.memory_space<vmem>>
    %48 = tpu.memref_slice %arg32[%c9_i32] : memref<16x!tpu.dma_semaphore, #tpu.memory_space<semaphore_mem>> -> memref<1x!tpu.dma_semaphore, #tpu.memory_space<semaphore_mem>>
    %49 = tpu.memref_squeeze %48 : memref<1x!tpu.dma_semaphore, #tpu.memory_space<semaphore_mem>> -> memref<!tpu.dma_semaphore, #tpu.memory_space<semaphore_mem>>
    tpu.enqueue_dma source(%46 : memref<1x128xf32, #tpu.memory_space<any>>) target(%47 : memref<1x128xf32, #tpu.memory_space<vmem>>) target_semaphore(%49 : memref<!tpu.dma_semaphore, #tpu.memory_space<semaphore_mem>>)
    %c10 = arith.constant 10 : index
    %50 = memref.load %arg0[%c10] : memref<16xi32, #tpu.memory_space<smem>>
    %c10_i32 = arith.constant 10 : i32
    %c0_i32_30 = arith.constant 0 : i32
    %51 = tpu.memref_slice %arg10[%50, %c0_i32_30] : memref<512x128xf32, #tpu.memory_space<any>> -> memref<1x128xf32, #tpu.memory_space<any>>
    %c10_i32_31 = arith.constant 10 : i32
    %c0_i32_32 = arith.constant 0 : i32
    %52 = tpu.memref_slice %arg28[%c10_i32_31, %c0_i32_32] : memref<16x128xf32, #tpu.memory_space<vmem>> -> memref<1x128xf32, #tpu.memory_space<vmem>>
    %53 = tpu.memref_slice %arg32[%c10_i32] : memref<16x!tpu.dma_semaphore, #tpu.memory_space<semaphore_mem>> -> memref<1x!tpu.dma_semaphore, #tpu.memory_space<semaphore_mem>>
    %54 = tpu.memref_squeeze %53 : memref<1x!tpu.dma_semaphore, #tpu.memory_space<semaphore_mem>> -> memref<!tpu.dma_semaphore, #tpu.memory_space<semaphore_mem>>
    tpu.enqueue_dma source(%51 : memref<1x128xf32, #tpu.memory_space<any>>) target(%52 : memref<1x128xf32, #tpu.memory_space<vmem>>) target_semaphore(%54 : memref<!tpu.dma_semaphore, #tpu.memory_space<semaphore_mem>>)
    %c11 = arith.constant 11 : index
    %55 = memref.load %arg0[%c11] : memref<16xi32, #tpu.memory_space<smem>>
    %c11_i32 = arith.constant 11 : i32
    %c0_i32_33 = arith.constant 0 : i32
    %56 = tpu.memref_slice %arg10[%55, %c0_i32_33] : memref<512x128xf32, #tpu.memory_space<any>> -> memref<1x128xf32, #tpu.memory_space<any>>
    %c11_i32_34 = arith.constant 11 : i32
    %c0_i32_35 = arith.constant 0 : i32
    %57 = tpu.memref_slice %arg28[%c11_i32_34, %c0_i32_35] : memref<16x128xf32, #tpu.memory_space<vmem>> -> memref<1x128xf32, #tpu.memory_space<vmem>>
    %58 = tpu.memref_slice %arg32[%c11_i32] : memref<16x!tpu.dma_semaphore, #tpu.memory_space<semaphore_mem>> -> memref<1x!tpu.dma_semaphore, #tpu.memory_space<semaphore_mem>>
    %59 = tpu.memref_squeeze %58 : memref<1x!tpu.dma_semaphore, #tpu.memory_space<semaphore_mem>> -> memref<!tpu.dma_semaphore, #tpu.memory_space<semaphore_mem>>
    tpu.enqueue_dma source(%56 : memref<1x128xf32, #tpu.memory_space<any>>) target(%57 : memref<1x128xf32, #tpu.memory_space<vmem>>) target_semaphore(%59 : memref<!tpu.dma_semaphore, #tpu.memory_space<semaphore_mem>>)
    %c12 = arith.constant 12 : index
    %60 = memref.load %arg0[%c12] : memref<16xi32, #tpu.memory_space<smem>>
    %c12_i32 = arith.constant 12 : i32
    %c0_i32_36 = arith.constant 0 : i32
    %61 = tpu.memref_slice %arg10[%60, %c0_i32_36] : memref<512x128xf32, #tpu.memory_space<any>> -> memref<1x128xf32, #tpu.memory_space<any>>
    %c12_i32_37 = arith.constant 12 : i32
    %c0_i32_38 = arith.constant 0 : i32
    %62 = tpu.memref_slice %arg28[%c12_i32_37, %c0_i32_38] : memref<16x128xf32, #tpu.memory_space<vmem>> -> memref<1x128xf32, #tpu.memory_space<vmem>>
    %63 = tpu.memref_slice %arg32[%c12_i32] : memref<16x!tpu.dma_semaphore, #tpu.memory_space<semaphore_mem>> -> memref<1x!tpu.dma_semaphore, #tpu.memory_space<semaphore_mem>>
    %64 = tpu.memref_squeeze %63 : memref<1x!tpu.dma_semaphore, #tpu.memory_space<semaphore_mem>> -> memref<!tpu.dma_semaphore, #tpu.memory_space<semaphore_mem>>
    tpu.enqueue_dma source(%61 : memref<1x128xf32, #tpu.memory_space<any>>) target(%62 : memref<1x128xf32, #tpu.memory_space<vmem>>) target_semaphore(%64 : memref<!tpu.dma_semaphore, #tpu.memory_space<semaphore_mem>>)
    %c13 = arith.constant 13 : index
    %65 = memref.load %arg0[%c13] : memref<16xi32, #tpu.memory_space<smem>>
    %c13_i32 = arith.constant 13 : i32
    %c0_i32_39 = arith.constant 0 : i32
    %66 = tpu.memref_slice %arg10[%65, %c0_i32_39] : memref<512x128xf32, #tpu.memory_space<any>> -> memref<1x128xf32, #tpu.memory_space<any>>
    %c13_i32_40 = arith.constant 13 : i32
    %c0_i32_41 = arith.constant 0 : i32
    %67 = tpu.memref_slice %arg28[%c13_i32_40, %c0_i32_41] : memref<16x128xf32, #tpu.memory_space<vmem>> -> memref<1x128xf32, #tpu.memory_space<vmem>>
    %68 = tpu.memref_slice %arg32[%c13_i32] : memref<16x!tpu.dma_semaphore, #tpu.memory_space<semaphore_mem>> -> memref<1x!tpu.dma_semaphore, #tpu.memory_space<semaphore_mem>>
    %69 = tpu.memref_squeeze %68 : memref<1x!tpu.dma_semaphore, #tpu.memory_space<semaphore_mem>> -> memref<!tpu.dma_semaphore, #tpu.memory_space<semaphore_mem>>
    tpu.enqueue_dma source(%66 : memref<1x128xf32, #tpu.memory_space<any>>) target(%67 : memref<1x128xf32, #tpu.memory_space<vmem>>) target_semaphore(%69 : memref<!tpu.dma_semaphore, #tpu.memory_space<semaphore_mem>>)
    %c14 = arith.constant 14 : index
    %70 = memref.load %arg0[%c14] : memref<16xi32, #tpu.memory_space<smem>>
    %c14_i32 = arith.constant 14 : i32
    %c0_i32_42 = arith.constant 0 : i32
    %71 = tpu.memref_slice %arg10[%70, %c0_i32_42] : memref<512x128xf32, #tpu.memory_space<any>> -> memref<1x128xf32, #tpu.memory_space<any>>
    %c14_i32_43 = arith.constant 14 : i32
    %c0_i32_44 = arith.constant 0 : i32
    %72 = tpu.memref_slice %arg28[%c14_i32_43, %c0_i32_44] : memref<16x128xf32, #tpu.memory_space<vmem>> -> memref<1x128xf32, #tpu.memory_space<vmem>>
    %73 = tpu.memref_slice %arg32[%c14_i32] : memref<16x!tpu.dma_semaphore, #tpu.memory_space<semaphore_mem>> -> memref<1x!tpu.dma_semaphore, #tpu.memory_space<semaphore_mem>>
    %74 = tpu.memref_squeeze %73 : memref<1x!tpu.dma_semaphore, #tpu.memory_space<semaphore_mem>> -> memref<!tpu.dma_semaphore, #tpu.memory_space<semaphore_mem>>
    tpu.enqueue_dma source(%71 : memref<1x128xf32, #tpu.memory_space<any>>) target(%72 : memref<1x128xf32, #tpu.memory_space<vmem>>) target_semaphore(%74 : memref<!tpu.dma_semaphore, #tpu.memory_space<semaphore_mem>>)
    %c15 = arith.constant 15 : index
    %75 = memref.load %arg0[%c15] : memref<16xi32, #tpu.memory_space<smem>>
    %c15_i32 = arith.constant 15 : i32
    %c0_i32_45 = arith.constant 0 : i32
    %76 = tpu.memref_slice %arg10[%75, %c0_i32_45] : memref<512x128xf32, #tpu.memory_space<any>> -> memref<1x128xf32, #tpu.memory_space<any>>
    %c15_i32_46 = arith.constant 15 : i32
    %c0_i32_47 = arith.constant 0 : i32
    %77 = tpu.memref_slice %arg28[%c15_i32_46, %c0_i32_47] : memref<16x128xf32, #tpu.memory_space<vmem>> -> memref<1x128xf32, #tpu.memory_space<vmem>>
    %78 = tpu.memref_slice %arg32[%c15_i32] : memref<16x!tpu.dma_semaphore, #tpu.memory_space<semaphore_mem>> -> memref<1x!tpu.dma_semaphore, #tpu.memory_space<semaphore_mem>>
    %79 = tpu.memref_squeeze %78 : memref<1x!tpu.dma_semaphore, #tpu.memory_space<semaphore_mem>> -> memref<!tpu.dma_semaphore, #tpu.memory_space<semaphore_mem>>
    tpu.enqueue_dma source(%76 : memref<1x128xf32, #tpu.memory_space<any>>) target(%77 : memref<1x128xf32, #tpu.memory_space<vmem>>) target_semaphore(%79 : memref<!tpu.dma_semaphore, #tpu.memory_space<semaphore_mem>>)
    %c0_i32_48 = arith.constant 0 : i32
    %80 = tpu.memref_slice %arg33[%c0_i32_48] : memref<3x!tpu.dma_semaphore, #tpu.memory_space<semaphore_mem>> -> memref<1x!tpu.dma_semaphore, #tpu.memory_space<semaphore_mem>>
    %81 = tpu.memref_squeeze %80 : memref<1x!tpu.dma_semaphore, #tpu.memory_space<semaphore_mem>> -> memref<!tpu.dma_semaphore, #tpu.memory_space<semaphore_mem>>
    tpu.enqueue_dma source(%arg19 : memref<128x512xbf16, #tpu.memory_space<any>>) target(%arg29 : memref<128x512xbf16, #tpu.memory_space<vmem>>) target_semaphore(%81 : memref<!tpu.dma_semaphore, #tpu.memory_space<semaphore_mem>>)
    %c1_i32_49 = arith.constant 1 : i32
    %82 = tpu.memref_slice %arg33[%c1_i32_49] : memref<3x!tpu.dma_semaphore, #tpu.memory_space<semaphore_mem>> -> memref<1x!tpu.dma_semaphore, #tpu.memory_space<semaphore_mem>>
    %83 = tpu.memref_squeeze %82 : memref<1x!tpu.dma_semaphore, #tpu.memory_space<semaphore_mem>> -> memref<!tpu.dma_semaphore, #tpu.memory_space<semaphore_mem>>
    tpu.enqueue_dma source(%arg21 : memref<512x128xbf16, #tpu.memory_space<any>>) target(%arg30 : memref<512x128xbf16, #tpu.memory_space<vmem>>) target_semaphore(%83 : memref<!tpu.dma_semaphore, #tpu.memory_space<semaphore_mem>>)
    %c2_i32_50 = arith.constant 2 : i32
    %84 = tpu.memref_slice %arg33[%c2_i32_50] : memref<3x!tpu.dma_semaphore, #tpu.memory_space<semaphore_mem>> -> memref<1x!tpu.dma_semaphore, #tpu.memory_space<semaphore_mem>>
    %85 = tpu.memref_squeeze %84 : memref<1x!tpu.dma_semaphore, #tpu.memory_space<semaphore_mem>> -> memref<!tpu.dma_semaphore, #tpu.memory_space<semaphore_mem>>
    tpu.enqueue_dma source(%arg25 : memref<128x512xbf16, #tpu.memory_space<any>>) target(%arg31 : memref<128x512xbf16, #tpu.memory_space<vmem>>) target_semaphore(%85 : memref<!tpu.dma_semaphore, #tpu.memory_space<semaphore_mem>>)
    %c0_51 = arith.constant 0 : index
    %c0_52 = arith.constant 0 : index
    %86 = vector.load %arg1[%c0_51, %c0_52] : memref<8x768xf32, #tpu.memory_space<vmem>>, vector<8x768xf32>
    %c0_53 = arith.constant 0 : index
    %c0_54 = arith.constant 0 : index
    %87 = vector.load %arg4[%c0_53, %c0_54] : memref<768x128xbf16, #tpu.memory_space<vmem>>, vector<768x128xbf16>
    %88 = arith.truncf %86 : vector<8x768xf32> to vector<8x768xbf16>
    %cst = arith.constant dense<0.000000e+00> : vector<8x128xf32>
    %89 = tpu.matmul %88, %87, %cst {dimension_numbers = #tpu.dot_dimension_numbers<[1], [0], [0], [1], [0, 0, 1, 1], [], []>} : vector<8x768xbf16>, vector<768x128xbf16>, vector<8x128xf32> -> vector<8x128xf32>
    %c0_55 = arith.constant 0 : index
    %c0_56 = arith.constant 0 : index
    %90 = vector.load %arg5[%c0_55, %c0_56] : memref<1x128xf32, #tpu.memory_space<vmem>>, vector<1x128xf32>
    %91 = vector.broadcast %90 : vector<1x128xf32> to vector<8x128xf32>
    %92 = arith.addf %89, %91 : vector<8x128xf32>
    %93 = vector.shape_cast %92 : vector<8x128xf32> to vector<2x4x128xf32>
    %cst_57 = arith.constant dense<0.000000e+00> : vector<2x128xf32>
    %94 = vector.multi_reduction <add>, %93, %cst_57 [1] : vector<2x4x128xf32> to vector<2x128xf32>
    %cst_58 = arith.constant 4.000000e+00 : f32
    %95 = vector.broadcast %cst_58 : f32 to vector<2x128xf32>
    %96 = arith.divf %94, %95 : vector<2x128xf32>
    %c0_59 = arith.constant 0 : index
    %c0_60 = arith.constant 0 : index
    %97 = vector.load %arg6[%c0_59, %c0_60] : memref<128x256xbf16, #tpu.memory_space<vmem>>, vector<128x256xbf16>
    %98 = arith.truncf %96 : vector<2x128xf32> to vector<2x128xbf16>
    %cst_61 = arith.constant dense<0.000000e+00> : vector<2x256xf32>
    %99 = tpu.matmul %98, %97, %cst_61 {dimension_numbers = #tpu.dot_dimension_numbers<[1], [0], [0], [1], [0, 0, 1, 1], [], []>} : vector<2x128xbf16>, vector<128x256xbf16>, vector<2x256xf32> -> vector<2x256xf32>
    %c0_62 = arith.constant 0 : index
    %c0_63 = arith.constant 0 : index
    %100 = vector.load %arg7[%c0_62, %c0_63] : memref<1x256xf32, #tpu.memory_space<vmem>>, vector<1x256xf32>
    %101 = vector.broadcast %100 : vector<1x256xf32> to vector<2x256xf32>
    %102 = arith.addf %99, %101 : vector<2x256xf32>
    %103 = arith.mulf %102, %102 : vector<2x256xf32>
    %104 = arith.mulf %102, %103 : vector<2x256xf32>
    %cst_64 = arith.constant 4.471500e-02 : f32
    %105 = vector.broadcast %cst_64 : f32 to vector<2x256xf32>
    %106 = arith.mulf %105, %104 : vector<2x256xf32>
    %107 = arith.addf %102, %106 : vector<2x256xf32>
    %cst_65 = arith.constant 0.797884583 : f32
    %108 = vector.broadcast %cst_65 : f32 to vector<2x256xf32>
    %109 = arith.mulf %108, %107 : vector<2x256xf32>
    %110 = math.tanh %109 : vector<2x256xf32>
    %cst_66 = arith.constant 1.000000e+00 : f32
    %111 = vector.broadcast %cst_66 : f32 to vector<2x256xf32>
    %112 = arith.addf %111, %110 : vector<2x256xf32>
    %cst_67 = arith.constant 5.000000e-01 : f32
    %113 = vector.broadcast %cst_67 : f32 to vector<2x256xf32>
    %114 = arith.mulf %113, %112 : vector<2x256xf32>
    %115 = arith.mulf %102, %114 : vector<2x256xf32>
    %c0_68 = arith.constant 0 : index
    %c0_69 = arith.constant 0 : index
    %116 = vector.load %arg8[%c0_68, %c0_69] : memref<256x1024xbf16, #tpu.memory_space<vmem>>, vector<256x1024xbf16>
    %117 = arith.truncf %115 : vector<2x256xf32> to vector<2x256xbf16>
    %cst_70 = arith.constant dense<0.000000e+00> : vector<2x1024xf32>
    %118 = tpu.matmul %117, %116, %cst_70 {dimension_numbers = #tpu.dot_dimension_numbers<[1], [0], [0], [1], [0, 0, 1, 1], [], []>} : vector<2x256xbf16>, vector<256x1024xbf16>, vector<2x1024xf32> -> vector<2x1024xf32>
    %c0_71 = arith.constant 0 : index
    %c0_72 = arith.constant 0 : index
    %119 = vector.load %arg9[%c0_71, %c0_72] : memref<1x1024xf32, #tpu.memory_space<vmem>>, vector<1x1024xf32>
    %120 = vector.broadcast %119 : vector<1x1024xf32> to vector<2x1024xf32>
    %121 = arith.addf %118, %120 : vector<2x1024xf32>
    %122 = vector.shape_cast %121 : vector<2x1024xf32> to vector<2x8x128xf32>
    %123 = vector.shape_cast %122 : vector<2x8x128xf32> to vector<16x128xf32>
    %c0_i32_73 = arith.constant 0 : i32
    %c0_i32_74 = arith.constant 0 : i32
    %124 = tpu.memref_slice %arg10[%0, %c0_i32_74] : memref<512x128xf32, #tpu.memory_space<any>> -> memref<1x128xf32, #tpu.memory_space<any>>
    %c0_i32_75 = arith.constant 0 : i32
    %c0_i32_76 = arith.constant 0 : i32
    %125 = tpu.memref_slice %arg28[%c0_i32_75, %c0_i32_76] : memref<16x128xf32, #tpu.memory_space<vmem>> -> memref<1x128xf32, #tpu.memory_space<vmem>>
    %126 = tpu.memref_slice %arg32[%c0_i32_73] : memref<16x!tpu.dma_semaphore, #tpu.memory_space<semaphore_mem>> -> memref<1x!tpu.dma_semaphore, #tpu.memory_space<semaphore_mem>>
    %127 = tpu.memref_squeeze %126 : memref<1x!tpu.dma_semaphore, #tpu.memory_space<semaphore_mem>> -> memref<!tpu.dma_semaphore, #tpu.memory_space<semaphore_mem>>
    tpu.wait_dma2 semaphore(%127 : memref<!tpu.dma_semaphore, #tpu.memory_space<semaphore_mem>>) src(%124 : memref<1x128xf32, #tpu.memory_space<any>>) dst(%125 : memref<1x128xf32, #tpu.memory_space<vmem>>)
    %c1_i32_77 = arith.constant 1 : i32
    %c0_i32_78 = arith.constant 0 : i32
    %128 = tpu.memref_slice %arg10[%5, %c0_i32_78] : memref<512x128xf32, #tpu.memory_space<any>> -> memref<1x128xf32, #tpu.memory_space<any>>
    %c1_i32_79 = arith.constant 1 : i32
    %c0_i32_80 = arith.constant 0 : i32
    %129 = tpu.memref_slice %arg28[%c1_i32_79, %c0_i32_80] : memref<16x128xf32, #tpu.memory_space<vmem>> -> memref<1x128xf32, #tpu.memory_space<vmem>>
    %130 = tpu.memref_slice %arg32[%c1_i32_77] : memref<16x!tpu.dma_semaphore, #tpu.memory_space<semaphore_mem>> -> memref<1x!tpu.dma_semaphore, #tpu.memory_space<semaphore_mem>>
    %131 = tpu.memref_squeeze %130 : memref<1x!tpu.dma_semaphore, #tpu.memory_space<semaphore_mem>> -> memref<!tpu.dma_semaphore, #tpu.memory_space<semaphore_mem>>
    tpu.wait_dma2 semaphore(%131 : memref<!tpu.dma_semaphore, #tpu.memory_space<semaphore_mem>>) src(%128 : memref<1x128xf32, #tpu.memory_space<any>>) dst(%129 : memref<1x128xf32, #tpu.memory_space<vmem>>)
    %c2_i32_81 = arith.constant 2 : i32
    %c0_i32_82 = arith.constant 0 : i32
    %132 = tpu.memref_slice %arg10[%10, %c0_i32_82] : memref<512x128xf32, #tpu.memory_space<any>> -> memref<1x128xf32, #tpu.memory_space<any>>
    %c2_i32_83 = arith.constant 2 : i32
    %c0_i32_84 = arith.constant 0 : i32
    %133 = tpu.memref_slice %arg28[%c2_i32_83, %c0_i32_84] : memref<16x128xf32, #tpu.memory_space<vmem>> -> memref<1x128xf32, #tpu.memory_space<vmem>>
    %134 = tpu.memref_slice %arg32[%c2_i32_81] : memref<16x!tpu.dma_semaphore, #tpu.memory_space<semaphore_mem>> -> memref<1x!tpu.dma_semaphore, #tpu.memory_space<semaphore_mem>>
    %135 = tpu.memref_squeeze %134 : memref<1x!tpu.dma_semaphore, #tpu.memory_space<semaphore_mem>> -> memref<!tpu.dma_semaphore, #tpu.memory_space<semaphore_mem>>
    tpu.wait_dma2 semaphore(%135 : memref<!tpu.dma_semaphore, #tpu.memory_space<semaphore_mem>>) src(%132 : memref<1x128xf32, #tpu.memory_space<any>>) dst(%133 : memref<1x128xf32, #tpu.memory_space<vmem>>)
    %c3_i32_85 = arith.constant 3 : i32
    %c0_i32_86 = arith.constant 0 : i32
    %136 = tpu.memref_slice %arg10[%15, %c0_i32_86] : memref<512x128xf32, #tpu.memory_space<any>> -> memref<1x128xf32, #tpu.memory_space<any>>
    %c3_i32_87 = arith.constant 3 : i32
    %c0_i32_88 = arith.constant 0 : i32
    %137 = tpu.memref_slice %arg28[%c3_i32_87, %c0_i32_88] : memref<16x128xf32, #tpu.memory_space<vmem>> -> memref<1x128xf32, #tpu.memory_space<vmem>>
    %138 = tpu.memref_slice %arg32[%c3_i32_85] : memref<16x!tpu.dma_semaphore, #tpu.memory_space<semaphore_mem>> -> memref<1x!tpu.dma_semaphore, #tpu.memory_space<semaphore_mem>>
    %139 = tpu.memref_squeeze %138 : memref<1x!tpu.dma_semaphore, #tpu.memory_space<semaphore_mem>> -> memref<!tpu.dma_semaphore, #tpu.memory_space<semaphore_mem>>
    tpu.wait_dma2 semaphore(%139 : memref<!tpu.dma_semaphore, #tpu.memory_space<semaphore_mem>>) src(%136 : memref<1x128xf32, #tpu.memory_space<any>>) dst(%137 : memref<1x128xf32, #tpu.memory_space<vmem>>)
    %c4_i32_89 = arith.constant 4 : i32
    %c0_i32_90 = arith.constant 0 : i32
    %140 = tpu.memref_slice %arg10[%20, %c0_i32_90] : memref<512x128xf32, #tpu.memory_space<any>> -> memref<1x128xf32, #tpu.memory_space<any>>
    %c4_i32_91 = arith.constant 4 : i32
    %c0_i32_92 = arith.constant 0 : i32
    %141 = tpu.memref_slice %arg28[%c4_i32_91, %c0_i32_92] : memref<16x128xf32, #tpu.memory_space<vmem>> -> memref<1x128xf32, #tpu.memory_space<vmem>>
    %142 = tpu.memref_slice %arg32[%c4_i32_89] : memref<16x!tpu.dma_semaphore, #tpu.memory_space<semaphore_mem>> -> memref<1x!tpu.dma_semaphore, #tpu.memory_space<semaphore_mem>>
    %143 = tpu.memref_squeeze %142 : memref<1x!tpu.dma_semaphore, #tpu.memory_space<semaphore_mem>> -> memref<!tpu.dma_semaphore, #tpu.memory_space<semaphore_mem>>
    tpu.wait_dma2 semaphore(%143 : memref<!tpu.dma_semaphore, #tpu.memory_space<semaphore_mem>>) src(%140 : memref<1x128xf32, #tpu.memory_space<any>>) dst(%141 : memref<1x128xf32, #tpu.memory_space<vmem>>)
    %c5_i32_93 = arith.constant 5 : i32
    %c0_i32_94 = arith.constant 0 : i32
    %144 = tpu.memref_slice %arg10[%25, %c0_i32_94] : memref<512x128xf32, #tpu.memory_space<any>> -> memref<1x128xf32, #tpu.memory_space<any>>
    %c5_i32_95 = arith.constant 5 : i32
    %c0_i32_96 = arith.constant 0 : i32
    %145 = tpu.memref_slice %arg28[%c5_i32_95, %c0_i32_96] : memref<16x128xf32, #tpu.memory_space<vmem>> -> memref<1x128xf32, #tpu.memory_space<vmem>>
    %146 = tpu.memref_slice %arg32[%c5_i32_93] : memref<16x!tpu.dma_semaphore, #tpu.memory_space<semaphore_mem>> -> memref<1x!tpu.dma_semaphore, #tpu.memory_space<semaphore_mem>>
    %147 = tpu.memref_squeeze %146 : memref<1x!tpu.dma_semaphore, #tpu.memory_space<semaphore_mem>> -> memref<!tpu.dma_semaphore, #tpu.memory_space<semaphore_mem>>
    tpu.wait_dma2 semaphore(%147 : memref<!tpu.dma_semaphore, #tpu.memory_space<semaphore_mem>>) src(%144 : memref<1x128xf32, #tpu.memory_space<any>>) dst(%145 : memref<1x128xf32, #tpu.memory_space<vmem>>)
    %c6_i32_97 = arith.constant 6 : i32
    %c0_i32_98 = arith.constant 0 : i32
    %148 = tpu.memref_slice %arg10[%30, %c0_i32_98] : memref<512x128xf32, #tpu.memory_space<any>> -> memref<1x128xf32, #tpu.memory_space<any>>
    %c6_i32_99 = arith.constant 6 : i32
    %c0_i32_100 = arith.constant 0 : i32
    %149 = tpu.memref_slice %arg28[%c6_i32_99, %c0_i32_100] : memref<16x128xf32, #tpu.memory_space<vmem>> -> memref<1x128xf32, #tpu.memory_space<vmem>>
    %150 = tpu.memref_slice %arg32[%c6_i32_97] : memref<16x!tpu.dma_semaphore, #tpu.memory_space<semaphore_mem>> -> memref<1x!tpu.dma_semaphore, #tpu.memory_space<semaphore_mem>>
    %151 = tpu.memref_squeeze %150 : memref<1x!tpu.dma_semaphore, #tpu.memory_space<semaphore_mem>> -> memref<!tpu.dma_semaphore, #tpu.memory_space<semaphore_mem>>
    tpu.wait_dma2 semaphore(%151 : memref<!tpu.dma_semaphore, #tpu.memory_space<semaphore_mem>>) src(%148 : memref<1x128xf32, #tpu.memory_space<any>>) dst(%149 : memref<1x128xf32, #tpu.memory_space<vmem>>)
    %c7_i32_101 = arith.constant 7 : i32
    %c0_i32_102 = arith.constant 0 : i32
    %152 = tpu.memref_slice %arg10[%35, %c0_i32_102] : memref<512x128xf32, #tpu.memory_space<any>> -> memref<1x128xf32, #tpu.memory_space<any>>
    %c7_i32_103 = arith.constant 7 : i32
    %c0_i32_104 = arith.constant 0 : i32
    %153 = tpu.memref_slice %arg28[%c7_i32_103, %c0_i32_104] : memref<16x128xf32, #tpu.memory_space<vmem>> -> memref<1x128xf32, #tpu.memory_space<vmem>>
    %154 = tpu.memref_slice %arg32[%c7_i32_101] : memref<16x!tpu.dma_semaphore, #tpu.memory_space<semaphore_mem>> -> memref<1x!tpu.dma_semaphore, #tpu.memory_space<semaphore_mem>>
    %155 = tpu.memref_squeeze %154 : memref<1x!tpu.dma_semaphore, #tpu.memory_space<semaphore_mem>> -> memref<!tpu.dma_semaphore, #tpu.memory_space<semaphore_mem>>
    tpu.wait_dma2 semaphore(%155 : memref<!tpu.dma_semaphore, #tpu.memory_space<semaphore_mem>>) src(%152 : memref<1x128xf32, #tpu.memory_space<any>>) dst(%153 : memref<1x128xf32, #tpu.memory_space<vmem>>)
    %c8_i32_105 = arith.constant 8 : i32
    %c0_i32_106 = arith.constant 0 : i32
    %156 = tpu.memref_slice %arg10[%40, %c0_i32_106] : memref<512x128xf32, #tpu.memory_space<any>> -> memref<1x128xf32, #tpu.memory_space<any>>
    %c8_i32_107 = arith.constant 8 : i32
    %c0_i32_108 = arith.constant 0 : i32
    %157 = tpu.memref_slice %arg28[%c8_i32_107, %c0_i32_108] : memref<16x128xf32, #tpu.memory_space<vmem>> -> memref<1x128xf32, #tpu.memory_space<vmem>>
    %158 = tpu.memref_slice %arg32[%c8_i32_105] : memref<16x!tpu.dma_semaphore, #tpu.memory_space<semaphore_mem>> -> memref<1x!tpu.dma_semaphore, #tpu.memory_space<semaphore_mem>>
    %159 = tpu.memref_squeeze %158 : memref<1x!tpu.dma_semaphore, #tpu.memory_space<semaphore_mem>> -> memref<!tpu.dma_semaphore, #tpu.memory_space<semaphore_mem>>
    tpu.wait_dma2 semaphore(%159 : memref<!tpu.dma_semaphore, #tpu.memory_space<semaphore_mem>>) src(%156 : memref<1x128xf32, #tpu.memory_space<any>>) dst(%157 : memref<1x128xf32, #tpu.memory_space<vmem>>)
    %c9_i32_109 = arith.constant 9 : i32
    %c0_i32_110 = arith.constant 0 : i32
    %160 = tpu.memref_slice %arg10[%45, %c0_i32_110] : memref<512x128xf32, #tpu.memory_space<any>> -> memref<1x128xf32, #tpu.memory_space<any>>
    %c9_i32_111 = arith.constant 9 : i32
    %c0_i32_112 = arith.constant 0 : i32
    %161 = tpu.memref_slice %arg28[%c9_i32_111, %c0_i32_112] : memref<16x128xf32, #tpu.memory_space<vmem>> -> memref<1x128xf32, #tpu.memory_space<vmem>>
    %162 = tpu.memref_slice %arg32[%c9_i32_109] : memref<16x!tpu.dma_semaphore, #tpu.memory_space<semaphore_mem>> -> memref<1x!tpu.dma_semaphore, #tpu.memory_space<semaphore_mem>>
    %163 = tpu.memref_squeeze %162 : memref<1x!tpu.dma_semaphore, #tpu.memory_space<semaphore_mem>> -> memref<!tpu.dma_semaphore, #tpu.memory_space<semaphore_mem>>
    tpu.wait_dma2 semaphore(%163 : memref<!tpu.dma_semaphore, #tpu.memory_space<semaphore_mem>>) src(%160 : memref<1x128xf32, #tpu.memory_space<any>>) dst(%161 : memref<1x128xf32, #tpu.memory_space<vmem>>)
    %c10_i32_113 = arith.constant 10 : i32
    %c0_i32_114 = arith.constant 0 : i32
    %164 = tpu.memref_slice %arg10[%50, %c0_i32_114] : memref<512x128xf32, #tpu.memory_space<any>> -> memref<1x128xf32, #tpu.memory_space<any>>
    %c10_i32_115 = arith.constant 10 : i32
    %c0_i32_116 = arith.constant 0 : i32
    %165 = tpu.memref_slice %arg28[%c10_i32_115, %c0_i32_116] : memref<16x128xf32, #tpu.memory_space<vmem>> -> memref<1x128xf32, #tpu.memory_space<vmem>>
    %166 = tpu.memref_slice %arg32[%c10_i32_113] : memref<16x!tpu.dma_semaphore, #tpu.memory_space<semaphore_mem>> -> memref<1x!tpu.dma_semaphore, #tpu.memory_space<semaphore_mem>>
    %167 = tpu.memref_squeeze %166 : memref<1x!tpu.dma_semaphore, #tpu.memory_space<semaphore_mem>> -> memref<!tpu.dma_semaphore, #tpu.memory_space<semaphore_mem>>
    tpu.wait_dma2 semaphore(%167 : memref<!tpu.dma_semaphore, #tpu.memory_space<semaphore_mem>>) src(%164 : memref<1x128xf32, #tpu.memory_space<any>>) dst(%165 : memref<1x128xf32, #tpu.memory_space<vmem>>)
    %c11_i32_117 = arith.constant 11 : i32
    %c0_i32_118 = arith.constant 0 : i32
    %168 = tpu.memref_slice %arg10[%55, %c0_i32_118] : memref<512x128xf32, #tpu.memory_space<any>> -> memref<1x128xf32, #tpu.memory_space<any>>
    %c11_i32_119 = arith.constant 11 : i32
    %c0_i32_120 = arith.constant 0 : i32
    %169 = tpu.memref_slice %arg28[%c11_i32_119, %c0_i32_120] : memref<16x128xf32, #tpu.memory_space<vmem>> -> memref<1x128xf32, #tpu.memory_space<vmem>>
    %170 = tpu.memref_slice %arg32[%c11_i32_117] : memref<16x!tpu.dma_semaphore, #tpu.memory_space<semaphore_mem>> -> memref<1x!tpu.dma_semaphore, #tpu.memory_space<semaphore_mem>>
    %171 = tpu.memref_squeeze %170 : memref<1x!tpu.dma_semaphore, #tpu.memory_space<semaphore_mem>> -> memref<!tpu.dma_semaphore, #tpu.memory_space<semaphore_mem>>
    tpu.wait_dma2 semaphore(%171 : memref<!tpu.dma_semaphore, #tpu.memory_space<semaphore_mem>>) src(%168 : memref<1x128xf32, #tpu.memory_space<any>>) dst(%169 : memref<1x128xf32, #tpu.memory_space<vmem>>)
    %c12_i32_121 = arith.constant 12 : i32
    %c0_i32_122 = arith.constant 0 : i32
    %172 = tpu.memref_slice %arg10[%60, %c0_i32_122] : memref<512x128xf32, #tpu.memory_space<any>> -> memref<1x128xf32, #tpu.memory_space<any>>
    %c12_i32_123 = arith.constant 12 : i32
    %c0_i32_124 = arith.constant 0 : i32
    %173 = tpu.memref_slice %arg28[%c12_i32_123, %c0_i32_124] : memref<16x128xf32, #tpu.memory_space<vmem>> -> memref<1x128xf32, #tpu.memory_space<vmem>>
    %174 = tpu.memref_slice %arg32[%c12_i32_121] : memref<16x!tpu.dma_semaphore, #tpu.memory_space<semaphore_mem>> -> memref<1x!tpu.dma_semaphore, #tpu.memory_space<semaphore_mem>>
    %175 = tpu.memref_squeeze %174 : memref<1x!tpu.dma_semaphore, #tpu.memory_space<semaphore_mem>> -> memref<!tpu.dma_semaphore, #tpu.memory_space<semaphore_mem>>
    tpu.wait_dma2 semaphore(%175 : memref<!tpu.dma_semaphore, #tpu.memory_space<semaphore_mem>>) src(%172 : memref<1x128xf32, #tpu.memory_space<any>>) dst(%173 : memref<1x128xf32, #tpu.memory_space<vmem>>)
    %c13_i32_125 = arith.constant 13 : i32
    %c0_i32_126 = arith.constant 0 : i32
    %176 = tpu.memref_slice %arg10[%65, %c0_i32_126] : memref<512x128xf32, #tpu.memory_space<any>> -> memref<1x128xf32, #tpu.memory_space<any>>
    %c13_i32_127 = arith.constant 13 : i32
    %c0_i32_128 = arith.constant 0 : i32
    %177 = tpu.memref_slice %arg28[%c13_i32_127, %c0_i32_128] : memref<16x128xf32, #tpu.memory_space<vmem>> -> memref<1x128xf32, #tpu.memory_space<vmem>>
    %178 = tpu.memref_slice %arg32[%c13_i32_125] : memref<16x!tpu.dma_semaphore, #tpu.memory_space<semaphore_mem>> -> memref<1x!tpu.dma_semaphore, #tpu.memory_space<semaphore_mem>>
    %179 = tpu.memref_squeeze %178 : memref<1x!tpu.dma_semaphore, #tpu.memory_space<semaphore_mem>> -> memref<!tpu.dma_semaphore, #tpu.memory_space<semaphore_mem>>
    tpu.wait_dma2 semaphore(%179 : memref<!tpu.dma_semaphore, #tpu.memory_space<semaphore_mem>>) src(%176 : memref<1x128xf32, #tpu.memory_space<any>>) dst(%177 : memref<1x128xf32, #tpu.memory_space<vmem>>)
    %c14_i32_129 = arith.constant 14 : i32
    %c0_i32_130 = arith.constant 0 : i32
    %180 = tpu.memref_slice %arg10[%70, %c0_i32_130] : memref<512x128xf32, #tpu.memory_space<any>> -> memref<1x128xf32, #tpu.memory_space<any>>
    %c14_i32_131 = arith.constant 14 : i32
    %c0_i32_132 = arith.constant 0 : i32
    %181 = tpu.memref_slice %arg28[%c14_i32_131, %c0_i32_132] : memref<16x128xf32, #tpu.memory_space<vmem>> -> memref<1x128xf32, #tpu.memory_space<vmem>>
    %182 = tpu.memref_slice %arg32[%c14_i32_129] : memref<16x!tpu.dma_semaphore, #tpu.memory_space<semaphore_mem>> -> memref<1x!tpu.dma_semaphore, #tpu.memory_space<semaphore_mem>>
    %183 = tpu.memref_squeeze %182 : memref<1x!tpu.dma_semaphore, #tpu.memory_space<semaphore_mem>> -> memref<!tpu.dma_semaphore, #tpu.memory_space<semaphore_mem>>
    tpu.wait_dma2 semaphore(%183 : memref<!tpu.dma_semaphore, #tpu.memory_space<semaphore_mem>>) src(%180 : memref<1x128xf32, #tpu.memory_space<any>>) dst(%181 : memref<1x128xf32, #tpu.memory_space<vmem>>)
    %c15_i32_133 = arith.constant 15 : i32
    %c0_i32_134 = arith.constant 0 : i32
    %184 = tpu.memref_slice %arg10[%75, %c0_i32_134] : memref<512x128xf32, #tpu.memory_space<any>> -> memref<1x128xf32, #tpu.memory_space<any>>
    %c15_i32_135 = arith.constant 15 : i32
    %c0_i32_136 = arith.constant 0 : i32
    %185 = tpu.memref_slice %arg28[%c15_i32_135, %c0_i32_136] : memref<16x128xf32, #tpu.memory_space<vmem>> -> memref<1x128xf32, #tpu.memory_space<vmem>>
    %186 = tpu.memref_slice %arg32[%c15_i32_133] : memref<16x!tpu.dma_semaphore, #tpu.memory_space<semaphore_mem>> -> memref<1x!tpu.dma_semaphore, #tpu.memory_space<semaphore_mem>>
    %187 = tpu.memref_squeeze %186 : memref<1x!tpu.dma_semaphore, #tpu.memory_space<semaphore_mem>> -> memref<!tpu.dma_semaphore, #tpu.memory_space<semaphore_mem>>
    tpu.wait_dma2 semaphore(%187 : memref<!tpu.dma_semaphore, #tpu.memory_space<semaphore_mem>>) src(%184 : memref<1x128xf32, #tpu.memory_space<any>>) dst(%185 : memref<1x128xf32, #tpu.memory_space<vmem>>)
    %c0_137 = arith.constant 0 : index
    %c0_138 = arith.constant 0 : index
    %188 = vector.load %arg28[%c0_137, %c0_138] : memref<16x128xf32, #tpu.memory_space<vmem>>, vector<16x128xf32>
    %189 = tpu.concatenate %123, %188 in 0 : vector<16x128xf32>, vector<16x128xf32> -> vector<32x128xf32>
    %c0_139 = arith.constant 0 : index
    %c0_140 = arith.constant 0 : index
    %190 = vector.load %arg3[%c0_139, %c0_140] : memref<32x128xf32, #tpu.memory_space<vmem>>, vector<32x128xf32>
    %191 = arith.addf %189, %190 : vector<32x128xf32>
    %cst_141 = arith.constant dense<0.000000e+00> : vector<32xf32>
    %192 = vector.multi_reduction <add>, %191, %cst_141 [1] : vector<32x128xf32> to vector<32xf32>
    %193 = vector.shape_cast %192 : vector<32xf32> to vector<32x1xf32>
    %cst_142 = arith.constant 1.280000e+02 : f32
    %194 = vector.broadcast %cst_142 : f32 to vector<32x1xf32>
    %195 = arith.divf %193, %194 : vector<32x1xf32>
    %196 = vector.broadcast %195 : vector<32x1xf32> to vector<32x128xf32>
    %197 = arith.subf %191, %196 : vector<32x128xf32>
    %198 = arith.mulf %197, %197 : vector<32x128xf32>
    %cst_143 = arith.constant dense<0.000000e+00> : vector<32xf32>
    %199 = vector.multi_reduction <add>, %198, %cst_143 [1] : vector<32x128xf32> to vector<32xf32>
    %200 = vector.shape_cast %199 : vector<32xf32> to vector<32x1xf32>
    %cst_144 = arith.constant 1.280000e+02 : f32
    %201 = vector.broadcast %cst_144 : f32 to vector<32x1xf32>
    %202 = arith.divf %200, %201 : vector<32x1xf32>
    %203 = vector.broadcast %195 : vector<32x1xf32> to vector<32x128xf32>
    %204 = arith.subf %191, %203 : vector<32x128xf32>
    %cst_145 = arith.constant 9.99999974E-6 : f32
    %205 = vector.broadcast %cst_145 : f32 to vector<32x1xf32>
    %206 = arith.addf %202, %205 : vector<32x1xf32>
    %207 = math.rsqrt %206 : vector<32x1xf32>
    %208 = vector.broadcast %207 : vector<32x1xf32> to vector<32x128xf32>
    %209 = arith.mulf %204, %208 : vector<32x128xf32>
    %c0_146 = arith.constant 0 : index
    %c0_147 = arith.constant 0 : index
    %210 = vector.load %arg11[%c0_146, %c0_147] : memref<1x128xf32, #tpu.memory_space<vmem>>, vector<1x128xf32>
    %211 = vector.broadcast %210 : vector<1x128xf32> to vector<32x128xf32>
    %212 = arith.mulf %209, %211 : vector<32x128xf32>
    %c0_148 = arith.constant 0 : index
    %c0_149 = arith.constant 0 : index
    %213 = vector.load %arg12[%c0_148, %c0_149] : memref<1x128xf32, #tpu.memory_space<vmem>>, vector<1x128xf32>
    %214 = vector.broadcast %213 : vector<1x128xf32> to vector<32x128xf32>
    %215 = arith.addf %212, %214 : vector<32x128xf32>
    %c0_150 = arith.constant 0 : index
    %c0_151 = arith.constant 0 : index
    %216 = vector.load %arg13[%c0_150, %c0_151] : memref<128x384xbf16, #tpu.memory_space<vmem>>, vector<128x384xbf16>
    %217 = arith.truncf %215 : vector<32x128xf32> to vector<32x128xbf16>
    %cst_152 = arith.constant dense<0.000000e+00> : vector<32x384xf32>
    %218 = tpu.matmul %217, %216, %cst_152 {dimension_numbers = #tpu.dot_dimension_numbers<[1], [0], [0], [1], [0, 0, 1, 1], [], []>} : vector<32x128xbf16>, vector<128x384xbf16>, vector<32x384xf32> -> vector<32x384xf32>
    %c0_153 = arith.constant 0 : index
    %c0_154 = arith.constant 0 : index
    %219 = vector.load %arg14[%c0_153, %c0_154] : memref<1x384xf32, #tpu.memory_space<vmem>>, vector<1x384xf32>
    %220 = vector.broadcast %219 : vector<1x384xf32> to vector<32x384xf32>
    %221 = arith.addf %218, %220 : vector<32x384xf32>
    %222 = vector.extract_strided_slice %221 {offsets = [0, 0], sizes = [32, 128], strides = [1, 1]} : vector<32x384xf32> to vector<32x128xf32>
    %223 = arith.truncf %222 : vector<32x128xf32> to vector<32x128xbf16>
    %224 = vector.extract_strided_slice %221 {offsets = [0, 128], sizes = [32, 128], strides = [1, 1]} : vector<32x384xf32> to vector<32x128xf32>
    %225 = arith.truncf %224 : vector<32x128xf32> to vector<32x128xbf16>
    %226 = vector.extract_strided_slice %221 {offsets = [0, 256], sizes = [32, 128], strides = [1, 1]} : vector<32x384xf32> to vector<32x128xf32>
    %227 = arith.truncf %226 : vector<32x128xf32> to vector<32x128xbf16>
    %cst_155 = arith.constant dense<0.000000e+00> : vector<32x32xf32>
    %228 = tpu.matmul %223, %225, %cst_155 {dimension_numbers = #tpu.dot_dimension_numbers<[1], [1], [0], [0], [0, 0, 1, 0], [], []>} : vector<32x128xbf16>, vector<32x128xbf16>, vector<32x32xf32> -> vector<32x32xf32>
    %cst_156 = arith.constant 0.0883883461 : f32
    %229 = vector.broadcast %cst_156 : f32 to vector<32x32xf32>
    %230 = arith.mulf %228, %229 : vector<32x32xf32>
    %c0_157 = arith.constant 0 : index
    %c0_158 = arith.constant 0 : index
    %231 = vector.load %arg2[%c0_157, %c0_158] : memref<32x32xf32, #tpu.memory_space<vmem>>, vector<32x32xf32>
    %232 = arith.addf %230, %231 : vector<32x32xf32>
    %cst_159 = arith.constant dense<0xFF800000> : vector<32xf32>
    %233 = vector.multi_reduction <maximumf>, %232, %cst_159 [1] : vector<32x32xf32> to vector<32xf32>
    %234 = vector.shape_cast %233 : vector<32xf32> to vector<32x1xf32>
    %235 = vector.broadcast %234 : vector<32x1xf32> to vector<32x32xf32>
    %236 = arith.subf %232, %235 : vector<32x32xf32>
    %237 = math.exp %236 : vector<32x32xf32>
    %cst_160 = arith.constant dense<0.000000e+00> : vector<32xf32>
    %238 = vector.multi_reduction <add>, %237, %cst_160 [1] : vector<32x32xf32> to vector<32xf32>
    %239 = vector.shape_cast %238 : vector<32xf32> to vector<32x1xf32>
    %240 = tpu.reciprocal %239 {approx = true} : vector<32x1xf32> -> vector<32x1xf32>
    %241 = vector.broadcast %240 : vector<32x1xf32> to vector<32x32xf32>
    %242 = arith.mulf %237, %241 : vector<32x32xf32>
    %243 = arith.truncf %242 : vector<32x32xf32> to vector<32x32xbf16>
    %cst_161 = arith.constant dense<0.000000e+00> : vector<32x128xf32>
    %244 = tpu.matmul %243, %227, %cst_161 {dimension_numbers = #tpu.dot_dimension_numbers<[1], [0], [0], [1], [0, 0, 1, 1], [], []>} : vector<32x32xbf16>, vector<32x128xbf16>, vector<32x128xf32> -> vector<32x128xf32>
    %c0_162 = arith.constant 0 : index
    %c0_163 = arith.constant 0 : index
    %245 = vector.load %arg15[%c0_162, %c0_163] : memref<128x128xbf16, #tpu.memory_space<vmem>>, vector<128x128xbf16>
    %246 = arith.truncf %244 : vector<32x128xf32> to vector<32x128xbf16>
    %cst_164 = arith.constant dense<0.000000e+00> : vector<32x128xf32>
    %247 = tpu.matmul %246, %245, %cst_164 {dimension_numbers = #tpu.dot_dimension_numbers<[1], [0], [0], [1], [0, 0, 1, 1], [], []>} : vector<32x128xbf16>, vector<128x128xbf16>, vector<32x128xf32> -> vector<32x128xf32>
    %248 = arith.addf %191, %247 : vector<32x128xf32>
    %c0_165 = arith.constant 0 : index
    %c0_166 = arith.constant 0 : index
    %249 = vector.load %arg16[%c0_165, %c0_166] : memref<1x128xf32, #tpu.memory_space<vmem>>, vector<1x128xf32>
    %250 = vector.broadcast %249 : vector<1x128xf32> to vector<32x128xf32>
    %251 = arith.addf %248, %250 : vector<32x128xf32>
    %cst_167 = arith.constant dense<0.000000e+00> : vector<32xf32>
    %252 = vector.multi_reduction <add>, %251, %cst_167 [1] : vector<32x128xf32> to vector<32xf32>
    %253 = vector.shape_cast %252 : vector<32xf32> to vector<32x1xf32>
    %cst_168 = arith.constant 1.280000e+02 : f32
    %254 = vector.broadcast %cst_168 : f32 to vector<32x1xf32>
    %255 = arith.divf %253, %254 : vector<32x1xf32>
    %256 = vector.broadcast %255 : vector<32x1xf32> to vector<32x128xf32>
    %257 = arith.subf %251, %256 : vector<32x128xf32>
    %258 = arith.mulf %257, %257 : vector<32x128xf32>
    %cst_169 = arith.constant dense<0.000000e+00> : vector<32xf32>
    %259 = vector.multi_reduction <add>, %258, %cst_169 [1] : vector<32x128xf32> to vector<32xf32>
    %260 = vector.shape_cast %259 : vector<32xf32> to vector<32x1xf32>
    %cst_170 = arith.constant 1.280000e+02 : f32
    %261 = vector.broadcast %cst_170 : f32 to vector<32x1xf32>
    %262 = arith.divf %260, %261 : vector<32x1xf32>
    %263 = vector.broadcast %255 : vector<32x1xf32> to vector<32x128xf32>
    %264 = arith.subf %251, %263 : vector<32x128xf32>
    %cst_171 = arith.constant 9.99999974E-6 : f32
    %265 = vector.broadcast %cst_171 : f32 to vector<32x1xf32>
    %266 = arith.addf %262, %265 : vector<32x1xf32>
    %267 = math.rsqrt %266 : vector<32x1xf32>
    %268 = vector.broadcast %267 : vector<32x1xf32> to vector<32x128xf32>
    %269 = arith.mulf %264, %268 : vector<32x128xf32>
    %c0_172 = arith.constant 0 : index
    %c0_173 = arith.constant 0 : index
    %270 = vector.load %arg17[%c0_172, %c0_173] : memref<1x128xf32, #tpu.memory_space<vmem>>, vector<1x128xf32>
    %271 = vector.broadcast %270 : vector<1x128xf32> to vector<32x128xf32>
    %272 = arith.mulf %269, %271 : vector<32x128xf32>
    %c0_174 = arith.constant 0 : index
    %c0_175 = arith.constant 0 : index
    %273 = vector.load %arg18[%c0_174, %c0_175] : memref<1x128xf32, #tpu.memory_space<vmem>>, vector<1x128xf32>
    %274 = vector.broadcast %273 : vector<1x128xf32> to vector<32x128xf32>
    %275 = arith.addf %272, %274 : vector<32x128xf32>
    %c0_i32_176 = arith.constant 0 : i32
    %276 = tpu.memref_slice %arg33[%c0_i32_176] : memref<3x!tpu.dma_semaphore, #tpu.memory_space<semaphore_mem>> -> memref<1x!tpu.dma_semaphore, #tpu.memory_space<semaphore_mem>>
    %277 = tpu.memref_squeeze %276 : memref<1x!tpu.dma_semaphore, #tpu.memory_space<semaphore_mem>> -> memref<!tpu.dma_semaphore, #tpu.memory_space<semaphore_mem>>
    tpu.wait_dma2 semaphore(%277 : memref<!tpu.dma_semaphore, #tpu.memory_space<semaphore_mem>>) src(%arg19 : memref<128x512xbf16, #tpu.memory_space<any>>) dst(%arg29 : memref<128x512xbf16, #tpu.memory_space<vmem>>)
    %c0_177 = arith.constant 0 : index
    %c0_178 = arith.constant 0 : index
    %278 = vector.load %arg29[%c0_177, %c0_178] : memref<128x512xbf16, #tpu.memory_space<vmem>>, vector<128x512xbf16>
    %279 = arith.truncf %275 : vector<32x128xf32> to vector<32x128xbf16>
    %cst_179 = arith.constant dense<0.000000e+00> : vector<32x512xf32>
    %280 = tpu.matmul %279, %278, %cst_179 {dimension_numbers = #tpu.dot_dimension_numbers<[1], [0], [0], [1], [0, 0, 1, 1], [], []>} : vector<32x128xbf16>, vector<128x512xbf16>, vector<32x512xf32> -> vector<32x512xf32>
    %c0_180 = arith.constant 0 : index
    %c0_181 = arith.constant 0 : index
    %281 = vector.load %arg20[%c0_180, %c0_181] : memref<1x512xf32, #tpu.memory_space<vmem>>, vector<1x512xf32>
    %282 = vector.broadcast %281 : vector<1x512xf32> to vector<32x512xf32>
    %283 = arith.addf %280, %282 : vector<32x512xf32>
    %284 = arith.mulf %283, %283 : vector<32x512xf32>
    %285 = arith.mulf %283, %284 : vector<32x512xf32>
    %cst_182 = arith.constant 4.471500e-02 : f32
    %286 = vector.broadcast %cst_182 : f32 to vector<32x512xf32>
    %287 = arith.mulf %286, %285 : vector<32x512xf32>
    %288 = arith.addf %283, %287 : vector<32x512xf32>
    %cst_183 = arith.constant 0.797884583 : f32
    %289 = vector.broadcast %cst_183 : f32 to vector<32x512xf32>
    %290 = arith.mulf %289, %288 : vector<32x512xf32>
    %291 = math.tanh %290 : vector<32x512xf32>
    %cst_184 = arith.constant 1.000000e+00 : f32
    %292 = vector.broadcast %cst_184 : f32 to vector<32x512xf32>
    %293 = arith.addf %292, %291 : vector<32x512xf32>
    %cst_185 = arith.constant 5.000000e-01 : f32
    %294 = vector.broadcast %cst_185 : f32 to vector<32x512xf32>
    %295 = arith.mulf %294, %293 : vector<32x512xf32>
    %296 = arith.mulf %283, %295 : vector<32x512xf32>
    %c1_i32_186 = arith.constant 1 : i32
    %297 = tpu.memref_slice %arg33[%c1_i32_186] : memref<3x!tpu.dma_semaphore, #tpu.memory_space<semaphore_mem>> -> memref<1x!tpu.dma_semaphore, #tpu.memory_space<semaphore_mem>>
    %298 = tpu.memref_squeeze %297 : memref<1x!tpu.dma_semaphore, #tpu.memory_space<semaphore_mem>> -> memref<!tpu.dma_semaphore, #tpu.memory_space<semaphore_mem>>
    tpu.wait_dma2 semaphore(%298 : memref<!tpu.dma_semaphore, #tpu.memory_space<semaphore_mem>>) src(%arg21 : memref<512x128xbf16, #tpu.memory_space<any>>) dst(%arg30 : memref<512x128xbf16, #tpu.memory_space<vmem>>)
    %c0_187 = arith.constant 0 : index
    %c0_188 = arith.constant 0 : index
    %299 = vector.load %arg30[%c0_187, %c0_188] : memref<512x128xbf16, #tpu.memory_space<vmem>>, vector<512x128xbf16>
    %300 = arith.truncf %296 : vector<32x512xf32> to vector<32x512xbf16>
    %cst_189 = arith.constant dense<0.000000e+00> : vector<32x128xf32>
    %301 = tpu.matmul %300, %299, %cst_189 {dimension_numbers = #tpu.dot_dimension_numbers<[1], [0], [0], [1], [0, 0, 1, 1], [], []>} : vector<32x512xbf16>, vector<512x128xbf16>, vector<32x128xf32> -> vector<32x128xf32>
    %302 = arith.addf %251, %301 : vector<32x128xf32>
    %c0_190 = arith.constant 0 : index
    %c0_191 = arith.constant 0 : index
    %303 = vector.load %arg22[%c0_190, %c0_191] : memref<1x128xf32, #tpu.memory_space<vmem>>, vector<1x128xf32>
    %304 = vector.broadcast %303 : vector<1x128xf32> to vector<32x128xf32>
    %305 = arith.addf %302, %304 : vector<32x128xf32>
    %cst_192 = arith.constant dense<0.000000e+00> : vector<32xf32>
    %306 = vector.multi_reduction <add>, %305, %cst_192 [1] : vector<32x128xf32> to vector<32xf32>
    %307 = vector.shape_cast %306 : vector<32xf32> to vector<32x1xf32>
    %cst_193 = arith.constant 1.280000e+02 : f32
    %308 = vector.broadcast %cst_193 : f32 to vector<32x1xf32>
    %309 = arith.divf %307, %308 : vector<32x1xf32>
    %310 = vector.broadcast %309 : vector<32x1xf32> to vector<32x128xf32>
    %311 = arith.subf %305, %310 : vector<32x128xf32>
    %312 = arith.mulf %311, %311 : vector<32x128xf32>
    %cst_194 = arith.constant dense<0.000000e+00> : vector<32xf32>
    %313 = vector.multi_reduction <add>, %312, %cst_194 [1] : vector<32x128xf32> to vector<32xf32>
    %314 = vector.shape_cast %313 : vector<32xf32> to vector<32x1xf32>
    %cst_195 = arith.constant 1.280000e+02 : f32
    %315 = vector.broadcast %cst_195 : f32 to vector<32x1xf32>
    %316 = arith.divf %314, %315 : vector<32x1xf32>
    %317 = vector.broadcast %309 : vector<32x1xf32> to vector<32x128xf32>
    %318 = arith.subf %305, %317 : vector<32x128xf32>
    %cst_196 = arith.constant 9.99999974E-6 : f32
    %319 = vector.broadcast %cst_196 : f32 to vector<32x1xf32>
    %320 = arith.addf %316, %319 : vector<32x1xf32>
    %321 = math.rsqrt %320 : vector<32x1xf32>
    %322 = vector.broadcast %321 : vector<32x1xf32> to vector<32x128xf32>
    %323 = arith.mulf %318, %322 : vector<32x128xf32>
    %c0_197 = arith.constant 0 : index
    %c0_198 = arith.constant 0 : index
    %324 = vector.load %arg23[%c0_197, %c0_198] : memref<1x128xf32, #tpu.memory_space<vmem>>, vector<1x128xf32>
    %325 = vector.broadcast %324 : vector<1x128xf32> to vector<32x128xf32>
    %326 = arith.mulf %323, %325 : vector<32x128xf32>
    %c0_199 = arith.constant 0 : index
    %c0_200 = arith.constant 0 : index
    %327 = vector.load %arg24[%c0_199, %c0_200] : memref<1x128xf32, #tpu.memory_space<vmem>>, vector<1x128xf32>
    %328 = vector.broadcast %327 : vector<1x128xf32> to vector<32x128xf32>
    %329 = arith.addf %326, %328 : vector<32x128xf32>
    %330 = vector.extract_strided_slice %329 {offsets = [16, 0], sizes = [16, 128], strides = [1, 1]} : vector<32x128xf32> to vector<16x128xf32>
    %c2_i32_201 = arith.constant 2 : i32
    %331 = tpu.memref_slice %arg33[%c2_i32_201] : memref<3x!tpu.dma_semaphore, #tpu.memory_space<semaphore_mem>> -> memref<1x!tpu.dma_semaphore, #tpu.memory_space<semaphore_mem>>
    %332 = tpu.memref_squeeze %331 : memref<1x!tpu.dma_semaphore, #tpu.memory_space<semaphore_mem>> -> memref<!tpu.dma_semaphore, #tpu.memory_space<semaphore_mem>>
    tpu.wait_dma2 semaphore(%332 : memref<!tpu.dma_semaphore, #tpu.memory_space<semaphore_mem>>) src(%arg25 : memref<128x512xbf16, #tpu.memory_space<any>>) dst(%arg31 : memref<128x512xbf16, #tpu.memory_space<vmem>>)
    %c0_202 = arith.constant 0 : index
    %c0_203 = arith.constant 0 : index
    %333 = vector.load %arg31[%c0_202, %c0_203] : memref<128x512xbf16, #tpu.memory_space<vmem>>, vector<128x512xbf16>
    %334 = arith.truncf %330 : vector<16x128xf32> to vector<16x128xbf16>
    %cst_204 = arith.constant dense<0.000000e+00> : vector<16x512xf32>
    %335 = tpu.matmul %334, %333, %cst_204 {dimension_numbers = #tpu.dot_dimension_numbers<[1], [0], [0], [1], [0, 0, 1, 1], [], []>} : vector<16x128xbf16>, vector<128x512xbf16>, vector<16x512xf32> -> vector<16x512xf32>
    %c0_205 = arith.constant 0 : index
    %c0_206 = arith.constant 0 : index
    %336 = vector.load %arg26[%c0_205, %c0_206] : memref<1x512xf32, #tpu.memory_space<vmem>>, vector<1x512xf32>
    %337 = vector.broadcast %336 : vector<1x512xf32> to vector<16x512xf32>
    %338 = arith.addf %335, %337 : vector<16x512xf32>
    %c0_207 = arith.constant 0 : index
    %c0_208 = arith.constant 0 : index
    %339 = vector.load %arg27[%c0_207, %c0_208] : memref<16x512xf32, #tpu.memory_space<vmem>>, vector<16x512xf32>
    tpu.vector_store %arg27[%c0_207, %c0_208], %338 {strides = array<i32>} : memref<16x512xf32, #tpu.memory_space<vmem>>, vector<16x512xf32>,
    return
  }
}

</mosaic_0001>

<llo_original>
// kernel: prompt_model_forward.1
$region0: #{prompt_model_forward.1}
  #allocation0 [shape = 'u32[]', space=smem, size = 0x4, offset = 0x4, fixed_abs, tag = 'smem constant byte address 0x4 - core index']
  #allocation1 [shape = 'u32[144,128]{1,0:T(1,128)}', space=vmem, size = 0x12000, scoped, tag = 'internal scratch']
  #allocation2 [shape = 'f32[16,128]{1,0:T(8,128)}', space=vmem, size = 0x2000, scoped, tag = 'scratch operand']
  #allocation3 [shape = 'bf16[128,512]{1,0:T(16,128)(2,1)}', space=vmem, size = 0x20000, scoped, tag = 'scratch operand']
  #allocation4 [shape = 'bf16[512,128]{1,0:T(16,128)(2,1)}', space=vmem, size = 0x20000, scoped, tag = 'scratch operand']
  #allocation5 [shape = 'bf16[128,512]{1,0:T(16,128)(2,1)}', space=vmem, size = 0x20000, scoped, tag = 'scratch operand']
  #allocation6 [shape = 's32[16]{0}', space=sflag, size = 0x40, scoped, tag = 'scratch operand']
  #allocation7 [shape = 's32[3]{0}', space=sflag, size = 0xc, scoped, tag = 'scratch operand']
  #allocation12 [shape = 's32[]', space=sflag, size = 0x4, offset = 0, fixed_abs, tag = 'sflag constant byte address 0x0 - dummy sync flag']
  #allocation13 [shape = 's32[]', space=sflag, size = 0x4, offset = 0, fixed_abs, tag = 'sflag constant byte address 0x0 - dummy sync flag']
  #allocation14 [shape = 's32[]', space=sflag, size = 0x4, offset = 0, fixed_abs, tag = 'sflag constant byte address 0x0 - dummy sync flag']
  #allocation15 [shape = 's32[]', space=sflag, size = 0x4, offset = 0, fixed_abs, tag = 'sflag constant byte address 0x0 - dummy sync flag']
  #allocation16 [shape = 's32[]', space=sflag, size = 0x4, offset = 0, fixed_abs, tag = 'sflag constant byte address 0x0 - dummy sync flag']
  #allocation17 [shape = 's32[]', space=sflag, size = 0x4, offset = 0, fixed_abs, tag = 'sflag constant byte address 0x0 - dummy sync flag']
  #allocation18 [shape = 's32[]', space=sflag, size = 0x4, offset = 0, fixed_abs, tag = 'sflag constant byte address 0x0 - dummy sync flag']
  #allocation19 [shape = 's32[]', space=sflag, size = 0x4, offset = 0, fixed_abs, tag = 'sflag constant byte address 0x0 - dummy sync flag']
  #allocation20 [shape = 's32[]', space=sflag, size = 0x4, offset = 0, fixed_abs, tag = 'sflag constant byte address 0x0 - dummy sync flag']
  #allocation21 [shape = 's32[]', space=sflag, size = 0x4, offset = 0, fixed_abs, tag = 'sflag constant byte address 0x0 - dummy sync flag']
  #allocation22 [shape = 's32[]', space=sflag, size = 0x4, offset = 0, fixed_abs, tag = 'sflag constant byte address 0x0 - dummy sync flag']
  #allocation23 [shape = 's32[]', space=sflag, size = 0x4, offset = 0, fixed_abs, tag = 'sflag constant byte address 0x0 - dummy sync flag']
  #allocation24 [shape = 's32[]', space=sflag, size = 0x4, offset = 0, fixed_abs, tag = 'sflag constant byte address 0x0 - dummy sync flag']
  #allocation25 [shape = 's32[]', space=sflag, size = 0x4, offset = 0, fixed_abs, tag = 'sflag constant byte address 0x0 - dummy sync flag']
  #allocation26 [shape = 's32[]', space=sflag, size = 0x4, offset = 0, fixed_abs, tag = 'sflag constant byte address 0x0 - dummy sync flag']
  #allocation27 [shape = 's32[]', space=sflag, size = 0x4, offset = 0, fixed_abs, tag = 'sflag constant byte address 0x0 - dummy sync flag']
  #allocation28 [shape = 's32[]', space=sflag, size = 0x4, offset = 0, fixed_abs, tag = 'sflag constant byte address 0x0 - dummy sync flag']
  #allocation29 [shape = 's32[]', space=sflag, size = 0x4, offset = 0, fixed_abs, tag = 'sflag constant byte address 0x0 - dummy sync flag']
  #allocation30 [shape = 's32[]', space=sflag, size = 0x4, offset = 0, fixed_abs, tag = 'sflag constant byte address 0x0 - dummy sync flag']
  %s0 = inlined_call_operand.vmem [shape: s32[16], index: 0, kind: input, shape index: {}]
  %s1 = inlined_call_operand.vmem [shape: f32[8,768], index: 1, kind: input, shape index: {}]
  %s2 = inlined_call_operand.vmem [shape: f32[32,32], index: 2, kind: input, shape index: {}]
  %s3 = inlined_call_operand.vmem [shape: f32[32,128], index: 3, kind: input, shape index: {}]
  %s4 = inlined_call_operand.vmem [shape: bf16[768,128], index: 4, kind: input, shape index: {}]
  %s5 = inlined_call_operand.vmem [shape: f32[1,128], index: 5, kind: input, shape index: {}]
  %s6 = inlined_call_operand.vmem [shape: bf16[128,256], index: 6, kind: input, shape index: {}]
  %s7 = inlined_call_operand.vmem [shape: f32[1,256], index: 7, kind: input, shape index: {}]
  %s8 = inlined_call_operand.vmem [shape: bf16[256,1024], index: 8, kind: input, shape index: {}]
  %s9 = inlined_call_operand.vmem [shape: f32[1,1024], index: 9, kind: input, shape index: {}]
  %s10 = inlined_call_operand.vmem [shape: f32[512,128], index: 10, kind: input, shape index: {}]
  %s11 = inlined_call_operand.vmem [shape: f32[1,128], index: 11, kind: input, shape index: {}]
  %s12 = inlined_call_operand.vmem [shape: f32[1,128], index: 12, kind: input, shape index: {}]
  %s13 = inlined_call_operand.vmem [shape: bf16[128,384], index: 13, kind: input, shape index: {}]
  %s14 = inlined_call_operand.vmem [shape: f32[1,384], index: 14, kind: input, shape index: {}]
  %s15 = inlined_call_operand.vmem [shape: bf16[128,128], index: 15, kind: input, shape index: {}]
  %s16 = inlined_call_operand.vmem [shape: f32[1,128], index: 16, kind: input, shape index: {}]
  %s17 = inlined_call_operand.vmem [shape: f32[1,128], index: 17, kind: input, shape index: {}]
  %s18 = inlined_call_operand.vmem [shape: f32[1,128], index: 18, kind: input, shape index: {}]
  %s19 = inlined_call_operand.vmem [shape: bf16[128,512], index: 19, kind: input, shape index: {}]
  %s20 = inlined_call_operand.vmem [shape: f32[1,512], index: 20, kind: input, shape index: {}]
  %s21 = inlined_call_operand.vmem [shape: bf16[512,128], index: 21, kind: input, shape index: {}]
  %s22 = inlined_call_operand.vmem [shape: f32[1,128], index: 22, kind: input, shape index: {}]
  %s23 = inlined_call_operand.vmem [shape: f32[1,128], index: 23, kind: input, shape index: {}]
  %s24 = inlined_call_operand.vmem [shape: f32[1,128], index: 24, kind: input, shape index: {}]
  %s25 = inlined_call_operand.vmem [shape: bf16[128,512], index: 25, kind: input, shape index: {}]
  %s26 = inlined_call_operand.vmem [shape: f32[1,512], index: 26, kind: input, shape index: {}]
  %s27 = inlined_call_operand.hbm [shape: f32[16,512], index: 27, kind: output, shape index: {}]
  %s28 = sld [smem:[#allocation0]]
  $region694: #{prompt_model_forward.1} parent=0
    _
  %s30 = ssub.s32 1, %s28
  %s31 = scalar_select 0, %s30, %s28
  $region1: #{prompt_model_forward.1} parent=0
    #allocation8 [shape = 'u8[512]{0}', space=smem, size = 0x200, scoped, tag = 'input window, operand 0, single buffered']
    #allocation9 [shape = 's32[1]{0}', space=sflag, size = 0x4, scoped, tag = 'scoped memory for prompt_model_forward.1']
    #allocation10 [shape = 's32[1]{0}', space=sflag, size = 0x4, scoped, tag = 'scoped memory for prompt_model_forward.1']
    #allocation11 [shape = 'u8[32768]{0}', space=vmem, size = 0x8000, scoped, tag = 'output window, operand 0, single buffered']
    %32 = vsyncpa [#allocation10], 0
    %33 = vsyncpa [#allocation9], 0
    // Predicated region
    $region2: #{prompt_model_forward.1} parent=1 // pred_check
      _
    $region3: #{prompt_model_forward.1} parent=1 // pred_check_branch
      %35 = sbr.rel (0) target = $region5
    $region4: #{prompt_model_forward.1} parent=1 // pred_region
      %s37 = ssub.s32 16, 16
      %38 = vsyncadd [#allocation10], %s37
      %s40 = sshll.u32 %s0, 4
      %s41 = int_to_ptr.vmem [resolvable:$true] %s40
      %43 = dma.vmem_to_smem %s41, 16, [#allocation8], [#allocation10]
    $region5: #{prompt_model_forward.1} parent=1 // pred_fallthru
      _
    // Predicated region
    $region6: #{prompt_model_forward.1} parent=1 // pred_check
      _
    $region7: #{prompt_model_forward.1} parent=1 // pred_check_branch
      %45 = sbr.rel (0) target = $region9
    $region8: #{prompt_model_forward.1} parent=1 // pred_region
      _
    $region9: #{prompt_model_forward.1} parent=1 // pred_fallthru
      _
    // Predicated region
    $region10: #{prompt_model_forward.1} parent=1 // pred_check
      _
    $region11: #{prompt_model_forward.1} parent=1 // pred_check_branch
      %47 = sbr.rel (0) target = $region13
    $region12: #{prompt_model_forward.1} parent=1 // pred_region
      _
    $region13: #{prompt_model_forward.1} parent=1 // pred_fallthru
      _
    // Predicated region
    $region14: #{prompt_model_forward.1} parent=1 // pred_check
      _
    $region15: #{prompt_model_forward.1} parent=1 // pred_check_branch
      %49 = sbr.rel (0) target = $region17
    $region16: #{prompt_model_forward.1} parent=1 // pred_region
      _
    $region17: #{prompt_model_forward.1} parent=1 // pred_fallthru
      _
    // Predicated region
    $region18: #{prompt_model_forward.1} parent=1 // pred_check
      _
    $region19: #{prompt_model_forward.1} parent=1 // pred_check_branch
      %51 = sbr.rel (0) target = $region21
    $region20: #{prompt_model_forward.1} parent=1 // pred_region
      _
    $region21: #{prompt_model_forward.1} parent=1 // pred_fallthru
      _
    // Predicated region
    $region22: #{prompt_model_forward.1} parent=1 // pred_check
      _
    $region23: #{prompt_model_forward.1} parent=1 // pred_check_branch
      %53 = sbr.rel (0) target = $region25
    $region24: #{prompt_model_forward.1} parent=1 // pred_region
      _
    $region25: #{prompt_model_forward.1} parent=1 // pred_fallthru
      _
    // Predicated region
    $region26: #{prompt_model_forward.1} parent=1 // pred_check
      _
    $region27: #{prompt_model_forward.1} parent=1 // pred_check_branch
      %55 = sbr.rel (0) target = $region29
    $region28: #{prompt_model_forward.1} parent=1 // pred_region
      _
    $region29: #{prompt_model_forward.1} parent=1 // pred_fallthru
      _
    // Predicated region
    $region30: #{prompt_model_forward.1} parent=1 // pred_check
      _
    $region31: #{prompt_model_forward.1} parent=1 // pred_check_branch
      %57 = sbr.rel (0) target = $region33
    $region32: #{prompt_model_forward.1} parent=1 // pred_region
      _
    $region33: #{prompt_model_forward.1} parent=1 // pred_fallthru
      _
    // Predicated region
    $region34: #{prompt_model_forward.1} parent=1 // pred_check
      _
    $region35: #{prompt_model_forward.1} parent=1 // pred_check_branch
      %59 = sbr.rel (0) target = $region37
    $region36: #{prompt_model_forward.1} parent=1 // pred_region
      _
    $region37: #{prompt_model_forward.1} parent=1 // pred_fallthru
      _
    // Predicated region
    $region38: #{prompt_model_forward.1} parent=1 // pred_check
      _
    $region39: #{prompt_model_forward.1} parent=1 // pred_check_branch
      %61 = sbr.rel (0) target = $region41
    $region40: #{prompt_model_forward.1} parent=1 // pred_region
      _
    $region41: #{prompt_model_forward.1} parent=1 // pred_fallthru
      _
    // Predicated region
    $region42: #{prompt_model_forward.1} parent=1 // pred_check
      _
    $region43: #{prompt_model_forward.1} parent=1 // pred_check_branch
      %63 = sbr.rel (0) target = $region45
    $region44: #{prompt_model_forward.1} parent=1 // pred_region
      _
    $region45: #{prompt_model_forward.1} parent=1 // pred_fallthru
      _
    // Predicated region
    $region46: #{prompt_model_forward.1} parent=1 // pred_check
      _
    $region47: #{prompt_model_forward.1} parent=1 // pred_check_branch
      %65 = sbr.rel (0) target = $region49
    $region48: #{prompt_model_forward.1} parent=1 // pred_region
      _
    $region49: #{prompt_model_forward.1} parent=1 // pred_fallthru
      _
    // Predicated region
    $region50: #{prompt_model_forward.1} parent=1 // pred_check
      _
    $region51: #{prompt_model_forward.1} parent=1 // pred_check_branch
      %67 = sbr.rel (0) target = $region53
    $region52: #{prompt_model_forward.1} parent=1 // pred_region
      _
    $region53: #{prompt_model_forward.1} parent=1 // pred_fallthru
      _
    // Predicated region
    $region54: #{prompt_model_forward.1} parent=1 // pred_check
      _
    $region55: #{prompt_model_forward.1} parent=1 // pred_check_branch
      %69 = sbr.rel (0) target = $region57
    $region56: #{prompt_model_forward.1} parent=1 // pred_region
      _
    $region57: #{prompt_model_forward.1} parent=1 // pred_fallthru
      _
    // Predicated region
    $region58: #{prompt_model_forward.1} parent=1 // pred_check
      _
    $region59: #{prompt_model_forward.1} parent=1 // pred_check_branch
      %71 = sbr.rel (0) target = $region61
    $region60: #{prompt_model_forward.1} parent=1 // pred_region
      _
    $region61: #{prompt_model_forward.1} parent=1 // pred_fallthru
      _
    // Predicated region
    $region62: #{prompt_model_forward.1} parent=1 // pred_check
      _
    $region63: #{prompt_model_forward.1} parent=1 // pred_check_branch
      %73 = sbr.rel (0) target = $region65
    $region64: #{prompt_model_forward.1} parent=1 // pred_region
      _
    $region65: #{prompt_model_forward.1} parent=1 // pred_fallthru
      _
    // Predicated region
    $region66: #{prompt_model_forward.1} parent=1 // pred_check
      _
    $region67: #{prompt_model_forward.1} parent=1 // pred_check_branch
      %75 = sbr.rel (0) target = $region69
    $region68: #{prompt_model_forward.1} parent=1 // pred_region
      _
    $region69: #{prompt_model_forward.1} parent=1 // pred_fallthru
      _
    // Predicated region
    $region70: #{prompt_model_forward.1} parent=1 // pred_check
      _
    $region71: #{prompt_model_forward.1} parent=1 // pred_check_branch
      %77 = sbr.rel (0) target = $region73
    $region72: #{prompt_model_forward.1} parent=1 // pred_region
      _
    $region73: #{prompt_model_forward.1} parent=1 // pred_fallthru
      _
    // Predicated region
    $region74: #{prompt_model_forward.1} parent=1 // pred_check
      _
    $region75: #{prompt_model_forward.1} parent=1 // pred_check_branch
      %79 = sbr.rel (0) target = $region77
    $region76: #{prompt_model_forward.1} parent=1 // pred_region
      _
    $region77: #{prompt_model_forward.1} parent=1 // pred_fallthru
      _
    // Predicated region
    $region78: #{prompt_model_forward.1} parent=1 // pred_check
      _
    $region79: #{prompt_model_forward.1} parent=1 // pred_check_branch
      %81 = sbr.rel (0) target = $region81
    $region80: #{prompt_model_forward.1} parent=1 // pred_region
      _
    $region81: #{prompt_model_forward.1} parent=1 // pred_fallthru
      _
    // Predicated region
    $region82: #{prompt_model_forward.1} parent=1 // pred_check
      _
    $region83: #{prompt_model_forward.1} parent=1 // pred_check_branch
      %83 = sbr.rel (0) target = $region85
    $region84: #{prompt_model_forward.1} parent=1 // pred_region
      _
    $region85: #{prompt_model_forward.1} parent=1 // pred_fallthru
      _
    // Predicated region
    $region86: #{prompt_model_forward.1} parent=1 // pred_check
      _
    $region87: #{prompt_model_forward.1} parent=1 // pred_check_branch
      %85 = sbr.rel (0) target = $region89
    $region88: #{prompt_model_forward.1} parent=1 // pred_region
      _
    $region89: #{prompt_model_forward.1} parent=1 // pred_fallthru
      _
    // Predicated region
    $region90: #{prompt_model_forward.1} parent=1 // pred_check
      _
    $region91: #{prompt_model_forward.1} parent=1 // pred_check_branch
      %87 = sbr.rel (0) target = $region93
    $region92: #{prompt_model_forward.1} parent=1 // pred_region
      _
    $region93: #{prompt_model_forward.1} parent=1 // pred_fallthru
      _
    // Predicated region
    $region94: #{prompt_model_forward.1} parent=1 // pred_check
      _
    $region95: #{prompt_model_forward.1} parent=1 // pred_check_branch
      %89 = sbr.rel (0) target = $region97
    $region96: #{prompt_model_forward.1} parent=1 // pred_region
      %90 = dma.done [#allocation10], 16
    $region97: #{prompt_model_forward.1} parent=1 // pred_fallthru
      _
    %91 = sfence
    %s93 = sld [smem:[#allocation8]]
    %s94 = scalar_lea.vmem %s10, %s93
    %p96 = scmp.lt.u32.totalorder 1, 8
    %p97 = pneg %p96
    // Predicated region
    $region98: #{prompt_model_forward.1} parent=1 // pred_check
      _
    $region99: #{prompt_model_forward.1} parent=1 // pred_check_branch
      %99 = sbr.rel (%p96) target = $region101
    $region100: #{prompt_model_forward.1} parent=1 // pred_region
      %s114 = sand.u32 1, 7
      %p115 = scmp.eq.s32.totalorder %s114, 0
      %p116 = pneg %p115
      // Predicated region
      $region113: #{prompt_model_forward.1} parent=100 // pred_check
        _
      $region114: #{prompt_model_forward.1} parent=100 // pred_check_branch
        %118 = sbr.rel (%p115) target = $region116
      $region115: #{prompt_model_forward.1} parent=100 // pred_region
        %s119 = sand.u32 1, 7
        %s120 = ssub.s32 1, %s119
        %s121 = scalar_lea.vmem %s94, %s120
        %s122 = ssub.s32 1, %s119
        %s123 = scalar_lea.vmem [#allocation2], %s122
        %s124 = sshllo.u32 0, %s119
        loop: start=0, step=1, limit=1
        $region117: #{prompt_model_forward.1} parent=115 // loop_pre_header
          _
        $region118: #{prompt_model_forward.1} parent=115 // loop_header
          %s126 = sphi 0, %s130
          %p127 = scmp.ge.s32.totalorder %s126, 1
          %s131 = sphi %s121, %s121
          %s132 = sphi %s123, %s123
        $region119: #{prompt_model_forward.1} parent=115 // loop_header_branch
          %129 = sbr.rel (%p127) target = $region123
        $region120: #{prompt_model_forward.1} parent=115 // loop_body
          %v133 = vld [vmem:[%s131] sm:%s124]
          %134 = vst [vmem:[%s132] sm:%s124] %v133
        $region121: #{prompt_model_forward.1} parent=115 // loop_footer
          %s130 = sadd.s32 1, %s126
        $region122: #{prompt_model_forward.1} parent=115 // loop_footer_branch
          %125 = sbr.rel target = $region118
        $region123: #{prompt_model_forward.1} parent=115 // loop_exit
          _
      $region116: #{prompt_model_forward.1} parent=100 // pred_fallthru
        _
    $region101: #{prompt_model_forward.1} parent=1 // pred_fallthru
      _
    // Predicated region
    $region102: #{prompt_model_forward.1} parent=1 // pred_check
      %p100 = pneg %p96
    $region103: #{prompt_model_forward.1} parent=1 // pred_check_branch
      %102 = sbr.rel (%p100) target = $region105
    $region104: #{prompt_model_forward.1} parent=1 // pred_region
      %s103 = sshllo.u32 0, 1
      loop: start=0, step=1, limit=1
      $region106: #{prompt_model_forward.1} parent=104 // loop_pre_header
        _
      $region107: #{prompt_model_forward.1} parent=104 // loop_header
        %s105 = sphi 0, %s109
        %p106 = scmp.ge.s32.totalorder %s105, 1
        %s110 = sphi %s94, %s94
        %s111 = sphi [#allocation2], [#allocation2]
      $region108: #{prompt_model_forward.1} parent=104 // loop_header_branch
        %108 = sbr.rel (%p106) target = $region112
      $region109: #{prompt_model_forward.1} parent=104 // loop_body
        %v112 = vld [vmem:[%s110] sm:%s103]
        %113 = vst [vmem:[%s111] sm:%s103] %v112
      $region110: #{prompt_model_forward.1} parent=104 // loop_footer
        %s109 = sadd.s32 1, %s105
      $region111: #{prompt_model_forward.1} parent=104 // loop_footer_branch
        %104 = sbr.rel target = $region107
      $region112: #{prompt_model_forward.1} parent=104 // loop_exit
        _
    $region105: #{prompt_model_forward.1} parent=1 // pred_fallthru
      _
    // Predicated region
    $region124: #{prompt_model_forward.1} parent=1 // pred_check
      _
    $region125: #{prompt_model_forward.1} parent=1 // pred_check_branch
      %137 = sbr.rel (0) target = $region127
    $region126: #{prompt_model_forward.1} parent=1 // pred_region
      %138 = vsyncadd [#allocation6], 16
    $region127: #{prompt_model_forward.1} parent=1 // pred_fallthru
      _
    %s139 = sld [smem:[#allocation8 + $0x1]]
    %s140 = scalar_lea.vmem %s10, %s139
    %s141 = scalar_lea.vmem [#allocation2], 1
    %s142 = scalar_lea.sflag [#allocation6], 1
    %p144 = scmp.lt.u32.totalorder 1, 8
    %p145 = pneg %p144
    // Predicated region
    $region128: #{prompt_model_forward.1} parent=1 // pred_check
      _
    $region129: #{prompt_model_forward.1} parent=1 // pred_check_branch
      %147 = sbr.rel (%p144) target = $region131
    $region130: #{prompt_model_forward.1} parent=1 // pred_region
      %s162 = sand.u32 1, 7
      %p163 = scmp.eq.s32.totalorder %s162, 0
      %p164 = pneg %p163
      // Predicated region
      $region143: #{prompt_model_forward.1} parent=130 // pred_check
        _
      $region144: #{prompt_model_forward.1} parent=130 // pred_check_branch
        %166 = sbr.rel (%p163) target = $region146
      $region145: #{prompt_model_forward.1} parent=130 // pred_region
        %s167 = sand.u32 1, 7
        %s168 = ssub.s32 1, %s167
        %s169 = scalar_lea.vmem %s140, %s168
        %s170 = ssub.s32 1, %s167
        %s171 = scalar_lea.vmem %s141, %s170 [#allocation2]
        %s172 = sshllo.u32 0, %s167
        loop: start=0, step=1, limit=1
        $region147: #{prompt_model_forward.1} parent=145 // loop_pre_header
          _
        $region148: #{prompt_model_forward.1} parent=145 // loop_header
          %s174 = sphi 0, %s178
          %p175 = scmp.ge.s32.totalorder %s174, 1
          %s179 = sphi %s169, %s169
          %s180 = sphi %s171, %s171
        $region149: #{prompt_model_forward.1} parent=145 // loop_header_branch
          %177 = sbr.rel (%p175) target = $region153
        $region150: #{prompt_model_forward.1} parent=145 // loop_body
          %v181 = vld [vmem:[%s179] sm:%s172]
          %182 = vst [vmem:[%s180] sm:%s172] %v181
        $region151: #{prompt_model_forward.1} parent=145 // loop_footer
          %s178 = sadd.s32 1, %s174
        $region152: #{prompt_model_forward.1} parent=145 // loop_footer_branch
          %173 = sbr.rel target = $region148
        $region153: #{prompt_model_forward.1} parent=145 // loop_exit
          _
      $region146: #{prompt_model_forward.1} parent=130 // pred_fallthru
        _
    $region131: #{prompt_model_forward.1} parent=1 // pred_fallthru
      _
    // Predicated region
    $region132: #{prompt_model_forward.1} parent=1 // pred_check
      %p148 = pneg %p144
    $region133: #{prompt_model_forward.1} parent=1 // pred_check_branch
      %150 = sbr.rel (%p148) target = $region135
    $region134: #{prompt_model_forward.1} parent=1 // pred_region
      %s151 = sshllo.u32 0, 1
      loop: start=0, step=1, limit=1
      $region136: #{prompt_model_forward.1} parent=134 // loop_pre_header
        _
      $region137: #{prompt_model_forward.1} parent=134 // loop_header
        %s153 = sphi 0, %s157
        %p154 = scmp.ge.s32.totalorder %s153, 1
        %s158 = sphi %s140, %s140
        %s159 = sphi %s141, %s141
      $region138: #{prompt_model_forward.1} parent=134 // loop_header_branch
        %156 = sbr.rel (%p154) target = $region142
      $region139: #{prompt_model_forward.1} parent=134 // loop_body
        %v160 = vld [vmem:[%s158] sm:%s151]
        %161 = vst [vmem:[%s159] sm:%s151] %v160
      $region140: #{prompt_model_forward.1} parent=134 // loop_footer
        %s157 = sadd.s32 1, %s153
      $region141: #{prompt_model_forward.1} parent=134 // loop_footer_branch
        %152 = sbr.rel target = $region137
      $region142: #{prompt_model_forward.1} parent=134 // loop_exit
        _
    $region135: #{prompt_model_forward.1} parent=1 // pred_fallthru
      _
    // Predicated region
    $region154: #{prompt_model_forward.1} parent=1 // pred_check
      _
    $region155: #{prompt_model_forward.1} parent=1 // pred_check_branch
      %185 = sbr.rel (0) target = $region157
    $region156: #{prompt_model_forward.1} parent=1 // pred_region
      %186 = vsyncadd %s142, 16
    $region157: #{prompt_model_forward.1} parent=1 // pred_fallthru
      _
    %s187 = sld [smem:[#allocation8 + $0x2]]
    %s188 = scalar_lea.vmem %s10, %s187
    %s189 = scalar_lea.vmem [#allocation2], 2
    %s190 = scalar_lea.sflag [#allocation6], 2
    %p192 = scmp.lt.u32.totalorder 1, 8
    %p193 = pneg %p192
    // Predicated region
    $region158: #{prompt_model_forward.1} parent=1 // pred_check
      _
    $region159: #{prompt_model_forward.1} parent=1 // pred_check_branch
      %195 = sbr.rel (%p192) target = $region161
    $region160: #{prompt_model_forward.1} parent=1 // pred_region
      %s210 = sand.u32 1, 7
      %p211 = scmp.eq.s32.totalorder %s210, 0
      %p212 = pneg %p211
      // Predicated region
      $region173: #{prompt_model_forward.1} parent=160 // pred_check
        _
      $region174: #{prompt_model_forward.1} parent=160 // pred_check_branch
        %214 = sbr.rel (%p211) target = $region176
      $region175: #{prompt_model_forward.1} parent=160 // pred_region
        %s215 = sand.u32 1, 7
        %s216 = ssub.s32 1, %s215
        %s217 = scalar_lea.vmem %s188, %s216
        %s218 = ssub.s32 1, %s215
        %s219 = scalar_lea.vmem %s189, %s218 [#allocation2]
        %s220 = sshllo.u32 0, %s215
        loop: start=0, step=1, limit=1
        $region177: #{prompt_model_forward.1} parent=175 // loop_pre_header
          _
        $region178: #{prompt_model_forward.1} parent=175 // loop_header
          %s222 = sphi 0, %s226
          %p223 = scmp.ge.s32.totalorder %s222, 1
          %s227 = sphi %s217, %s217
          %s228 = sphi %s219, %s219
        $region179: #{prompt_model_forward.1} parent=175 // loop_header_branch
          %225 = sbr.rel (%p223) target = $region183
        $region180: #{prompt_model_forward.1} parent=175 // loop_body
          %v229 = vld [vmem:[%s227] sm:%s220]
          %230 = vst [vmem:[%s228] sm:%s220] %v229
        $region181: #{prompt_model_forward.1} parent=175 // loop_footer
          %s226 = sadd.s32 1, %s222
        $region182: #{prompt_model_forward.1} parent=175 // loop_footer_branch
          %221 = sbr.rel target = $region178
        $region183: #{prompt_model_forward.1} parent=175 // loop_exit
          _
      $region176: #{prompt_model_forward.1} parent=160 // pred_fallthru
        _
    $region161: #{prompt_model_forward.1} parent=1 // pred_fallthru
      _
    // Predicated region
    $region162: #{prompt_model_forward.1} parent=1 // pred_check
      %p196 = pneg %p192
    $region163: #{prompt_model_forward.1} parent=1 // pred_check_branch
      %198 = sbr.rel (%p196) target = $region165
    $region164: #{prompt_model_forward.1} parent=1 // pred_region
      %s199 = sshllo.u32 0, 1
      loop: start=0, step=1, limit=1
      $region166: #{prompt_model_forward.1} parent=164 // loop_pre_header
        _
      $region167: #{prompt_model_forward.1} parent=164 // loop_header
        %s201 = sphi 0, %s205
        %p202 = scmp.ge.s32.totalorder %s201, 1
        %s206 = sphi %s188, %s188
        %s207 = sphi %s189, %s189
      $region168: #{prompt_model_forward.1} parent=164 // loop_header_branch
        %204 = sbr.rel (%p202) target = $region172
      $region169: #{prompt_model_forward.1} parent=164 // loop_body
        %v208 = vld [vmem:[%s206] sm:%s199]
        %209 = vst [vmem:[%s207] sm:%s199] %v208
      $region170: #{prompt_model_forward.1} parent=164 // loop_footer
        %s205 = sadd.s32 1, %s201
      $region171: #{prompt_model_forward.1} parent=164 // loop_footer_branch
        %200 = sbr.rel target = $region167
      $region172: #{prompt_model_forward.1} parent=164 // loop_exit
        _
    $region165: #{prompt_model_forward.1} parent=1 // pred_fallthru
      _
    // Predicated region
    $region184: #{prompt_model_forward.1} parent=1 // pred_check
      _
    $region185: #{prompt_model_forward.1} parent=1 // pred_check_branch
      %233 = sbr.rel (0) target = $region187
    $region186: #{prompt_model_forward.1} parent=1 // pred_region
      %234 = vsyncadd %s190, 16
    $region187: #{prompt_model_forward.1} parent=1 // pred_fallthru
      _
    %s235 = sld [smem:[#allocation8 + $0x3]]
    %s236 = scalar_lea.vmem %s10, %s235
    %s237 = scalar_lea.vmem [#allocation2], 3
    %s238 = scalar_lea.sflag [#allocation6], 3
    %p240 = scmp.lt.u32.totalorder 1, 8
    %p241 = pneg %p240
    // Predicated region
    $region188: #{prompt_model_forward.1} parent=1 // pred_check
      _
    $region189: #{prompt_model_forward.1} parent=1 // pred_check_branch
      %243 = sbr.rel (%p240) target = $region191
    $region190: #{prompt_model_forward.1} parent=1 // pred_region
      %s258 = sand.u32 1, 7
      %p259 = scmp.eq.s32.totalorder %s258, 0
      %p260 = pneg %p259
      // Predicated region
      $region203: #{prompt_model_forward.1} parent=190 // pred_check
        _
      $region204: #{prompt_model_forward.1} parent=190 // pred_check_branch
        %262 = sbr.rel (%p259) target = $region206
      $region205: #{prompt_model_forward.1} parent=190 // pred_region
        %s263 = sand.u32 1, 7
        %s264 = ssub.s32 1, %s263
        %s265 = scalar_lea.vmem %s236, %s264
        %s266 = ssub.s32 1, %s263
        %s267 = scalar_lea.vmem %s237, %s266 [#allocation2]
        %s268 = sshllo.u32 0, %s263
        loop: start=0, step=1, limit=1
        $region207: #{prompt_model_forward.1} parent=205 // loop_pre_header
          _
        $region208: #{prompt_model_forward.1} parent=205 // loop_header
          %s270 = sphi 0, %s274
          %p271 = scmp.ge.s32.totalorder %s270, 1
          %s275 = sphi %s265, %s265
          %s276 = sphi %s267, %s267
        $region209: #{prompt_model_forward.1} parent=205 // loop_header_branch
          %273 = sbr.rel (%p271) target = $region213
        $region210: #{prompt_model_forward.1} parent=205 // loop_body
          %v277 = vld [vmem:[%s275] sm:%s268]
          %278 = vst [vmem:[%s276] sm:%s268] %v277
        $region211: #{prompt_model_forward.1} parent=205 // loop_footer
          %s274 = sadd.s32 1, %s270
        $region212: #{prompt_model_forward.1} parent=205 // loop_footer_branch
          %269 = sbr.rel target = $region208
        $region213: #{prompt_model_forward.1} parent=205 // loop_exit
          _
      $region206: #{prompt_model_forward.1} parent=190 // pred_fallthru
        _
    $region191: #{prompt_model_forward.1} parent=1 // pred_fallthru
      _
    // Predicated region
    $region192: #{prompt_model_forward.1} parent=1 // pred_check
      %p244 = pneg %p240
    $region193: #{prompt_model_forward.1} parent=1 // pred_check_branch
      %246 = sbr.rel (%p244) target = $region195
    $region194: #{prompt_model_forward.1} parent=1 // pred_region
      %s247 = sshllo.u32 0, 1
      loop: start=0, step=1, limit=1
      $region196: #{prompt_model_forward.1} parent=194 // loop_pre_header
        _
      $region197: #{prompt_model_forward.1} parent=194 // loop_header
        %s249 = sphi 0, %s253
        %p250 = scmp.ge.s32.totalorder %s249, 1
        %s254 = sphi %s236, %s236
        %s255 = sphi %s237, %s237
      $region198: #{prompt_model_forward.1} parent=194 // loop_header_branch
        %252 = sbr.rel (%p250) target = $region202
      $region199: #{prompt_model_forward.1} parent=194 // loop_body
        %v256 = vld [vmem:[%s254] sm:%s247]
        %257 = vst [vmem:[%s255] sm:%s247] %v256
      $region200: #{prompt_model_forward.1} parent=194 // loop_footer
        %s253 = sadd.s32 1, %s249
      $region201: #{prompt_model_forward.1} parent=194 // loop_footer_branch
        %248 = sbr.rel target = $region197
      $region202: #{prompt_model_forward.1} parent=194 // loop_exit
        _
    $region195: #{prompt_model_forward.1} parent=1 // pred_fallthru
      _
    // Predicated region
    $region214: #{prompt_model_forward.1} parent=1 // pred_check
      _
    $region215: #{prompt_model_forward.1} parent=1 // pred_check_branch
      %281 = sbr.rel (0) target = $region217
    $region216: #{prompt_model_forward.1} parent=1 // pred_region
      %282 = vsyncadd %s238, 16
    $region217: #{prompt_model_forward.1} parent=1 // pred_fallthru
      _
    %s283 = sld [smem:[#allocation8 + $0x4]]
    %s284 = scalar_lea.vmem %s10, %s283
    %s285 = scalar_lea.vmem [#allocation2], 4
    %s286 = scalar_lea.sflag [#allocation6], 4
    %p288 = scmp.lt.u32.totalorder 1, 8
    %p289 = pneg %p288
    // Predicated region
    $region218: #{prompt_model_forward.1} parent=1 // pred_check
      _
    $region219: #{prompt_model_forward.1} parent=1 // pred_check_branch
      %291 = sbr.rel (%p288) target = $region221
    $region220: #{prompt_model_forward.1} parent=1 // pred_region
      %s306 = sand.u32 1, 7
      %p307 = scmp.eq.s32.totalorder %s306, 0
      %p308 = pneg %p307
      // Predicated region
      $region233: #{prompt_model_forward.1} parent=220 // pred_check
        _
      $region234: #{prompt_model_forward.1} parent=220 // pred_check_branch
        %310 = sbr.rel (%p307) target = $region236
      $region235: #{prompt_model_forward.1} parent=220 // pred_region
        %s311 = sand.u32 1, 7
        %s312 = ssub.s32 1, %s311
        %s313 = scalar_lea.vmem %s284, %s312
        %s314 = ssub.s32 1, %s311
        %s315 = scalar_lea.vmem %s285, %s314 [#allocation2]
        %s316 = sshllo.u32 0, %s311
        loop: start=0, step=1, limit=1
        $region237: #{prompt_model_forward.1} parent=235 // loop_pre_header
          _
        $region238: #{prompt_model_forward.1} parent=235 // loop_header
          %s318 = sphi 0, %s322
          %p319 = scmp.ge.s32.totalorder %s318, 1
          %s323 = sphi %s313, %s313
          %s324 = sphi %s315, %s315
        $region239: #{prompt_model_forward.1} parent=235 // loop_header_branch
          %321 = sbr.rel (%p319) target = $region243
        $region240: #{prompt_model_forward.1} parent=235 // loop_body
          %v325 = vld [vmem:[%s323] sm:%s316]
          %326 = vst [vmem:[%s324] sm:%s316] %v325
        $region241: #{prompt_model_forward.1} parent=235 // loop_footer
          %s322 = sadd.s32 1, %s318
        $region242: #{prompt_model_forward.1} parent=235 // loop_footer_branch
          %317 = sbr.rel target = $region238
        $region243: #{prompt_model_forward.1} parent=235 // loop_exit
          _
      $region236: #{prompt_model_forward.1} parent=220 // pred_fallthru
        _
    $region221: #{prompt_model_forward.1} parent=1 // pred_fallthru
      _
    // Predicated region
    $region222: #{prompt_model_forward.1} parent=1 // pred_check
      %p292 = pneg %p288
    $region223: #{prompt_model_forward.1} parent=1 // pred_check_branch
      %294 = sbr.rel (%p292) target = $region225
    $region224: #{prompt_model_forward.1} parent=1 // pred_region
      %s295 = sshllo.u32 0, 1
      loop: start=0, step=1, limit=1
      $region226: #{prompt_model_forward.1} parent=224 // loop_pre_header
        _
      $region227: #{prompt_model_forward.1} parent=224 // loop_header
        %s297 = sphi 0, %s301
        %p298 = scmp.ge.s32.totalorder %s297, 1
        %s302 = sphi %s284, %s284
        %s303 = sphi %s285, %s285
      $region228: #{prompt_model_forward.1} parent=224 // loop_header_branch
        %300 = sbr.rel (%p298) target = $region232
      $region229: #{prompt_model_forward.1} parent=224 // loop_body
        %v304 = vld [vmem:[%s302] sm:%s295]
        %305 = vst [vmem:[%s303] sm:%s295] %v304
      $region230: #{prompt_model_forward.1} parent=224 // loop_footer
        %s301 = sadd.s32 1, %s297
      $region231: #{prompt_model_forward.1} parent=224 // loop_footer_branch
        %296 = sbr.rel target = $region227
      $region232: #{prompt_model_forward.1} parent=224 // loop_exit
        _
    $region225: #{prompt_model_forward.1} parent=1 // pred_fallthru
      _
    // Predicated region
    $region244: #{prompt_model_forward.1} parent=1 // pred_check
      _
    $region245: #{prompt_model_forward.1} parent=1 // pred_check_branch
      %329 = sbr.rel (0) target = $region247
    $region246: #{prompt_model_forward.1} parent=1 // pred_region
      %330 = vsyncadd %s286, 16
    $region247: #{prompt_model_forward.1} parent=1 // pred_fallthru
      _
    %s331 = sld [smem:[#allocation8 + $0x5]]
    %s332 = scalar_lea.vmem %s10, %s331
    %s333 = scalar_lea.vmem [#allocation2], 5
    %s334 = scalar_lea.sflag [#allocation6], 5
    %p336 = scmp.lt.u32.totalorder 1, 8
    %p337 = pneg %p336
    // Predicated region
    $region248: #{prompt_model_forward.1} parent=1 // pred_check
      _
    $region249: #{prompt_model_forward.1} parent=1 // pred_check_branch
      %339 = sbr.rel (%p336) target = $region251
    $region250: #{prompt_model_forward.1} parent=1 // pred_region
      %s354 = sand.u32 1, 7
      %p355 = scmp.eq.s32.totalorder %s354, 0
      %p356 = pneg %p355
      // Predicated region
      $region263: #{prompt_model_forward.1} parent=250 // pred_check
        _
      $region264: #{prompt_model_forward.1} parent=250 // pred_check_branch
        %358 = sbr.rel (%p355) target = $region266
      $region265: #{prompt_model_forward.1} parent=250 // pred_region
        %s359 = sand.u32 1, 7
        %s360 = ssub.s32 1, %s359
        %s361 = scalar_lea.vmem %s332, %s360
        %s362 = ssub.s32 1, %s359
        %s363 = scalar_lea.vmem %s333, %s362 [#allocation2]
        %s364 = sshllo.u32 0, %s359
        loop: start=0, step=1, limit=1
        $region267: #{prompt_model_forward.1} parent=265 // loop_pre_header
          _
        $region268: #{prompt_model_forward.1} parent=265 // loop_header
          %s366 = sphi 0, %s370
          %p367 = scmp.ge.s32.totalorder %s366, 1
          %s371 = sphi %s361, %s361
          %s372 = sphi %s363, %s363
        $region269: #{prompt_model_forward.1} parent=265 // loop_header_branch
          %369 = sbr.rel (%p367) target = $region273
        $region270: #{prompt_model_forward.1} parent=265 // loop_body
          %v373 = vld [vmem:[%s371] sm:%s364]
          %374 = vst [vmem:[%s372] sm:%s364] %v373
        $region271: #{prompt_model_forward.1} parent=265 // loop_footer
          %s370 = sadd.s32 1, %s366
        $region272: #{prompt_model_forward.1} parent=265 // loop_footer_branch
          %365 = sbr.rel target = $region268
        $region273: #{prompt_model_forward.1} parent=265 // loop_exit
          _
      $region266: #{prompt_model_forward.1} parent=250 // pred_fallthru
        _
    $region251: #{prompt_model_forward.1} parent=1 // pred_fallthru
      _
    // Predicated region
    $region252: #{prompt_model_forward.1} parent=1 // pred_check
      %p340 = pneg %p336
    $region253: #{prompt_model_forward.1} parent=1 // pred_check_branch
      %342 = sbr.rel (%p340) target = $region255
    $region254: #{prompt_model_forward.1} parent=1 // pred_region
      %s343 = sshllo.u32 0, 1
      loop: start=0, step=1, limit=1
      $region256: #{prompt_model_forward.1} parent=254 // loop_pre_header
        _
      $region257: #{prompt_model_forward.1} parent=254 // loop_header
        %s345 = sphi 0, %s349
        %p346 = scmp.ge.s32.totalorder %s345, 1
        %s350 = sphi %s332, %s332
        %s351 = sphi %s333, %s333
      $region258: #{prompt_model_forward.1} parent=254 // loop_header_branch
        %348 = sbr.rel (%p346) target = $region262
      $region259: #{prompt_model_forward.1} parent=254 // loop_body
        %v352 = vld [vmem:[%s350] sm:%s343]
        %353 = vst [vmem:[%s351] sm:%s343] %v352
      $region260: #{prompt_model_forward.1} parent=254 // loop_footer
        %s349 = sadd.s32 1, %s345
      $region261: #{prompt_model_forward.1} parent=254 // loop_footer_branch
        %344 = sbr.rel target = $region257
      $region262: #{prompt_model_forward.1} parent=254 // loop_exit
        _
    $region255: #{prompt_model_forward.1} parent=1 // pred_fallthru
      _
    // Predicated region
    $region274: #{prompt_model_forward.1} parent=1 // pred_check
      _
    $region275: #{prompt_model_forward.1} parent=1 // pred_check_branch
      %377 = sbr.rel (0) target = $region277
    $region276: #{prompt_model_forward.1} parent=1 // pred_region
      %378 = vsyncadd %s334, 16
    $region277: #{prompt_model_forward.1} parent=1 // pred_fallthru
      _
    %s379 = sld [smem:[#allocation8 + $0x6]]
    %s380 = scalar_lea.vmem %s10, %s379
    %s381 = scalar_lea.vmem [#allocation2], 6
    %s382 = scalar_lea.sflag [#allocation6], 6
    %p384 = scmp.lt.u32.totalorder 1, 8
    %p385 = pneg %p384
    // Predicated region
    $region278: #{prompt_model_forward.1} parent=1 // pred_check
      _
    $region279: #{prompt_model_forward.1} parent=1 // pred_check_branch
      %387 = sbr.rel (%p384) target = $region281
    $region280: #{prompt_model_forward.1} parent=1 // pred_region
      %s402 = sand.u32 1, 7
      %p403 = scmp.eq.s32.totalorder %s402, 0
      %p404 = pneg %p403
      // Predicated region
      $region293: #{prompt_model_forward.1} parent=280 // pred_check
        _
      $region294: #{prompt_model_forward.1} parent=280 // pred_check_branch
        %406 = sbr.rel (%p403) target = $region296
      $region295: #{prompt_model_forward.1} parent=280 // pred_region
        %s407 = sand.u32 1, 7
        %s408 = ssub.s32 1, %s407
        %s409 = scalar_lea.vmem %s380, %s408
        %s410 = ssub.s32 1, %s407
        %s411 = scalar_lea.vmem %s381, %s410 [#allocation2]
        %s412 = sshllo.u32 0, %s407
        loop: start=0, step=1, limit=1
        $region297: #{prompt_model_forward.1} parent=295 // loop_pre_header
          _
        $region298: #{prompt_model_forward.1} parent=295 // loop_header
          %s414 = sphi 0, %s418
          %p415 = scmp.ge.s32.totalorder %s414, 1
          %s419 = sphi %s409, %s409
          %s420 = sphi %s411, %s411
        $region299: #{prompt_model_forward.1} parent=295 // loop_header_branch
          %417 = sbr.rel (%p415) target = $region303
        $region300: #{prompt_model_forward.1} parent=295 // loop_body
          %v421 = vld [vmem:[%s419] sm:%s412]
          %422 = vst [vmem:[%s420] sm:%s412] %v421
        $region301: #{prompt_model_forward.1} parent=295 // loop_footer
          %s418 = sadd.s32 1, %s414
        $region302: #{prompt_model_forward.1} parent=295 // loop_footer_branch
          %413 = sbr.rel target = $region298
        $region303: #{prompt_model_forward.1} parent=295 // loop_exit
          _
      $region296: #{prompt_model_forward.1} parent=280 // pred_fallthru
        _
    $region281: #{prompt_model_forward.1} parent=1 // pred_fallthru
      _
    // Predicated region
    $region282: #{prompt_model_forward.1} parent=1 // pred_check
      %p388 = pneg %p384
    $region283: #{prompt_model_forward.1} parent=1 // pred_check_branch
      %390 = sbr.rel (%p388) target = $region285
    $region284: #{prompt_model_forward.1} parent=1 // pred_region
      %s391 = sshllo.u32 0, 1
      loop: start=0, step=1, limit=1
      $region286: #{prompt_model_forward.1} parent=284 // loop_pre_header
        _
      $region287: #{prompt_model_forward.1} parent=284 // loop_header
        %s393 = sphi 0, %s397
        %p394 = scmp.ge.s32.totalorder %s393, 1
        %s398 = sphi %s380, %s380
        %s399 = sphi %s381, %s381
      $region288: #{prompt_model_forward.1} parent=284 // loop_header_branch
        %396 = sbr.rel (%p394) target = $region292
      $region289: #{prompt_model_forward.1} parent=284 // loop_body
        %v400 = vld [vmem:[%s398] sm:%s391]
        %401 = vst [vmem:[%s399] sm:%s391] %v400
      $region290: #{prompt_model_forward.1} parent=284 // loop_footer
        %s397 = sadd.s32 1, %s393
      $region291: #{prompt_model_forward.1} parent=284 // loop_footer_branch
        %392 = sbr.rel target = $region287
      $region292: #{prompt_model_forward.1} parent=284 // loop_exit
        _
    $region285: #{prompt_model_forward.1} parent=1 // pred_fallthru
      _
    // Predicated region
    $region304: #{prompt_model_forward.1} parent=1 // pred_check
      _
    $region305: #{prompt_model_forward.1} parent=1 // pred_check_branch
      %425 = sbr.rel (0) target = $region307
    $region306: #{prompt_model_forward.1} parent=1 // pred_region
      %426 = vsyncadd %s382, 16
    $region307: #{prompt_model_forward.1} parent=1 // pred_fallthru
      _
    %s427 = sld [smem:[#allocation8 + $0x7]]
    %s428 = scalar_lea.vmem %s10, %s427
    %s429 = scalar_lea.vmem [#allocation2], 7
    %s430 = scalar_lea.sflag [#allocation6], 7
    %p432 = scmp.lt.u32.totalorder 1, 8
    %p433 = pneg %p432
    // Predicated region
    $region308: #{prompt_model_forward.1} parent=1 // pred_check
      _
    $region309: #{prompt_model_forward.1} parent=1 // pred_check_branch
      %435 = sbr.rel (%p432) target = $region311
    $region310: #{prompt_model_forward.1} parent=1 // pred_region
      %s450 = sand.u32 1, 7
      %p451 = scmp.eq.s32.totalorder %s450, 0
      %p452 = pneg %p451
      // Predicated region
      $region323: #{prompt_model_forward.1} parent=310 // pred_check
        _
      $region324: #{prompt_model_forward.1} parent=310 // pred_check_branch
        %454 = sbr.rel (%p451) target = $region326
      $region325: #{prompt_model_forward.1} parent=310 // pred_region
        %s455 = sand.u32 1, 7
        %s456 = ssub.s32 1, %s455
        %s457 = scalar_lea.vmem %s428, %s456
        %s458 = ssub.s32 1, %s455
        %s459 = scalar_lea.vmem %s429, %s458 [#allocation2]
        %s460 = sshllo.u32 0, %s455
        loop: start=0, step=1, limit=1
        $region327: #{prompt_model_forward.1} parent=325 // loop_pre_header
          _
        $region328: #{prompt_model_forward.1} parent=325 // loop_header
          %s462 = sphi 0, %s466
          %p463 = scmp.ge.s32.totalorder %s462, 1
          %s467 = sphi %s457, %s457
          %s468 = sphi %s459, %s459
        $region329: #{prompt_model_forward.1} parent=325 // loop_header_branch
          %465 = sbr.rel (%p463) target = $region333
        $region330: #{prompt_model_forward.1} parent=325 // loop_body
          %v469 = vld [vmem:[%s467] sm:%s460]
          %470 = vst [vmem:[%s468] sm:%s460] %v469
        $region331: #{prompt_model_forward.1} parent=325 // loop_footer
          %s466 = sadd.s32 1, %s462
        $region332: #{prompt_model_forward.1} parent=325 // loop_footer_branch
          %461 = sbr.rel target = $region328
        $region333: #{prompt_model_forward.1} parent=325 // loop_exit
          _
      $region326: #{prompt_model_forward.1} parent=310 // pred_fallthru
        _
    $region311: #{prompt_model_forward.1} parent=1 // pred_fallthru
      _
    // Predicated region
    $region312: #{prompt_model_forward.1} parent=1 // pred_check
      %p436 = pneg %p432
    $region313: #{prompt_model_forward.1} parent=1 // pred_check_branch
      %438 = sbr.rel (%p436) target = $region315
    $region314: #{prompt_model_forward.1} parent=1 // pred_region
      %s439 = sshllo.u32 0, 1
      loop: start=0, step=1, limit=1
      $region316: #{prompt_model_forward.1} parent=314 // loop_pre_header
        _
      $region317: #{prompt_model_forward.1} parent=314 // loop_header
        %s441 = sphi 0, %s445
        %p442 = scmp.ge.s32.totalorder %s441, 1
        %s446 = sphi %s428, %s428
        %s447 = sphi %s429, %s429
      $region318: #{prompt_model_forward.1} parent=314 // loop_header_branch
        %444 = sbr.rel (%p442) target = $region322
      $region319: #{prompt_model_forward.1} parent=314 // loop_body
        %v448 = vld [vmem:[%s446] sm:%s439]
        %449 = vst [vmem:[%s447] sm:%s439] %v448
      $region320: #{prompt_model_forward.1} parent=314 // loop_footer
        %s445 = sadd.s32 1, %s441
      $region321: #{prompt_model_forward.1} parent=314 // loop_footer_branch
        %440 = sbr.rel target = $region317
      $region322: #{prompt_model_forward.1} parent=314 // loop_exit
        _
    $region315: #{prompt_model_forward.1} parent=1 // pred_fallthru
      _
    // Predicated region
    $region334: #{prompt_model_forward.1} parent=1 // pred_check
      _
    $region335: #{prompt_model_forward.1} parent=1 // pred_check_branch
      %473 = sbr.rel (0) target = $region337
    $region336: #{prompt_model_forward.1} parent=1 // pred_region
      %474 = vsyncadd %s430, 16
    $region337: #{prompt_model_forward.1} parent=1 // pred_fallthru
      _
    %s475 = sld [smem:[#allocation8 + $0x8]]
    %s476 = scalar_lea.vmem %s10, %s475
    %s477 = scalar_lea.vmem [#allocation2], 8
    %s478 = scalar_lea.sflag [#allocation6], 8
    %p480 = scmp.lt.u32.totalorder 1, 8
    %p481 = pneg %p480
    // Predicated region
    $region338: #{prompt_model_forward.1} parent=1 // pred_check
      _
    $region339: #{prompt_model_forward.1} parent=1 // pred_check_branch
      %483 = sbr.rel (%p480) target = $region341
    $region340: #{prompt_model_forward.1} parent=1 // pred_region
      %s498 = sand.u32 1, 7
      %p499 = scmp.eq.s32.totalorder %s498, 0
      %p500 = pneg %p499
      // Predicated region
      $region353: #{prompt_model_forward.1} parent=340 // pred_check
        _
      $region354: #{prompt_model_forward.1} parent=340 // pred_check_branch
        %502 = sbr.rel (%p499) target = $region356
      $region355: #{prompt_model_forward.1} parent=340 // pred_region
        %s503 = sand.u32 1, 7
        %s504 = ssub.s32 1, %s503
        %s505 = scalar_lea.vmem %s476, %s504
        %s506 = ssub.s32 1, %s503
        %s507 = scalar_lea.vmem %s477, %s506 [#allocation2]
        %s508 = sshllo.u32 0, %s503
        loop: start=0, step=1, limit=1
        $region357: #{prompt_model_forward.1} parent=355 // loop_pre_header
          _
        $region358: #{prompt_model_forward.1} parent=355 // loop_header
          %s510 = sphi 0, %s514
          %p511 = scmp.ge.s32.totalorder %s510, 1
          %s515 = sphi %s505, %s505
          %s516 = sphi %s507, %s507
        $region359: #{prompt_model_forward.1} parent=355 // loop_header_branch
          %513 = sbr.rel (%p511) target = $region363
        $region360: #{prompt_model_forward.1} parent=355 // loop_body
          %v517 = vld [vmem:[%s515] sm:%s508]
          %518 = vst [vmem:[%s516] sm:%s508] %v517
        $region361: #{prompt_model_forward.1} parent=355 // loop_footer
          %s514 = sadd.s32 1, %s510
        $region362: #{prompt_model_forward.1} parent=355 // loop_footer_branch
          %509 = sbr.rel target = $region358
        $region363: #{prompt_model_forward.1} parent=355 // loop_exit
          _
      $region356: #{prompt_model_forward.1} parent=340 // pred_fallthru
        _
    $region341: #{prompt_model_forward.1} parent=1 // pred_fallthru
      _
    // Predicated region
    $region342: #{prompt_model_forward.1} parent=1 // pred_check
      %p484 = pneg %p480
    $region343: #{prompt_model_forward.1} parent=1 // pred_check_branch
      %486 = sbr.rel (%p484) target = $region345
    $region344: #{prompt_model_forward.1} parent=1 // pred_region
      %s487 = sshllo.u32 0, 1
      loop: start=0, step=1, limit=1
      $region346: #{prompt_model_forward.1} parent=344 // loop_pre_header
        _
      $region347: #{prompt_model_forward.1} parent=344 // loop_header
        %s489 = sphi 0, %s493
        %p490 = scmp.ge.s32.totalorder %s489, 1
        %s494 = sphi %s476, %s476
        %s495 = sphi %s477, %s477
      $region348: #{prompt_model_forward.1} parent=344 // loop_header_branch
        %492 = sbr.rel (%p490) target = $region352
      $region349: #{prompt_model_forward.1} parent=344 // loop_body
        %v496 = vld [vmem:[%s494] sm:%s487]
        %497 = vst [vmem:[%s495] sm:%s487] %v496
      $region350: #{prompt_model_forward.1} parent=344 // loop_footer
        %s493 = sadd.s32 1, %s489
      $region351: #{prompt_model_forward.1} parent=344 // loop_footer_branch
        %488 = sbr.rel target = $region347
      $region352: #{prompt_model_forward.1} parent=344 // loop_exit
        _
    $region345: #{prompt_model_forward.1} parent=1 // pred_fallthru
      _
    // Predicated region
    $region364: #{prompt_model_forward.1} parent=1 // pred_check
      _
    $region365: #{prompt_model_forward.1} parent=1 // pred_check_branch
      %521 = sbr.rel (0) target = $region367
    $region366: #{prompt_model_forward.1} parent=1 // pred_region
      %522 = vsyncadd %s478, 16
    $region367: #{prompt_model_forward.1} parent=1 // pred_fallthru
      _
    %s523 = sld [smem:[#allocation8 + $0x9]]
    %s524 = scalar_lea.vmem %s10, %s523
    %s525 = scalar_lea.vmem [#allocation2], 9
    %s526 = scalar_lea.sflag [#allocation6], 9
    %p528 = scmp.lt.u32.totalorder 1, 8
    %p529 = pneg %p528
    // Predicated region
    $region368: #{prompt_model_forward.1} parent=1 // pred_check
      _
    $region369: #{prompt_model_forward.1} parent=1 // pred_check_branch
      %531 = sbr.rel (%p528) target = $region371
    $region370: #{prompt_model_forward.1} parent=1 // pred_region
      %s546 = sand.u32 1, 7
      %p547 = scmp.eq.s32.totalorder %s546, 0
      %p548 = pneg %p547
      // Predicated region
      $region383: #{prompt_model_forward.1} parent=370 // pred_check
        _
      $region384: #{prompt_model_forward.1} parent=370 // pred_check_branch
        %550 = sbr.rel (%p547) target = $region386
      $region385: #{prompt_model_forward.1} parent=370 // pred_region
        %s551 = sand.u32 1, 7
        %s552 = ssub.s32 1, %s551
        %s553 = scalar_lea.vmem %s524, %s552
        %s554 = ssub.s32 1, %s551
        %s555 = scalar_lea.vmem %s525, %s554 [#allocation2]
        %s556 = sshllo.u32 0, %s551
        loop: start=0, step=1, limit=1
        $region387: #{prompt_model_forward.1} parent=385 // loop_pre_header
          _
        $region388: #{prompt_model_forward.1} parent=385 // loop_header
          %s558 = sphi 0, %s562
          %p559 = scmp.ge.s32.totalorder %s558, 1
          %s563 = sphi %s553, %s553
          %s564 = sphi %s555, %s555
        $region389: #{prompt_model_forward.1} parent=385 // loop_header_branch
          %561 = sbr.rel (%p559) target = $region393
        $region390: #{prompt_model_forward.1} parent=385 // loop_body
          %v565 = vld [vmem:[%s563] sm:%s556]
          %566 = vst [vmem:[%s564] sm:%s556] %v565
        $region391: #{prompt_model_forward.1} parent=385 // loop_footer
          %s562 = sadd.s32 1, %s558
        $region392: #{prompt_model_forward.1} parent=385 // loop_footer_branch
          %557 = sbr.rel target = $region388
        $region393: #{prompt_model_forward.1} parent=385 // loop_exit
          _
      $region386: #{prompt_model_forward.1} parent=370 // pred_fallthru
        _
    $region371: #{prompt_model_forward.1} parent=1 // pred_fallthru
      _
    // Predicated region
    $region372: #{prompt_model_forward.1} parent=1 // pred_check
      %p532 = pneg %p528
    $region373: #{prompt_model_forward.1} parent=1 // pred_check_branch
      %534 = sbr.rel (%p532) target = $region375
    $region374: #{prompt_model_forward.1} parent=1 // pred_region
      %s535 = sshllo.u32 0, 1
      loop: start=0, step=1, limit=1
      $region376: #{prompt_model_forward.1} parent=374 // loop_pre_header
        _
      $region377: #{prompt_model_forward.1} parent=374 // loop_header
        %s537 = sphi 0, %s541
        %p538 = scmp.ge.s32.totalorder %s537, 1
        %s542 = sphi %s524, %s524
        %s543 = sphi %s525, %s525
      $region378: #{prompt_model_forward.1} parent=374 // loop_header_branch
        %540 = sbr.rel (%p538) target = $region382
      $region379: #{prompt_model_forward.1} parent=374 // loop_body
        %v544 = vld [vmem:[%s542] sm:%s535]
        %545 = vst [vmem:[%s543] sm:%s535] %v544
      $region380: #{prompt_model_forward.1} parent=374 // loop_footer
        %s541 = sadd.s32 1, %s537
      $region381: #{prompt_model_forward.1} parent=374 // loop_footer_branch
        %536 = sbr.rel target = $region377
      $region382: #{prompt_model_forward.1} parent=374 // loop_exit
        _
    $region375: #{prompt_model_forward.1} parent=1 // pred_fallthru
      _
    // Predicated region
    $region394: #{prompt_model_forward.1} parent=1 // pred_check
      _
    $region395: #{prompt_model_forward.1} parent=1 // pred_check_branch
      %569 = sbr.rel (0) target = $region397
    $region396: #{prompt_model_forward.1} parent=1 // pred_region
      %570 = vsyncadd %s526, 16
    $region397: #{prompt_model_forward.1} parent=1 // pred_fallthru
      _
    %s571 = sld [smem:[#allocation8 + $0xa]]
    %s572 = scalar_lea.vmem %s10, %s571
    %s573 = scalar_lea.vmem [#allocation2], 10
    %s574 = scalar_lea.sflag [#allocation6], 10
    %p576 = scmp.lt.u32.totalorder 1, 8
    %p577 = pneg %p576
    // Predicated region
    $region398: #{prompt_model_forward.1} parent=1 // pred_check
      _
    $region399: #{prompt_model_forward.1} parent=1 // pred_check_branch
      %579 = sbr.rel (%p576) target = $region401
    $region400: #{prompt_model_forward.1} parent=1 // pred_region
      %s594 = sand.u32 1, 7
      %p595 = scmp.eq.s32.totalorder %s594, 0
      %p596 = pneg %p595
      // Predicated region
      $region413: #{prompt_model_forward.1} parent=400 // pred_check
        _
      $region414: #{prompt_model_forward.1} parent=400 // pred_check_branch
        %598 = sbr.rel (%p595) target = $region416
      $region415: #{prompt_model_forward.1} parent=400 // pred_region
        %s599 = sand.u32 1, 7
        %s600 = ssub.s32 1, %s599
        %s601 = scalar_lea.vmem %s572, %s600
        %s602 = ssub.s32 1, %s599
        %s603 = scalar_lea.vmem %s573, %s602 [#allocation2]
        %s604 = sshllo.u32 0, %s599
        loop: start=0, step=1, limit=1
        $region417: #{prompt_model_forward.1} parent=415 // loop_pre_header
          _
        $region418: #{prompt_model_forward.1} parent=415 // loop_header
          %s606 = sphi 0, %s610
          %p607 = scmp.ge.s32.totalorder %s606, 1
          %s611 = sphi %s601, %s601
          %s612 = sphi %s603, %s603
        $region419: #{prompt_model_forward.1} parent=415 // loop_header_branch
          %609 = sbr.rel (%p607) target = $region423
        $region420: #{prompt_model_forward.1} parent=415 // loop_body
          %v613 = vld [vmem:[%s611] sm:%s604]
          %614 = vst [vmem:[%s612] sm:%s604] %v613
        $region421: #{prompt_model_forward.1} parent=415 // loop_footer
          %s610 = sadd.s32 1, %s606
        $region422: #{prompt_model_forward.1} parent=415 // loop_footer_branch
          %605 = sbr.rel target = $region418
        $region423: #{prompt_model_forward.1} parent=415 // loop_exit
          _
      $region416: #{prompt_model_forward.1} parent=400 // pred_fallthru
        _
    $region401: #{prompt_model_forward.1} parent=1 // pred_fallthru
      _
    // Predicated region
    $region402: #{prompt_model_forward.1} parent=1 // pred_check
      %p580 = pneg %p576
    $region403: #{prompt_model_forward.1} parent=1 // pred_check_branch
      %582 = sbr.rel (%p580) target = $region405
    $region404: #{prompt_model_forward.1} parent=1 // pred_region
      %s583 = sshllo.u32 0, 1
      loop: start=0, step=1, limit=1
      $region406: #{prompt_model_forward.1} parent=404 // loop_pre_header
        _
      $region407: #{prompt_model_forward.1} parent=404 // loop_header
        %s585 = sphi 0, %s589
        %p586 = scmp.ge.s32.totalorder %s585, 1
        %s590 = sphi %s572, %s572
        %s591 = sphi %s573, %s573
      $region408: #{prompt_model_forward.1} parent=404 // loop_header_branch
        %588 = sbr.rel (%p586) target = $region412
      $region409: #{prompt_model_forward.1} parent=404 // loop_body
        %v592 = vld [vmem:[%s590] sm:%s583]
        %593 = vst [vmem:[%s591] sm:%s583] %v592
      $region410: #{prompt_model_forward.1} parent=404 // loop_footer
        %s589 = sadd.s32 1, %s585
      $region411: #{prompt_model_forward.1} parent=404 // loop_footer_branch
        %584 = sbr.rel target = $region407
      $region412: #{prompt_model_forward.1} parent=404 // loop_exit
        _
    $region405: #{prompt_model_forward.1} parent=1 // pred_fallthru
      _
    // Predicated region
    $region424: #{prompt_model_forward.1} parent=1 // pred_check
      _
    $region425: #{prompt_model_forward.1} parent=1 // pred_check_branch
      %617 = sbr.rel (0) target = $region427
    $region426: #{prompt_model_forward.1} parent=1 // pred_region
      %618 = vsyncadd %s574, 16
    $region427: #{prompt_model_forward.1} parent=1 // pred_fallthru
      _
    %s619 = sld [smem:[#allocation8 + $0xb]]
    %s620 = scalar_lea.vmem %s10, %s619
    %s621 = scalar_lea.vmem [#allocation2], 11
    %s622 = scalar_lea.sflag [#allocation6], 11
    %p624 = scmp.lt.u32.totalorder 1, 8
    %p625 = pneg %p624
    // Predicated region
    $region428: #{prompt_model_forward.1} parent=1 // pred_check
      _
    $region429: #{prompt_model_forward.1} parent=1 // pred_check_branch
      %627 = sbr.rel (%p624) target = $region431
    $region430: #{prompt_model_forward.1} parent=1 // pred_region
      %s642 = sand.u32 1, 7
      %p643 = scmp.eq.s32.totalorder %s642, 0
      %p644 = pneg %p643
      // Predicated region
      $region443: #{prompt_model_forward.1} parent=430 // pred_check
        _
      $region444: #{prompt_model_forward.1} parent=430 // pred_check_branch
        %646 = sbr.rel (%p643) target = $region446
      $region445: #{prompt_model_forward.1} parent=430 // pred_region
        %s647 = sand.u32 1, 7
        %s648 = ssub.s32 1, %s647
        %s649 = scalar_lea.vmem %s620, %s648
        %s650 = ssub.s32 1, %s647
        %s651 = scalar_lea.vmem %s621, %s650 [#allocation2]
        %s652 = sshllo.u32 0, %s647
        loop: start=0, step=1, limit=1
        $region447: #{prompt_model_forward.1} parent=445 // loop_pre_header
          _
        $region448: #{prompt_model_forward.1} parent=445 // loop_header
          %s654 = sphi 0, %s658
          %p655 = scmp.ge.s32.totalorder %s654, 1
          %s659 = sphi %s649, %s649
          %s660 = sphi %s651, %s651
        $region449: #{prompt_model_forward.1} parent=445 // loop_header_branch
          %657 = sbr.rel (%p655) target = $region453
        $region450: #{prompt_model_forward.1} parent=445 // loop_body
          %v661 = vld [vmem:[%s659] sm:%s652]
          %662 = vst [vmem:[%s660] sm:%s652] %v661
        $region451: #{prompt_model_forward.1} parent=445 // loop_footer
          %s658 = sadd.s32 1, %s654
        $region452: #{prompt_model_forward.1} parent=445 // loop_footer_branch
          %653 = sbr.rel target = $region448
        $region453: #{prompt_model_forward.1} parent=445 // loop_exit
          _
      $region446: #{prompt_model_forward.1} parent=430 // pred_fallthru
        _
    $region431: #{prompt_model_forward.1} parent=1 // pred_fallthru
      _
    // Predicated region
    $region432: #{prompt_model_forward.1} parent=1 // pred_check
      %p628 = pneg %p624
    $region433: #{prompt_model_forward.1} parent=1 // pred_check_branch
      %630 = sbr.rel (%p628) target = $region435
    $region434: #{prompt_model_forward.1} parent=1 // pred_region
      %s631 = sshllo.u32 0, 1
      loop: start=0, step=1, limit=1
      $region436: #{prompt_model_forward.1} parent=434 // loop_pre_header
        _
      $region437: #{prompt_model_forward.1} parent=434 // loop_header
        %s633 = sphi 0, %s637
        %p634 = scmp.ge.s32.totalorder %s633, 1
        %s638 = sphi %s620, %s620
        %s639 = sphi %s621, %s621
      $region438: #{prompt_model_forward.1} parent=434 // loop_header_branch
        %636 = sbr.rel (%p634) target = $region442
      $region439: #{prompt_model_forward.1} parent=434 // loop_body
        %v640 = vld [vmem:[%s638] sm:%s631]
        %641 = vst [vmem:[%s639] sm:%s631] %v640
      $region440: #{prompt_model_forward.1} parent=434 // loop_footer
        %s637 = sadd.s32 1, %s633
      $region441: #{prompt_model_forward.1} parent=434 // loop_footer_branch
        %632 = sbr.rel target = $region437
      $region442: #{prompt_model_forward.1} parent=434 // loop_exit
        _
    $region435: #{prompt_model_forward.1} parent=1 // pred_fallthru
      _
    // Predicated region
    $region454: #{prompt_model_forward.1} parent=1 // pred_check
      _
    $region455: #{prompt_model_forward.1} parent=1 // pred_check_branch
      %665 = sbr.rel (0) target = $region457
    $region456: #{prompt_model_forward.1} parent=1 // pred_region
      %666 = vsyncadd %s622, 16
    $region457: #{prompt_model_forward.1} parent=1 // pred_fallthru
      _
    %s667 = sld [smem:[#allocation8 + $0xc]]
    %s668 = scalar_lea.vmem %s10, %s667
    %s669 = scalar_lea.vmem [#allocation2], 12
    %s670 = scalar_lea.sflag [#allocation6], 12
    %p672 = scmp.lt.u32.totalorder 1, 8
    %p673 = pneg %p672
    // Predicated region
    $region458: #{prompt_model_forward.1} parent=1 // pred_check
      _
    $region459: #{prompt_model_forward.1} parent=1 // pred_check_branch
      %675 = sbr.rel (%p672) target = $region461
    $region460: #{prompt_model_forward.1} parent=1 // pred_region
      %s690 = sand.u32 1, 7
      %p691 = scmp.eq.s32.totalorder %s690, 0
      %p692 = pneg %p691
      // Predicated region
      $region473: #{prompt_model_forward.1} parent=460 // pred_check
        _
      $region474: #{prompt_model_forward.1} parent=460 // pred_check_branch
        %694 = sbr.rel (%p691) target = $region476
      $region475: #{prompt_model_forward.1} parent=460 // pred_region
        %s695 = sand.u32 1, 7
        %s696 = ssub.s32 1, %s695
        %s697 = scalar_lea.vmem %s668, %s696
        %s698 = ssub.s32 1, %s695
        %s699 = scalar_lea.vmem %s669, %s698 [#allocation2]
        %s700 = sshllo.u32 0, %s695
        loop: start=0, step=1, limit=1
        $region477: #{prompt_model_forward.1} parent=475 // loop_pre_header
          _
        $region478: #{prompt_model_forward.1} parent=475 // loop_header
          %s702 = sphi 0, %s706
          %p703 = scmp.ge.s32.totalorder %s702, 1
          %s707 = sphi %s697, %s697
          %s708 = sphi %s699, %s699
        $region479: #{prompt_model_forward.1} parent=475 // loop_header_branch
          %705 = sbr.rel (%p703) target = $region483
        $region480: #{prompt_model_forward.1} parent=475 // loop_body
          %v709 = vld [vmem:[%s707] sm:%s700]
          %710 = vst [vmem:[%s708] sm:%s700] %v709
        $region481: #{prompt_model_forward.1} parent=475 // loop_footer
          %s706 = sadd.s32 1, %s702
        $region482: #{prompt_model_forward.1} parent=475 // loop_footer_branch
          %701 = sbr.rel target = $region478
        $region483: #{prompt_model_forward.1} parent=475 // loop_exit
          _
      $region476: #{prompt_model_forward.1} parent=460 // pred_fallthru
        _
    $region461: #{prompt_model_forward.1} parent=1 // pred_fallthru
      _
    // Predicated region
    $region462: #{prompt_model_forward.1} parent=1 // pred_check
      %p676 = pneg %p672
    $region463: #{prompt_model_forward.1} parent=1 // pred_check_branch
      %678 = sbr.rel (%p676) target = $region465
    $region464: #{prompt_model_forward.1} parent=1 // pred_region
      %s679 = sshllo.u32 0, 1
      loop: start=0, step=1, limit=1
      $region466: #{prompt_model_forward.1} parent=464 // loop_pre_header
        _
      $region467: #{prompt_model_forward.1} parent=464 // loop_header
        %s681 = sphi 0, %s685
        %p682 = scmp.ge.s32.totalorder %s681, 1
        %s686 = sphi %s668, %s668
        %s687 = sphi %s669, %s669
      $region468: #{prompt_model_forward.1} parent=464 // loop_header_branch
        %684 = sbr.rel (%p682) target = $region472
      $region469: #{prompt_model_forward.1} parent=464 // loop_body
        %v688 = vld [vmem:[%s686] sm:%s679]
        %689 = vst [vmem:[%s687] sm:%s679] %v688
      $region470: #{prompt_model_forward.1} parent=464 // loop_footer
        %s685 = sadd.s32 1, %s681
      $region471: #{prompt_model_forward.1} parent=464 // loop_footer_branch
        %680 = sbr.rel target = $region467
      $region472: #{prompt_model_forward.1} parent=464 // loop_exit
        _
    $region465: #{prompt_model_forward.1} parent=1 // pred_fallthru
      _
    // Predicated region
    $region484: #{prompt_model_forward.1} parent=1 // pred_check
      _
    $region485: #{prompt_model_forward.1} parent=1 // pred_check_branch
      %713 = sbr.rel (0) target = $region487
    $region486: #{prompt_model_forward.1} parent=1 // pred_region
      %714 = vsyncadd %s670, 16
    $region487: #{prompt_model_forward.1} parent=1 // pred_fallthru
      _
    %s715 = sld [smem:[#allocation8 + $0xd]]
    %s716 = scalar_lea.vmem %s10, %s715
    %s717 = scalar_lea.vmem [#allocation2], 13
    %s718 = scalar_lea.sflag [#allocation6], 13
    %p720 = scmp.lt.u32.totalorder 1, 8
    %p721 = pneg %p720
    // Predicated region
    $region488: #{prompt_model_forward.1} parent=1 // pred_check
      _
    $region489: #{prompt_model_forward.1} parent=1 // pred_check_branch
      %723 = sbr.rel (%p720) target = $region491
    $region490: #{prompt_model_forward.1} parent=1 // pred_region
      %s738 = sand.u32 1, 7
      %p739 = scmp.eq.s32.totalorder %s738, 0
      %p740 = pneg %p739
      // Predicated region
      $region503: #{prompt_model_forward.1} parent=490 // pred_check
        _
      $region504: #{prompt_model_forward.1} parent=490 // pred_check_branch
        %742 = sbr.rel (%p739) target = $region506
      $region505: #{prompt_model_forward.1} parent=490 // pred_region
        %s743 = sand.u32 1, 7
        %s744 = ssub.s32 1, %s743
        %s745 = scalar_lea.vmem %s716, %s744
        %s746 = ssub.s32 1, %s743
        %s747 = scalar_lea.vmem %s717, %s746 [#allocation2]
        %s748 = sshllo.u32 0, %s743
        loop: start=0, step=1, limit=1
        $region507: #{prompt_model_forward.1} parent=505 // loop_pre_header
          _
        $region508: #{prompt_model_forward.1} parent=505 // loop_header
          %s750 = sphi 0, %s754
          %p751 = scmp.ge.s32.totalorder %s750, 1
          %s755 = sphi %s745, %s745
          %s756 = sphi %s747, %s747
        $region509: #{prompt_model_forward.1} parent=505 // loop_header_branch
          %753 = sbr.rel (%p751) target = $region513
        $region510: #{prompt_model_forward.1} parent=505 // loop_body
          %v757 = vld [vmem:[%s755] sm:%s748]
          %758 = vst [vmem:[%s756] sm:%s748] %v757
        $region511: #{prompt_model_forward.1} parent=505 // loop_footer
          %s754 = sadd.s32 1, %s750
        $region512: #{prompt_model_forward.1} parent=505 // loop_footer_branch
          %749 = sbr.rel target = $region508
        $region513: #{prompt_model_forward.1} parent=505 // loop_exit
          _
      $region506: #{prompt_model_forward.1} parent=490 // pred_fallthru
        _
    $region491: #{prompt_model_forward.1} parent=1 // pred_fallthru
      _
    // Predicated region
    $region492: #{prompt_model_forward.1} parent=1 // pred_check
      %p724 = pneg %p720
    $region493: #{prompt_model_forward.1} parent=1 // pred_check_branch
      %726 = sbr.rel (%p724) target = $region495
    $region494: #{prompt_model_forward.1} parent=1 // pred_region
      %s727 = sshllo.u32 0, 1
      loop: start=0, step=1, limit=1
      $region496: #{prompt_model_forward.1} parent=494 // loop_pre_header
        _
      $region497: #{prompt_model_forward.1} parent=494 // loop_header
        %s729 = sphi 0, %s733
        %p730 = scmp.ge.s32.totalorder %s729, 1
        %s734 = sphi %s716, %s716
        %s735 = sphi %s717, %s717
      $region498: #{prompt_model_forward.1} parent=494 // loop_header_branch
        %732 = sbr.rel (%p730) target = $region502
      $region499: #{prompt_model_forward.1} parent=494 // loop_body
        %v736 = vld [vmem:[%s734] sm:%s727]
        %737 = vst [vmem:[%s735] sm:%s727] %v736
      $region500: #{prompt_model_forward.1} parent=494 // loop_footer
        %s733 = sadd.s32 1, %s729
      $region501: #{prompt_model_forward.1} parent=494 // loop_footer_branch
        %728 = sbr.rel target = $region497
      $region502: #{prompt_model_forward.1} parent=494 // loop_exit
        _
    $region495: #{prompt_model_forward.1} parent=1 // pred_fallthru
      _
    // Predicated region
    $region514: #{prompt_model_forward.1} parent=1 // pred_check
      _
    $region515: #{prompt_model_forward.1} parent=1 // pred_check_branch
      %761 = sbr.rel (0) target = $region517
    $region516: #{prompt_model_forward.1} parent=1 // pred_region
      %762 = vsyncadd %s718, 16
    $region517: #{prompt_model_forward.1} parent=1 // pred_fallthru
      _
    %s763 = sld [smem:[#allocation8 + $0xe]]
    %s764 = scalar_lea.vmem %s10, %s763
    %s765 = scalar_lea.vmem [#allocation2], 14
    %s766 = scalar_lea.sflag [#allocation6], 14
    %p768 = scmp.lt.u32.totalorder 1, 8
    %p769 = pneg %p768
    // Predicated region
    $region518: #{prompt_model_forward.1} parent=1 // pred_check
      _
    $region519: #{prompt_model_forward.1} parent=1 // pred_check_branch
      %771 = sbr.rel (%p768) target = $region521
    $region520: #{prompt_model_forward.1} parent=1 // pred_region
      %s786 = sand.u32 1, 7
      %p787 = scmp.eq.s32.totalorder %s786, 0
      %p788 = pneg %p787
      // Predicated region
      $region533: #{prompt_model_forward.1} parent=520 // pred_check
        _
      $region534: #{prompt_model_forward.1} parent=520 // pred_check_branch
        %790 = sbr.rel (%p787) target = $region536
      $region535: #{prompt_model_forward.1} parent=520 // pred_region
        %s791 = sand.u32 1, 7
        %s792 = ssub.s32 1, %s791
        %s793 = scalar_lea.vmem %s764, %s792
        %s794 = ssub.s32 1, %s791
        %s795 = scalar_lea.vmem %s765, %s794 [#allocation2]
        %s796 = sshllo.u32 0, %s791
        loop: start=0, step=1, limit=1
        $region537: #{prompt_model_forward.1} parent=535 // loop_pre_header
          _
        $region538: #{prompt_model_forward.1} parent=535 // loop_header
          %s798 = sphi 0, %s802
          %p799 = scmp.ge.s32.totalorder %s798, 1
          %s803 = sphi %s793, %s793
          %s804 = sphi %s795, %s795
        $region539: #{prompt_model_forward.1} parent=535 // loop_header_branch
          %801 = sbr.rel (%p799) target = $region543
        $region540: #{prompt_model_forward.1} parent=535 // loop_body
          %v805 = vld [vmem:[%s803] sm:%s796]
          %806 = vst [vmem:[%s804] sm:%s796] %v805
        $region541: #{prompt_model_forward.1} parent=535 // loop_footer
          %s802 = sadd.s32 1, %s798
        $region542: #{prompt_model_forward.1} parent=535 // loop_footer_branch
          %797 = sbr.rel target = $region538
        $region543: #{prompt_model_forward.1} parent=535 // loop_exit
          _
      $region536: #{prompt_model_forward.1} parent=520 // pred_fallthru
        _
    $region521: #{prompt_model_forward.1} parent=1 // pred_fallthru
      _
    // Predicated region
    $region522: #{prompt_model_forward.1} parent=1 // pred_check
      %p772 = pneg %p768
    $region523: #{prompt_model_forward.1} parent=1 // pred_check_branch
      %774 = sbr.rel (%p772) target = $region525
    $region524: #{prompt_model_forward.1} parent=1 // pred_region
      %s775 = sshllo.u32 0, 1
      loop: start=0, step=1, limit=1
      $region526: #{prompt_model_forward.1} parent=524 // loop_pre_header
        _
      $region527: #{prompt_model_forward.1} parent=524 // loop_header
        %s777 = sphi 0, %s781
        %p778 = scmp.ge.s32.totalorder %s777, 1
        %s782 = sphi %s764, %s764
        %s783 = sphi %s765, %s765
      $region528: #{prompt_model_forward.1} parent=524 // loop_header_branch
        %780 = sbr.rel (%p778) target = $region532
      $region529: #{prompt_model_forward.1} parent=524 // loop_body
        %v784 = vld [vmem:[%s782] sm:%s775]
        %785 = vst [vmem:[%s783] sm:%s775] %v784
      $region530: #{prompt_model_forward.1} parent=524 // loop_footer
        %s781 = sadd.s32 1, %s777
      $region531: #{prompt_model_forward.1} parent=524 // loop_footer_branch
        %776 = sbr.rel target = $region527
      $region532: #{prompt_model_forward.1} parent=524 // loop_exit
        _
    $region525: #{prompt_model_forward.1} parent=1 // pred_fallthru
      _
    // Predicated region
    $region544: #{prompt_model_forward.1} parent=1 // pred_check
      _
    $region545: #{prompt_model_forward.1} parent=1 // pred_check_branch
      %809 = sbr.rel (0) target = $region547
    $region546: #{prompt_model_forward.1} parent=1 // pred_region
      %810 = vsyncadd %s766, 16
    $region547: #{prompt_model_forward.1} parent=1 // pred_fallthru
      _
    %s811 = sld [smem:[#allocation8 + $0xf]]
    %s812 = scalar_lea.vmem %s10, %s811
    %s813 = scalar_lea.vmem [#allocation2], 15
    %s814 = scalar_lea.sflag [#allocation6], 15
    %p816 = scmp.lt.u32.totalorder 1, 8
    %p817 = pneg %p816
    // Predicated region
    $region548: #{prompt_model_forward.1} parent=1 // pred_check
      _
    $region549: #{prompt_model_forward.1} parent=1 // pred_check_branch
      %819 = sbr.rel (%p816) target = $region551
    $region550: #{prompt_model_forward.1} parent=1 // pred_region
      %s834 = sand.u32 1, 7
      %p835 = scmp.eq.s32.totalorder %s834, 0
      %p836 = pneg %p835
      // Predicated region
      $region563: #{prompt_model_forward.1} parent=550 // pred_check
        _
      $region564: #{prompt_model_forward.1} parent=550 // pred_check_branch
        %838 = sbr.rel (%p835) target = $region566
      $region565: #{prompt_model_forward.1} parent=550 // pred_region
        %s839 = sand.u32 1, 7
        %s840 = ssub.s32 1, %s839
        %s841 = scalar_lea.vmem %s812, %s840
        %s842 = ssub.s32 1, %s839
        %s843 = scalar_lea.vmem %s813, %s842 [#allocation2]
        %s844 = sshllo.u32 0, %s839
        loop: start=0, step=1, limit=1
        $region567: #{prompt_model_forward.1} parent=565 // loop_pre_header
          _
        $region568: #{prompt_model_forward.1} parent=565 // loop_header
          %s846 = sphi 0, %s850
          %p847 = scmp.ge.s32.totalorder %s846, 1
          %s851 = sphi %s841, %s841
          %s852 = sphi %s843, %s843
        $region569: #{prompt_model_forward.1} parent=565 // loop_header_branch
          %849 = sbr.rel (%p847) target = $region573
        $region570: #{prompt_model_forward.1} parent=565 // loop_body
          %v853 = vld [vmem:[%s851] sm:%s844]
          %854 = vst [vmem:[%s852] sm:%s844] %v853
        $region571: #{prompt_model_forward.1} parent=565 // loop_footer
          %s850 = sadd.s32 1, %s846
        $region572: #{prompt_model_forward.1} parent=565 // loop_footer_branch
          %845 = sbr.rel target = $region568
        $region573: #{prompt_model_forward.1} parent=565 // loop_exit
          _
      $region566: #{prompt_model_forward.1} parent=550 // pred_fallthru
        _
    $region551: #{prompt_model_forward.1} parent=1 // pred_fallthru
      _
    // Predicated region
    $region552: #{prompt_model_forward.1} parent=1 // pred_check
      %p820 = pneg %p816
    $region553: #{prompt_model_forward.1} parent=1 // pred_check_branch
      %822 = sbr.rel (%p820) target = $region555
    $region554: #{prompt_model_forward.1} parent=1 // pred_region
      %s823 = sshllo.u32 0, 1
      loop: start=0, step=1, limit=1
      $region556: #{prompt_model_forward.1} parent=554 // loop_pre_header
        _
      $region557: #{prompt_model_forward.1} parent=554 // loop_header
        %s825 = sphi 0, %s829
        %p826 = scmp.ge.s32.totalorder %s825, 1
        %s830 = sphi %s812, %s812
        %s831 = sphi %s813, %s813
      $region558: #{prompt_model_forward.1} parent=554 // loop_header_branch
        %828 = sbr.rel (%p826) target = $region562
      $region559: #{prompt_model_forward.1} parent=554 // loop_body
        %v832 = vld [vmem:[%s830] sm:%s823]
        %833 = vst [vmem:[%s831] sm:%s823] %v832
      $region560: #{prompt_model_forward.1} parent=554 // loop_footer
        %s829 = sadd.s32 1, %s825
      $region561: #{prompt_model_forward.1} parent=554 // loop_footer_branch
        %824 = sbr.rel target = $region557
      $region562: #{prompt_model_forward.1} parent=554 // loop_exit
        _
    $region555: #{prompt_model_forward.1} parent=1 // pred_fallthru
      _
    // Predicated region
    $region574: #{prompt_model_forward.1} parent=1 // pred_check
      _
    $region575: #{prompt_model_forward.1} parent=1 // pred_check_branch
      %857 = sbr.rel (0) target = $region577
    $region576: #{prompt_model_forward.1} parent=1 // pred_region
      %858 = vsyncadd %s814, 16
    $region577: #{prompt_model_forward.1} parent=1 // pred_fallthru
      _
    %p860 = scmp.lt.u32.totalorder 4, 8
    %p861 = pneg %p860
    // Predicated region
    $region578: #{prompt_model_forward.1} parent=1 // pred_check
      _
    $region579: #{prompt_model_forward.1} parent=1 // pred_check_branch
      %863 = sbr.rel (%p860) target = $region581
    $region580: #{prompt_model_forward.1} parent=1 // pred_region
      %s1004 = sand.u32 4, 7
      %p1005 = scmp.eq.s32.totalorder %s1004, 0
      %p1006 = pneg %p1005
      // Predicated region
      $region593: #{prompt_model_forward.1} parent=580 // pred_check
        _
      $region594: #{prompt_model_forward.1} parent=580 // pred_check_branch
        %1008 = sbr.rel (%p1005) target = $region596
      $region595: #{prompt_model_forward.1} parent=580 // pred_region
        %s1009 = sand.u32 4, 7
        %s1010 = ssub.s32 4, %s1009
        %s1011 = scalar_lea.vmem %s19, %s1010
        %s1012 = ssub.s32 4, %s1009
        %s1013 = scalar_lea.vmem [#allocation3], %s1012
        loop: start=0, step=1, limit=1
        $region597: #{prompt_model_forward.1} parent=595 // loop_pre_header
          _
        $region598: #{prompt_model_forward.1} parent=595 // loop_header
          %s1015 = sphi 0, %s1019
          %p1016 = scmp.ge.s32.totalorder %s1015, 1
          %s1020 = sphi %s19, %s19
          %s1021 = sphi [#allocation3], [#allocation3]
        $region599: #{prompt_model_forward.1} parent=595 // loop_header_branch
          %1018 = sbr.rel (%p1016) target = $region603
        $region600: #{prompt_model_forward.1} parent=595 // loop_body
          _
        $region601: #{prompt_model_forward.1} parent=595 // loop_footer
          %s1019 = sadd.s32 1, %s1015
        $region602: #{prompt_model_forward.1} parent=595 // loop_footer_branch
          %1014 = sbr.rel target = $region598
        $region603: #{prompt_model_forward.1} parent=595 // loop_exit
          _
        %s1022 = sshllo.u32 0, %s1009
        loop: start=0, step=1, limit=1
        $region604: #{prompt_model_forward.1} parent=595 // loop_pre_header
          _
        $region605: #{prompt_model_forward.1} parent=595 // loop_header
          %s1024 = sphi 0, %s1028
          %p1025 = scmp.ge.s32.totalorder %s1024, 1
          %s1029 = sphi %s1011, %s1011
          %s1030 = sphi %s1013, %s1013
        $region606: #{prompt_model_forward.1} parent=595 // loop_header_branch
          %1027 = sbr.rel (%p1025) target = $region610
        $region607: #{prompt_model_forward.1} parent=595 // loop_body
          %v1031 = vld [vmem:[%s1029] sm:%s1022]
          %1032 = vst [vmem:[%s1030] sm:%s1022] %v1031
          %v1033 = vld [vmem:[%s1029 + $0x10] sm:%s1022]
          %1034 = vst [vmem:[%s1030 + $0x4] sm:%s1022] %v1033
          %v1035 = vld [vmem:[%s1029 + $0x4] sm:%s1022]
          %1036 = vst [vmem:[%s1030 + $0x8] sm:%s1022] %v1035
          %v1037 = vld [vmem:[%s1029 + $0x14] sm:%s1022]
          %1038 = vst [vmem:[%s1030 + $0xc] sm:%s1022] %v1037
          %v1039 = vld [vmem:[%s1029 + $0x8] sm:%s1022]
          %1040 = vst [vmem:[%s1030 + $0x10] sm:%s1022] %v1039
          %v1041 = vld [vmem:[%s1029 + $0x18] sm:%s1022]
          %1042 = vst [vmem:[%s1030 + $0x14] sm:%s1022] %v1041
          %v1043 = vld [vmem:[%s1029 + $0xc] sm:%s1022]
          %1044 = vst [vmem:[%s1030 + $0x18] sm:%s1022] %v1043
          %v1045 = vld [vmem:[%s1029 + $0x1c] sm:%s1022]
          %1046 = vst [vmem:[%s1030 + $0x1c] sm:%s1022] %v1045
          %v1047 = vld [vmem:[%s1029 + $0x20] sm:%s1022]
          %1048 = vst [vmem:[%s1030 + $0x20] sm:%s1022] %v1047
          %v1049 = vld [vmem:[%s1029 + $0x30] sm:%s1022]
          %1050 = vst [vmem:[%s1030 + $0x24] sm:%s1022] %v1049
          %v1051 = vld [vmem:[%s1029 + $0x24] sm:%s1022]
          %1052 = vst [vmem:[%s1030 + $0x28] sm:%s1022] %v1051
          %v1053 = vld [vmem:[%s1029 + $0x34] sm:%s1022]
          %1054 = vst [vmem:[%s1030 + $0x2c] sm:%s1022] %v1053
          %v1055 = vld [vmem:[%s1029 + $0x28] sm:%s1022]
          %1056 = vst [vmem:[%s1030 + $0x30] sm:%s1022] %v1055
          %v1057 = vld [vmem:[%s1029 + $0x38] sm:%s1022]
          %1058 = vst [vmem:[%s1030 + $0x34] sm:%s1022] %v1057
          %v1059 = vld [vmem:[%s1029 + $0x2c] sm:%s1022]
          %1060 = vst [vmem:[%s1030 + $0x38] sm:%s1022] %v1059
          %v1061 = vld [vmem:[%s1029 + $0x3c] sm:%s1022]
          %1062 = vst [vmem:[%s1030 + $0x3c] sm:%s1022] %v1061
          %v1063 = vld [vmem:[%s1029 + $0x40] sm:%s1022]
          %1064 = vst [vmem:[%s1030 + $0x40] sm:%s1022] %v1063
          %v1065 = vld [vmem:[%s1029 + $0x50] sm:%s1022]
          %1066 = vst [vmem:[%s1030 + $0x44] sm:%s1022] %v1065
          %v1067 = vld [vmem:[%s1029 + $0x44] sm:%s1022]
          %1068 = vst [vmem:[%s1030 + $0x48] sm:%s1022] %v1067
          %v1069 = vld [vmem:[%s1029 + $0x54] sm:%s1022]
          %1070 = vst [vmem:[%s1030 + $0x4c] sm:%s1022] %v1069
          %v1071 = vld [vmem:[%s1029 + $0x48] sm:%s1022]
          %1072 = vst [vmem:[%s1030 + $0x50] sm:%s1022] %v1071
          %v1073 = vld [vmem:[%s1029 + $0x58] sm:%s1022]
          %1074 = vst [vmem:[%s1030 + $0x54] sm:%s1022] %v1073
          %v1075 = vld [vmem:[%s1029 + $0x4c] sm:%s1022]
          %1076 = vst [vmem:[%s1030 + $0x58] sm:%s1022] %v1075
          %v1077 = vld [vmem:[%s1029 + $0x5c] sm:%s1022]
          %1078 = vst [vmem:[%s1030 + $0x5c] sm:%s1022] %v1077
          %v1079 = vld [vmem:[%s1029 + $0x60] sm:%s1022]
          %1080 = vst [vmem:[%s1030 + $0x60] sm:%s1022] %v1079
          %v1081 = vld [vmem:[%s1029 + $0x70] sm:%s1022]
          %1082 = vst [vmem:[%s1030 + $0x64] sm:%s1022] %v1081
          %v1083 = vld [vmem:[%s1029 + $0x64] sm:%s1022]
          %1084 = vst [vmem:[%s1030 + $0x68] sm:%s1022] %v1083
          %v1085 = vld [vmem:[%s1029 + $0x74] sm:%s1022]
          %1086 = vst [vmem:[%s1030 + $0x6c] sm:%s1022] %v1085
          %v1087 = vld [vmem:[%s1029 + $0x68] sm:%s1022]
          %1088 = vst [vmem:[%s1030 + $0x70] sm:%s1022] %v1087
          %v1089 = vld [vmem:[%s1029 + $0x78] sm:%s1022]
          %1090 = vst [vmem:[%s1030 + $0x74] sm:%s1022] %v1089
          %v1091 = vld [vmem:[%s1029 + $0x6c] sm:%s1022]
          %1092 = vst [vmem:[%s1030 + $0x78] sm:%s1022] %v1091
          %v1093 = vld [vmem:[%s1029 + $0x7c] sm:%s1022]
          %1094 = vst [vmem:[%s1030 + $0x7c] sm:%s1022] %v1093
          %v1095 = vld [vmem:[%s1029 + $0x80] sm:%s1022]
          %1096 = vst [vmem:[%s1030 + $0x80] sm:%s1022] %v1095
          %v1097 = vld [vmem:[%s1029 + $0x90] sm:%s1022]
          %1098 = vst [vmem:[%s1030 + $0x84] sm:%s1022] %v1097
          %v1099 = vld [vmem:[%s1029 + $0x84] sm:%s1022]
          %1100 = vst [vmem:[%s1030 + $0x88] sm:%s1022] %v1099
          %v1101 = vld [vmem:[%s1029 + $0x94] sm:%s1022]
          %1102 = vst [vmem:[%s1030 + $0x8c] sm:%s1022] %v1101
          %v1103 = vld [vmem:[%s1029 + $0x88] sm:%s1022]
          %1104 = vst [vmem:[%s1030 + $0x90] sm:%s1022] %v1103
          %v1105 = vld [vmem:[%s1029 + $0x98] sm:%s1022]
          %1106 = vst [vmem:[%s1030 + $0x94] sm:%s1022] %v1105
          %v1107 = vld [vmem:[%s1029 + $0x8c] sm:%s1022]
          %1108 = vst [vmem:[%s1030 + $0x98] sm:%s1022] %v1107
          %v1109 = vld [vmem:[%s1029 + $0x9c] sm:%s1022]
          %1110 = vst [vmem:[%s1030 + $0x9c] sm:%s1022] %v1109
          %v1111 = vld [vmem:[%s1029 + $0xa0] sm:%s1022]
          %1112 = vst [vmem:[%s1030 + $0xa0] sm:%s1022] %v1111
          %v1113 = vld [vmem:[%s1029 + $0xb0] sm:%s1022]
          %1114 = vst [vmem:[%s1030 + $0xa4] sm:%s1022] %v1113
          %v1115 = vld [vmem:[%s1029 + $0xa4] sm:%s1022]
          %1116 = vst [vmem:[%s1030 + $0xa8] sm:%s1022] %v1115
          %v1117 = vld [vmem:[%s1029 + $0xb4] sm:%s1022]
          %1118 = vst [vmem:[%s1030 + $0xac] sm:%s1022] %v1117
          %v1119 = vld [vmem:[%s1029 + $0xa8] sm:%s1022]
          %1120 = vst [vmem:[%s1030 + $0xb0] sm:%s1022] %v1119
          %v1121 = vld [vmem:[%s1029 + $0xb8] sm:%s1022]
          %1122 = vst [vmem:[%s1030 + $0xb4] sm:%s1022] %v1121
          %v1123 = vld [vmem:[%s1029 + $0xac] sm:%s1022]
          %1124 = vst [vmem:[%s1030 + $0xb8] sm:%s1022] %v1123
          %v1125 = vld [vmem:[%s1029 + $0xbc] sm:%s1022]
          %1126 = vst [vmem:[%s1030 + $0xbc] sm:%s1022] %v1125
          %v1127 = vld [vmem:[%s1029 + $0xc0] sm:%s1022]
          %1128 = vst [vmem:[%s1030 + $0xc0] sm:%s1022] %v1127
          %v1129 = vld [vmem:[%s1029 + $0xd0] sm:%s1022]
          %1130 = vst [vmem:[%s1030 + $0xc4] sm:%s1022] %v1129
          %v1131 = vld [vmem:[%s1029 + $0xc4] sm:%s1022]
          %1132 = vst [vmem:[%s1030 + $0xc8] sm:%s1022] %v1131
          %v1133 = vld [vmem:[%s1029 + $0xd4] sm:%s1022]
          %1134 = vst [vmem:[%s1030 + $0xcc] sm:%s1022] %v1133
          %v1135 = vld [vmem:[%s1029 + $0xc8] sm:%s1022]
          %1136 = vst [vmem:[%s1030 + $0xd0] sm:%s1022] %v1135
          %v1137 = vld [vmem:[%s1029 + $0xd8] sm:%s1022]
          %1138 = vst [vmem:[%s1030 + $0xd4] sm:%s1022] %v1137
          %v1139 = vld [vmem:[%s1029 + $0xcc] sm:%s1022]
          %1140 = vst [vmem:[%s1030 + $0xd8] sm:%s1022] %v1139
          %v1141 = vld [vmem:[%s1029 + $0xdc] sm:%s1022]
          %1142 = vst [vmem:[%s1030 + $0xdc] sm:%s1022] %v1141
          %v1143 = vld [vmem:[%s1029 + $0xe0] sm:%s1022]
          %1144 = vst [vmem:[%s1030 + $0xe0] sm:%s1022] %v1143
          %v1145 = vld [vmem:[%s1029 + $0xf0] sm:%s1022]
          %1146 = vst [vmem:[%s1030 + $0xe4] sm:%s1022] %v1145
          %v1147 = vld [vmem:[%s1029 + $0xe4] sm:%s1022]
          %1148 = vst [vmem:[%s1030 + $0xe8] sm:%s1022] %v1147
          %v1149 = vld [vmem:[%s1029 + $0xf4] sm:%s1022]
          %1150 = vst [vmem:[%s1030 + $0xec] sm:%s1022] %v1149
          %v1151 = vld [vmem:[%s1029 + $0xe8] sm:%s1022]
          %1152 = vst [vmem:[%s1030 + $0xf0] sm:%s1022] %v1151
          %v1153 = vld [vmem:[%s1029 + $0xf8] sm:%s1022]
          %1154 = vst [vmem:[%s1030 + $0xf4] sm:%s1022] %v1153
          %v1155 = vld [vmem:[%s1029 + $0xec] sm:%s1022]
          %1156 = vst [vmem:[%s1030 + $0xf8] sm:%s1022] %v1155
          %v1157 = vld [vmem:[%s1029 + $0xfc] sm:%s1022]
          %1158 = vst [vmem:[%s1030 + $0xfc] sm:%s1022] %v1157
        $region608: #{prompt_model_forward.1} parent=595 // loop_footer
          %s1028 = sadd.s32 1, %s1024
        $region609: #{prompt_model_forward.1} parent=595 // loop_footer_branch
          %1023 = sbr.rel target = $region605
        $region610: #{prompt_model_forward.1} parent=595 // loop_exit
          _
      $region596: #{prompt_model_forward.1} parent=580 // pred_fallthru
        _
    $region581: #{prompt_model_forward.1} parent=1 // pred_fallthru
      _
    // Predicated region
    $region582: #{prompt_model_forward.1} parent=1 // pred_check
      %p864 = pneg %p860
    $region583: #{prompt_model_forward.1} parent=1 // pred_check_branch
      %866 = sbr.rel (%p864) target = $region585
    $region584: #{prompt_model_forward.1} parent=1 // pred_region
      %s867 = sshllo.u32 0, 4
      loop: start=0, step=1, limit=1
      $region586: #{prompt_model_forward.1} parent=584 // loop_pre_header
        _
      $region587: #{prompt_model_forward.1} parent=584 // loop_header
        %s869 = sphi 0, %s873
        %p870 = scmp.ge.s32.totalorder %s869, 1
        %s874 = sphi %s19, %s19
        %s875 = sphi [#allocation3], [#allocation3]
      $region588: #{prompt_model_forward.1} parent=584 // loop_header_branch
        %872 = sbr.rel (%p870) target = $region592
      $region589: #{prompt_model_forward.1} parent=584 // loop_body
        %v876 = vld [vmem:[%s874] sm:%s867]
        %877 = vst [vmem:[%s875] sm:%s867] %v876
        %v878 = vld [vmem:[%s874 + $0x10] sm:%s867]
        %879 = vst [vmem:[%s875 + $0x4] sm:%s867] %v878
        %v880 = vld [vmem:[%s874 + $0x4] sm:%s867]
        %881 = vst [vmem:[%s875 + $0x8] sm:%s867] %v880
        %v882 = vld [vmem:[%s874 + $0x14] sm:%s867]
        %883 = vst [vmem:[%s875 + $0xc] sm:%s867] %v882
        %v884 = vld [vmem:[%s874 + $0x8] sm:%s867]
        %885 = vst [vmem:[%s875 + $0x10] sm:%s867] %v884
        %v886 = vld [vmem:[%s874 + $0x18] sm:%s867]
        %887 = vst [vmem:[%s875 + $0x14] sm:%s867] %v886
        %v888 = vld [vmem:[%s874 + $0xc] sm:%s867]
        %889 = vst [vmem:[%s875 + $0x18] sm:%s867] %v888
        %v890 = vld [vmem:[%s874 + $0x1c] sm:%s867]
        %891 = vst [vmem:[%s875 + $0x1c] sm:%s867] %v890
        %v892 = vld [vmem:[%s874 + $0x20] sm:%s867]
        %893 = vst [vmem:[%s875 + $0x20] sm:%s867] %v892
        %v894 = vld [vmem:[%s874 + $0x30] sm:%s867]
        %895 = vst [vmem:[%s875 + $0x24] sm:%s867] %v894
        %v896 = vld [vmem:[%s874 + $0x24] sm:%s867]
        %897 = vst [vmem:[%s875 + $0x28] sm:%s867] %v896
        %v898 = vld [vmem:[%s874 + $0x34] sm:%s867]
        %899 = vst [vmem:[%s875 + $0x2c] sm:%s867] %v898
        %v900 = vld [vmem:[%s874 + $0x28] sm:%s867]
        %901 = vst [vmem:[%s875 + $0x30] sm:%s867] %v900
        %v902 = vld [vmem:[%s874 + $0x38] sm:%s867]
        %903 = vst [vmem:[%s875 + $0x34] sm:%s867] %v902
        %v904 = vld [vmem:[%s874 + $0x2c] sm:%s867]
        %905 = vst [vmem:[%s875 + $0x38] sm:%s867] %v904
        %v906 = vld [vmem:[%s874 + $0x3c] sm:%s867]
        %907 = vst [vmem:[%s875 + $0x3c] sm:%s867] %v906
        %v908 = vld [vmem:[%s874 + $0x40] sm:%s867]
        %909 = vst [vmem:[%s875 + $0x40] sm:%s867] %v908
        %v910 = vld [vmem:[%s874 + $0x50] sm:%s867]
        %911 = vst [vmem:[%s875 + $0x44] sm:%s867] %v910
        %v912 = vld [vmem:[%s874 + $0x44] sm:%s867]
        %913 = vst [vmem:[%s875 + $0x48] sm:%s867] %v912
        %v914 = vld [vmem:[%s874 + $0x54] sm:%s867]
        %915 = vst [vmem:[%s875 + $0x4c] sm:%s867] %v914
        %v916 = vld [vmem:[%s874 + $0x48] sm:%s867]
        %917 = vst [vmem:[%s875 + $0x50] sm:%s867] %v916
        %v918 = vld [vmem:[%s874 + $0x58] sm:%s867]
        %919 = vst [vmem:[%s875 + $0x54] sm:%s867] %v918
        %v920 = vld [vmem:[%s874 + $0x4c] sm:%s867]
        %921 = vst [vmem:[%s875 + $0x58] sm:%s867] %v920
        %v922 = vld [vmem:[%s874 + $0x5c] sm:%s867]
        %923 = vst [vmem:[%s875 + $0x5c] sm:%s867] %v922
        %v924 = vld [vmem:[%s874 + $0x60] sm:%s867]
        %925 = vst [vmem:[%s875 + $0x60] sm:%s867] %v924
        %v926 = vld [vmem:[%s874 + $0x70] sm:%s867]
        %927 = vst [vmem:[%s875 + $0x64] sm:%s867] %v926
        %v928 = vld [vmem:[%s874 + $0x64] sm:%s867]
        %929 = vst [vmem:[%s875 + $0x68] sm:%s867] %v928
        %v930 = vld [vmem:[%s874 + $0x74] sm:%s867]
        %931 = vst [vmem:[%s875 + $0x6c] sm:%s867] %v930
        %v932 = vld [vmem:[%s874 + $0x68] sm:%s867]
        %933 = vst [vmem:[%s875 + $0x70] sm:%s867] %v932
        %v934 = vld [vmem:[%s874 + $0x78] sm:%s867]
        %935 = vst [vmem:[%s875 + $0x74] sm:%s867] %v934
        %v936 = vld [vmem:[%s874 + $0x6c] sm:%s867]
        %937 = vst [vmem:[%s875 + $0x78] sm:%s867] %v936
        %v938 = vld [vmem:[%s874 + $0x7c] sm:%s867]
        %939 = vst [vmem:[%s875 + $0x7c] sm:%s867] %v938
        %v940 = vld [vmem:[%s874 + $0x80] sm:%s867]
        %941 = vst [vmem:[%s875 + $0x80] sm:%s867] %v940
        %v942 = vld [vmem:[%s874 + $0x90] sm:%s867]
        %943 = vst [vmem:[%s875 + $0x84] sm:%s867] %v942
        %v944 = vld [vmem:[%s874 + $0x84] sm:%s867]
        %945 = vst [vmem:[%s875 + $0x88] sm:%s867] %v944
        %v946 = vld [vmem:[%s874 + $0x94] sm:%s867]
        %947 = vst [vmem:[%s875 + $0x8c] sm:%s867] %v946
        %v948 = vld [vmem:[%s874 + $0x88] sm:%s867]
        %949 = vst [vmem:[%s875 + $0x90] sm:%s867] %v948
        %v950 = vld [vmem:[%s874 + $0x98] sm:%s867]
        %951 = vst [vmem:[%s875 + $0x94] sm:%s867] %v950
        %v952 = vld [vmem:[%s874 + $0x8c] sm:%s867]
        %953 = vst [vmem:[%s875 + $0x98] sm:%s867] %v952
        %v954 = vld [vmem:[%s874 + $0x9c] sm:%s867]
        %955 = vst [vmem:[%s875 + $0x9c] sm:%s867] %v954
        %v956 = vld [vmem:[%s874 + $0xa0] sm:%s867]
        %957 = vst [vmem:[%s875 + $0xa0] sm:%s867] %v956
        %v958 = vld [vmem:[%s874 + $0xb0] sm:%s867]
        %959 = vst [vmem:[%s875 + $0xa4] sm:%s867] %v958
        %v960 = vld [vmem:[%s874 + $0xa4] sm:%s867]
        %961 = vst [vmem:[%s875 + $0xa8] sm:%s867] %v960
        %v962 = vld [vmem:[%s874 + $0xb4] sm:%s867]
        %963 = vst [vmem:[%s875 + $0xac] sm:%s867] %v962
        %v964 = vld [vmem:[%s874 + $0xa8] sm:%s867]
        %965 = vst [vmem:[%s875 + $0xb0] sm:%s867] %v964
        %v966 = vld [vmem:[%s874 + $0xb8] sm:%s867]
        %967 = vst [vmem:[%s875 + $0xb4] sm:%s867] %v966
        %v968 = vld [vmem:[%s874 + $0xac] sm:%s867]
        %969 = vst [vmem:[%s875 + $0xb8] sm:%s867] %v968
        %v970 = vld [vmem:[%s874 + $0xbc] sm:%s867]
        %971 = vst [vmem:[%s875 + $0xbc] sm:%s867] %v970
        %v972 = vld [vmem:[%s874 + $0xc0] sm:%s867]
        %973 = vst [vmem:[%s875 + $0xc0] sm:%s867] %v972
        %v974 = vld [vmem:[%s874 + $0xd0] sm:%s867]
        %975 = vst [vmem:[%s875 + $0xc4] sm:%s867] %v974
        %v976 = vld [vmem:[%s874 + $0xc4] sm:%s867]
        %977 = vst [vmem:[%s875 + $0xc8] sm:%s867] %v976
        %v978 = vld [vmem:[%s874 + $0xd4] sm:%s867]
        %979 = vst [vmem:[%s875 + $0xcc] sm:%s867] %v978
        %v980 = vld [vmem:[%s874 + $0xc8] sm:%s867]
        %981 = vst [vmem:[%s875 + $0xd0] sm:%s867] %v980
        %v982 = vld [vmem:[%s874 + $0xd8] sm:%s867]
        %983 = vst [vmem:[%s875 + $0xd4] sm:%s867] %v982
        %v984 = vld [vmem:[%s874 + $0xcc] sm:%s867]
        %985 = vst [vmem:[%s875 + $0xd8] sm:%s867] %v984
        %v986 = vld [vmem:[%s874 + $0xdc] sm:%s867]
        %987 = vst [vmem:[%s875 + $0xdc] sm:%s867] %v986
        %v988 = vld [vmem:[%s874 + $0xe0] sm:%s867]
        %989 = vst [vmem:[%s875 + $0xe0] sm:%s867] %v988
        %v990 = vld [vmem:[%s874 + $0xf0] sm:%s867]
        %991 = vst [vmem:[%s875 + $0xe4] sm:%s867] %v990
        %v992 = vld [vmem:[%s874 + $0xe4] sm:%s867]
        %993 = vst [vmem:[%s875 + $0xe8] sm:%s867] %v992
        %v994 = vld [vmem:[%s874 + $0xf4] sm:%s867]
        %995 = vst [vmem:[%s875 + $0xec] sm:%s867] %v994
        %v996 = vld [vmem:[%s874 + $0xe8] sm:%s867]
        %997 = vst [vmem:[%s875 + $0xf0] sm:%s867] %v996
        %v998 = vld [vmem:[%s874 + $0xf8] sm:%s867]
        %999 = vst [vmem:[%s875 + $0xf4] sm:%s867] %v998
        %v1000 = vld [vmem:[%s874 + $0xec] sm:%s867]
        %1001 = vst [vmem:[%s875 + $0xf8] sm:%s867] %v1000
        %v1002 = vld [vmem:[%s874 + $0xfc] sm:%s867]
        %1003 = vst [vmem:[%s875 + $0xfc] sm:%s867] %v1002
      $region590: #{prompt_model_forward.1} parent=584 // loop_footer
        %s873 = sadd.s32 1, %s869
      $region591: #{prompt_model_forward.1} parent=584 // loop_footer_branch
        %868 = sbr.rel target = $region587
      $region592: #{prompt_model_forward.1} parent=584 // loop_exit
        _
    $region585: #{prompt_model_forward.1} parent=1 // pred_fallthru
      _
    // Predicated region
    $region611: #{prompt_model_forward.1} parent=1 // pred_check
      _
    $region612: #{prompt_model_forward.1} parent=1 // pred_check_branch
      %1161 = sbr.rel (0) target = $region614
    $region613: #{prompt_model_forward.1} parent=1 // pred_region
      %1162 = vsyncadd [#allocation7], 4096
    $region614: #{prompt_model_forward.1} parent=1 // pred_fallthru
      _
    %s1163 = scalar_lea.sflag [#allocation7], 1
    %p1165 = scmp.lt.u32.totalorder 256, 8
    %p1166 = pneg %p1165
    // Predicated region
    $region615: #{prompt_model_forward.1} parent=1 // pred_check
      _
    $region616: #{prompt_model_forward.1} parent=1 // pred_check_branch
      %1168 = sbr.rel (%p1165) target = $region618
    $region617: #{prompt_model_forward.1} parent=1 // pred_region
      %s1183 = sand.u32 256, 7
      %p1184 = scmp.eq.s32.totalorder %s1183, 0
      // Predicated region
      $region630: #{prompt_model_forward.1} parent=617 // pred_check
        %p1185 = pneg %p1184
      $region631: #{prompt_model_forward.1} parent=617 // pred_check_branch
        %1187 = sbr.rel (%p1185) target = $region633
      $region632: #{prompt_model_forward.1} parent=617 // pred_region
        loop: start=0, step=1, limit=1
        $region634: #{prompt_model_forward.1} parent=632 // loop_pre_header
          _
        $region635: #{prompt_model_forward.1} parent=632 // loop_header
          %s1189 = sphi 0, %s1193
          %p1190 = scmp.ge.s32.totalorder %s1189, 1
          %s1194 = sphi %s21, %s21
          %s1195 = sphi [#allocation4], [#allocation4]
        $region636: #{prompt_model_forward.1} parent=632 // loop_header_branch
          %1192 = sbr.rel (%p1190) target = $region640
        $region637: #{prompt_model_forward.1} parent=632 // loop_body
          %v1196 = vld [vmem:[%s1194] sm:$0xff]
          %1197 = vst [vmem:[%s1195] sm:$0xff] %v1196
          %v1198 = vld [vmem:[%s1194 + $0x8] sm:$0xff]
          %1199 = vst [vmem:[%s1195 + $0x8] sm:$0xff] %v1198
          %v1200 = vld [vmem:[%s1194 + $0x10] sm:$0xff]
          %1201 = vst [vmem:[%s1195 + $0x10] sm:$0xff] %v1200
          %v1202 = vld [vmem:[%s1194 + $0x18] sm:$0xff]
          %1203 = vst [vmem:[%s1195 + $0x18] sm:$0xff] %v1202
          %v1204 = vld [vmem:[%s1194 + $0x20] sm:$0xff]
          %1205 = vst [vmem:[%s1195 + $0x20] sm:$0xff] %v1204
          %v1206 = vld [vmem:[%s1194 + $0x28] sm:$0xff]
          %1207 = vst [vmem:[%s1195 + $0x28] sm:$0xff] %v1206
          %v1208 = vld [vmem:[%s1194 + $0x30] sm:$0xff]
          %1209 = vst [vmem:[%s1195 + $0x30] sm:$0xff] %v1208
          %v1210 = vld [vmem:[%s1194 + $0x38] sm:$0xff]
          %1211 = vst [vmem:[%s1195 + $0x38] sm:$0xff] %v1210
          %v1212 = vld [vmem:[%s1194 + $0x40] sm:$0xff]
          %1213 = vst [vmem:[%s1195 + $0x40] sm:$0xff] %v1212
          %v1214 = vld [vmem:[%s1194 + $0x48] sm:$0xff]
          %1215 = vst [vmem:[%s1195 + $0x48] sm:$0xff] %v1214
          %v1216 = vld [vmem:[%s1194 + $0x50] sm:$0xff]
          %1217 = vst [vmem:[%s1195 + $0x50] sm:$0xff] %v1216
          %v1218 = vld [vmem:[%s1194 + $0x58] sm:$0xff]
          %1219 = vst [vmem:[%s1195 + $0x58] sm:$0xff] %v1218
          %v1220 = vld [vmem:[%s1194 + $0x60] sm:$0xff]
          %1221 = vst [vmem:[%s1195 + $0x60] sm:$0xff] %v1220
          %v1222 = vld [vmem:[%s1194 + $0x68] sm:$0xff]
          %1223 = vst [vmem:[%s1195 + $0x68] sm:$0xff] %v1222
          %v1224 = vld [vmem:[%s1194 + $0x70] sm:$0xff]
          %1225 = vst [vmem:[%s1195 + $0x70] sm:$0xff] %v1224
          %v1226 = vld [vmem:[%s1194 + $0x78] sm:$0xff]
          %1227 = vst [vmem:[%s1195 + $0x78] sm:$0xff] %v1226
          %v1228 = vld [vmem:[%s1194 + $0x80] sm:$0xff]
          %1229 = vst [vmem:[%s1195 + $0x80] sm:$0xff] %v1228
          %v1230 = vld [vmem:[%s1194 + $0x88] sm:$0xff]
          %1231 = vst [vmem:[%s1195 + $0x88] sm:$0xff] %v1230
          %v1232 = vld [vmem:[%s1194 + $0x90] sm:$0xff]
          %1233 = vst [vmem:[%s1195 + $0x90] sm:$0xff] %v1232
          %v1234 = vld [vmem:[%s1194 + $0x98] sm:$0xff]
          %1235 = vst [vmem:[%s1195 + $0x98] sm:$0xff] %v1234
          %v1236 = vld [vmem:[%s1194 + $0xa0] sm:$0xff]
          %1237 = vst [vmem:[%s1195 + $0xa0] sm:$0xff] %v1236
          %v1238 = vld [vmem:[%s1194 + $0xa8] sm:$0xff]
          %1239 = vst [vmem:[%s1195 + $0xa8] sm:$0xff] %v1238
          %v1240 = vld [vmem:[%s1194 + $0xb0] sm:$0xff]
          %1241 = vst [vmem:[%s1195 + $0xb0] sm:$0xff] %v1240
          %v1242 = vld [vmem:[%s1194 + $0xb8] sm:$0xff]
          %1243 = vst [vmem:[%s1195 + $0xb8] sm:$0xff] %v1242
          %v1244 = vld [vmem:[%s1194 + $0xc0] sm:$0xff]
          %1245 = vst [vmem:[%s1195 + $0xc0] sm:$0xff] %v1244
          %v1246 = vld [vmem:[%s1194 + $0xc8] sm:$0xff]
          %1247 = vst [vmem:[%s1195 + $0xc8] sm:$0xff] %v1246
          %v1248 = vld [vmem:[%s1194 + $0xd0] sm:$0xff]
          %1249 = vst [vmem:[%s1195 + $0xd0] sm:$0xff] %v1248
          %v1250 = vld [vmem:[%s1194 + $0xd8] sm:$0xff]
          %1251 = vst [vmem:[%s1195 + $0xd8] sm:$0xff] %v1250
          %v1252 = vld [vmem:[%s1194 + $0xe0] sm:$0xff]
          %1253 = vst [vmem:[%s1195 + $0xe0] sm:$0xff] %v1252
          %v1254 = vld [vmem:[%s1194 + $0xe8] sm:$0xff]
          %1255 = vst [vmem:[%s1195 + $0xe8] sm:$0xff] %v1254
          %v1256 = vld [vmem:[%s1194 + $0xf0] sm:$0xff]
          %1257 = vst [vmem:[%s1195 + $0xf0] sm:$0xff] %v1256
          %v1258 = vld [vmem:[%s1194 + $0xf8] sm:$0xff]
          %1259 = vst [vmem:[%s1195 + $0xf8] sm:$0xff] %v1258
        $region638: #{prompt_model_forward.1} parent=632 // loop_footer
          %s1193 = sadd.s32 1, %s1189
        $region639: #{prompt_model_forward.1} parent=632 // loop_footer_branch
          %1188 = sbr.rel target = $region635
        $region640: #{prompt_model_forward.1} parent=632 // loop_exit
          _
      $region633: #{prompt_model_forward.1} parent=617 // pred_fallthru
        _
      %p1260 = pneg %p1184
      // Predicated region
      $region641: #{prompt_model_forward.1} parent=617 // pred_check
        _
      $region642: #{prompt_model_forward.1} parent=617 // pred_check_branch
        %1262 = sbr.rel (%p1184) target = $region644
      $region643: #{prompt_model_forward.1} parent=617 // pred_region
        %s1263 = sand.u32 256, 7
      $region644: #{prompt_model_forward.1} parent=617 // pred_fallthru
        _
    $region618: #{prompt_model_forward.1} parent=1 // pred_fallthru
      _
    // Predicated region
    $region619: #{prompt_model_forward.1} parent=1 // pred_check
      %p1169 = pneg %p1165
    $region620: #{prompt_model_forward.1} parent=1 // pred_check_branch
      %1171 = sbr.rel (%p1169) target = $region622
    $region621: #{prompt_model_forward.1} parent=1 // pred_region
      %s1172 = sshllo.u32 0, 256
      loop: start=0, step=1, limit=1
      $region623: #{prompt_model_forward.1} parent=621 // loop_pre_header
        _
      $region624: #{prompt_model_forward.1} parent=621 // loop_header
        %s1174 = sphi 0, %s1178
        %p1175 = scmp.ge.s32.totalorder %s1174, 1
        %s1179 = sphi %s21, %s21
        %s1180 = sphi [#allocation4], [#allocation4]
      $region625: #{prompt_model_forward.1} parent=621 // loop_header_branch
        %1177 = sbr.rel (%p1175) target = $region629
      $region626: #{prompt_model_forward.1} parent=621 // loop_body
        %v1181 = vld [vmem:[%s1179] sm:%s1172]
        %1182 = vst [vmem:[%s1180] sm:%s1172] %v1181
      $region627: #{prompt_model_forward.1} parent=621 // loop_footer
        %s1178 = sadd.s32 1, %s1174
      $region628: #{prompt_model_forward.1} parent=621 // loop_footer_branch
        %1173 = sbr.rel target = $region624
      $region629: #{prompt_model_forward.1} parent=621 // loop_exit
        _
    $region622: #{prompt_model_forward.1} parent=1 // pred_fallthru
      _
    // Predicated region
    $region645: #{prompt_model_forward.1} parent=1 // pred_check
      _
    $region646: #{prompt_model_forward.1} parent=1 // pred_check_branch
      %1266 = sbr.rel (0) target = $region648
    $region647: #{prompt_model_forward.1} parent=1 // pred_region
      %1267 = vsyncadd %s1163, 4096
    $region648: #{prompt_model_forward.1} parent=1 // pred_fallthru
      _
    %s1268 = scalar_lea.sflag [#allocation7], 2
    %p1270 = scmp.lt.u32.totalorder 4, 8
    %p1271 = pneg %p1270
    // Predicated region
    $region649: #{prompt_model_forward.1} parent=1 // pred_check
      _
    $region650: #{prompt_model_forward.1} parent=1 // pred_check_branch
      %1273 = sbr.rel (%p1270) target = $region652
    $region651: #{prompt_model_forward.1} parent=1 // pred_region
      %s1414 = sand.u32 4, 7
      %p1415 = scmp.eq.s32.totalorder %s1414, 0
      %p1416 = pneg %p1415
      // Predicated region
      $region664: #{prompt_model_forward.1} parent=651 // pred_check
        _
      $region665: #{prompt_model_forward.1} parent=651 // pred_check_branch
        %1418 = sbr.rel (%p1415) target = $region667
      $region666: #{prompt_model_forward.1} parent=651 // pred_region
        %s1419 = sand.u32 4, 7
        %s1420 = ssub.s32 4, %s1419
        %s1421 = scalar_lea.vmem %s25, %s1420
        %s1422 = ssub.s32 4, %s1419
        %s1423 = scalar_lea.vmem [#allocation5], %s1422
        loop: start=0, step=1, limit=1
        $region668: #{prompt_model_forward.1} parent=666 // loop_pre_header
          _
        $region669: #{prompt_model_forward.1} parent=666 // loop_header
          %s1425 = sphi 0, %s1429
          %p1426 = scmp.ge.s32.totalorder %s1425, 1
          %s1430 = sphi %s25, %s25
          %s1431 = sphi [#allocation5], [#allocation5]
        $region670: #{prompt_model_forward.1} parent=666 // loop_header_branch
          %1428 = sbr.rel (%p1426) target = $region674
        $region671: #{prompt_model_forward.1} parent=666 // loop_body
          _
        $region672: #{prompt_model_forward.1} parent=666 // loop_footer
          %s1429 = sadd.s32 1, %s1425
        $region673: #{prompt_model_forward.1} parent=666 // loop_footer_branch
          %1424 = sbr.rel target = $region669
        $region674: #{prompt_model_forward.1} parent=666 // loop_exit
          _
        %s1432 = sshllo.u32 0, %s1419
        loop: start=0, step=1, limit=1
        $region675: #{prompt_model_forward.1} parent=666 // loop_pre_header
          _
        $region676: #{prompt_model_forward.1} parent=666 // loop_header
          %s1434 = sphi 0, %s1438
          %p1435 = scmp.ge.s32.totalorder %s1434, 1
          %s1439 = sphi %s1421, %s1421
          %s1440 = sphi %s1423, %s1423
        $region677: #{prompt_model_forward.1} parent=666 // loop_header_branch
          %1437 = sbr.rel (%p1435) target = $region681
        $region678: #{prompt_model_forward.1} parent=666 // loop_body
          %v1441 = vld [vmem:[%s1439] sm:%s1432]
          %1442 = vst [vmem:[%s1440] sm:%s1432] %v1441
          %v1443 = vld [vmem:[%s1439 + $0x10] sm:%s1432]
          %1444 = vst [vmem:[%s1440 + $0x4] sm:%s1432] %v1443
          %v1445 = vld [vmem:[%s1439 + $0x4] sm:%s1432]
          %1446 = vst [vmem:[%s1440 + $0x8] sm:%s1432] %v1445
          %v1447 = vld [vmem:[%s1439 + $0x14] sm:%s1432]
          %1448 = vst [vmem:[%s1440 + $0xc] sm:%s1432] %v1447
          %v1449 = vld [vmem:[%s1439 + $0x8] sm:%s1432]
          %1450 = vst [vmem:[%s1440 + $0x10] sm:%s1432] %v1449
          %v1451 = vld [vmem:[%s1439 + $0x18] sm:%s1432]
          %1452 = vst [vmem:[%s1440 + $0x14] sm:%s1432] %v1451
          %v1453 = vld [vmem:[%s1439 + $0xc] sm:%s1432]
          %1454 = vst [vmem:[%s1440 + $0x18] sm:%s1432] %v1453
          %v1455 = vld [vmem:[%s1439 + $0x1c] sm:%s1432]
          %1456 = vst [vmem:[%s1440 + $0x1c] sm:%s1432] %v1455
          %v1457 = vld [vmem:[%s1439 + $0x20] sm:%s1432]
          %1458 = vst [vmem:[%s1440 + $0x20] sm:%s1432] %v1457
          %v1459 = vld [vmem:[%s1439 + $0x30] sm:%s1432]
          %1460 = vst [vmem:[%s1440 + $0x24] sm:%s1432] %v1459
          %v1461 = vld [vmem:[%s1439 + $0x24] sm:%s1432]
          %1462 = vst [vmem:[%s1440 + $0x28] sm:%s1432] %v1461
          %v1463 = vld [vmem:[%s1439 + $0x34] sm:%s1432]
          %1464 = vst [vmem:[%s1440 + $0x2c] sm:%s1432] %v1463
          %v1465 = vld [vmem:[%s1439 + $0x28] sm:%s1432]
          %1466 = vst [vmem:[%s1440 + $0x30] sm:%s1432] %v1465
          %v1467 = vld [vmem:[%s1439 + $0x38] sm:%s1432]
          %1468 = vst [vmem:[%s1440 + $0x34] sm:%s1432] %v1467
          %v1469 = vld [vmem:[%s1439 + $0x2c] sm:%s1432]
          %1470 = vst [vmem:[%s1440 + $0x38] sm:%s1432] %v1469
          %v1471 = vld [vmem:[%s1439 + $0x3c] sm:%s1432]
          %1472 = vst [vmem:[%s1440 + $0x3c] sm:%s1432] %v1471
          %v1473 = vld [vmem:[%s1439 + $0x40] sm:%s1432]
          %1474 = vst [vmem:[%s1440 + $0x40] sm:%s1432] %v1473
          %v1475 = vld [vmem:[%s1439 + $0x50] sm:%s1432]
          %1476 = vst [vmem:[%s1440 + $0x44] sm:%s1432] %v1475
          %v1477 = vld [vmem:[%s1439 + $0x44] sm:%s1432]
          %1478 = vst [vmem:[%s1440 + $0x48] sm:%s1432] %v1477
          %v1479 = vld [vmem:[%s1439 + $0x54] sm:%s1432]
          %1480 = vst [vmem:[%s1440 + $0x4c] sm:%s1432] %v1479
          %v1481 = vld [vmem:[%s1439 + $0x48] sm:%s1432]
          %1482 = vst [vmem:[%s1440 + $0x50] sm:%s1432] %v1481
          %v1483 = vld [vmem:[%s1439 + $0x58] sm:%s1432]
          %1484 = vst [vmem:[%s1440 + $0x54] sm:%s1432] %v1483
          %v1485 = vld [vmem:[%s1439 + $0x4c] sm:%s1432]
          %1486 = vst [vmem:[%s1440 + $0x58] sm:%s1432] %v1485
          %v1487 = vld [vmem:[%s1439 + $0x5c] sm:%s1432]
          %1488 = vst [vmem:[%s1440 + $0x5c] sm:%s1432] %v1487
          %v1489 = vld [vmem:[%s1439 + $0x60] sm:%s1432]
          %1490 = vst [vmem:[%s1440 + $0x60] sm:%s1432] %v1489
          %v1491 = vld [vmem:[%s1439 + $0x70] sm:%s1432]
          %1492 = vst [vmem:[%s1440 + $0x64] sm:%s1432] %v1491
          %v1493 = vld [vmem:[%s1439 + $0x64] sm:%s1432]
          %1494 = vst [vmem:[%s1440 + $0x68] sm:%s1432] %v1493
          %v1495 = vld [vmem:[%s1439 + $0x74] sm:%s1432]
          %1496 = vst [vmem:[%s1440 + $0x6c] sm:%s1432] %v1495
          %v1497 = vld [vmem:[%s1439 + $0x68] sm:%s1432]
          %1498 = vst [vmem:[%s1440 + $0x70] sm:%s1432] %v1497
          %v1499 = vld [vmem:[%s1439 + $0x78] sm:%s1432]
          %1500 = vst [vmem:[%s1440 + $0x74] sm:%s1432] %v1499
          %v1501 = vld [vmem:[%s1439 + $0x6c] sm:%s1432]
          %1502 = vst [vmem:[%s1440 + $0x78] sm:%s1432] %v1501
          %v1503 = vld [vmem:[%s1439 + $0x7c] sm:%s1432]
          %1504 = vst [vmem:[%s1440 + $0x7c] sm:%s1432] %v1503
          %v1505 = vld [vmem:[%s1439 + $0x80] sm:%s1432]
          %1506 = vst [vmem:[%s1440 + $0x80] sm:%s1432] %v1505
          %v1507 = vld [vmem:[%s1439 + $0x90] sm:%s1432]
          %1508 = vst [vmem:[%s1440 + $0x84] sm:%s1432] %v1507
          %v1509 = vld [vmem:[%s1439 + $0x84] sm:%s1432]
          %1510 = vst [vmem:[%s1440 + $0x88] sm:%s1432] %v1509
          %v1511 = vld [vmem:[%s1439 + $0x94] sm:%s1432]
          %1512 = vst [vmem:[%s1440 + $0x8c] sm:%s1432] %v1511
          %v1513 = vld [vmem:[%s1439 + $0x88] sm:%s1432]
          %1514 = vst [vmem:[%s1440 + $0x90] sm:%s1432] %v1513
          %v1515 = vld [vmem:[%s1439 + $0x98] sm:%s1432]
          %1516 = vst [vmem:[%s1440 + $0x94] sm:%s1432] %v1515
          %v1517 = vld [vmem:[%s1439 + $0x8c] sm:%s1432]
          %1518 = vst [vmem:[%s1440 + $0x98] sm:%s1432] %v1517
          %v1519 = vld [vmem:[%s1439 + $0x9c] sm:%s1432]
          %1520 = vst [vmem:[%s1440 + $0x9c] sm:%s1432] %v1519
          %v1521 = vld [vmem:[%s1439 + $0xa0] sm:%s1432]
          %1522 = vst [vmem:[%s1440 + $0xa0] sm:%s1432] %v1521
          %v1523 = vld [vmem:[%s1439 + $0xb0] sm:%s1432]
          %1524 = vst [vmem:[%s1440 + $0xa4] sm:%s1432] %v1523
          %v1525 = vld [vmem:[%s1439 + $0xa4] sm:%s1432]
          %1526 = vst [vmem:[%s1440 + $0xa8] sm:%s1432] %v1525
          %v1527 = vld [vmem:[%s1439 + $0xb4] sm:%s1432]
          %1528 = vst [vmem:[%s1440 + $0xac] sm:%s1432] %v1527
          %v1529 = vld [vmem:[%s1439 + $0xa8] sm:%s1432]
          %1530 = vst [vmem:[%s1440 + $0xb0] sm:%s1432] %v1529
          %v1531 = vld [vmem:[%s1439 + $0xb8] sm:%s1432]
          %1532 = vst [vmem:[%s1440 + $0xb4] sm:%s1432] %v1531
          %v1533 = vld [vmem:[%s1439 + $0xac] sm:%s1432]
          %1534 = vst [vmem:[%s1440 + $0xb8] sm:%s1432] %v1533
          %v1535 = vld [vmem:[%s1439 + $0xbc] sm:%s1432]
          %1536 = vst [vmem:[%s1440 + $0xbc] sm:%s1432] %v1535
          %v1537 = vld [vmem:[%s1439 + $0xc0] sm:%s1432]
          %1538 = vst [vmem:[%s1440 + $0xc0] sm:%s1432] %v1537
          %v1539 = vld [vmem:[%s1439 + $0xd0] sm:%s1432]
          %1540 = vst [vmem:[%s1440 + $0xc4] sm:%s1432] %v1539
          %v1541 = vld [vmem:[%s1439 + $0xc4] sm:%s1432]
          %1542 = vst [vmem:[%s1440 + $0xc8] sm:%s1432] %v1541
          %v1543 = vld [vmem:[%s1439 + $0xd4] sm:%s1432]
          %1544 = vst [vmem:[%s1440 + $0xcc] sm:%s1432] %v1543
          %v1545 = vld [vmem:[%s1439 + $0xc8] sm:%s1432]
          %1546 = vst [vmem:[%s1440 + $0xd0] sm:%s1432] %v1545
          %v1547 = vld [vmem:[%s1439 + $0xd8] sm:%s1432]
          %1548 = vst [vmem:[%s1440 + $0xd4] sm:%s1432] %v1547
          %v1549 = vld [vmem:[%s1439 + $0xcc] sm:%s1432]
          %1550 = vst [vmem:[%s1440 + $0xd8] sm:%s1432] %v1549
          %v1551 = vld [vmem:[%s1439 + $0xdc] sm:%s1432]
          %1552 = vst [vmem:[%s1440 + $0xdc] sm:%s1432] %v1551
          %v1553 = vld [vmem:[%s1439 + $0xe0] sm:%s1432]
          %1554 = vst [vmem:[%s1440 + $0xe0] sm:%s1432] %v1553
          %v1555 = vld [vmem:[%s1439 + $0xf0] sm:%s1432]
          %1556 = vst [vmem:[%s1440 + $0xe4] sm:%s1432] %v1555
          %v1557 = vld [vmem:[%s1439 + $0xe4] sm:%s1432]
          %1558 = vst [vmem:[%s1440 + $0xe8] sm:%s1432] %v1557
          %v1559 = vld [vmem:[%s1439 + $0xf4] sm:%s1432]
          %1560 = vst [vmem:[%s1440 + $0xec] sm:%s1432] %v1559
          %v1561 = vld [vmem:[%s1439 + $0xe8] sm:%s1432]
          %1562 = vst [vmem:[%s1440 + $0xf0] sm:%s1432] %v1561
          %v1563 = vld [vmem:[%s1439 + $0xf8] sm:%s1432]
          %1564 = vst [vmem:[%s1440 + $0xf4] sm:%s1432] %v1563
          %v1565 = vld [vmem:[%s1439 + $0xec] sm:%s1432]
          %1566 = vst [vmem:[%s1440 + $0xf8] sm:%s1432] %v1565
          %v1567 = vld [vmem:[%s1439 + $0xfc] sm:%s1432]
          %1568 = vst [vmem:[%s1440 + $0xfc] sm:%s1432] %v1567
        $region679: #{prompt_model_forward.1} parent=666 // loop_footer
          %s1438 = sadd.s32 1, %s1434
        $region680: #{prompt_model_forward.1} parent=666 // loop_footer_branch
          %1433 = sbr.rel target = $region676
        $region681: #{prompt_model_forward.1} parent=666 // loop_exit
          _
      $region667: #{prompt_model_forward.1} parent=651 // pred_fallthru
        _
    $region652: #{prompt_model_forward.1} parent=1 // pred_fallthru
      _
    // Predicated region
    $region653: #{prompt_model_forward.1} parent=1 // pred_check
      %p1274 = pneg %p1270
    $region654: #{prompt_model_forward.1} parent=1 // pred_check_branch
      %1276 = sbr.rel (%p1274) target = $region656
    $region655: #{prompt_model_forward.1} parent=1 // pred_region
      %s1277 = sshllo.u32 0, 4
      loop: start=0, step=1, limit=1
      $region657: #{prompt_model_forward.1} parent=655 // loop_pre_header
        _
      $region658: #{prompt_model_forward.1} parent=655 // loop_header
        %s1279 = sphi 0, %s1283
        %p1280 = scmp.ge.s32.totalorder %s1279, 1
        %s1284 = sphi %s25, %s25
        %s1285 = sphi [#allocation5], [#allocation5]
      $region659: #{prompt_model_forward.1} parent=655 // loop_header_branch
        %1282 = sbr.rel (%p1280) target = $region663
      $region660: #{prompt_model_forward.1} parent=655 // loop_body
        %v1286 = vld [vmem:[%s1284] sm:%s1277]
        %1287 = vst [vmem:[%s1285] sm:%s1277] %v1286
        %v1288 = vld [vmem:[%s1284 + $0x10] sm:%s1277]
        %1289 = vst [vmem:[%s1285 + $0x4] sm:%s1277] %v1288
        %v1290 = vld [vmem:[%s1284 + $0x4] sm:%s1277]
        %1291 = vst [vmem:[%s1285 + $0x8] sm:%s1277] %v1290
        %v1292 = vld [vmem:[%s1284 + $0x14] sm:%s1277]
        %1293 = vst [vmem:[%s1285 + $0xc] sm:%s1277] %v1292
        %v1294 = vld [vmem:[%s1284 + $0x8] sm:%s1277]
        %1295 = vst [vmem:[%s1285 + $0x10] sm:%s1277] %v1294
        %v1296 = vld [vmem:[%s1284 + $0x18] sm:%s1277]
        %1297 = vst [vmem:[%s1285 + $0x14] sm:%s1277] %v1296
        %v1298 = vld [vmem:[%s1284 + $0xc] sm:%s1277]
        %1299 = vst [vmem:[%s1285 + $0x18] sm:%s1277] %v1298
        %v1300 = vld [vmem:[%s1284 + $0x1c] sm:%s1277]
        %1301 = vst [vmem:[%s1285 + $0x1c] sm:%s1277] %v1300
        %v1302 = vld [vmem:[%s1284 + $0x20] sm:%s1277]
        %1303 = vst [vmem:[%s1285 + $0x20] sm:%s1277] %v1302
        %v1304 = vld [vmem:[%s1284 + $0x30] sm:%s1277]
        %1305 = vst [vmem:[%s1285 + $0x24] sm:%s1277] %v1304
        %v1306 = vld [vmem:[%s1284 + $0x24] sm:%s1277]
        %1307 = vst [vmem:[%s1285 + $0x28] sm:%s1277] %v1306
        %v1308 = vld [vmem:[%s1284 + $0x34] sm:%s1277]
        %1309 = vst [vmem:[%s1285 + $0x2c] sm:%s1277] %v1308
        %v1310 = vld [vmem:[%s1284 + $0x28] sm:%s1277]
        %1311 = vst [vmem:[%s1285 + $0x30] sm:%s1277] %v1310
        %v1312 = vld [vmem:[%s1284 + $0x38] sm:%s1277]
        %1313 = vst [vmem:[%s1285 + $0x34] sm:%s1277] %v1312
        %v1314 = vld [vmem:[%s1284 + $0x2c] sm:%s1277]
        %1315 = vst [vmem:[%s1285 + $0x38] sm:%s1277] %v1314
        %v1316 = vld [vmem:[%s1284 + $0x3c] sm:%s1277]
        %1317 = vst [vmem:[%s1285 + $0x3c] sm:%s1277] %v1316
        %v1318 = vld [vmem:[%s1284 + $0x40] sm:%s1277]
        %1319 = vst [vmem:[%s1285 + $0x40] sm:%s1277] %v1318
        %v1320 = vld [vmem:[%s1284 + $0x50] sm:%s1277]
        %1321 = vst [vmem:[%s1285 + $0x44] sm:%s1277] %v1320
        %v1322 = vld [vmem:[%s1284 + $0x44] sm:%s1277]
        %1323 = vst [vmem:[%s1285 + $0x48] sm:%s1277] %v1322
        %v1324 = vld [vmem:[%s1284 + $0x54] sm:%s1277]
        %1325 = vst [vmem:[%s1285 + $0x4c] sm:%s1277] %v1324
        %v1326 = vld [vmem:[%s1284 + $0x48] sm:%s1277]
        %1327 = vst [vmem:[%s1285 + $0x50] sm:%s1277] %v1326
        %v1328 = vld [vmem:[%s1284 + $0x58] sm:%s1277]
        %1329 = vst [vmem:[%s1285 + $0x54] sm:%s1277] %v1328
        %v1330 = vld [vmem:[%s1284 + $0x4c] sm:%s1277]
        %1331 = vst [vmem:[%s1285 + $0x58] sm:%s1277] %v1330
        %v1332 = vld [vmem:[%s1284 + $0x5c] sm:%s1277]
        %1333 = vst [vmem:[%s1285 + $0x5c] sm:%s1277] %v1332
        %v1334 = vld [vmem:[%s1284 + $0x60] sm:%s1277]
        %1335 = vst [vmem:[%s1285 + $0x60] sm:%s1277] %v1334
        %v1336 = vld [vmem:[%s1284 + $0x70] sm:%s1277]
        %1337 = vst [vmem:[%s1285 + $0x64] sm:%s1277] %v1336
        %v1338 = vld [vmem:[%s1284 + $0x64] sm:%s1277]
        %1339 = vst [vmem:[%s1285 + $0x68] sm:%s1277] %v1338
        %v1340 = vld [vmem:[%s1284 + $0x74] sm:%s1277]
        %1341 = vst [vmem:[%s1285 + $0x6c] sm:%s1277] %v1340
        %v1342 = vld [vmem:[%s1284 + $0x68] sm:%s1277]
        %1343 = vst [vmem:[%s1285 + $0x70] sm:%s1277] %v1342
        %v1344 = vld [vmem:[%s1284 + $0x78] sm:%s1277]
        %1345 = vst [vmem:[%s1285 + $0x74] sm:%s1277] %v1344
        %v1346 = vld [vmem:[%s1284 + $0x6c] sm:%s1277]
        %1347 = vst [vmem:[%s1285 + $0x78] sm:%s1277] %v1346
        %v1348 = vld [vmem:[%s1284 + $0x7c] sm:%s1277]
        %1349 = vst [vmem:[%s1285 + $0x7c] sm:%s1277] %v1348
        %v1350 = vld [vmem:[%s1284 + $0x80] sm:%s1277]
        %1351 = vst [vmem:[%s1285 + $0x80] sm:%s1277] %v1350
        %v1352 = vld [vmem:[%s1284 + $0x90] sm:%s1277]
        %1353 = vst [vmem:[%s1285 + $0x84] sm:%s1277] %v1352
        %v1354 = vld [vmem:[%s1284 + $0x84] sm:%s1277]
        %1355 = vst [vmem:[%s1285 + $0x88] sm:%s1277] %v1354
        %v1356 = vld [vmem:[%s1284 + $0x94] sm:%s1277]
        %1357 = vst [vmem:[%s1285 + $0x8c] sm:%s1277] %v1356
        %v1358 = vld [vmem:[%s1284 + $0x88] sm:%s1277]
        %1359 = vst [vmem:[%s1285 + $0x90] sm:%s1277] %v1358
        %v1360 = vld [vmem:[%s1284 + $0x98] sm:%s1277]
        %1361 = vst [vmem:[%s1285 + $0x94] sm:%s1277] %v1360
        %v1362 = vld [vmem:[%s1284 + $0x8c] sm:%s1277]
        %1363 = vst [vmem:[%s1285 + $0x98] sm:%s1277] %v1362
        %v1364 = vld [vmem:[%s1284 + $0x9c] sm:%s1277]
        %1365 = vst [vmem:[%s1285 + $0x9c] sm:%s1277] %v1364
        %v1366 = vld [vmem:[%s1284 + $0xa0] sm:%s1277]
        %1367 = vst [vmem:[%s1285 + $0xa0] sm:%s1277] %v1366
        %v1368 = vld [vmem:[%s1284 + $0xb0] sm:%s1277]
        %1369 = vst [vmem:[%s1285 + $0xa4] sm:%s1277] %v1368
        %v1370 = vld [vmem:[%s1284 + $0xa4] sm:%s1277]
        %1371 = vst [vmem:[%s1285 + $0xa8] sm:%s1277] %v1370
        %v1372 = vld [vmem:[%s1284 + $0xb4] sm:%s1277]
        %1373 = vst [vmem:[%s1285 + $0xac] sm:%s1277] %v1372
        %v1374 = vld [vmem:[%s1284 + $0xa8] sm:%s1277]
        %1375 = vst [vmem:[%s1285 + $0xb0] sm:%s1277] %v1374
        %v1376 = vld [vmem:[%s1284 + $0xb8] sm:%s1277]
        %1377 = vst [vmem:[%s1285 + $0xb4] sm:%s1277] %v1376
        %v1378 = vld [vmem:[%s1284 + $0xac] sm:%s1277]
        %1379 = vst [vmem:[%s1285 + $0xb8] sm:%s1277] %v1378
        %v1380 = vld [vmem:[%s1284 + $0xbc] sm:%s1277]
        %1381 = vst [vmem:[%s1285 + $0xbc] sm:%s1277] %v1380
        %v1382 = vld [vmem:[%s1284 + $0xc0] sm:%s1277]
        %1383 = vst [vmem:[%s1285 + $0xc0] sm:%s1277] %v1382
        %v1384 = vld [vmem:[%s1284 + $0xd0] sm:%s1277]
        %1385 = vst [vmem:[%s1285 + $0xc4] sm:%s1277] %v1384
        %v1386 = vld [vmem:[%s1284 + $0xc4] sm:%s1277]
        %1387 = vst [vmem:[%s1285 + $0xc8] sm:%s1277] %v1386
        %v1388 = vld [vmem:[%s1284 + $0xd4] sm:%s1277]
        %1389 = vst [vmem:[%s1285 + $0xcc] sm:%s1277] %v1388
        %v1390 = vld [vmem:[%s1284 + $0xc8] sm:%s1277]
        %1391 = vst [vmem:[%s1285 + $0xd0] sm:%s1277] %v1390
        %v1392 = vld [vmem:[%s1284 + $0xd8] sm:%s1277]
        %1393 = vst [vmem:[%s1285 + $0xd4] sm:%s1277] %v1392
        %v1394 = vld [vmem:[%s1284 + $0xcc] sm:%s1277]
        %1395 = vst [vmem:[%s1285 + $0xd8] sm:%s1277] %v1394
        %v1396 = vld [vmem:[%s1284 + $0xdc] sm:%s1277]
        %1397 = vst [vmem:[%s1285 + $0xdc] sm:%s1277] %v1396
        %v1398 = vld [vmem:[%s1284 + $0xe0] sm:%s1277]
        %1399 = vst [vmem:[%s1285 + $0xe0] sm:%s1277] %v1398
        %v1400 = vld [vmem:[%s1284 + $0xf0] sm:%s1277]
        %1401 = vst [vmem:[%s1285 + $0xe4] sm:%s1277] %v1400
        %v1402 = vld [vmem:[%s1284 + $0xe4] sm:%s1277]
        %1403 = vst [vmem:[%s1285 + $0xe8] sm:%s1277] %v1402
        %v1404 = vld [vmem:[%s1284 + $0xf4] sm:%s1277]
        %1405 = vst [vmem:[%s1285 + $0xec] sm:%s1277] %v1404
        %v1406 = vld [vmem:[%s1284 + $0xe8] sm:%s1277]
        %1407 = vst [vmem:[%s1285 + $0xf0] sm:%s1277] %v1406
        %v1408 = vld [vmem:[%s1284 + $0xf8] sm:%s1277]
        %1409 = vst [vmem:[%s1285 + $0xf4] sm:%s1277] %v1408
        %v1410 = vld [vmem:[%s1284 + $0xec] sm:%s1277]
        %1411 = vst [vmem:[%s1285 + $0xf8] sm:%s1277] %v1410
        %v1412 = vld [vmem:[%s1284 + $0xfc] sm:%s1277]
        %1413 = vst [vmem:[%s1285 + $0xfc] sm:%s1277] %v1412
      $region661: #{prompt_model_forward.1} parent=655 // loop_footer
        %s1283 = sadd.s32 1, %s1279
      $region662: #{prompt_model_forward.1} parent=655 // loop_footer_branch
        %1278 = sbr.rel target = $region658
      $region663: #{prompt_model_forward.1} parent=655 // loop_exit
        _
    $region656: #{prompt_model_forward.1} parent=1 // pred_fallthru
      _
    // Predicated region
    $region682: #{prompt_model_forward.1} parent=1 // pred_check
      _
    $region683: #{prompt_model_forward.1} parent=1 // pred_check_branch
      %1571 = sbr.rel (0) target = $region685
    $region684: #{prompt_model_forward.1} parent=1 // pred_region
      %1572 = vsyncadd %s1268, 4096
    $region685: #{prompt_model_forward.1} parent=1 // pred_fallthru
      _
    %v1573 = vld [vmem:[%s1] sm:$0xff]
    %v1574 = vld [vmem:[%s1 + $0x8] sm:$0xff]
    %v1575 = vld [vmem:[%s1 + $0x10] sm:$0xff]
    %v1576 = vld [vmem:[%s1 + $0x18] sm:$0xff]
    %v1577 = vld [vmem:[%s1 + $0x20] sm:$0xff]
    %v1578 = vld [vmem:[%s1 + $0x28] sm:$0xff]
    %v1579 = vld [vmem:[%s4] sm:$0xf]
    %v1580 = vld [vmem:[%s4 + $0x4] sm:$0xf]
    %v1581 = vld [vmem:[%s4 + $0x8] sm:$0xf]
    %v1582 = vld [vmem:[%s4 + $0xc] sm:$0xf]
    %v1583 = vld [vmem:[%s4 + $0x10] sm:$0xf]
    %v1584 = vld [vmem:[%s4 + $0x14] sm:$0xf]
    %v1585 = vld [vmem:[%s4 + $0x18] sm:$0xf]
    %v1586 = vld [vmem:[%s4 + $0x1c] sm:$0xf]
    %v1587 = vld [vmem:[%s4 + $0x20] sm:$0xf]
    %v1588 = vld [vmem:[%s4 + $0x24] sm:$0xf]
    %v1589 = vld [vmem:[%s4 + $0x28] sm:$0xf]
    %v1590 = vld [vmem:[%s4 + $0x2c] sm:$0xf]
    %v1591 = vld [vmem:[%s4 + $0x30] sm:$0xf]
    %v1592 = vld [vmem:[%s4 + $0x34] sm:$0xf]
    %v1593 = vld [vmem:[%s4 + $0x38] sm:$0xf]
    %v1594 = vld [vmem:[%s4 + $0x3c] sm:$0xf]
    %v1595 = vld [vmem:[%s4 + $0x40] sm:$0xf]
    %v1596 = vld [vmem:[%s4 + $0x44] sm:$0xf]
    %v1597 = vld [vmem:[%s4 + $0x48] sm:$0xf]
    %v1598 = vld [vmem:[%s4 + $0x4c] sm:$0xf]
    %v1599 = vld [vmem:[%s4 + $0x50] sm:$0xf]
    %v1600 = vld [vmem:[%s4 + $0x54] sm:$0xf]
    %v1601 = vld [vmem:[%s4 + $0x58] sm:$0xf]
    %v1602 = vld [vmem:[%s4 + $0x5c] sm:$0xf]
    %v1603 = vld [vmem:[%s4 + $0x60] sm:$0xf]
    %v1604 = vld [vmem:[%s4 + $0x64] sm:$0xf]
    %v1605 = vld [vmem:[%s4 + $0x68] sm:$0xf]
    %v1606 = vld [vmem:[%s4 + $0x6c] sm:$0xf]
    %v1607 = vld [vmem:[%s4 + $0x70] sm:$0xf]
    %v1608 = vld [vmem:[%s4 + $0x74] sm:$0xf]
    %v1609 = vld [vmem:[%s4 + $0x78] sm:$0xf]
    %v1610 = vld [vmem:[%s4 + $0x7c] sm:$0xf]
    %v1611 = vld [vmem:[%s4 + $0x80] sm:$0xf]
    %v1612 = vld [vmem:[%s4 + $0x84] sm:$0xf]
    %v1613 = vld [vmem:[%s4 + $0x88] sm:$0xf]
    %v1614 = vld [vmem:[%s4 + $0x8c] sm:$0xf]
    %v1615 = vld [vmem:[%s4 + $0x90] sm:$0xf]
    %v1616 = vld [vmem:[%s4 + $0x94] sm:$0xf]
    %v1617 = vld [vmem:[%s4 + $0x98] sm:$0xf]
    %v1618 = vld [vmem:[%s4 + $0x9c] sm:$0xf]
    %v1619 = vld [vmem:[%s4 + $0xa0] sm:$0xf]
    %v1620 = vld [vmem:[%s4 + $0xa4] sm:$0xf]
    %v1621 = vld [vmem:[%s4 + $0xa8] sm:$0xf]
    %v1622 = vld [vmem:[%s4 + $0xac] sm:$0xf]
    %v1623 = vld [vmem:[%s4 + $0xb0] sm:$0xf]
    %v1624 = vld [vmem:[%s4 + $0xb4] sm:$0xf]
    %v1625 = vld [vmem:[%s4 + $0xb8] sm:$0xf]
    %v1626 = vld [vmem:[%s4 + $0xbc] sm:$0xf]
    %v1627 = vld [vmem:[%s4 + $0xc0] sm:$0xf]
    %v1628 = vld [vmem:[%s4 + $0xc4] sm:$0xf]
    %v1629 = vld [vmem:[%s4 + $0xc8] sm:$0xf]
    %v1630 = vld [vmem:[%s4 + $0xcc] sm:$0xf]
    %v1631 = vld [vmem:[%s4 + $0xd0] sm:$0xf]
    %v1632 = vld [vmem:[%s4 + $0xd4] sm:$0xf]
    %v1633 = vld [vmem:[%s4 + $0xd8] sm:$0xf]
    %v1634 = vld [vmem:[%s4 + $0xdc] sm:$0xf]
    %v1635 = vld [vmem:[%s4 + $0xe0] sm:$0xf]
    %v1636 = vld [vmem:[%s4 + $0xe4] sm:$0xf]
    %v1637 = vld [vmem:[%s4 + $0xe8] sm:$0xf]
    %v1638 = vld [vmem:[%s4 + $0xec] sm:$0xf]
    %v1639 = vld [vmem:[%s4 + $0xf0] sm:$0xf]
    %v1640 = vld [vmem:[%s4 + $0xf4] sm:$0xf]
    %v1641 = vld [vmem:[%s4 + $0xf8] sm:$0xf]
    %v1642 = vld [vmem:[%s4 + $0xfc] sm:$0xf]
    %v1643 = vld [vmem:[%s4 + $0x100] sm:$0xf]
    %v1644 = vld [vmem:[%s4 + $0x104] sm:$0xf]
    %v1645 = vld [vmem:[%s4 + $0x108] sm:$0xf]
    %v1646 = vld [vmem:[%s4 + $0x10c] sm:$0xf]
    %v1647 = vld [vmem:[%s4 + $0x110] sm:$0xf]
    %v1648 = vld [vmem:[%s4 + $0x114] sm:$0xf]
    %v1649 = vld [vmem:[%s4 + $0x118] sm:$0xf]
    %v1650 = vld [vmem:[%s4 + $0x11c] sm:$0xf]
    %v1651 = vld [vmem:[%s4 + $0x120] sm:$0xf]
    %v1652 = vld [vmem:[%s4 + $0x124] sm:$0xf]
    %v1653 = vld [vmem:[%s4 + $0x128] sm:$0xf]
    %v1654 = vld [vmem:[%s4 + $0x12c] sm:$0xf]
    %v1655 = vld [vmem:[%s4 + $0x130] sm:$0xf]
    %v1656 = vld [vmem:[%s4 + $0x134] sm:$0xf]
    %v1657 = vld [vmem:[%s4 + $0x138] sm:$0xf]
    %v1658 = vld [vmem:[%s4 + $0x13c] sm:$0xf]
    %v1659 = vld [vmem:[%s4 + $0x140] sm:$0xf]
    %v1660 = vld [vmem:[%s4 + $0x144] sm:$0xf]
    %v1661 = vld [vmem:[%s4 + $0x148] sm:$0xf]
    %v1662 = vld [vmem:[%s4 + $0x14c] sm:$0xf]
    %v1663 = vld [vmem:[%s4 + $0x150] sm:$0xf]
    %v1664 = vld [vmem:[%s4 + $0x154] sm:$0xf]
    %v1665 = vld [vmem:[%s4 + $0x158] sm:$0xf]
    %v1666 = vld [vmem:[%s4 + $0x15c] sm:$0xf]
    %v1667 = vld [vmem:[%s4 + $0x160] sm:$0xf]
    %v1668 = vld [vmem:[%s4 + $0x164] sm:$0xf]
    %v1669 = vld [vmem:[%s4 + $0x168] sm:$0xf]
    %v1670 = vld [vmem:[%s4 + $0x16c] sm:$0xf]
    %v1671 = vld [vmem:[%s4 + $0x170] sm:$0xf]
    %v1672 = vld [vmem:[%s4 + $0x174] sm:$0xf]
    %v1673 = vld [vmem:[%s4 + $0x178] sm:$0xf]
    %v1674 = vld [vmem:[%s4 + $0x17c] sm:$0xf]
    %v1675 = vpack.c.bf16 %v1573, %v1573
    %v1676 = vpack.c.bf16 %v1574, %v1574
    %v1677 = vpack.c.bf16 %v1575, %v1575
    %v1678 = vpack.c.bf16 %v1576, %v1576
    %v1679 = vpack.c.bf16 %v1577, %v1577
    %v1680 = vpack.c.bf16 %v1578, %v1578
    %v1681 = vld [vmem:[%s5] sm:$0x1]
    %v1683 = vlaneseq
    %v1684 = vshrl.u32 %v1683, 7
    %v1685 = vsub.s32 0, %v1684
    %v1686 = vrot.slane %v1681, %v1685
    %v1784 = vunpack.c.l.b16 %v1579
    %v1785 = vunpack.c.l.b16 %v1580
    %v1786 = vunpack.c.l.b16 %v1581
    %v1787 = vunpack.c.l.b16 %v1582
    %v1788 = vunpack.c.l.b16 %v1583
    %v1789 = vunpack.c.l.b16 %v1584
    %v1790 = vunpack.c.l.b16 %v1585
    %v1791 = vunpack.c.l.b16 %v1586
    %v1792 = vunpack.c.l.b16 %v1587
    %v1793 = vunpack.c.l.b16 %v1588
    %v1794 = vunpack.c.l.b16 %v1589
    %v1795 = vunpack.c.l.b16 %v1590
    %v1796 = vunpack.c.l.b16 %v1591
    %v1797 = vunpack.c.l.b16 %v1592
    %v1798 = vunpack.c.l.b16 %v1593
    %v1799 = vunpack.c.l.b16 %v1594
    %v1800 = vunpack.c.l.b16 %v1595
    %v1801 = vunpack.c.l.b16 %v1596
    %v1802 = vunpack.c.l.b16 %v1597
    %v1803 = vunpack.c.l.b16 %v1598
    %v1804 = vunpack.c.l.b16 %v1599
    %v1805 = vunpack.c.l.b16 %v1600
    %v1806 = vunpack.c.l.b16 %v1601
    %v1807 = vunpack.c.l.b16 %v1602
    %v1808 = vunpack.c.l.b16 %v1603
    %v1809 = vunpack.c.l.b16 %v1604
    %v1810 = vunpack.c.l.b16 %v1605
    %v1811 = vunpack.c.l.b16 %v1606
    %v1812 = vunpack.c.l.b16 %v1607
    %v1813 = vunpack.c.l.b16 %v1608
    %v1814 = vunpack.c.l.b16 %v1609
    %v1815 = vunpack.c.l.b16 %v1610
    %v1816 = vunpack.c.l.b16 %v1611
    %v1817 = vunpack.c.l.b16 %v1612
    %v1818 = vunpack.c.l.b16 %v1613
    %v1819 = vunpack.c.l.b16 %v1614
    %v1820 = vunpack.c.l.b16 %v1615
    %v1821 = vunpack.c.l.b16 %v1616
    %v1822 = vunpack.c.l.b16 %v1617
    %v1823 = vunpack.c.l.b16 %v1618
    %v1824 = vunpack.c.l.b16 %v1619
    %v1825 = vunpack.c.l.b16 %v1620
    %v1826 = vunpack.c.l.b16 %v1621
    %v1827 = vunpack.c.l.b16 %v1622
    %v1828 = vunpack.c.l.b16 %v1623
    %v1829 = vunpack.c.l.b16 %v1624
    %v1830 = vunpack.c.l.b16 %v1625
    %v1831 = vunpack.c.l.b16 %v1626
    %v1832 = vunpack.c.l.b16 %v1627
    %v1833 = vunpack.c.l.b16 %v1628
    %v1834 = vunpack.c.l.b16 %v1629
    %v1835 = vunpack.c.l.b16 %v1630
    %v1836 = vunpack.c.l.b16 %v1631
    %v1837 = vunpack.c.l.b16 %v1632
    %v1838 = vunpack.c.l.b16 %v1633
    %v1839 = vunpack.c.l.b16 %v1634
    %v1840 = vunpack.c.l.b16 %v1635
    %v1841 = vunpack.c.l.b16 %v1636
    %v1842 = vunpack.c.l.b16 %v1637
    %v1843 = vunpack.c.l.b16 %v1638
    %v1844 = vunpack.c.l.b16 %v1639
    %v1845 = vunpack.c.l.b16 %v1640
    %v1846 = vunpack.c.l.b16 %v1641
    %v1847 = vunpack.c.l.b16 %v1642
    %v1848 = vunpack.c.l.b16 %v1643
    %v1849 = vunpack.c.l.b16 %v1644
    %v1850 = vunpack.c.l.b16 %v1645
    %v1851 = vunpack.c.l.b16 %v1646
    %v1852 = vunpack.c.l.b16 %v1647
    %v1853 = vunpack.c.l.b16 %v1648
    %v1854 = vunpack.c.l.b16 %v1649
    %v1855 = vunpack.c.l.b16 %v1650
    %v1856 = vunpack.c.l.b16 %v1651
    %v1857 = vunpack.c.l.b16 %v1652
    %v1858 = vunpack.c.l.b16 %v1653
    %v1859 = vunpack.c.l.b16 %v1654
    %v1860 = vunpack.c.l.b16 %v1655
    %v1861 = vunpack.c.l.b16 %v1656
    %v1862 = vunpack.c.l.b16 %v1657
    %v1863 = vunpack.c.l.b16 %v1658
    %v1864 = vunpack.c.l.b16 %v1659
    %v1865 = vunpack.c.l.b16 %v1660
    %v1866 = vunpack.c.l.b16 %v1661
    %v1867 = vunpack.c.l.b16 %v1662
    %v1868 = vunpack.c.l.b16 %v1663
    %v1869 = vunpack.c.l.b16 %v1664
    %v1870 = vunpack.c.l.b16 %v1665
    %v1871 = vunpack.c.l.b16 %v1666
    %v1872 = vunpack.c.l.b16 %v1667
    %v1873 = vunpack.c.l.b16 %v1668
    %v1874 = vunpack.c.l.b16 %v1669
    %v1875 = vunpack.c.l.b16 %v1670
    %v1876 = vunpack.c.l.b16 %v1671
    %v1877 = vunpack.c.l.b16 %v1672
    %v1878 = vunpack.c.l.b16 %v1673
    %v1879 = vunpack.c.l.b16 %v1674
    %v1880 = vpack.c.b16 %v1785, %v1784
    %v1881 = vpack.c.b16 %v1787, %v1786
    %v1882 = vpack.c.b16 %v1789, %v1788
    %v1883 = vpack.c.b16 %v1791, %v1790
    %v1884 = vpack.c.b16 %v1793, %v1792
    %v1885 = vpack.c.b16 %v1795, %v1794
    %v1886 = vpack.c.b16 %v1797, %v1796
    %v1887 = vpack.c.b16 %v1799, %v1798
    %v1888 = vpack.c.b16 %v1801, %v1800
    %v1889 = vpack.c.b16 %v1803, %v1802
    %v1890 = vpack.c.b16 %v1805, %v1804
    %v1891 = vpack.c.b16 %v1807, %v1806
    %v1892 = vpack.c.b16 %v1809, %v1808
    %v1893 = vpack.c.b16 %v1811, %v1810
    %v1894 = vpack.c.b16 %v1813, %v1812
    %v1895 = vpack.c.b16 %v1815, %v1814
    %v1896 = vpack.c.b16 %v1817, %v1816
    %v1897 = vpack.c.b16 %v1819, %v1818
    %v1898 = vpack.c.b16 %v1821, %v1820
    %v1899 = vpack.c.b16 %v1823, %v1822
    %v1900 = vpack.c.b16 %v1825, %v1824
    %v1901 = vpack.c.b16 %v1827, %v1826
    %v1902 = vpack.c.b16 %v1829, %v1828
    %v1903 = vpack.c.b16 %v1831, %v1830
    %v1904 = vpack.c.b16 %v1833, %v1832
    %v1905 = vpack.c.b16 %v1835, %v1834
    %v1906 = vpack.c.b16 %v1837, %v1836
    %v1907 = vpack.c.b16 %v1839, %v1838
    %v1908 = vpack.c.b16 %v1841, %v1840
    %v1909 = vpack.c.b16 %v1843, %v1842
    %v1910 = vpack.c.b16 %v1845, %v1844
    %v1911 = vpack.c.b16 %v1847, %v1846
    %v1912 = vpack.c.b16 %v1849, %v1848
    %v1913 = vpack.c.b16 %v1851, %v1850
    %v1914 = vpack.c.b16 %v1853, %v1852
    %v1915 = vpack.c.b16 %v1855, %v1854
    %v1916 = vpack.c.b16 %v1857, %v1856
    %v1917 = vpack.c.b16 %v1859, %v1858
    %v1918 = vpack.c.b16 %v1861, %v1860
    %v1919 = vpack.c.b16 %v1863, %v1862
    %v1920 = vpack.c.b16 %v1865, %v1864
    %v1921 = vpack.c.b16 %v1867, %v1866
    %v1922 = vpack.c.b16 %v1869, %v1868
    %v1923 = vpack.c.b16 %v1871, %v1870
    %v1924 = vpack.c.b16 %v1873, %v1872
    %v1925 = vpack.c.b16 %v1875, %v1874
    %v1926 = vpack.c.b16 %v1877, %v1876
    %v1927 = vpack.c.b16 %v1879, %v1878
    %1976 = vmatprep.subr.bf16.mxu0 0
    %1977 = vmatpush1.bf16.msra.mxu0 %v1880
    %1978 = vmatprep.subr.bf16.mxu0 0
    %1979 = vmatpush1.bf16.msra.mxu0 %v1881
    %1980 = vmatprep.subr.bf16.mxu0 0
    %1981 = vmatpush1.bf16.msra.mxu0 %v1882
    %1982 = vmatprep.subr.bf16.mxu0 0
    %1983 = vmatpush1.bf16.msra.mxu0 %v1883
    %1984 = vmatprep.subr.bf16.mxu0 0
    %1985 = vmatpush1.bf16.msra.mxu0 %v1884
    %1986 = vmatprep.subr.bf16.mxu0 0
    %1987 = vmatpush1.bf16.msra.mxu0 %v1885
    %1988 = vmatprep.subr.bf16.mxu0 0
    %1989 = vmatpush1.bf16.msra.mxu0 %v1886
    %1990 = vmatprep.subr.bf16.mxu0 0
    %1991 = vmatpush1.bf16.msra.mxu0 %v1887
    %1992 = vmatprep.subr.bf16.mxu0 0
    %1993 = vmatpush1.bf16.msra.mxu0 %v1888
    %1994 = vmatprep.subr.bf16.mxu0 0
    %1995 = vmatpush1.bf16.msra.mxu0 %v1889
    %1996 = vmatprep.subr.bf16.mxu0 0
    %1997 = vmatpush1.bf16.msra.mxu0 %v1890
    %1998 = vmatprep.subr.bf16.mxu0 0
    %1999 = vmatpush1.bf16.msra.mxu0 %v1891
    %2000 = vmatprep.subr.bf16.mxu0 0
    %2001 = vmatpush1.bf16.msra.mxu0 %v1892
    %2002 = vmatprep.subr.bf16.mxu0 0
    %2003 = vmatpush1.bf16.msra.mxu0 %v1893
    %2004 = vmatprep.subr.bf16.mxu0 0
    %2005 = vmatpush1.bf16.msra.mxu0 %v1894
    %2006 = vmatprep.subr.bf16.mxu0 0
    %2007 = vmatpush1.bf16.msra.mxu0 %v1895
    %2008 = vmatprep.mubr.bf16.mxu0 %v1676
    %2009 = vmatmul.mubr.bf16.gmra.mrb[0].mxu0 %v1675
    %v2010 = vpop.f32.mrb[0].mxu0
    %v2011 = vadd.f32 %v1686, %v2010
    %v2012 = vpop.f32.mrb[0].mxu0
    %v2013 = vpop.f32.mrb[0].mxu0
    %v2014 = vpop.f32.mrb[0].mxu0
    %2015 = vdwg.mxu0
    %2016 = vmatprep.subr.bf16.mxu0 0
    %2017 = vmatpush1.bf16.msra.mxu0 %v1896
    %2018 = vmatprep.subr.bf16.mxu0 0
    %2019 = vmatpush1.bf16.msra.mxu0 %v1897
    %2020 = vmatprep.subr.bf16.mxu0 0
    %2021 = vmatpush1.bf16.msra.mxu0 %v1898
    %2022 = vmatprep.subr.bf16.mxu0 0
    %2023 = vmatpush1.bf16.msra.mxu0 %v1899
    %2024 = vmatprep.subr.bf16.mxu0 0
    %2025 = vmatpush1.bf16.msra.mxu0 %v1900
    %2026 = vmatprep.subr.bf16.mxu0 0
    %2027 = vmatpush1.bf16.msra.mxu0 %v1901
    %2028 = vmatprep.subr.bf16.mxu0 0
    %2029 = vmatpush1.bf16.msra.mxu0 %v1902
    %2030 = vmatprep.subr.bf16.mxu0 0
    %2031 = vmatpush1.bf16.msra.mxu0 %v1903
    %2032 = vmatprep.subr.bf16.mxu0 0
    %2033 = vmatpush1.bf16.msra.mxu0 %v1904
    %2034 = vmatprep.subr.bf16.mxu0 0
    %2035 = vmatpush1.bf16.msra.mxu0 %v1905
    %2036 = vmatprep.subr.bf16.mxu0 0
    %2037 = vmatpush1.bf16.msra.mxu0 %v1906
    %2038 = vmatprep.subr.bf16.mxu0 0
    %2039 = vmatpush1.bf16.msra.mxu0 %v1907
    %2040 = vmatprep.subr.bf16.mxu0 0
    %2041 = vmatpush1.bf16.msra.mxu0 %v1908
    %2042 = vmatprep.subr.bf16.mxu0 0
    %2043 = vmatpush1.bf16.msra.mxu0 %v1909
    %2044 = vmatprep.subr.bf16.mxu0 0
    %2045 = vmatpush1.bf16.msra.mxu0 %v1910
    %2046 = vmatprep.subr.bf16.mxu0 0
    %2047 = vmatpush1.bf16.msra.mxu0 %v1911
    %2048 = vmatprep.mubr.bf16.mxu0 %v1678
    %2049 = vmatmul.mubr.bf16.gmra.mrb[0].mxu0 %v1677
    %v2050 = vpop.f32.mrb[0].mxu0
    %v2051 = vadd.f32 %v2011, %v2050
    %v2052 = vpop.f32.mrb[0].mxu0
    %v2053 = vpop.f32.mrb[0].mxu0
    %v2054 = vpop.f32.mrb[0].mxu0
    %2055 = vdwg.mxu0
    %2056 = vmatprep.subr.bf16.mxu0 0
    %2057 = vmatpush1.bf16.msra.mxu0 %v1912
    %2058 = vmatprep.subr.bf16.mxu0 0
    %2059 = vmatpush1.bf16.msra.mxu0 %v1913
    %2060 = vmatprep.subr.bf16.mxu0 0
    %2061 = vmatpush1.bf16.msra.mxu0 %v1914
    %2062 = vmatprep.subr.bf16.mxu0 0
    %2063 = vmatpush1.bf16.msra.mxu0 %v1915
    %2064 = vmatprep.subr.bf16.mxu0 0
    %2065 = vmatpush1.bf16.msra.mxu0 %v1916
    %2066 = vmatprep.subr.bf16.mxu0 0
    %2067 = vmatpush1.bf16.msra.mxu0 %v1917
    %2068 = vmatprep.subr.bf16.mxu0 0
    %2069 = vmatpush1.bf16.msra.mxu0 %v1918
    %2070 = vmatprep.subr.bf16.mxu0 0
    %2071 = vmatpush1.bf16.msra.mxu0 %v1919
    %2072 = vmatprep.subr.bf16.mxu0 0
    %2073 = vmatpush1.bf16.msra.mxu0 %v1920
    %2074 = vmatprep.subr.bf16.mxu0 0
    %2075 = vmatpush1.bf16.msra.mxu0 %v1921
    %2076 = vmatprep.subr.bf16.mxu0 0
    %2077 = vmatpush1.bf16.msra.mxu0 %v1922
    %2078 = vmatprep.subr.bf16.mxu0 0
    %2079 = vmatpush1.bf16.msra.mxu0 %v1923
    %2080 = vmatprep.subr.bf16.mxu0 0
    %2081 = vmatpush1.bf16.msra.mxu0 %v1924
    %2082 = vmatprep.subr.bf16.mxu0 0
    %2083 = vmatpush1.bf16.msra.mxu0 %v1925
    %2084 = vmatprep.subr.bf16.mxu0 0
    %2085 = vmatpush1.bf16.msra.mxu0 %v1926
    %2086 = vmatprep.subr.bf16.mxu0 0
    %2087 = vmatpush1.bf16.msra.mxu0 %v1927
    %2088 = vmatprep.mubr.bf16.mxu0 %v1680
    %2089 = vmatmul.mubr.bf16.gmra.mrb[0].mxu0 %v1679
    %v2090 = vpop.f32.mrb[0].mxu0
    %v2091 = vadd.f32 %v2051, %v2090
    %v2092 = vpop.f32.mrb[0].mxu0
    %v2093 = vpop.f32.mrb[0].mxu0
    %v2094 = vpop.f32.mrb[0].mxu0
    %2095 = vdwg.mxu0
    %v2097 = vcombine.high %v2091, %v2091
    %vm2099 = vcmask 1043456
    %v2100 = vsel %vm2099, %v2091, 0.0
    %v2101 = vrot.slane %v2100, 4
    %v2102 = vadd.f32 %v2100, %v2101
    %v2103 = vrot.slane %v2102, 2
    %v2104 = vadd.f32 %v2102, %v2103
    %v2105 = vrot.slane %v2104, 1
    %v2106 = vadd.f32 %v2104, %v2105
    %v2107 = vsel %vm2099, %v2097, 0.0
    %v2108 = vrot.slane %v2107, 4
    %v2109 = vadd.f32 %v2107, %v2108
    %v2110 = vrot.slane %v2109, 2
    %v2111 = vadd.f32 %v2109, %v2110
    %v2112 = vrot.slane %v2111, 1
    %v2113 = vadd.f32 %v2111, %v2112
    %v2114 = vrcp.pop 4.0
    %v2115 = vmul.f32 %v2106, %v2114
    %v2116 = vmul.f32 %v2113, %v2114
    %v2117 = vld [vmem:[%s6] sm:$0xff]
    %v2118 = vld [vmem:[%s6 + $0x8] sm:$0xff]
    %v2119 = vld [vmem:[%s6 + $0x10] sm:$0xff]
    %v2120 = vld [vmem:[%s6 + $0x18] sm:$0xff]
    %v2121 = vld [vmem:[%s6 + $0x20] sm:$0xff]
    %v2122 = vld [vmem:[%s6 + $0x28] sm:$0xff]
    %v2123 = vld [vmem:[%s6 + $0x30] sm:$0xff]
    %v2124 = vld [vmem:[%s6 + $0x38] sm:$0xff]
    %v2125 = vld [vmem:[%s6 + $0x40] sm:$0xff]
    %v2126 = vld [vmem:[%s6 + $0x48] sm:$0xff]
    %v2127 = vld [vmem:[%s6 + $0x50] sm:$0xff]
    %v2128 = vld [vmem:[%s6 + $0x58] sm:$0xff]
    %v2129 = vld [vmem:[%s6 + $0x60] sm:$0xff]
    %v2130 = vld [vmem:[%s6 + $0x68] sm:$0xff]
    %v2131 = vld [vmem:[%s6 + $0x70] sm:$0xff]
    %v2132 = vld [vmem:[%s6 + $0x78] sm:$0xff]
    %v2133 = vpack.c.bf16 %v2115, %v2115
    %v2134 = vpack.c.bf16 %v2116, %v2116
    %v2135 = vld [vmem:[%s7] sm:$0x3]
    %v2137 = vlaneseq
    %v2138 = vshrl.u32 %v2137, 7
    %v2139 = vsub.s32 0, %v2138
    %v2140 = vrot.slane %v2135, %v2139
    %v2141 = vlaneseq
    %v2142 = vshrl.u32 %v2141, 7
    %v2143 = vsub.s32 1, %v2142
    %v2144 = vrot.slane %v2135, %v2143
    %v2149 = vunpack.c.l.b16 %v2133
    %v2150 = vunpack.c.l.b16 %v2134
    %vm2151 = vcmask 1041409
    %v2152 = vsel %vm2151, %v2150, %v2149
    %v2153 = vpack.c.b16 %v2152, %v2152
    %v2171 = vunpack.c.l.b16 %v2117
    %v2172 = vunpack.c.h.b16 %v2117
    %v2173 = vunpack.c.l.b16 %v2118
    %v2174 = vunpack.c.h.b16 %v2118
    %v2175 = vunpack.c.l.b16 %v2119
    %v2176 = vunpack.c.h.b16 %v2119
    %v2177 = vunpack.c.l.b16 %v2120
    %v2178 = vunpack.c.h.b16 %v2120
    %v2179 = vunpack.c.l.b16 %v2121
    %v2180 = vunpack.c.h.b16 %v2121
    %v2181 = vunpack.c.l.b16 %v2122
    %v2182 = vunpack.c.h.b16 %v2122
    %v2183 = vunpack.c.l.b16 %v2123
    %v2184 = vunpack.c.h.b16 %v2123
    %v2185 = vunpack.c.l.b16 %v2124
    %v2186 = vunpack.c.h.b16 %v2124
    %v2187 = vunpack.c.l.b16 %v2125
    %v2188 = vunpack.c.h.b16 %v2125
    %v2189 = vunpack.c.l.b16 %v2126
    %v2190 = vunpack.c.h.b16 %v2126
    %v2191 = vunpack.c.l.b16 %v2127
    %v2192 = vunpack.c.h.b16 %v2127
    %v2193 = vunpack.c.l.b16 %v2128
    %v2194 = vunpack.c.h.b16 %v2128
    %v2195 = vunpack.c.l.b16 %v2129
    %v2196 = vunpack.c.h.b16 %v2129
    %v2197 = vunpack.c.l.b16 %v2130
    %v2198 = vunpack.c.h.b16 %v2130
    %v2199 = vunpack.c.l.b16 %v2131
    %v2200 = vunpack.c.h.b16 %v2131
    %v2201 = vunpack.c.l.b16 %v2132
    %v2202 = vunpack.c.h.b16 %v2132
    %v2203 = vpack.c.b16 %v2173, %v2171
    %v2204 = vpack.c.b16 %v2174, %v2172
    %v2205 = vpack.c.b16 %v2177, %v2175
    %v2206 = vpack.c.b16 %v2178, %v2176
    %v2207 = vpack.c.b16 %v2181, %v2179
    %v2208 = vpack.c.b16 %v2182, %v2180
    %v2209 = vpack.c.b16 %v2185, %v2183
    %v2210 = vpack.c.b16 %v2186, %v2184
    %v2211 = vpack.c.b16 %v2189, %v2187
    %v2212 = vpack.c.b16 %v2190, %v2188
    %v2213 = vpack.c.b16 %v2193, %v2191
    %v2214 = vpack.c.b16 %v2194, %v2192
    %v2215 = vpack.c.b16 %v2197, %v2195
    %v2216 = vpack.c.b16 %v2198, %v2196
    %v2217 = vpack.c.b16 %v2201, %v2199
    %v2218 = vpack.c.b16 %v2202, %v2200
    %2235 = vmatprep.subr.bf16.mxu0 %v2204
    %2236 = vmatpush1.bf16.msra.mxu0 %v2203
    %2237 = vmatprep.subr.bf16.mxu0 %v2206
    %2238 = vmatpush1.bf16.msra.mxu0 %v2205
    %2239 = vmatprep.subr.bf16.mxu0 %v2208
    %2240 = vmatpush1.bf16.msra.mxu0 %v2207
    %2241 = vmatprep.subr.bf16.mxu0 %v2210
    %2242 = vmatpush1.bf16.msra.mxu0 %v2209
    %2243 = vmatprep.subr.bf16.mxu0 %v2212
    %2244 = vmatpush1.bf16.msra.mxu0 %v2211
    %2245 = vmatprep.subr.bf16.mxu0 %v2214
    %2246 = vmatpush1.bf16.msra.mxu0 %v2213
    %2247 = vmatprep.subr.bf16.mxu0 %v2216
    %2248 = vmatpush1.bf16.msra.mxu0 %v2215
    %2249 = vmatprep.subr.bf16.mxu0 %v2218
    %2250 = vmatpush1.bf16.msra.mxu0 %v2217
    %2251 = vmatprep.subr.bf16.mxu0 0
    %2252 = vmatpush1.bf16.msra.mxu0 0
    %2253 = vmatprep.subr.bf16.mxu0 0
    %2254 = vmatpush1.bf16.msra.mxu0 0
    %2255 = vmatprep.subr.bf16.mxu0 0
    %2256 = vmatpush1.bf16.msra.mxu0 0
    %2257 = vmatprep.subr.bf16.mxu0 0
    %2258 = vmatpush1.bf16.msra.mxu0 0
    %2259 = vmatprep.subr.bf16.mxu0 0
    %2260 = vmatpush1.bf16.msra.mxu0 0
    %2261 = vmatprep.subr.bf16.mxu0 0
    %2262 = vmatpush1.bf16.msra.mxu0 0
    %2263 = vmatprep.subr.bf16.mxu0 0
    %2264 = vmatpush1.bf16.msra.mxu0 0
    %2265 = vmatprep.subr.bf16.mxu0 0
    %2266 = vmatpush1.bf16.msra.mxu0 0
    %2267 = vmatprep.mubr.bf16.mxu0 0
    %2268 = vmatmul.mubr.bf16.gmra.mrb[0].mxu0 %v2153
    %v2269 = vpop.f32.mrb[0].mxu0
    %v2270 = vadd.f32 %v2140, %v2269
    %v2271 = vpop.f32.mrb[0].mxu0
    %v2272 = vadd.f32 %v2144, %v2271
    %v2273 = vpop.f32.mrb[0].mxu0
    %v2274 = vpop.f32.mrb[0].mxu0
    %2275 = vdwg.mxu0
    %v2276 = vmul.f32 %v2270, %v2270
    %v2277 = vmul.f32 %v2272, %v2272
    %v2278 = vmul.f32 %v2270, %v2276
    %v2279 = vmul.f32 %v2272, %v2277
    %v2280 = vmul.f32 %v2278, 0.044715
    %v2281 = vmul.f32 %v2279, 0.044715
    %v2282 = vadd.f32 %v2270, %v2280
    %v2283 = vadd.f32 %v2272, %v2281
    %v2284 = vmul.f32 %v2282, 0.7978846
    %v2285 = vmul.f32 %v2283, 0.7978846
    %v2286 = vtanh.pop %v2284
    %v2287 = vtanh.pop %v2285
    %v2288 = vadd.f32 %v2286, 1.0
    %v2289 = vadd.f32 %v2287, 1.0
    %v2290 = vmul.f32 %v2288, 0.5
    %v2291 = vmul.f32 %v2289, 0.5
    %v2292 = vmul.f32 %v2270, %v2290
    %v2293 = vmul.f32 %v2272, %v2291
    %v2294 = vld [vmem:[%s8] sm:$0xff]
    %v2295 = vld [vmem:[%s8 + $0x8] sm:$0xff]
    %v2296 = vld [vmem:[%s8 + $0x10] sm:$0xff]
    %v2297 = vld [vmem:[%s8 + $0x18] sm:$0xff]
    %v2298 = vld [vmem:[%s8 + $0x20] sm:$0xff]
    %v2299 = vld [vmem:[%s8 + $0x28] sm:$0xff]
    %v2300 = vld [vmem:[%s8 + $0x30] sm:$0xff]
    %v2301 = vld [vmem:[%s8 + $0x38] sm:$0xff]
    %v2302 = vld [vmem:[%s8 + $0x40] sm:$0xff]
    %v2303 = vld [vmem:[%s8 + $0x48] sm:$0xff]
    %v2304 = vld [vmem:[%s8 + $0x50] sm:$0xff]
    %v2305 = vld [vmem:[%s8 + $0x58] sm:$0xff]
    %v2306 = vld [vmem:[%s8 + $0x60] sm:$0xff]
    %v2307 = vld [vmem:[%s8 + $0x68] sm:$0xff]
    %v2308 = vld [vmem:[%s8 + $0x70] sm:$0xff]
    %v2309 = vld [vmem:[%s8 + $0x78] sm:$0xff]
    %v2310 = vld [vmem:[%s8 + $0x80] sm:$0xff]
    %v2311 = vld [vmem:[%s8 + $0x88] sm:$0xff]
    %v2312 = vld [vmem:[%s8 + $0x90] sm:$0xff]
    %v2313 = vld [vmem:[%s8 + $0x98] sm:$0xff]
    %v2314 = vld [vmem:[%s8 + $0xa0] sm:$0xff]
    %v2315 = vld [vmem:[%s8 + $0xa8] sm:$0xff]
    %v2316 = vld [vmem:[%s8 + $0xb0] sm:$0xff]
    %v2317 = vld [vmem:[%s8 + $0xb8] sm:$0xff]
    %v2318 = vld [vmem:[%s8 + $0xc0] sm:$0xff]
    %v2319 = vld [vmem:[%s8 + $0xc8] sm:$0xff]
    %v2320 = vld [vmem:[%s8 + $0xd0] sm:$0xff]
    %v2321 = vld [vmem:[%s8 + $0xd8] sm:$0xff]
    %v2322 = vld [vmem:[%s8 + $0xe0] sm:$0xff]
    %v2323 = vld [vmem:[%s8 + $0xe8] sm:$0xff]
    %v2324 = vld [vmem:[%s8 + $0xf0] sm:$0xff]
    %v2325 = vld [vmem:[%s8 + $0xf8] sm:$0xff]
    %v2326 = vld [vmem:[%s8 + $0x100] sm:$0xff]
    %v2327 = vld [vmem:[%s8 + $0x108] sm:$0xff]
    %v2328 = vld [vmem:[%s8 + $0x110] sm:$0xff]
    %v2329 = vld [vmem:[%s8 + $0x118] sm:$0xff]
    %v2330 = vld [vmem:[%s8 + $0x120] sm:$0xff]
    %v2331 = vld [vmem:[%s8 + $0x128] sm:$0xff]
    %v2332 = vld [vmem:[%s8 + $0x130] sm:$0xff]
    %v2333 = vld [vmem:[%s8 + $0x138] sm:$0xff]
    %v2334 = vld [vmem:[%s8 + $0x140] sm:$0xff]
    %v2335 = vld [vmem:[%s8 + $0x148] sm:$0xff]
    %v2336 = vld [vmem:[%s8 + $0x150] sm:$0xff]
    %v2337 = vld [vmem:[%s8 + $0x158] sm:$0xff]
    %v2338 = vld [vmem:[%s8 + $0x160] sm:$0xff]
    %v2339 = vld [vmem:[%s8 + $0x168] sm:$0xff]
    %v2340 = vld [vmem:[%s8 + $0x170] sm:$0xff]
    %v2341 = vld [vmem:[%s8 + $0x178] sm:$0xff]
    %v2342 = vld [vmem:[%s8 + $0x180] sm:$0xff]
    %v2343 = vld [vmem:[%s8 + $0x188] sm:$0xff]
    %v2344 = vld [vmem:[%s8 + $0x190] sm:$0xff]
    %v2345 = vld [vmem:[%s8 + $0x198] sm:$0xff]
    %v2346 = vld [vmem:[%s8 + $0x1a0] sm:$0xff]
    %v2347 = vld [vmem:[%s8 + $0x1a8] sm:$0xff]
    %v2348 = vld [vmem:[%s8 + $0x1b0] sm:$0xff]
    %v2349 = vld [vmem:[%s8 + $0x1b8] sm:$0xff]
    %v2350 = vld [vmem:[%s8 + $0x1c0] sm:$0xff]
    %v2351 = vld [vmem:[%s8 + $0x1c8] sm:$0xff]
    %v2352 = vld [vmem:[%s8 + $0x1d0] sm:$0xff]
    %v2353 = vld [vmem:[%s8 + $0x1d8] sm:$0xff]
    %v2354 = vld [vmem:[%s8 + $0x1e0] sm:$0xff]
    %v2355 = vld [vmem:[%s8 + $0x1e8] sm:$0xff]
    %v2356 = vld [vmem:[%s8 + $0x1f0] sm:$0xff]
    %v2357 = vld [vmem:[%s8 + $0x1f8] sm:$0xff]
    %v2358 = vld [vmem:[%s8 + $0x200] sm:$0xff]
    %v2359 = vld [vmem:[%s8 + $0x208] sm:$0xff]
    %v2360 = vld [vmem:[%s8 + $0x210] sm:$0xff]
    %v2361 = vld [vmem:[%s8 + $0x218] sm:$0xff]
    %v2362 = vld [vmem:[%s8 + $0x220] sm:$0xff]
    %v2363 = vld [vmem:[%s8 + $0x228] sm:$0xff]
    %v2364 = vld [vmem:[%s8 + $0x230] sm:$0xff]
    %v2365 = vld [vmem:[%s8 + $0x238] sm:$0xff]
    %v2366 = vld [vmem:[%s8 + $0x240] sm:$0xff]
    %v2367 = vld [vmem:[%s8 + $0x248] sm:$0xff]
    %v2368 = vld [vmem:[%s8 + $0x250] sm:$0xff]
    %v2369 = vld [vmem:[%s8 + $0x258] sm:$0xff]
    %v2370 = vld [vmem:[%s8 + $0x260] sm:$0xff]
    %v2371 = vld [vmem:[%s8 + $0x268] sm:$0xff]
    %v2372 = vld [vmem:[%s8 + $0x270] sm:$0xff]
    %v2373 = vld [vmem:[%s8 + $0x278] sm:$0xff]
    %v2374 = vld [vmem:[%s8 + $0x280] sm:$0xff]
    %v2375 = vld [vmem:[%s8 + $0x288] sm:$0xff]
    %v2376 = vld [vmem:[%s8 + $0x290] sm:$0xff]
    %v2377 = vld [vmem:[%s8 + $0x298] sm:$0xff]
    %v2378 = vld [vmem:[%s8 + $0x2a0] sm:$0xff]
    %v2379 = vld [vmem:[%s8 + $0x2a8] sm:$0xff]
    %v2380 = vld [vmem:[%s8 + $0x2b0] sm:$0xff]
    %v2381 = vld [vmem:[%s8 + $0x2b8] sm:$0xff]
    %v2382 = vld [vmem:[%s8 + $0x2c0] sm:$0xff]
    %v2383 = vld [vmem:[%s8 + $0x2c8] sm:$0xff]
    %v2384 = vld [vmem:[%s8 + $0x2d0] sm:$0xff]
    %v2385 = vld [vmem:[%s8 + $0x2d8] sm:$0xff]
    %v2386 = vld [vmem:[%s8 + $0x2e0] sm:$0xff]
    %v2387 = vld [vmem:[%s8 + $0x2e8] sm:$0xff]
    %v2388 = vld [vmem:[%s8 + $0x2f0] sm:$0xff]
    %v2389 = vld [vmem:[%s8 + $0x2f8] sm:$0xff]
    %v2390 = vld [vmem:[%s8 + $0x300] sm:$0xff]
    %v2391 = vld [vmem:[%s8 + $0x308] sm:$0xff]
    %v2392 = vld [vmem:[%s8 + $0x310] sm:$0xff]
    %v2393 = vld [vmem:[%s8 + $0x318] sm:$0xff]
    %v2394 = vld [vmem:[%s8 + $0x320] sm:$0xff]
    %v2395 = vld [vmem:[%s8 + $0x328] sm:$0xff]
    %v2396 = vld [vmem:[%s8 + $0x330] sm:$0xff]
    %v2397 = vld [vmem:[%s8 + $0x338] sm:$0xff]
    %v2398 = vld [vmem:[%s8 + $0x340] sm:$0xff]
    %v2399 = vld [vmem:[%s8 + $0x348] sm:$0xff]
    %v2400 = vld [vmem:[%s8 + $0x350] sm:$0xff]
    %v2401 = vld [vmem:[%s8 + $0x358] sm:$0xff]
    %v2402 = vld [vmem:[%s8 + $0x360] sm:$0xff]
    %v2403 = vld [vmem:[%s8 + $0x368] sm:$0xff]
    %v2404 = vld [vmem:[%s8 + $0x370] sm:$0xff]
    %v2405 = vld [vmem:[%s8 + $0x378] sm:$0xff]
    %v2406 = vld [vmem:[%s8 + $0x380] sm:$0xff]
    %v2407 = vld [vmem:[%s8 + $0x388] sm:$0xff]
    %v2408 = vld [vmem:[%s8 + $0x390] sm:$0xff]
    %v2409 = vld [vmem:[%s8 + $0x398] sm:$0xff]
    %v2410 = vld [vmem:[%s8 + $0x3a0] sm:$0xff]
    %v2411 = vld [vmem:[%s8 + $0x3a8] sm:$0xff]
    %v2412 = vld [vmem:[%s8 + $0x3b0] sm:$0xff]
    %v2413 = vld [vmem:[%s8 + $0x3b8] sm:$0xff]
    %v2414 = vld [vmem:[%s8 + $0x3c0] sm:$0xff]
    %v2415 = vld [vmem:[%s8 + $0x3c8] sm:$0xff]
    %v2416 = vld [vmem:[%s8 + $0x3d0] sm:$0xff]
    %v2417 = vld [vmem:[%s8 + $0x3d8] sm:$0xff]
    %v2418 = vld [vmem:[%s8 + $0x3e0] sm:$0xff]
    %v2419 = vld [vmem:[%s8 + $0x3e8] sm:$0xff]
    %v2420 = vld [vmem:[%s8 + $0x3f0] sm:$0xff]
    %v2421 = vld [vmem:[%s8 + $0x3f8] sm:$0xff]
    %v2422 = vpack.c.bf16 %v2292, %v2292
    %v2423 = vpack.c.bf16 %v2293, %v2293
    %v2424 = vld [vmem:[%s9] sm:$0xff]
    %v2426 = vlaneseq
    %v2427 = vshrl.u32 %v2426, 7
    %v2428 = vsub.s32 0, %v2427
    %v2429 = vrot.slane %v2424, %v2428
    %v2430 = vlaneseq
    %v2431 = vshrl.u32 %v2430, 7
    %v2432 = vsub.s32 1, %v2431
    %v2433 = vrot.slane %v2424, %v2432
    %v2434 = vlaneseq
    %v2435 = vshrl.u32 %v2434, 7
    %v2436 = vsub.s32 2, %v2435
    %v2437 = vrot.slane %v2424, %v2436
    %v2438 = vlaneseq
    %v2439 = vshrl.u32 %v2438, 7
    %v2440 = vsub.s32 3, %v2439
    %v2441 = vrot.slane %v2424, %v2440
    %v2442 = vlaneseq
    %v2443 = vshrl.u32 %v2442, 7
    %v2444 = vsub.s32 4, %v2443
    %v2445 = vrot.slane %v2424, %v2444
    %v2446 = vlaneseq
    %v2447 = vshrl.u32 %v2446, 7
    %v2448 = vsub.s32 5, %v2447
    %v2449 = vrot.slane %v2424, %v2448
    %v2450 = vlaneseq
    %v2451 = vshrl.u32 %v2450, 7
    %v2452 = vsub.s32 6, %v2451
    %v2453 = vrot.slane %v2424, %v2452
    %v2454 = vlaneseq
    %v2455 = vshrl.u32 %v2454, 7
    %v2456 = vsub.s32 7, %v2455
    %v2457 = vrot.slane %v2424, %v2456
    %v2594 = vunpack.c.l.b16 %v2294
    %v2595 = vunpack.c.h.b16 %v2294
    %v2596 = vunpack.c.l.b16 %v2295
    %v2597 = vunpack.c.h.b16 %v2295
    %v2598 = vunpack.c.l.b16 %v2296
    %v2599 = vunpack.c.h.b16 %v2296
    %v2600 = vunpack.c.l.b16 %v2297
    %v2601 = vunpack.c.h.b16 %v2297
    %v2602 = vunpack.c.l.b16 %v2298
    %v2603 = vunpack.c.h.b16 %v2298
    %v2604 = vunpack.c.l.b16 %v2299
    %v2605 = vunpack.c.h.b16 %v2299
    %v2606 = vunpack.c.l.b16 %v2300
    %v2607 = vunpack.c.h.b16 %v2300
    %v2608 = vunpack.c.l.b16 %v2301
    %v2609 = vunpack.c.h.b16 %v2301
    %v2610 = vunpack.c.l.b16 %v2302
    %v2611 = vunpack.c.h.b16 %v2302
    %v2612 = vunpack.c.l.b16 %v2303
    %v2613 = vunpack.c.h.b16 %v2303
    %v2614 = vunpack.c.l.b16 %v2304
    %v2615 = vunpack.c.h.b16 %v2304
    %v2616 = vunpack.c.l.b16 %v2305
    %v2617 = vunpack.c.h.b16 %v2305
    %v2618 = vunpack.c.l.b16 %v2306
    %v2619 = vunpack.c.h.b16 %v2306
    %v2620 = vunpack.c.l.b16 %v2307
    %v2621 = vunpack.c.h.b16 %v2307
    %v2622 = vunpack.c.l.b16 %v2308
    %v2623 = vunpack.c.h.b16 %v2308
    %v2624 = vunpack.c.l.b16 %v2309
    %v2625 = vunpack.c.h.b16 %v2309
    %v2626 = vunpack.c.l.b16 %v2310
    %v2627 = vunpack.c.h.b16 %v2310
    %v2628 = vunpack.c.l.b16 %v2311
    %v2629 = vunpack.c.h.b16 %v2311
    %v2630 = vunpack.c.l.b16 %v2312
    %v2631 = vunpack.c.h.b16 %v2312
    %v2632 = vunpack.c.l.b16 %v2313
    %v2633 = vunpack.c.h.b16 %v2313
    %v2634 = vunpack.c.l.b16 %v2314
    %v2635 = vunpack.c.h.b16 %v2314
    %v2636 = vunpack.c.l.b16 %v2315
    %v2637 = vunpack.c.h.b16 %v2315
    %v2638 = vunpack.c.l.b16 %v2316
    %v2639 = vunpack.c.h.b16 %v2316
    %v2640 = vunpack.c.l.b16 %v2317
    %v2641 = vunpack.c.h.b16 %v2317
    %v2642 = vunpack.c.l.b16 %v2318
    %v2643 = vunpack.c.h.b16 %v2318
    %v2644 = vunpack.c.l.b16 %v2319
    %v2645 = vunpack.c.h.b16 %v2319
    %v2646 = vunpack.c.l.b16 %v2320
    %v2647 = vunpack.c.h.b16 %v2320
    %v2648 = vunpack.c.l.b16 %v2321
    %v2649 = vunpack.c.h.b16 %v2321
    %v2650 = vunpack.c.l.b16 %v2322
    %v2651 = vunpack.c.h.b16 %v2322
    %v2652 = vunpack.c.l.b16 %v2323
    %v2653 = vunpack.c.h.b16 %v2323
    %v2654 = vunpack.c.l.b16 %v2324
    %v2655 = vunpack.c.h.b16 %v2324
    %v2656 = vunpack.c.l.b16 %v2325
    %v2657 = vunpack.c.h.b16 %v2325
    %v2658 = vunpack.c.l.b16 %v2326
    %v2659 = vunpack.c.h.b16 %v2326
    %v2660 = vunpack.c.l.b16 %v2327
    %v2661 = vunpack.c.h.b16 %v2327
    %v2662 = vunpack.c.l.b16 %v2328
    %v2663 = vunpack.c.h.b16 %v2328
    %v2664 = vunpack.c.l.b16 %v2329
    %v2665 = vunpack.c.h.b16 %v2329
    %v2666 = vunpack.c.l.b16 %v2330
    %v2667 = vunpack.c.h.b16 %v2330
    %v2668 = vunpack.c.l.b16 %v2331
    %v2669 = vunpack.c.h.b16 %v2331
    %v2670 = vunpack.c.l.b16 %v2332
    %v2671 = vunpack.c.h.b16 %v2332
    %v2672 = vunpack.c.l.b16 %v2333
    %v2673 = vunpack.c.h.b16 %v2333
    %v2674 = vunpack.c.l.b16 %v2334
    %v2675 = vunpack.c.h.b16 %v2334
    %v2676 = vunpack.c.l.b16 %v2335
    %v2677 = vunpack.c.h.b16 %v2335
    %v2678 = vunpack.c.l.b16 %v2336
    %v2679 = vunpack.c.h.b16 %v2336
    %v2680 = vunpack.c.l.b16 %v2337
    %v2681 = vunpack.c.h.b16 %v2337
    %v2682 = vunpack.c.l.b16 %v2338
    %v2683 = vunpack.c.h.b16 %v2338
    %v2684 = vunpack.c.l.b16 %v2339
    %v2685 = vunpack.c.h.b16 %v2339
    %v2686 = vunpack.c.l.b16 %v2340
    %v2687 = vunpack.c.h.b16 %v2340
    %v2688 = vunpack.c.l.b16 %v2341
    %v2689 = vunpack.c.h.b16 %v2341
    %v2690 = vunpack.c.l.b16 %v2342
    %v2691 = vunpack.c.h.b16 %v2342
    %v2692 = vunpack.c.l.b16 %v2343
    %v2693 = vunpack.c.h.b16 %v2343
    %v2694 = vunpack.c.l.b16 %v2344
    %v2695 = vunpack.c.h.b16 %v2344
    %v2696 = vunpack.c.l.b16 %v2345
    %v2697 = vunpack.c.h.b16 %v2345
    %v2698 = vunpack.c.l.b16 %v2346
    %v2699 = vunpack.c.h.b16 %v2346
    %v2700 = vunpack.c.l.b16 %v2347
    %v2701 = vunpack.c.h.b16 %v2347
    %v2702 = vunpack.c.l.b16 %v2348
    %v2703 = vunpack.c.h.b16 %v2348
    %v2704 = vunpack.c.l.b16 %v2349
    %v2705 = vunpack.c.h.b16 %v2349
    %v2706 = vunpack.c.l.b16 %v2350
    %v2707 = vunpack.c.h.b16 %v2350
    %v2708 = vunpack.c.l.b16 %v2351
    %v2709 = vunpack.c.h.b16 %v2351
    %v2710 = vunpack.c.l.b16 %v2352
    %v2711 = vunpack.c.h.b16 %v2352
    %v2712 = vunpack.c.l.b16 %v2353
    %v2713 = vunpack.c.h.b16 %v2353
    %v2714 = vunpack.c.l.b16 %v2354
    %v2715 = vunpack.c.h.b16 %v2354
    %v2716 = vunpack.c.l.b16 %v2355
    %v2717 = vunpack.c.h.b16 %v2355
    %v2718 = vunpack.c.l.b16 %v2356
    %v2719 = vunpack.c.h.b16 %v2356
    %v2720 = vunpack.c.l.b16 %v2357
    %v2721 = vunpack.c.h.b16 %v2357
    %v2722 = vunpack.c.l.b16 %v2358
    %v2723 = vunpack.c.h.b16 %v2358
    %v2724 = vunpack.c.l.b16 %v2359
    %v2725 = vunpack.c.h.b16 %v2359
    %v2726 = vunpack.c.l.b16 %v2360
    %v2727 = vunpack.c.h.b16 %v2360
    %v2728 = vunpack.c.l.b16 %v2361
    %v2729 = vunpack.c.h.b16 %v2361
    %v2730 = vunpack.c.l.b16 %v2362
    %v2731 = vunpack.c.h.b16 %v2362
    %v2732 = vunpack.c.l.b16 %v2363
    %v2733 = vunpack.c.h.b16 %v2363
    %v2734 = vunpack.c.l.b16 %v2364
    %v2735 = vunpack.c.h.b16 %v2364
    %v2736 = vunpack.c.l.b16 %v2365
    %v2737 = vunpack.c.h.b16 %v2365
    %v2738 = vunpack.c.l.b16 %v2366
    %v2739 = vunpack.c.h.b16 %v2366
    %v2740 = vunpack.c.l.b16 %v2367
    %v2741 = vunpack.c.h.b16 %v2367
    %v2742 = vunpack.c.l.b16 %v2368
    %v2743 = vunpack.c.h.b16 %v2368
    %v2744 = vunpack.c.l.b16 %v2369
    %v2745 = vunpack.c.h.b16 %v2369
    %v2746 = vunpack.c.l.b16 %v2370
    %v2747 = vunpack.c.h.b16 %v2370
    %v2748 = vunpack.c.l.b16 %v2371
    %v2749 = vunpack.c.h.b16 %v2371
    %v2750 = vunpack.c.l.b16 %v2372
    %v2751 = vunpack.c.h.b16 %v2372
    %v2752 = vunpack.c.l.b16 %v2373
    %v2753 = vunpack.c.h.b16 %v2373
    %v2754 = vunpack.c.l.b16 %v2374
    %v2755 = vunpack.c.h.b16 %v2374
    %v2756 = vunpack.c.l.b16 %v2375
    %v2757 = vunpack.c.h.b16 %v2375
    %v2758 = vunpack.c.l.b16 %v2376
    %v2759 = vunpack.c.h.b16 %v2376
    %v2760 = vunpack.c.l.b16 %v2377
    %v2761 = vunpack.c.h.b16 %v2377
    %v2762 = vunpack.c.l.b16 %v2378
    %v2763 = vunpack.c.h.b16 %v2378
    %v2764 = vunpack.c.l.b16 %v2379
    %v2765 = vunpack.c.h.b16 %v2379
    %v2766 = vunpack.c.l.b16 %v2380
    %v2767 = vunpack.c.h.b16 %v2380
    %v2768 = vunpack.c.l.b16 %v2381
    %v2769 = vunpack.c.h.b16 %v2381
    %v2770 = vunpack.c.l.b16 %v2382
    %v2771 = vunpack.c.h.b16 %v2382
    %v2772 = vunpack.c.l.b16 %v2383
    %v2773 = vunpack.c.h.b16 %v2383
    %v2774 = vunpack.c.l.b16 %v2384
    %v2775 = vunpack.c.h.b16 %v2384
    %v2776 = vunpack.c.l.b16 %v2385
    %v2777 = vunpack.c.h.b16 %v2385
    %v2778 = vunpack.c.l.b16 %v2386
    %v2779 = vunpack.c.h.b16 %v2386
    %v2780 = vunpack.c.l.b16 %v2387
    %v2781 = vunpack.c.h.b16 %v2387
    %v2782 = vunpack.c.l.b16 %v2388
    %v2783 = vunpack.c.h.b16 %v2388
    %v2784 = vunpack.c.l.b16 %v2389
    %v2785 = vunpack.c.h.b16 %v2389
    %v2786 = vunpack.c.l.b16 %v2390
    %v2787 = vunpack.c.h.b16 %v2390
    %v2788 = vunpack.c.l.b16 %v2391
    %v2789 = vunpack.c.h.b16 %v2391
    %v2790 = vunpack.c.l.b16 %v2392
    %v2791 = vunpack.c.h.b16 %v2392
    %v2792 = vunpack.c.l.b16 %v2393
    %v2793 = vunpack.c.h.b16 %v2393
    %v2794 = vunpack.c.l.b16 %v2394
    %v2795 = vunpack.c.h.b16 %v2394
    %v2796 = vunpack.c.l.b16 %v2395
    %v2797 = vunpack.c.h.b16 %v2395
    %v2798 = vunpack.c.l.b16 %v2396
    %v2799 = vunpack.c.h.b16 %v2396
    %v2800 = vunpack.c.l.b16 %v2397
    %v2801 = vunpack.c.h.b16 %v2397
    %v2802 = vunpack.c.l.b16 %v2398
    %v2803 = vunpack.c.h.b16 %v2398
    %v2804 = vunpack.c.l.b16 %v2399
    %v2805 = vunpack.c.h.b16 %v2399
    %v2806 = vunpack.c.l.b16 %v2400
    %v2807 = vunpack.c.h.b16 %v2400
    %v2808 = vunpack.c.l.b16 %v2401
    %v2809 = vunpack.c.h.b16 %v2401
    %v2810 = vunpack.c.l.b16 %v2402
    %v2811 = vunpack.c.h.b16 %v2402
    %v2812 = vunpack.c.l.b16 %v2403
    %v2813 = vunpack.c.h.b16 %v2403
    %v2814 = vunpack.c.l.b16 %v2404
    %v2815 = vunpack.c.h.b16 %v2404
    %v2816 = vunpack.c.l.b16 %v2405
    %v2817 = vunpack.c.h.b16 %v2405
    %v2818 = vunpack.c.l.b16 %v2406
    %v2819 = vunpack.c.h.b16 %v2406
    %v2820 = vunpack.c.l.b16 %v2407
    %v2821 = vunpack.c.h.b16 %v2407
    %v2822 = vunpack.c.l.b16 %v2408
    %v2823 = vunpack.c.h.b16 %v2408
    %v2824 = vunpack.c.l.b16 %v2409
    %v2825 = vunpack.c.h.b16 %v2409
    %v2826 = vunpack.c.l.b16 %v2410
    %v2827 = vunpack.c.h.b16 %v2410
    %v2828 = vunpack.c.l.b16 %v2411
    %v2829 = vunpack.c.h.b16 %v2411
    %v2830 = vunpack.c.l.b16 %v2412
    %v2831 = vunpack.c.h.b16 %v2412
    %v2832 = vunpack.c.l.b16 %v2413
    %v2833 = vunpack.c.h.b16 %v2413
    %v2834 = vunpack.c.l.b16 %v2414
    %v2835 = vunpack.c.h.b16 %v2414
    %v2836 = vunpack.c.l.b16 %v2415
    %v2837 = vunpack.c.h.b16 %v2415
    %v2838 = vunpack.c.l.b16 %v2416
    %v2839 = vunpack.c.h.b16 %v2416
    %v2840 = vunpack.c.l.b16 %v2417
    %v2841 = vunpack.c.h.b16 %v2417
    %v2842 = vunpack.c.l.b16 %v2418
    %v2843 = vunpack.c.h.b16 %v2418
    %v2844 = vunpack.c.l.b16 %v2419
    %v2845 = vunpack.c.h.b16 %v2419
    %v2846 = vunpack.c.l.b16 %v2420
    %v2847 = vunpack.c.h.b16 %v2420
    %v2848 = vunpack.c.l.b16 %v2421
    %v2849 = vunpack.c.h.b16 %v2421
    %v2850 = vpack.c.b16 %v2602, %v2594
    %v2851 = vpack.c.b16 %v2603, %v2595
    %v2852 = vpack.c.b16 %v2604, %v2596
    %v2853 = vpack.c.b16 %v2605, %v2597
    %v2854 = vpack.c.b16 %v2606, %v2598
    %v2855 = vpack.c.b16 %v2607, %v2599
    %v2856 = vpack.c.b16 %v2608, %v2600
    %v2857 = vpack.c.b16 %v2609, %v2601
    %v2858 = vpack.c.b16 %v2618, %v2610
    %v2859 = vpack.c.b16 %v2619, %v2611
    %v2860 = vpack.c.b16 %v2620, %v2612
    %v2861 = vpack.c.b16 %v2621, %v2613
    %v2862 = vpack.c.b16 %v2622, %v2614
    %v2863 = vpack.c.b16 %v2623, %v2615
    %v2864 = vpack.c.b16 %v2624, %v2616
    %v2865 = vpack.c.b16 %v2625, %v2617
    %v2866 = vpack.c.b16 %v2634, %v2626
    %v2867 = vpack.c.b16 %v2635, %v2627
    %v2868 = vpack.c.b16 %v2636, %v2628
    %v2869 = vpack.c.b16 %v2637, %v2629
    %v2870 = vpack.c.b16 %v2638, %v2630
    %v2871 = vpack.c.b16 %v2639, %v2631
    %v2872 = vpack.c.b16 %v2640, %v2632
    %v2873 = vpack.c.b16 %v2641, %v2633
    %v2874 = vpack.c.b16 %v2650, %v2642
    %v2875 = vpack.c.b16 %v2651, %v2643
    %v2876 = vpack.c.b16 %v2652, %v2644
    %v2877 = vpack.c.b16 %v2653, %v2645
    %v2878 = vpack.c.b16 %v2654, %v2646
    %v2879 = vpack.c.b16 %v2655, %v2647
    %v2880 = vpack.c.b16 %v2656, %v2648
    %v2881 = vpack.c.b16 %v2657, %v2649
    %v2882 = vpack.c.b16 %v2666, %v2658
    %v2883 = vpack.c.b16 %v2667, %v2659
    %v2884 = vpack.c.b16 %v2668, %v2660
    %v2885 = vpack.c.b16 %v2669, %v2661
    %v2886 = vpack.c.b16 %v2670, %v2662
    %v2887 = vpack.c.b16 %v2671, %v2663
    %v2888 = vpack.c.b16 %v2672, %v2664
    %v2889 = vpack.c.b16 %v2673, %v2665
    %v2890 = vpack.c.b16 %v2682, %v2674
    %v2891 = vpack.c.b16 %v2683, %v2675
    %v2892 = vpack.c.b16 %v2684, %v2676
    %v2893 = vpack.c.b16 %v2685, %v2677
    %v2894 = vpack.c.b16 %v2686, %v2678
    %v2895 = vpack.c.b16 %v2687, %v2679
    %v2896 = vpack.c.b16 %v2688, %v2680
    %v2897 = vpack.c.b16 %v2689, %v2681
    %v2898 = vpack.c.b16 %v2698, %v2690
    %v2899 = vpack.c.b16 %v2699, %v2691
    %v2900 = vpack.c.b16 %v2700, %v2692
    %v2901 = vpack.c.b16 %v2701, %v2693
    %v2902 = vpack.c.b16 %v2702, %v2694
    %v2903 = vpack.c.b16 %v2703, %v2695
    %v2904 = vpack.c.b16 %v2704, %v2696
    %v2905 = vpack.c.b16 %v2705, %v2697
    %v2906 = vpack.c.b16 %v2714, %v2706
    %v2907 = vpack.c.b16 %v2715, %v2707
    %v2908 = vpack.c.b16 %v2716, %v2708
    %v2909 = vpack.c.b16 %v2717, %v2709
    %v2910 = vpack.c.b16 %v2718, %v2710
    %v2911 = vpack.c.b16 %v2719, %v2711
    %v2912 = vpack.c.b16 %v2720, %v2712
    %v2913 = vpack.c.b16 %v2721, %v2713
    %v2914 = vpack.c.b16 %v2730, %v2722
    %v2915 = vpack.c.b16 %v2731, %v2723
    %v2916 = vpack.c.b16 %v2732, %v2724
    %v2917 = vpack.c.b16 %v2733, %v2725
    %v2918 = vpack.c.b16 %v2734, %v2726
    %v2919 = vpack.c.b16 %v2735, %v2727
    %v2920 = vpack.c.b16 %v2736, %v2728
    %v2921 = vpack.c.b16 %v2737, %v2729
    %v2922 = vpack.c.b16 %v2746, %v2738
    %v2923 = vpack.c.b16 %v2747, %v2739
    %v2924 = vpack.c.b16 %v2748, %v2740
    %v2925 = vpack.c.b16 %v2749, %v2741
    %v2926 = vpack.c.b16 %v2750, %v2742
    %v2927 = vpack.c.b16 %v2751, %v2743
    %v2928 = vpack.c.b16 %v2752, %v2744
    %v2929 = vpack.c.b16 %v2753, %v2745
    %v2930 = vpack.c.b16 %v2762, %v2754
    %v2931 = vpack.c.b16 %v2763, %v2755
    %v2932 = vpack.c.b16 %v2764, %v2756
    %v2933 = vpack.c.b16 %v2765, %v2757
    %v2934 = vpack.c.b16 %v2766, %v2758
    %v2935 = vpack.c.b16 %v2767, %v2759
    %v2936 = vpack.c.b16 %v2768, %v2760
    %v2937 = vpack.c.b16 %v2769, %v2761
    %v2938 = vpack.c.b16 %v2778, %v2770
    %v2939 = vpack.c.b16 %v2779, %v2771
    %v2940 = vpack.c.b16 %v2780, %v2772
    %v2941 = vpack.c.b16 %v2781, %v2773
    %v2942 = vpack.c.b16 %v2782, %v2774
    %v2943 = vpack.c.b16 %v2783, %v2775
    %v2944 = vpack.c.b16 %v2784, %v2776
    %v2945 = vpack.c.b16 %v2785, %v2777
    %v2946 = vpack.c.b16 %v2794, %v2786
    %v2947 = vpack.c.b16 %v2795, %v2787
    %v2948 = vpack.c.b16 %v2796, %v2788
    %v2949 = vpack.c.b16 %v2797, %v2789
    %v2950 = vpack.c.b16 %v2798, %v2790
    %v2951 = vpack.c.b16 %v2799, %v2791
    %v2952 = vpack.c.b16 %v2800, %v2792
    %v2953 = vpack.c.b16 %v2801, %v2793
    %v2954 = vpack.c.b16 %v2810, %v2802
    %v2955 = vpack.c.b16 %v2811, %v2803
    %v2956 = vpack.c.b16 %v2812, %v2804
    %v2957 = vpack.c.b16 %v2813, %v2805
    %v2958 = vpack.c.b16 %v2814, %v2806
    %v2959 = vpack.c.b16 %v2815, %v2807
    %v2960 = vpack.c.b16 %v2816, %v2808
    %v2961 = vpack.c.b16 %v2817, %v2809
    %v2962 = vpack.c.b16 %v2826, %v2818
    %v2963 = vpack.c.b16 %v2827, %v2819
    %v2964 = vpack.c.b16 %v2828, %v2820
    %v2965 = vpack.c.b16 %v2829, %v2821
    %v2966 = vpack.c.b16 %v2830, %v2822
    %v2967 = vpack.c.b16 %v2831, %v2823
    %v2968 = vpack.c.b16 %v2832, %v2824
    %v2969 = vpack.c.b16 %v2833, %v2825
    %v2970 = vpack.c.b16 %v2842, %v2834
    %v2971 = vpack.c.b16 %v2843, %v2835
    %v2972 = vpack.c.b16 %v2844, %v2836
    %v2973 = vpack.c.b16 %v2845, %v2837
    %v2974 = vpack.c.b16 %v2846, %v2838
    %v2975 = vpack.c.b16 %v2847, %v2839
    %v2976 = vpack.c.b16 %v2848, %v2840
    %v2977 = vpack.c.b16 %v2849, %v2841
    %3106 = vmatprep.subr.bf16.mxu0 %v2851
    %3107 = vmatpush1.bf16.msra.mxu0 %v2850
    %3108 = vmatprep.subr.bf16.mxu0 %v2859
    %3109 = vmatpush1.bf16.msra.mxu0 %v2858
    %3110 = vmatprep.subr.bf16.mxu0 %v2867
    %3111 = vmatpush1.bf16.msra.mxu0 %v2866
    %3112 = vmatprep.subr.bf16.mxu0 %v2875
    %3113 = vmatpush1.bf16.msra.mxu0 %v2874
    %3114 = vmatprep.subr.bf16.mxu0 %v2883
    %3115 = vmatpush1.bf16.msra.mxu0 %v2882
    %3116 = vmatprep.subr.bf16.mxu0 %v2891
    %3117 = vmatpush1.bf16.msra.mxu0 %v2890
    %3118 = vmatprep.subr.bf16.mxu0 %v2899
    %3119 = vmatpush1.bf16.msra.mxu0 %v2898
    %3120 = vmatprep.subr.bf16.mxu0 %v2907
    %3121 = vmatpush1.bf16.msra.mxu0 %v2906
    %3122 = vmatprep.subr.bf16.mxu0 %v2915
    %3123 = vmatpush1.bf16.msra.mxu0 %v2914
    %3124 = vmatprep.subr.bf16.mxu0 %v2923
    %3125 = vmatpush1.bf16.msra.mxu0 %v2922
    %3126 = vmatprep.subr.bf16.mxu0 %v2931
    %3127 = vmatpush1.bf16.msra.mxu0 %v2930
    %3128 = vmatprep.subr.bf16.mxu0 %v2939
    %3129 = vmatpush1.bf16.msra.mxu0 %v2938
    %3130 = vmatprep.subr.bf16.mxu0 %v2947
    %3131 = vmatpush1.bf16.msra.mxu0 %v2946
    %3132 = vmatprep.subr.bf16.mxu0 %v2955
    %3133 = vmatpush1.bf16.msra.mxu0 %v2954
    %3134 = vmatprep.subr.bf16.mxu0 %v2963
    %3135 = vmatpush1.bf16.msra.mxu0 %v2962
    %3136 = vmatprep.subr.bf16.mxu0 %v2971
    %3137 = vmatpush1.bf16.msra.mxu0 %v2970
    %3138 = vmatprep.mubr.bf16.mxu0 %v2423
    %3139 = vmatmul.mubr.bf16.gmra.mrb[0].mxu0 %v2422
    %v3140 = vpop.f32.mrb[0].mxu0
    %v3141 = vadd.f32 %v2429, %v3140
    %v3142 = vpop.f32.mrb[0].mxu0
    %v3143 = vadd.f32 %v2433, %v3142
    %v3144 = vpop.f32.mrb[0].mxu0
    %v3145 = vpop.f32.mrb[0].mxu0
    %3146 = vdwg.mxu0
    %3147 = vmatprep.subr.bf16.mxu0 %v2853
    %3148 = vmatpush1.bf16.msra.mxu0 %v2852
    %3149 = vmatprep.subr.bf16.mxu0 %v2861
    %3150 = vmatpush1.bf16.msra.mxu0 %v2860
    %3151 = vmatprep.subr.bf16.mxu0 %v2869
    %3152 = vmatpush1.bf16.msra.mxu0 %v2868
    %3153 = vmatprep.subr.bf16.mxu0 %v2877
    %3154 = vmatpush1.bf16.msra.mxu0 %v2876
    %3155 = vmatprep.subr.bf16.mxu0 %v2885
    %3156 = vmatpush1.bf16.msra.mxu0 %v2884
    %3157 = vmatprep.subr.bf16.mxu0 %v2893
    %3158 = vmatpush1.bf16.msra.mxu0 %v2892
    %3159 = vmatprep.subr.bf16.mxu0 %v2901
    %3160 = vmatpush1.bf16.msra.mxu0 %v2900
    %3161 = vmatprep.subr.bf16.mxu0 %v2909
    %3162 = vmatpush1.bf16.msra.mxu0 %v2908
    %3163 = vmatprep.subr.bf16.mxu0 %v2917
    %3164 = vmatpush1.bf16.msra.mxu0 %v2916
    %3165 = vmatprep.subr.bf16.mxu0 %v2925
    %3166 = vmatpush1.bf16.msra.mxu0 %v2924
    %3167 = vmatprep.subr.bf16.mxu0 %v2933
    %3168 = vmatpush1.bf16.msra.mxu0 %v2932
    %3169 = vmatprep.subr.bf16.mxu0 %v2941
    %3170 = vmatpush1.bf16.msra.mxu0 %v2940
    %3171 = vmatprep.subr.bf16.mxu0 %v2949
    %3172 = vmatpush1.bf16.msra.mxu0 %v2948
    %3173 = vmatprep.subr.bf16.mxu0 %v2957
    %3174 = vmatpush1.bf16.msra.mxu0 %v2956
    %3175 = vmatprep.subr.bf16.mxu0 %v2965
    %3176 = vmatpush1.bf16.msra.mxu0 %v2964
    %3177 = vmatprep.subr.bf16.mxu0 %v2973
    %3178 = vmatpush1.bf16.msra.mxu0 %v2972
    %3179 = vmatprep.mubr.bf16.mxu0 %v2423
    %3180 = vmatmul.mubr.bf16.gmra.mrb[0].mxu0 %v2422
    %v3181 = vpop.f32.mrb[0].mxu0
    %v3182 = vadd.f32 %v2437, %v3181
    %v3183 = vpop.f32.mrb[0].mxu0
    %v3184 = vadd.f32 %v2441, %v3183
    %v3185 = vpop.f32.mrb[0].mxu0
    %v3186 = vpop.f32.mrb[0].mxu0
    %3187 = vdwg.mxu0
    %3188 = vmatprep.subr.bf16.mxu0 %v2855
    %3189 = vmatpush1.bf16.msra.mxu0 %v2854
    %3190 = vmatprep.subr.bf16.mxu0 %v2863
    %3191 = vmatpush1.bf16.msra.mxu0 %v2862
    %3192 = vmatprep.subr.bf16.mxu0 %v2871
    %3193 = vmatpush1.bf16.msra.mxu0 %v2870
    %3194 = vmatprep.subr.bf16.mxu0 %v2879
    %3195 = vmatpush1.bf16.msra.mxu0 %v2878
    %3196 = vmatprep.subr.bf16.mxu0 %v2887
    %3197 = vmatpush1.bf16.msra.mxu0 %v2886
    %3198 = vmatprep.subr.bf16.mxu0 %v2895
    %3199 = vmatpush1.bf16.msra.mxu0 %v2894
    %3200 = vmatprep.subr.bf16.mxu0 %v2903
    %3201 = vmatpush1.bf16.msra.mxu0 %v2902
    %3202 = vmatprep.subr.bf16.mxu0 %v2911
    %3203 = vmatpush1.bf16.msra.mxu0 %v2910
    %3204 = vmatprep.subr.bf16.mxu0 %v2919
    %3205 = vmatpush1.bf16.msra.mxu0 %v2918
    %3206 = vmatprep.subr.bf16.mxu0 %v2927
    %3207 = vmatpush1.bf16.msra.mxu0 %v2926
    %3208 = vmatprep.subr.bf16.mxu0 %v2935
    %3209 = vmatpush1.bf16.msra.mxu0 %v2934
    %3210 = vmatprep.subr.bf16.mxu0 %v2943
    %3211 = vmatpush1.bf16.msra.mxu0 %v2942
    %3212 = vmatprep.subr.bf16.mxu0 %v2951
    %3213 = vmatpush1.bf16.msra.mxu0 %v2950
    %3214 = vmatprep.subr.bf16.mxu0 %v2959
    %3215 = vmatpush1.bf16.msra.mxu0 %v2958
    %3216 = vmatprep.subr.bf16.mxu0 %v2967
    %3217 = vmatpush1.bf16.msra.mxu0 %v2966
    %3218 = vmatprep.subr.bf16.mxu0 %v2975
    %3219 = vmatpush1.bf16.msra.mxu0 %v2974
    %3220 = vmatprep.mubr.bf16.mxu0 %v2423
    %3221 = vmatmul.mubr.bf16.gmra.mrb[0].mxu0 %v2422
    %v3222 = vpop.f32.mrb[0].mxu0
    %v3223 = vadd.f32 %v2445, %v3222
    %v3224 = vpop.f32.mrb[0].mxu0
    %v3225 = vadd.f32 %v2449, %v3224
    %v3226 = vpop.f32.mrb[0].mxu0
    %v3227 = vpop.f32.mrb[0].mxu0
    %3228 = vdwg.mxu0
    %3229 = vmatprep.subr.bf16.mxu0 %v2857
    %3230 = vmatpush1.bf16.msra.mxu0 %v2856
    %3231 = vmatprep.subr.bf16.mxu0 %v2865
    %3232 = vmatpush1.bf16.msra.mxu0 %v2864
    %3233 = vmatprep.subr.bf16.mxu0 %v2873
    %3234 = vmatpush1.bf16.msra.mxu0 %v2872
    %3235 = vmatprep.subr.bf16.mxu0 %v2881
    %3236 = vmatpush1.bf16.msra.mxu0 %v2880
    %3237 = vmatprep.subr.bf16.mxu0 %v2889
    %3238 = vmatpush1.bf16.msra.mxu0 %v2888
    %3239 = vmatprep.subr.bf16.mxu0 %v2897
    %3240 = vmatpush1.bf16.msra.mxu0 %v2896
    %3241 = vmatprep.subr.bf16.mxu0 %v2905
    %3242 = vmatpush1.bf16.msra.mxu0 %v2904
    %3243 = vmatprep.subr.bf16.mxu0 %v2913
    %3244 = vmatpush1.bf16.msra.mxu0 %v2912
    %3245 = vmatprep.subr.bf16.mxu0 %v2921
    %3246 = vmatpush1.bf16.msra.mxu0 %v2920
    %3247 = vmatprep.subr.bf16.mxu0 %v2929
    %3248 = vmatpush1.bf16.msra.mxu0 %v2928
    %3249 = vmatprep.subr.bf16.mxu0 %v2937
    %3250 = vmatpush1.bf16.msra.mxu0 %v2936
    %3251 = vmatprep.subr.bf16.mxu0 %v2945
    %3252 = vmatpush1.bf16.msra.mxu0 %v2944
    %3253 = vmatprep.subr.bf16.mxu0 %v2953
    %3254 = vmatpush1.bf16.msra.mxu0 %v2952
    %3255 = vmatprep.subr.bf16.mxu0 %v2961
    %3256 = vmatpush1.bf16.msra.mxu0 %v2960
    %3257 = vmatprep.subr.bf16.mxu0 %v2969
    %3258 = vmatpush1.bf16.msra.mxu0 %v2968
    %3259 = vmatprep.subr.bf16.mxu0 %v2977
    %3260 = vmatpush1.bf16.msra.mxu0 %v2976
    %3261 = vmatprep.mubr.bf16.mxu0 %v2423
    %3262 = vmatmul.mubr.bf16.gmra.mrb[0].mxu0 %v2422
    %v3263 = vpop.f32.mrb[0].mxu0
    %v3264 = vadd.f32 %v2453, %v3263
    %v3265 = vpop.f32.mrb[0].mxu0
    %v3266 = vadd.f32 %v2457, %v3265
    %v3267 = vpop.f32.mrb[0].mxu0
    %v3268 = vpop.f32.mrb[0].mxu0
    %3269 = vdwg.mxu0
    %v3278 = vcombine.low %v3141, %v3143
    %v3279 = vcombine.low %v3182, %v3184
    %v3280 = vcombine.low %v3223, %v3225
    %v3281 = vcombine.low %v3264, %v3266
    %v3283 = vunpack.c.l.s4 1966171168
    %v3284 = vunpack.c.0.s8 %v3283
    %v3285 = vlaneseq
    %v3286 = vshrl.u32 %v3285, 7
    %v3287 = vsub.s32 %v3284, %v3286
    %v3288 = vrot.slane %v3278, %v3287
    %v3290 = vunpack.c.l.s4 1966171168
    %v3291 = vunpack.c.0.s8 %v3290
    %v3292 = vlaneseq
    %v3293 = vshrl.u32 %v3292, 7
    %v3294 = vsub.s32 %v3291, %v3293
    %v3295 = vrot.slane %v3279, %v3294
    %v3297 = vunpack.c.l.s4 1966171168
    %v3298 = vunpack.c.0.s8 %v3297
    %v3299 = vlaneseq
    %v3300 = vshrl.u32 %v3299, 7
    %v3301 = vsub.s32 %v3298, %v3300
    %v3302 = vrot.slane %v3280, %v3301
    %v3304 = vunpack.c.l.s4 1966171168
    %v3305 = vunpack.c.0.s8 %v3304
    %v3306 = vlaneseq
    %v3307 = vshrl.u32 %v3306, 7
    %v3308 = vsub.s32 %v3305, %v3307
    %v3309 = vrot.slane %v3281, %v3308
    %v3310 = vcombine.low %v3288, %v3295
    %v3311 = vcombine.high %v3288, %v3295
    %v3312 = vcombine.low %v3302, %v3309
    %v3313 = vcombine.high %v3302, %v3309
    %v3315 = vunpack.c.l.s4 1966171168
    %v3316 = vunpack.c.0.s8 %v3315
    %v3317 = vlaneseq
    %v3318 = vshrl.u32 %v3317, 7
    %v3319 = vsub.s32 %v3316, %v3318
    %v3320 = vrot.slane %v3310, %v3319
    %v3322 = vunpack.c.l.s4 1966171168
    %v3323 = vunpack.c.0.s8 %v3322
    %v3324 = vlaneseq
    %v3325 = vshrl.u32 %v3324, 7
    %v3326 = vsub.s32 %v3323, %v3325
    %v3327 = vrot.slane %v3311, %v3326
    %v3329 = vunpack.c.l.s4 1966171168
    %v3330 = vunpack.c.0.s8 %v3329
    %v3331 = vlaneseq
    %v3332 = vshrl.u32 %v3331, 7
    %v3333 = vsub.s32 %v3330, %v3332
    %v3334 = vrot.slane %v3312, %v3333
    %v3336 = vunpack.c.l.s4 1966171168
    %v3337 = vunpack.c.0.s8 %v3336
    %v3338 = vlaneseq
    %v3339 = vshrl.u32 %v3338, 7
    %v3340 = vsub.s32 %v3337, %v3339
    %v3341 = vrot.slane %v3313, %v3340
    %v3342 = vcombine.low %v3320, %v3334
    %v3343 = vcombine.low %v3327, %v3341
    %s3346 = smul.u32 1, 1
    %s3347 = sshll.u32 %s3346, 4
    %3348 = dma.done [#allocation6], %s3347
    %s3349 = sshll.u32 %s3346, 4
    %3350 = dma.done %s142, %s3349
    %s3351 = sshll.u32 %s3346, 4
    %3352 = dma.done %s190, %s3351
    %s3353 = sshll.u32 %s3346, 4
    %3354 = dma.done %s238, %s3353
    %s3355 = sshll.u32 %s3346, 4
    %3356 = dma.done %s286, %s3355
    %s3357 = sshll.u32 %s3346, 4
    %3358 = dma.done %s334, %s3357
    %s3359 = sshll.u32 %s3346, 4
    %3360 = dma.done %s382, %s3359
    %s3361 = sshll.u32 %s3346, 4
    %3362 = dma.done %s430, %s3361
    %s3363 = sshll.u32 %s3346, 4
    %3364 = dma.done %s478, %s3363
    %s3365 = sshll.u32 %s3346, 4
    %3366 = dma.done %s526, %s3365
    %s3367 = sshll.u32 %s3346, 4
    %3368 = dma.done %s574, %s3367
    %s3369 = sshll.u32 %s3346, 4
    %3370 = dma.done %s622, %s3369
    %s3371 = sshll.u32 %s3346, 4
    %3372 = dma.done %s670, %s3371
    %s3373 = sshll.u32 %s3346, 4
    %3374 = dma.done %s718, %s3373
    %s3375 = sshll.u32 %s3346, 4
    %3376 = dma.done %s766, %s3375
    %s3377 = sshll.u32 %s3346, 4
    %3378 = dma.done %s814, %s3377
    %v3379 = vld [vmem:[#allocation2] sm:$0xff]
    %v3380 = vld [vmem:[#allocation2 + $0x8] sm:$0xff]
    %v3381 = vld [vmem:[%s3] sm:$0xff]
    %v3382 = vld [vmem:[%s3 + $0x8] sm:$0xff]
    %v3383 = vld [vmem:[%s3 + $0x10] sm:$0xff]
    %v3384 = vld [vmem:[%s3 + $0x18] sm:$0xff]
    %v3385 = vadd.f32 %v3342, %v3381
    %v3386 = vadd.f32 %v3343, %v3382
    %v3387 = vadd.f32 %v3379, %v3383
    %v3388 = vadd.f32 %v3380, %v3384
    %3389 = vadd.xlane.f32.xlu0 %v3385
    %v3390 = vpop.xlane.xlu0 %3389
    %3391 = vadd.xlane.f32.xlu0 %v3386
    %v3392 = vpop.xlane.xlu0 %3391
    %3393 = vadd.xlane.f32.xlu0 %v3387
    %v3394 = vpop.xlane.xlu0 %3393
    %3395 = vadd.xlane.f32.xlu0 %v3388
    %v3396 = vpop.xlane.xlu0 %3395
    %v3397 = vrcp.pop 128.0
    %v3398 = vmul.f32 %v3390, %v3397
    %v3399 = vmul.f32 %v3392, %v3397
    %v3400 = vmul.f32 %v3394, %v3397
    %v3401 = vmul.f32 %v3396, %v3397
    %v3402 = vsub.f32 %v3385, %v3398
    %v3403 = vsub.f32 %v3386, %v3399
    %v3404 = vsub.f32 %v3387, %v3400
    %v3405 = vsub.f32 %v3388, %v3401
    %v3406 = vmul.f32 %v3402, %v3402
    %v3407 = vmul.f32 %v3403, %v3403
    %v3408 = vmul.f32 %v3404, %v3404
    %v3409 = vmul.f32 %v3405, %v3405
    %3410 = vadd.xlane.f32.xlu0 %v3406
    %v3411 = vpop.xlane.xlu0 %3410
    %3412 = vadd.xlane.f32.xlu0 %v3407
    %v3413 = vpop.xlane.xlu0 %3412
    %3414 = vadd.xlane.f32.xlu0 %v3408
    %v3415 = vpop.xlane.xlu0 %3414
    %3416 = vadd.xlane.f32.xlu0 %v3409
    %v3417 = vpop.xlane.xlu0 %3416
    %v3418 = vmul.f32 %v3411, %v3397
    %v3419 = vmul.f32 %v3413, %v3397
    %v3420 = vmul.f32 %v3415, %v3397
    %v3421 = vmul.f32 %v3417, %v3397
    %v3422 = vadd.f32 %v3418, 1e-05
    %v3423 = vadd.f32 %v3419, 1e-05
    %v3424 = vadd.f32 %v3420, 1e-05
    %v3425 = vadd.f32 %v3421, 1e-05
    %v3426 = vrsqrt.pop %v3422
    %v3427 = vrsqrt.pop %v3423
    %v3428 = vrsqrt.pop %v3424
    %v3429 = vrsqrt.pop %v3425
    %v3430 = vmul.f32 %v3402, %v3426
    %v3431 = vmul.f32 %v3403, %v3427
    %v3432 = vmul.f32 %v3404, %v3428
    %v3433 = vmul.f32 %v3405, %v3429
    %v3434 = vld [vmem:[%s11] sm:$0x1]
    %v3436 = vlaneseq
    %v3437 = vshrl.u32 %v3436, 7
    %v3438 = vsub.s32 0, %v3437
    %v3439 = vrot.slane %v3434, %v3438
    %v3441 = vmul.f32 %v3430, %v3439
    %v3442 = vmul.f32 %v3431, %v3439
    %v3443 = vmul.f32 %v3432, %v3439
    %v3444 = vmul.f32 %v3433, %v3439
    %v3445 = vld [vmem:[%s12] sm:$0x1]
    %v3447 = vlaneseq
    %v3448 = vshrl.u32 %v3447, 7
    %v3449 = vsub.s32 0, %v3448
    %v3450 = vrot.slane %v3445, %v3449
    %v3452 = vadd.f32 %v3441, %v3450
    %v3453 = vadd.f32 %v3442, %v3450
    %v3454 = vadd.f32 %v3443, %v3450
    %v3455 = vadd.f32 %v3444, %v3450
    %v3456 = vld [vmem:[%s13] sm:$0xff]
    %v3457 = vld [vmem:[%s13 + $0x8] sm:$0xf]
    %v3458 = vld [vmem:[%s13 + $0xc] sm:$0xff]
    %v3459 = vld [vmem:[%s13 + $0x14] sm:$0xf]
    %v3460 = vld [vmem:[%s13 + $0x18] sm:$0xff]
    %v3461 = vld [vmem:[%s13 + $0x20] sm:$0xf]
    %v3462 = vld [vmem:[%s13 + $0x24] sm:$0xff]
    %v3463 = vld [vmem:[%s13 + $0x2c] sm:$0xf]
    %v3464 = vld [vmem:[%s13 + $0x30] sm:$0xff]
    %v3465 = vld [vmem:[%s13 + $0x38] sm:$0xf]
    %v3466 = vld [vmem:[%s13 + $0x3c] sm:$0xff]
    %v3467 = vld [vmem:[%s13 + $0x44] sm:$0xf]
    %v3468 = vld [vmem:[%s13 + $0x48] sm:$0xff]
    %v3469 = vld [vmem:[%s13 + $0x50] sm:$0xf]
    %v3470 = vld [vmem:[%s13 + $0x54] sm:$0xff]
    %v3471 = vld [vmem:[%s13 + $0x5c] sm:$0xf]
    %v3472 = vld [vmem:[%s13 + $0x60] sm:$0xff]
    %v3473 = vld [vmem:[%s13 + $0x68] sm:$0xf]
    %v3474 = vld [vmem:[%s13 + $0x6c] sm:$0xff]
    %v3475 = vld [vmem:[%s13 + $0x74] sm:$0xf]
    %v3476 = vld [vmem:[%s13 + $0x78] sm:$0xff]
    %v3477 = vld [vmem:[%s13 + $0x80] sm:$0xf]
    %v3478 = vld [vmem:[%s13 + $0x84] sm:$0xff]
    %v3479 = vld [vmem:[%s13 + $0x8c] sm:$0xf]
    %v3480 = vld [vmem:[%s13 + $0x90] sm:$0xff]
    %v3481 = vld [vmem:[%s13 + $0x98] sm:$0xf]
    %v3482 = vld [vmem:[%s13 + $0x9c] sm:$0xff]
    %v3483 = vld [vmem:[%s13 + $0xa4] sm:$0xf]
    %v3484 = vld [vmem:[%s13 + $0xa8] sm:$0xff]
    %v3485 = vld [vmem:[%s13 + $0xb0] sm:$0xf]
    %v3486 = vld [vmem:[%s13 + $0xb4] sm:$0xff]
    %v3487 = vld [vmem:[%s13 + $0xbc] sm:$0xf]
    %v3488 = vpack.c.bf16 %v3453, %v3452
    %v3489 = vpack.c.bf16 %v3455, %v3454
    %v3490 = vld [vmem:[%s14] sm:$0x7]
    %v3492 = vlaneseq
    %v3493 = vshrl.u32 %v3492, 7
    %v3494 = vsub.s32 0, %v3493
    %v3495 = vrot.slane %v3490, %v3494
    %v3496 = vlaneseq
    %v3497 = vshrl.u32 %v3496, 7
    %v3498 = vsub.s32 1, %v3497
    %v3499 = vrot.slane %v3490, %v3498
    %v3500 = vlaneseq
    %v3501 = vshrl.u32 %v3500, 7
    %v3502 = vsub.s32 2, %v3501
    %v3503 = vrot.slane %v3490, %v3502
    %v3539 = vunpack.c.l.b16 %v3456
    %v3540 = vunpack.c.h.b16 %v3456
    %v3541 = vunpack.c.l.b16 %v3457
    %v3542 = vunpack.c.l.b16 %v3458
    %v3543 = vunpack.c.h.b16 %v3458
    %v3544 = vunpack.c.l.b16 %v3459
    %v3545 = vunpack.c.l.b16 %v3460
    %v3546 = vunpack.c.h.b16 %v3460
    %v3547 = vunpack.c.l.b16 %v3461
    %v3548 = vunpack.c.l.b16 %v3462
    %v3549 = vunpack.c.h.b16 %v3462
    %v3550 = vunpack.c.l.b16 %v3463
    %v3551 = vunpack.c.l.b16 %v3464
    %v3552 = vunpack.c.h.b16 %v3464
    %v3553 = vunpack.c.l.b16 %v3465
    %v3554 = vunpack.c.l.b16 %v3466
    %v3555 = vunpack.c.h.b16 %v3466
    %v3556 = vunpack.c.l.b16 %v3467
    %v3557 = vunpack.c.l.b16 %v3468
    %v3558 = vunpack.c.h.b16 %v3468
    %v3559 = vunpack.c.l.b16 %v3469
    %v3560 = vunpack.c.l.b16 %v3470
    %v3561 = vunpack.c.h.b16 %v3470
    %v3562 = vunpack.c.l.b16 %v3471
    %v3563 = vunpack.c.l.b16 %v3472
    %v3564 = vunpack.c.h.b16 %v3472
    %v3565 = vunpack.c.l.b16 %v3473
    %v3566 = vunpack.c.l.b16 %v3474
    %v3567 = vunpack.c.h.b16 %v3474
    %v3568 = vunpack.c.l.b16 %v3475
    %v3569 = vunpack.c.l.b16 %v3476
    %v3570 = vunpack.c.h.b16 %v3476
    %v3571 = vunpack.c.l.b16 %v3477
    %v3572 = vunpack.c.l.b16 %v3478
    %v3573 = vunpack.c.h.b16 %v3478
    %v3574 = vunpack.c.l.b16 %v3479
    %v3575 = vunpack.c.l.b16 %v3480
    %v3576 = vunpack.c.h.b16 %v3480
    %v3577 = vunpack.c.l.b16 %v3481
    %v3578 = vunpack.c.l.b16 %v3482
    %v3579 = vunpack.c.h.b16 %v3482
    %v3580 = vunpack.c.l.b16 %v3483
    %v3581 = vunpack.c.l.b16 %v3484
    %v3582 = vunpack.c.h.b16 %v3484
    %v3583 = vunpack.c.l.b16 %v3485
    %v3584 = vunpack.c.l.b16 %v3486
    %v3585 = vunpack.c.h.b16 %v3486
    %v3586 = vunpack.c.l.b16 %v3487
    %v3587 = vpack.c.b16 %v3542, %v3539
    %v3588 = vpack.c.b16 %v3543, %v3540
    %v3589 = vpack.c.b16 %v3544, %v3541
    %v3590 = vpack.c.b16 %v3548, %v3545
    %v3591 = vpack.c.b16 %v3549, %v3546
    %v3592 = vpack.c.b16 %v3550, %v3547
    %v3593 = vpack.c.b16 %v3554, %v3551
    %v3594 = vpack.c.b16 %v3555, %v3552
    %v3595 = vpack.c.b16 %v3556, %v3553
    %v3596 = vpack.c.b16 %v3560, %v3557
    %v3597 = vpack.c.b16 %v3561, %v3558
    %v3598 = vpack.c.b16 %v3562, %v3559
    %v3599 = vpack.c.b16 %v3566, %v3563
    %v3600 = vpack.c.b16 %v3567, %v3564
    %v3601 = vpack.c.b16 %v3568, %v3565
    %v3602 = vpack.c.b16 %v3572, %v3569
    %v3603 = vpack.c.b16 %v3573, %v3570
    %v3604 = vpack.c.b16 %v3574, %v3571
    %v3605 = vpack.c.b16 %v3578, %v3575
    %v3606 = vpack.c.b16 %v3579, %v3576
    %v3607 = vpack.c.b16 %v3580, %v3577
    %v3608 = vpack.c.b16 %v3584, %v3581
    %v3609 = vpack.c.b16 %v3585, %v3582
    %v3610 = vpack.c.b16 %v3586, %v3583
    %3635 = vmatprep.subr.bf16.mxu0 %v3588
    %3636 = vmatpush1.bf16.msra.mxu0 %v3587
    %3637 = vmatprep.subr.bf16.mxu0 %v3591
    %3638 = vmatpush1.bf16.msra.mxu0 %v3590
    %3639 = vmatprep.subr.bf16.mxu0 %v3594
    %3640 = vmatpush1.bf16.msra.mxu0 %v3593
    %3641 = vmatprep.subr.bf16.mxu0 %v3597
    %3642 = vmatpush1.bf16.msra.mxu0 %v3596
    %3643 = vmatprep.subr.bf16.mxu0 %v3600
    %3644 = vmatpush1.bf16.msra.mxu0 %v3599
    %3645 = vmatprep.subr.bf16.mxu0 %v3603
    %3646 = vmatpush1.bf16.msra.mxu0 %v3602
    %3647 = vmatprep.subr.bf16.mxu0 %v3606
    %3648 = vmatpush1.bf16.msra.mxu0 %v3605
    %3649 = vmatprep.subr.bf16.mxu0 %v3609
    %3650 = vmatpush1.bf16.msra.mxu0 %v3608
    %3651 = vmatprep.subr.bf16.mxu0 0
    %3652 = vmatpush1.bf16.msra.mxu0 0
    %3653 = vmatprep.subr.bf16.mxu0 0
    %3654 = vmatpush1.bf16.msra.mxu0 0
    %3655 = vmatprep.subr.bf16.mxu0 0
    %3656 = vmatpush1.bf16.msra.mxu0 0
    %3657 = vmatprep.subr.bf16.mxu0 0
    %3658 = vmatpush1.bf16.msra.mxu0 0
    %3659 = vmatprep.subr.bf16.mxu0 0
    %3660 = vmatpush1.bf16.msra.mxu0 0
    %3661 = vmatprep.subr.bf16.mxu0 0
    %3662 = vmatpush1.bf16.msra.mxu0 0
    %3663 = vmatprep.subr.bf16.mxu0 0
    %3664 = vmatpush1.bf16.msra.mxu0 0
    %3665 = vmatprep.subr.bf16.mxu0 0
    %3666 = vmatpush1.bf16.msra.mxu0 0
    %3667 = vmatprep.mubr.bf16.mxu0 0
    %3668 = vmatmul.mubr.bf16.gmra.mrb[0].mxu0 %v3488
    %v3669 = vpop.f32.mrb[0].mxu0
    %v3670 = vadd.f32 %v3495, %v3669
    %v3671 = vpop.f32.mrb[0].mxu0
    %v3672 = vadd.f32 %v3499, %v3671
    %v3673 = vpop.f32.mrb[0].mxu0
    %v3674 = vadd.f32 %v3495, %v3673
    %v3675 = vpop.f32.mrb[0].mxu0
    %v3676 = vadd.f32 %v3499, %v3675
    %3677 = vmatprep.mubr.bf16.mxu0 0
    %3678 = vmatmul.mubr.bf16.gmra.mrb[0].mxu0 %v3489
    %v3679 = vpop.f32.mrb[0].mxu0
    %v3680 = vadd.f32 %v3495, %v3679
    %v3681 = vpop.f32.mrb[0].mxu0
    %v3682 = vadd.f32 %v3499, %v3681
    %v3683 = vpop.f32.mrb[0].mxu0
    %v3684 = vadd.f32 %v3495, %v3683
    %v3685 = vpop.f32.mrb[0].mxu0
    %v3686 = vadd.f32 %v3499, %v3685
    %3687 = vdwg.mxu0
    %3688 = vmatprep.subr.bf16.mxu0 0
    %3689 = vmatpush1.bf16.msra.mxu0 %v3589
    %3690 = vmatprep.subr.bf16.mxu0 0
    %3691 = vmatpush1.bf16.msra.mxu0 %v3592
    %3692 = vmatprep.subr.bf16.mxu0 0
    %3693 = vmatpush1.bf16.msra.mxu0 %v3595
    %3694 = vmatprep.subr.bf16.mxu0 0
    %3695 = vmatpush1.bf16.msra.mxu0 %v3598
    %3696 = vmatprep.subr.bf16.mxu0 0
    %3697 = vmatpush1.bf16.msra.mxu0 %v3601
    %3698 = vmatprep.subr.bf16.mxu0 0
    %3699 = vmatpush1.bf16.msra.mxu0 %v3604
    %3700 = vmatprep.subr.bf16.mxu0 0
    %3701 = vmatpush1.bf16.msra.mxu0 %v3607
    %3702 = vmatprep.subr.bf16.mxu0 0
    %3703 = vmatpush1.bf16.msra.mxu0 %v3610
    %3704 = vmatprep.subr.bf16.mxu0 0
    %3705 = vmatpush1.bf16.msra.mxu0 0
    %3706 = vmatprep.subr.bf16.mxu0 0
    %3707 = vmatpush1.bf16.msra.mxu0 0
    %3708 = vmatprep.subr.bf16.mxu0 0
    %3709 = vmatpush1.bf16.msra.mxu0 0
    %3710 = vmatprep.subr.bf16.mxu0 0
    %3711 = vmatpush1.bf16.msra.mxu0 0
    %3712 = vmatprep.subr.bf16.mxu0 0
    %3713 = vmatpush1.bf16.msra.mxu0 0
    %3714 = vmatprep.subr.bf16.mxu0 0
    %3715 = vmatpush1.bf16.msra.mxu0 0
    %3716 = vmatprep.subr.bf16.mxu0 0
    %3717 = vmatpush1.bf16.msra.mxu0 0
    %3718 = vmatprep.subr.bf16.mxu0 0
    %3719 = vmatpush1.bf16.msra.mxu0 0
    %3720 = vmatprep.mubr.bf16.mxu0 0
    %3721 = vmatmul.mubr.bf16.gmra.mrb[0].mxu0 %v3488
    %v3722 = vpop.f32.mrb[0].mxu0
    %v3723 = vadd.f32 %v3503, %v3722
    %v3724 = vpop.f32.mrb[0].mxu0
    %v3725 = vpop.f32.mrb[0].mxu0
    %v3726 = vadd.f32 %v3503, %v3725
    %v3727 = vpop.f32.mrb[0].mxu0
    %3728 = vmatprep.mubr.bf16.mxu0 0
    %3729 = vmatmul.mubr.bf16.gmra.mrb[0].mxu0 %v3489
    %v3730 = vpop.f32.mrb[0].mxu0
    %v3731 = vadd.f32 %v3503, %v3730
    %v3732 = vpop.f32.mrb[0].mxu0
    %v3733 = vpop.f32.mrb[0].mxu0
    %v3734 = vadd.f32 %v3503, %v3733
    %v3735 = vpop.f32.mrb[0].mxu0
    %3736 = vdwg.mxu0
    %v3737 = vpack.c.bf16 %v3674, %v3670
    %v3738 = vpack.c.bf16 %v3684, %v3680
    %v3739 = vpack.c.bf16 %v3676, %v3672
    %v3740 = vpack.c.bf16 %v3686, %v3682
    %v3741 = vpack.c.bf16 %v3726, %v3723
    %v3742 = vpack.c.bf16 %v3734, %v3731
    %3743 = vmatprep.subr.bf16.mxu0 0
    %3744 = vmatpush1.bf16.xpose.msra.mxu0 %v3739
    %3745 = vmatprep.subr.bf16.mxu0 0
    %3746 = vmatpush1.bf16.xpose.msra.mxu0 %v3740
    %3747 = vmatprep.subr.bf16.mxu0 0
    %3748 = vmatpush1.bf16.xpose.msra.mxu0 0
    %3749 = vmatprep.subr.bf16.mxu0 0
    %3750 = vmatpush1.bf16.xpose.msra.mxu0 0
    %3751 = vmatprep.subr.bf16.mxu0 0
    %3752 = vmatpush1.bf16.xpose.msra.mxu0 0
    %3753 = vmatprep.subr.bf16.mxu0 0
    %3754 = vmatpush1.bf16.xpose.msra.mxu0 0
    %3755 = vmatprep.subr.bf16.mxu0 0
    %3756 = vmatpush1.bf16.xpose.msra.mxu0 0
    %3757 = vmatprep.subr.bf16.mxu0 0
    %3758 = vmatpush1.bf16.xpose.msra.mxu0 0
    %3759 = vmatprep.subr.bf16.mxu0 0
    %3760 = vmatpush1.bf16.xpose.msra.mxu0 0
    %3761 = vmatprep.subr.bf16.mxu0 0
    %3762 = vmatpush1.bf16.xpose.msra.mxu0 0
    %3763 = vmatprep.subr.bf16.mxu0 0
    %3764 = vmatpush1.bf16.xpose.msra.mxu0 0
    %3765 = vmatprep.subr.bf16.mxu0 0
    %3766 = vmatpush1.bf16.xpose.msra.mxu0 0
    %3767 = vmatprep.subr.bf16.mxu0 0
    %3768 = vmatpush1.bf16.xpose.msra.mxu0 0
    %3769 = vmatprep.subr.bf16.mxu0 0
    %3770 = vmatpush1.bf16.xpose.msra.mxu0 0
    %3771 = vmatprep.subr.bf16.mxu0 0
    %3772 = vmatpush1.bf16.xpose.msra.mxu0 0
    %3773 = vmatprep.subr.bf16.mxu0 0
    %3774 = vmatpush1.bf16.xpose.msra.mxu0 0
    %3775 = vmatprep.mubr.bf16.mxu0 0
    %3776 = vmatmul.mubr.bf16.gmra.mrb[0].mxu0 %v3737
    %v3777 = vpop.f32.mrb[0].mxu0
    %v3778 = vadd.f32 0.0, %v3777
    %v3779 = vpop.f32.mrb[0].mxu0
    %v3780 = vpop.f32.mrb[0].mxu0
    %v3781 = vadd.f32 0.0, %v3780
    %v3782 = vpop.f32.mrb[0].mxu0
    %3783 = vmatprep.mubr.bf16.mxu0 0
    %3784 = vmatmul.mubr.bf16.gmra.mrb[0].mxu0 %v3738
    %v3785 = vpop.f32.mrb[0].mxu0
    %v3786 = vadd.f32 0.0, %v3785
    %v3787 = vpop.f32.mrb[0].mxu0
    %v3788 = vpop.f32.mrb[0].mxu0
    %v3789 = vadd.f32 0.0, %v3788
    %v3790 = vpop.f32.mrb[0].mxu0
    %3791 = vdwg.mxu0
    %v3792 = vmul.f32 %v3778, 0.088388346
    %v3793 = vmul.f32 %v3781, 0.088388346
    %v3794 = vmul.f32 %v3786, 0.088388346
    %v3795 = vmul.f32 %v3789, 0.088388346
    %v3796 = vld [vmem:[%s2] sm:$0xff]
    %v3797 = vld [vmem:[%s2 + $0x8] sm:$0xff]
    %v3798 = vld [vmem:[%s2 + $0x10] sm:$0xff]
    %v3799 = vld [vmem:[%s2 + $0x18] sm:$0xff]
    %v3800 = vadd.f32 %v3792, %v3796
    %v3801 = vadd.f32 %v3793, %v3797
    %v3802 = vadd.f32 %v3794, %v3798
    %v3803 = vadd.f32 %v3795, %v3799
    %vm3804 = vcmask 261120
    %v3805 = vsel %vm3804, %v3800, -inf
    %3806 = vmax.xlane.f32.xlu0 %v3805
    %v3807 = vpop.xlane.xlu0 %3806
    %v3808 = vsel %vm3804, %v3801, -inf
    %3809 = vmax.xlane.f32.xlu0 %v3808
    %v3810 = vpop.xlane.xlu0 %3809
    %v3811 = vsel %vm3804, %v3802, -inf
    %3812 = vmax.xlane.f32.xlu0 %v3811
    %v3813 = vpop.xlane.xlu0 %3812
    %v3814 = vsel %vm3804, %v3803, -inf
    %3815 = vmax.xlane.f32.xlu0 %v3814
    %v3816 = vpop.xlane.xlu0 %3815
    %v3817 = vsub.f32 %v3800, %v3807
    %v3818 = vsub.f32 %v3801, %v3810
    %v3819 = vsub.f32 %v3802, %v3813
    %v3820 = vsub.f32 %v3803, %v3816
    %v3821 = vmul.f32 %v3817, 1.442695
    %v3822 = vpow.pop %v3821
    %v3823 = vmul.f32 %v3818, 1.442695
    %v3824 = vpow.pop %v3823
    %v3825 = vmul.f32 %v3819, 1.442695
    %v3826 = vpow.pop %v3825
    %v3827 = vmul.f32 %v3820, 1.442695
    %v3828 = vpow.pop %v3827
    %v3829 = vsel %vm3804, %v3822, 0.0
    %3830 = vadd.xlane.f32.xlu0 %v3829
    %v3831 = vpop.xlane.xlu0 %3830
    %v3832 = vsel %vm3804, %v3824, 0.0
    %3833 = vadd.xlane.f32.xlu0 %v3832
    %v3834 = vpop.xlane.xlu0 %3833
    %v3835 = vsel %vm3804, %v3826, 0.0
    %3836 = vadd.xlane.f32.xlu0 %v3835
    %v3837 = vpop.xlane.xlu0 %3836
    %v3838 = vsel %vm3804, %v3828, 0.0
    %3839 = vadd.xlane.f32.xlu0 %v3838
    %v3840 = vpop.xlane.xlu0 %3839
    %v3841 = vrcp.pop %v3831
    %v3842 = vrcp.pop %v3834
    %v3843 = vrcp.pop %v3837
    %v3844 = vrcp.pop %v3840
    %v3845 = vmul.f32 %v3822, %v3841
    %v3846 = vmul.f32 %v3824, %v3842
    %v3847 = vmul.f32 %v3826, %v3843
    %v3848 = vmul.f32 %v3828, %v3844
    %v3849 = vpack.c.bf16 %v3846, %v3845
    %v3850 = vpack.c.bf16 %v3848, %v3847
    %v3852 = vsel %vm3804, %v3849, 0
    %v3855 = vsel %vm3804, %v3850, 0
    %3857 = vmatprep.subr.bf16.mxu0 0
    %3858 = vmatpush1.bf16.msra.mxu0 %v3741
    %3859 = vmatprep.subr.bf16.mxu0 0
    %3860 = vmatpush1.bf16.msra.mxu0 %v3742
    %3861 = vmatprep.subr.bf16.mxu0 0
    %3862 = vmatpush1.bf16.msra.mxu0 0
    %3863 = vmatprep.subr.bf16.mxu0 0
    %3864 = vmatpush1.bf16.msra.mxu0 0
    %3865 = vmatprep.subr.bf16.mxu0 0
    %3866 = vmatpush1.bf16.msra.mxu0 0
    %3867 = vmatprep.subr.bf16.mxu0 0
    %3868 = vmatpush1.bf16.msra.mxu0 0
    %3869 = vmatprep.subr.bf16.mxu0 0
    %3870 = vmatpush1.bf16.msra.mxu0 0
    %3871 = vmatprep.subr.bf16.mxu0 0
    %3872 = vmatpush1.bf16.msra.mxu0 0
    %3873 = vmatprep.subr.bf16.mxu0 0
    %3874 = vmatpush1.bf16.msra.mxu0 0
    %3875 = vmatprep.subr.bf16.mxu0 0
    %3876 = vmatpush1.bf16.msra.mxu0 0
    %3877 = vmatprep.subr.bf16.mxu0 0
    %3878 = vmatpush1.bf16.msra.mxu0 0
    %3879 = vmatprep.subr.bf16.mxu0 0
    %3880 = vmatpush1.bf16.msra.mxu0 0
    %3881 = vmatprep.subr.bf16.mxu0 0
    %3882 = vmatpush1.bf16.msra.mxu0 0
    %3883 = vmatprep.subr.bf16.mxu0 0
    %3884 = vmatpush1.bf16.msra.mxu0 0
    %3885 = vmatprep.subr.bf16.mxu0 0
    %3886 = vmatpush1.bf16.msra.mxu0 0
    %3887 = vmatprep.subr.bf16.mxu0 0
    %3888 = vmatpush1.bf16.msra.mxu0 0
    %3889 = vmatprep.mubr.bf16.mxu0 0
    %3890 = vmatmul.mubr.bf16.gmra.mrb[0].mxu0 %v3852
    %v3891 = vpop.f32.mrb[0].mxu0
    %v3892 = vadd.f32 0.0, %v3891
    %v3893 = vpop.f32.mrb[0].mxu0
    %v3894 = vpop.f32.mrb[0].mxu0
    %v3895 = vadd.f32 0.0, %v3894
    %v3896 = vpop.f32.mrb[0].mxu0
    %3897 = vmatprep.mubr.bf16.mxu0 0
    %3898 = vmatmul.mubr.bf16.gmra.mrb[0].mxu0 %v3855
    %v3899 = vpop.f32.mrb[0].mxu0
    %v3900 = vadd.f32 0.0, %v3899
    %v3901 = vpop.f32.mrb[0].mxu0
    %v3902 = vpop.f32.mrb[0].mxu0
    %v3903 = vadd.f32 0.0, %v3902
    %v3904 = vpop.f32.mrb[0].mxu0
    %3905 = vdwg.mxu0
    %v3906 = vld [vmem:[%s15] sm:$0xf]
    %v3907 = vld [vmem:[%s15 + $0x4] sm:$0xf]
    %v3908 = vld [vmem:[%s15 + $0x8] sm:$0xf]
    %v3909 = vld [vmem:[%s15 + $0xc] sm:$0xf]
    %v3910 = vld [vmem:[%s15 + $0x10] sm:$0xf]
    %v3911 = vld [vmem:[%s15 + $0x14] sm:$0xf]
    %v3912 = vld [vmem:[%s15 + $0x18] sm:$0xf]
    %v3913 = vld [vmem:[%s15 + $0x1c] sm:$0xf]
    %v3914 = vld [vmem:[%s15 + $0x20] sm:$0xf]
    %v3915 = vld [vmem:[%s15 + $0x24] sm:$0xf]
    %v3916 = vld [vmem:[%s15 + $0x28] sm:$0xf]
    %v3917 = vld [vmem:[%s15 + $0x2c] sm:$0xf]
    %v3918 = vld [vmem:[%s15 + $0x30] sm:$0xf]
    %v3919 = vld [vmem:[%s15 + $0x34] sm:$0xf]
    %v3920 = vld [vmem:[%s15 + $0x38] sm:$0xf]
    %v3921 = vld [vmem:[%s15 + $0x3c] sm:$0xf]
    %v3922 = vpack.c.bf16 %v3895, %v3892
    %v3923 = vpack.c.bf16 %v3903, %v3900
    %v3940 = vunpack.c.l.b16 %v3906
    %v3941 = vunpack.c.l.b16 %v3907
    %v3942 = vunpack.c.l.b16 %v3908
    %v3943 = vunpack.c.l.b16 %v3909
    %v3944 = vunpack.c.l.b16 %v3910
    %v3945 = vunpack.c.l.b16 %v3911
    %v3946 = vunpack.c.l.b16 %v3912
    %v3947 = vunpack.c.l.b16 %v3913
    %v3948 = vunpack.c.l.b16 %v3914
    %v3949 = vunpack.c.l.b16 %v3915
    %v3950 = vunpack.c.l.b16 %v3916
    %v3951 = vunpack.c.l.b16 %v3917
    %v3952 = vunpack.c.l.b16 %v3918
    %v3953 = vunpack.c.l.b16 %v3919
    %v3954 = vunpack.c.l.b16 %v3920
    %v3955 = vunpack.c.l.b16 %v3921
    %v3956 = vpack.c.b16 %v3941, %v3940
    %v3957 = vpack.c.b16 %v3943, %v3942
    %v3958 = vpack.c.b16 %v3945, %v3944
    %v3959 = vpack.c.b16 %v3947, %v3946
    %v3960 = vpack.c.b16 %v3949, %v3948
    %v3961 = vpack.c.b16 %v3951, %v3950
    %v3962 = vpack.c.b16 %v3953, %v3952
    %v3963 = vpack.c.b16 %v3955, %v3954
    %3972 = vmatprep.subr.bf16.mxu0 0
    %3973 = vmatpush1.bf16.msra.mxu0 %v3956
    %3974 = vmatprep.subr.bf16.mxu0 0
    %3975 = vmatpush1.bf16.msra.mxu0 %v3957
    %3976 = vmatprep.subr.bf16.mxu0 0
    %3977 = vmatpush1.bf16.msra.mxu0 %v3958
    %3978 = vmatprep.subr.bf16.mxu0 0
    %3979 = vmatpush1.bf16.msra.mxu0 %v3959
    %3980 = vmatprep.subr.bf16.mxu0 0
    %3981 = vmatpush1.bf16.msra.mxu0 %v3960
    %3982 = vmatprep.subr.bf16.mxu0 0
    %3983 = vmatpush1.bf16.msra.mxu0 %v3961
    %3984 = vmatprep.subr.bf16.mxu0 0
    %3985 = vmatpush1.bf16.msra.mxu0 %v3962
    %3986 = vmatprep.subr.bf16.mxu0 0
    %3987 = vmatpush1.bf16.msra.mxu0 %v3963
    %3988 = vmatprep.subr.bf16.mxu0 0
    %3989 = vmatpush1.bf16.msra.mxu0 0
    %3990 = vmatprep.subr.bf16.mxu0 0
    %3991 = vmatpush1.bf16.msra.mxu0 0
    %3992 = vmatprep.subr.bf16.mxu0 0
    %3993 = vmatpush1.bf16.msra.mxu0 0
    %3994 = vmatprep.subr.bf16.mxu0 0
    %3995 = vmatpush1.bf16.msra.mxu0 0
    %3996 = vmatprep.subr.bf16.mxu0 0
    %3997 = vmatpush1.bf16.msra.mxu0 0
    %3998 = vmatprep.subr.bf16.mxu0 0
    %3999 = vmatpush1.bf16.msra.mxu0 0
    %4000 = vmatprep.subr.bf16.mxu0 0
    %4001 = vmatpush1.bf16.msra.mxu0 0
    %4002 = vmatprep.subr.bf16.mxu0 0
    %4003 = vmatpush1.bf16.msra.mxu0 0
    %4004 = vmatprep.mubr.bf16.mxu0 0
    %4005 = vmatmul.mubr.bf16.gmra.mrb[0].mxu0 %v3922
    %v4006 = vpop.f32.mrb[0].mxu0
    %v4007 = vadd.f32 0.0, %v4006
    %v4008 = vpop.f32.mrb[0].mxu0
    %v4009 = vpop.f32.mrb[0].mxu0
    %v4010 = vadd.f32 0.0, %v4009
    %v4011 = vpop.f32.mrb[0].mxu0
    %4012 = vmatprep.mubr.bf16.mxu0 0
    %4013 = vmatmul.mubr.bf16.gmra.mrb[0].mxu0 %v3923
    %v4014 = vpop.f32.mrb[0].mxu0
    %v4015 = vadd.f32 0.0, %v4014
    %v4016 = vpop.f32.mrb[0].mxu0
    %v4017 = vpop.f32.mrb[0].mxu0
    %v4018 = vadd.f32 0.0, %v4017
    %v4019 = vpop.f32.mrb[0].mxu0
    %4020 = vdwg.mxu0
    %v4021 = vadd.f32 %v3385, %v4007
    %v4022 = vadd.f32 %v3386, %v4010
    %v4023 = vadd.f32 %v3387, %v4015
    %v4024 = vadd.f32 %v3388, %v4018
    %v4025 = vld [vmem:[%s16] sm:$0x1]
    %v4027 = vlaneseq
    %v4028 = vshrl.u32 %v4027, 7
    %v4029 = vsub.s32 0, %v4028
    %v4030 = vrot.slane %v4025, %v4029
    %v4032 = vadd.f32 %v4021, %v4030
    %v4033 = vadd.f32 %v4022, %v4030
    %v4034 = vadd.f32 %v4023, %v4030
    %v4035 = vadd.f32 %v4024, %v4030
    %4036 = vadd.xlane.f32.xlu0 %v4032
    %v4037 = vpop.xlane.xlu0 %4036
    %4038 = vadd.xlane.f32.xlu0 %v4033
    %v4039 = vpop.xlane.xlu0 %4038
    %4040 = vadd.xlane.f32.xlu0 %v4034
    %v4041 = vpop.xlane.xlu0 %4040
    %4042 = vadd.xlane.f32.xlu0 %v4035
    %v4043 = vpop.xlane.xlu0 %4042
    %v4044 = vmul.f32 %v4037, %v3397
    %v4045 = vmul.f32 %v4039, %v3397
    %v4046 = vmul.f32 %v4041, %v3397
    %v4047 = vmul.f32 %v4043, %v3397
    %v4048 = vsub.f32 %v4032, %v4044
    %v4049 = vsub.f32 %v4033, %v4045
    %v4050 = vsub.f32 %v4034, %v4046
    %v4051 = vsub.f32 %v4035, %v4047
    %v4052 = vmul.f32 %v4048, %v4048
    %v4053 = vmul.f32 %v4049, %v4049
    %v4054 = vmul.f32 %v4050, %v4050
    %v4055 = vmul.f32 %v4051, %v4051
    %4056 = vadd.xlane.f32.xlu0 %v4052
    %v4057 = vpop.xlane.xlu0 %4056
    %4058 = vadd.xlane.f32.xlu0 %v4053
    %v4059 = vpop.xlane.xlu0 %4058
    %4060 = vadd.xlane.f32.xlu0 %v4054
    %v4061 = vpop.xlane.xlu0 %4060
    %4062 = vadd.xlane.f32.xlu0 %v4055
    %v4063 = vpop.xlane.xlu0 %4062
    %v4064 = vmul.f32 %v4057, %v3397
    %v4065 = vmul.f32 %v4059, %v3397
    %v4066 = vmul.f32 %v4061, %v3397
    %v4067 = vmul.f32 %v4063, %v3397
    %v4068 = vadd.f32 %v4064, 1e-05
    %v4069 = vadd.f32 %v4065, 1e-05
    %v4070 = vadd.f32 %v4066, 1e-05
    %v4071 = vadd.f32 %v4067, 1e-05
    %v4072 = vrsqrt.pop %v4068
    %v4073 = vrsqrt.pop %v4069
    %v4074 = vrsqrt.pop %v4070
    %v4075 = vrsqrt.pop %v4071
    %v4076 = vmul.f32 %v4048, %v4072
    %v4077 = vmul.f32 %v4049, %v4073
    %v4078 = vmul.f32 %v4050, %v4074
    %v4079 = vmul.f32 %v4051, %v4075
    %v4080 = vld [vmem:[%s17] sm:$0x1]
    %v4082 = vlaneseq
    %v4083 = vshrl.u32 %v4082, 7
    %v4084 = vsub.s32 0, %v4083
    %v4085 = vrot.slane %v4080, %v4084
    %v4087 = vmul.f32 %v4076, %v4085
    %v4088 = vmul.f32 %v4077, %v4085
    %v4089 = vmul.f32 %v4078, %v4085
    %v4090 = vmul.f32 %v4079, %v4085
    %v4091 = vld [vmem:[%s18] sm:$0x1]
    %v4093 = vlaneseq
    %v4094 = vshrl.u32 %v4093, 7
    %v4095 = vsub.s32 0, %v4094
    %v4096 = vrot.slane %v4091, %v4095
    %v4098 = vadd.f32 %v4087, %v4096
    %v4099 = vadd.f32 %v4088, %v4096
    %v4100 = vadd.f32 %v4089, %v4096
    %v4101 = vadd.f32 %v4090, %v4096
    %s4102 = smul.u32 4, 16
    %s4103 = smul.u32 %s4102, 4
    %s4104 = sshll.u32 %s4103, 4
    %4105 = dma.done [#allocation7], %s4104
    %v4106 = vld [vmem:[#allocation3] sm:$0xff]
    %v4107 = vld [vmem:[#allocation3 + $0x8] sm:$0xff]
    %v4108 = vld [vmem:[#allocation3 + $0x10] sm:$0xff]
    %v4109 = vld [vmem:[#allocation3 + $0x18] sm:$0xff]
    %v4110 = vld [vmem:[#allocation3 + $0x20] sm:$0xff]
    %v4111 = vld [vmem:[#allocation3 + $0x28] sm:$0xff]
    %v4112 = vld [vmem:[#allocation3 + $0x30] sm:$0xff]
    %v4113 = vld [vmem:[#allocation3 + $0x38] sm:$0xff]
    %v4114 = vld [vmem:[#allocation3 + $0x40] sm:$0xff]
    %v4115 = vld [vmem:[#allocation3 + $0x48] sm:$0xff]
    %v4116 = vld [vmem:[#allocation3 + $0x50] sm:$0xff]
    %v4117 = vld [vmem:[#allocation3 + $0x58] sm:$0xff]
    %v4118 = vld [vmem:[#allocation3 + $0x60] sm:$0xff]
    %v4119 = vld [vmem:[#allocation3 + $0x68] sm:$0xff]
    %v4120 = vld [vmem:[#allocation3 + $0x70] sm:$0xff]
    %v4121 = vld [vmem:[#allocation3 + $0x78] sm:$0xff]
    %v4122 = vld [vmem:[#allocation3 + $0x80] sm:$0xff]
    %v4123 = vld [vmem:[#allocation3 + $0x88] sm:$0xff]
    %v4124 = vld [vmem:[#allocation3 + $0x90] sm:$0xff]
    %v4125 = vld [vmem:[#allocation3 + $0x98] sm:$0xff]
    %v4126 = vld [vmem:[#allocation3 + $0xa0] sm:$0xff]
    %v4127 = vld [vmem:[#allocation3 + $0xa8] sm:$0xff]
    %v4128 = vld [vmem:[#allocation3 + $0xb0] sm:$0xff]
    %v4129 = vld [vmem:[#allocation3 + $0xb8] sm:$0xff]
    %v4130 = vld [vmem:[#allocation3 + $0xc0] sm:$0xff]
    %v4131 = vld [vmem:[#allocation3 + $0xc8] sm:$0xff]
    %v4132 = vld [vmem:[#allocation3 + $0xd0] sm:$0xff]
    %v4133 = vld [vmem:[#allocation3 + $0xd8] sm:$0xff]
    %v4134 = vld [vmem:[#allocation3 + $0xe0] sm:$0xff]
    %v4135 = vld [vmem:[#allocation3 + $0xe8] sm:$0xff]
    %v4136 = vld [vmem:[#allocation3 + $0xf0] sm:$0xff]
    %v4137 = vld [vmem:[#allocation3 + $0xf8] sm:$0xff]
    %v4138 = vpack.c.bf16 %v4099, %v4098
    %v4139 = vpack.c.bf16 %v4101, %v4100
    %v4140 = vld [vmem:[%s20] sm:$0xf]
    %v4142 = vlaneseq
    %v4143 = vshrl.u32 %v4142, 7
    %v4144 = vsub.s32 0, %v4143
    %v4145 = vrot.slane %v4140, %v4144
    %v4146 = vlaneseq
    %v4147 = vshrl.u32 %v4146, 7
    %v4148 = vsub.s32 1, %v4147
    %v4149 = vrot.slane %v4140, %v4148
    %v4150 = vlaneseq
    %v4151 = vshrl.u32 %v4150, 7
    %v4152 = vsub.s32 2, %v4151
    %v4153 = vrot.slane %v4140, %v4152
    %v4154 = vlaneseq
    %v4155 = vshrl.u32 %v4154, 7
    %v4156 = vsub.s32 3, %v4155
    %v4157 = vrot.slane %v4140, %v4156
    %4162 = vmatprep.subr.bf16.mxu0 %v4107
    %4163 = vmatpush1.bf16.msra.mxu0 %v4106
    %4164 = vmatprep.subr.bf16.mxu0 %v4111
    %4165 = vmatpush1.bf16.msra.mxu0 %v4110
    %4166 = vmatprep.subr.bf16.mxu0 %v4115
    %4167 = vmatpush1.bf16.msra.mxu0 %v4114
    %4168 = vmatprep.subr.bf16.mxu0 %v4119
    %4169 = vmatpush1.bf16.msra.mxu0 %v4118
    %4170 = vmatprep.subr.bf16.mxu0 %v4123
    %4171 = vmatpush1.bf16.msra.mxu0 %v4122
    %4172 = vmatprep.subr.bf16.mxu0 %v4127
    %4173 = vmatpush1.bf16.msra.mxu0 %v4126
    %4174 = vmatprep.subr.bf16.mxu0 %v4131
    %4175 = vmatpush1.bf16.msra.mxu0 %v4130
    %4176 = vmatprep.subr.bf16.mxu0 %v4135
    %4177 = vmatpush1.bf16.msra.mxu0 %v4134
    %4178 = vmatprep.subr.bf16.mxu0 0
    %4179 = vmatpush1.bf16.msra.mxu0 0
    %4180 = vmatprep.subr.bf16.mxu0 0
    %4181 = vmatpush1.bf16.msra.mxu0 0
    %4182 = vmatprep.subr.bf16.mxu0 0
    %4183 = vmatpush1.bf16.msra.mxu0 0
    %4184 = vmatprep.subr.bf16.mxu0 0
    %4185 = vmatpush1.bf16.msra.mxu0 0
    %4186 = vmatprep.subr.bf16.mxu0 0
    %4187 = vmatpush1.bf16.msra.mxu0 0
    %4188 = vmatprep.subr.bf16.mxu0 0
    %4189 = vmatpush1.bf16.msra.mxu0 0
    %4190 = vmatprep.subr.bf16.mxu0 0
    %4191 = vmatpush1.bf16.msra.mxu0 0
    %4192 = vmatprep.subr.bf16.mxu0 0
    %4193 = vmatpush1.bf16.msra.mxu0 0
    %4194 = vmatprep.mubr.bf16.mxu0 0
    %4195 = vmatmul.mubr.bf16.gmra.mrb[0].mxu0 %v4138
    %v4196 = vpop.f32.mrb[0].mxu0
    %v4197 = vadd.f32 %v4145, %v4196
    %v4198 = vpop.f32.mrb[0].mxu0
    %v4199 = vadd.f32 %v4149, %v4198
    %v4200 = vpop.f32.mrb[0].mxu0
    %v4201 = vadd.f32 %v4145, %v4200
    %v4202 = vpop.f32.mrb[0].mxu0
    %v4203 = vadd.f32 %v4149, %v4202
    %4204 = vmatprep.mubr.bf16.mxu0 0
    %4205 = vmatmul.mubr.bf16.gmra.mrb[0].mxu0 %v4139
    %v4206 = vpop.f32.mrb[0].mxu0
    %v4207 = vadd.f32 %v4145, %v4206
    %v4208 = vpop.f32.mrb[0].mxu0
    %v4209 = vadd.f32 %v4149, %v4208
    %v4210 = vpop.f32.mrb[0].mxu0
    %v4211 = vadd.f32 %v4145, %v4210
    %v4212 = vpop.f32.mrb[0].mxu0
    %v4213 = vadd.f32 %v4149, %v4212
    %4214 = vdwg.mxu0
    %4215 = vmatprep.subr.bf16.mxu0 %v4109
    %4216 = vmatpush1.bf16.msra.mxu0 %v4108
    %4217 = vmatprep.subr.bf16.mxu0 %v4113
    %4218 = vmatpush1.bf16.msra.mxu0 %v4112
    %4219 = vmatprep.subr.bf16.mxu0 %v4117
    %4220 = vmatpush1.bf16.msra.mxu0 %v4116
    %4221 = vmatprep.subr.bf16.mxu0 %v4121
    %4222 = vmatpush1.bf16.msra.mxu0 %v4120
    %4223 = vmatprep.subr.bf16.mxu0 %v4125
    %4224 = vmatpush1.bf16.msra.mxu0 %v4124
    %4225 = vmatprep.subr.bf16.mxu0 %v4129
    %4226 = vmatpush1.bf16.msra.mxu0 %v4128
    %4227 = vmatprep.subr.bf16.mxu0 %v4133
    %4228 = vmatpush1.bf16.msra.mxu0 %v4132
    %4229 = vmatprep.subr.bf16.mxu0 %v4137
    %4230 = vmatpush1.bf16.msra.mxu0 %v4136
    %4231 = vmatprep.subr.bf16.mxu0 0
    %4232 = vmatpush1.bf16.msra.mxu0 0
    %4233 = vmatprep.subr.bf16.mxu0 0
    %4234 = vmatpush1.bf16.msra.mxu0 0
    %4235 = vmatprep.subr.bf16.mxu0 0
    %4236 = vmatpush1.bf16.msra.mxu0 0
    %4237 = vmatprep.subr.bf16.mxu0 0
    %4238 = vmatpush1.bf16.msra.mxu0 0
    %4239 = vmatprep.subr.bf16.mxu0 0
    %4240 = vmatpush1.bf16.msra.mxu0 0
    %4241 = vmatprep.subr.bf16.mxu0 0
    %4242 = vmatpush1.bf16.msra.mxu0 0
    %4243 = vmatprep.subr.bf16.mxu0 0
    %4244 = vmatpush1.bf16.msra.mxu0 0
    %4245 = vmatprep.subr.bf16.mxu0 0
    %4246 = vmatpush1.bf16.msra.mxu0 0
    %4247 = vmatprep.mubr.bf16.mxu0 0
    %4248 = vmatmul.mubr.bf16.gmra.mrb[0].mxu0 %v4138
    %v4249 = vpop.f32.mrb[0].mxu0
    %v4250 = vadd.f32 %v4153, %v4249
    %v4251 = vpop.f32.mrb[0].mxu0
    %v4252 = vadd.f32 %v4157, %v4251
    %v4253 = vpop.f32.mrb[0].mxu0
    %v4254 = vadd.f32 %v4153, %v4253
    %v4255 = vpop.f32.mrb[0].mxu0
    %v4256 = vadd.f32 %v4157, %v4255
    %4257 = vmatprep.mubr.bf16.mxu0 0
    %4258 = vmatmul.mubr.bf16.gmra.mrb[0].mxu0 %v4139
    %v4259 = vpop.f32.mrb[0].mxu0
    %v4260 = vadd.f32 %v4153, %v4259
    %v4261 = vpop.f32.mrb[0].mxu0
    %v4262 = vadd.f32 %v4157, %v4261
    %v4263 = vpop.f32.mrb[0].mxu0
    %v4264 = vadd.f32 %v4153, %v4263
    %v4265 = vpop.f32.mrb[0].mxu0
    %v4266 = vadd.f32 %v4157, %v4265
    %4267 = vdwg.mxu0
    %v4268 = vmul.f32 %v4197, %v4197
    %v4269 = vmul.f32 %v4199, %v4199
    %v4270 = vmul.f32 %v4250, %v4250
    %v4271 = vmul.f32 %v4252, %v4252
    %v4272 = vmul.f32 %v4201, %v4201
    %v4273 = vmul.f32 %v4203, %v4203
    %v4274 = vmul.f32 %v4254, %v4254
    %v4275 = vmul.f32 %v4256, %v4256
    %v4276 = vmul.f32 %v4207, %v4207
    %v4277 = vmul.f32 %v4209, %v4209
    %v4278 = vmul.f32 %v4260, %v4260
    %v4279 = vmul.f32 %v4262, %v4262
    %v4280 = vmul.f32 %v4211, %v4211
    %v4281 = vmul.f32 %v4213, %v4213
    %v4282 = vmul.f32 %v4264, %v4264
    %v4283 = vmul.f32 %v4266, %v4266
    %v4284 = vmul.f32 %v4197, %v4268
    %v4285 = vmul.f32 %v4199, %v4269
    %v4286 = vmul.f32 %v4250, %v4270
    %v4287 = vmul.f32 %v4252, %v4271
    %v4288 = vmul.f32 %v4201, %v4272
    %v4289 = vmul.f32 %v4203, %v4273
    %v4290 = vmul.f32 %v4254, %v4274
    %v4291 = vmul.f32 %v4256, %v4275
    %v4292 = vmul.f32 %v4207, %v4276
    %v4293 = vmul.f32 %v4209, %v4277
    %v4294 = vmul.f32 %v4260, %v4278
    %v4295 = vmul.f32 %v4262, %v4279
    %v4296 = vmul.f32 %v4211, %v4280
    %v4297 = vmul.f32 %v4213, %v4281
    %v4298 = vmul.f32 %v4264, %v4282
    %v4299 = vmul.f32 %v4266, %v4283
    %v4300 = vmul.f32 %v4284, 0.044715
    %v4301 = vmul.f32 %v4285, 0.044715
    %v4302 = vmul.f32 %v4286, 0.044715
    %v4303 = vmul.f32 %v4287, 0.044715
    %v4304 = vmul.f32 %v4288, 0.044715
    %v4305 = vmul.f32 %v4289, 0.044715
    %v4306 = vmul.f32 %v4290, 0.044715
    %v4307 = vmul.f32 %v4291, 0.044715
    %v4308 = vmul.f32 %v4292, 0.044715
    %v4309 = vmul.f32 %v4293, 0.044715
    %v4310 = vmul.f32 %v4294, 0.044715
    %v4311 = vmul.f32 %v4295, 0.044715
    %v4312 = vmul.f32 %v4296, 0.044715
    %v4313 = vmul.f32 %v4297, 0.044715
    %v4314 = vmul.f32 %v4298, 0.044715
    %v4315 = vmul.f32 %v4299, 0.044715
    %v4316 = vadd.f32 %v4197, %v4300
    %v4317 = vadd.f32 %v4199, %v4301
    %v4318 = vadd.f32 %v4250, %v4302
    %v4319 = vadd.f32 %v4252, %v4303
    %v4320 = vadd.f32 %v4201, %v4304
    %v4321 = vadd.f32 %v4203, %v4305
    %v4322 = vadd.f32 %v4254, %v4306
    %v4323 = vadd.f32 %v4256, %v4307
    %v4324 = vadd.f32 %v4207, %v4308
    %v4325 = vadd.f32 %v4209, %v4309
    %v4326 = vadd.f32 %v4260, %v4310
    %v4327 = vadd.f32 %v4262, %v4311
    %v4328 = vadd.f32 %v4211, %v4312
    %v4329 = vadd.f32 %v4213, %v4313
    %v4330 = vadd.f32 %v4264, %v4314
    %v4331 = vadd.f32 %v4266, %v4315
    %v4332 = vmul.f32 %v4316, 0.7978846
    %v4333 = vmul.f32 %v4317, 0.7978846
    %v4334 = vmul.f32 %v4318, 0.7978846
    %v4335 = vmul.f32 %v4319, 0.7978846
    %v4336 = vmul.f32 %v4320, 0.7978846
    %v4337 = vmul.f32 %v4321, 0.7978846
    %v4338 = vmul.f32 %v4322, 0.7978846
    %v4339 = vmul.f32 %v4323, 0.7978846
    %v4340 = vmul.f32 %v4324, 0.7978846
    %v4341 = vmul.f32 %v4325, 0.7978846
    %v4342 = vmul.f32 %v4326, 0.7978846
    %v4343 = vmul.f32 %v4327, 0.7978846
    %v4344 = vmul.f32 %v4328, 0.7978846
    %v4345 = vmul.f32 %v4329, 0.7978846
    %v4346 = vmul.f32 %v4330, 0.7978846
    %v4347 = vmul.f32 %v4331, 0.7978846
    %v4348 = vtanh.pop %v4332
    %v4349 = vtanh.pop %v4333
    %v4350 = vtanh.pop %v4334
    %v4351 = vtanh.pop %v4335
    %v4352 = vtanh.pop %v4336
    %v4353 = vtanh.pop %v4337
    %v4354 = vtanh.pop %v4338
    %v4355 = vtanh.pop %v4339
    %v4356 = vtanh.pop %v4340
    %v4357 = vtanh.pop %v4341
    %v4358 = vtanh.pop %v4342
    %v4359 = vtanh.pop %v4343
    %v4360 = vtanh.pop %v4344
    %v4361 = vtanh.pop %v4345
    %v4362 = vtanh.pop %v4346
    %v4363 = vtanh.pop %v4347
    %v4364 = vadd.f32 %v4348, 1.0
    %v4365 = vadd.f32 %v4349, 1.0
    %v4366 = vadd.f32 %v4350, 1.0
    %v4367 = vadd.f32 %v4351, 1.0
    %v4368 = vadd.f32 %v4352, 1.0
    %v4369 = vadd.f32 %v4353, 1.0
    %v4370 = vadd.f32 %v4354, 1.0
    %v4371 = vadd.f32 %v4355, 1.0
    %v4372 = vadd.f32 %v4356, 1.0
    %v4373 = vadd.f32 %v4357, 1.0
    %v4374 = vadd.f32 %v4358, 1.0
    %v4375 = vadd.f32 %v4359, 1.0
    %v4376 = vadd.f32 %v4360, 1.0
    %v4377 = vadd.f32 %v4361, 1.0
    %v4378 = vadd.f32 %v4362, 1.0
    %v4379 = vadd.f32 %v4363, 1.0
    %v4380 = vmul.f32 %v4364, 0.5
    %v4381 = vmul.f32 %v4365, 0.5
    %v4382 = vmul.f32 %v4366, 0.5
    %v4383 = vmul.f32 %v4367, 0.5
    %v4384 = vmul.f32 %v4368, 0.5
    %v4385 = vmul.f32 %v4369, 0.5
    %v4386 = vmul.f32 %v4370, 0.5
    %v4387 = vmul.f32 %v4371, 0.5
    %v4388 = vmul.f32 %v4372, 0.5
    %v4389 = vmul.f32 %v4373, 0.5
    %v4390 = vmul.f32 %v4374, 0.5
    %v4391 = vmul.f32 %v4375, 0.5
    %v4392 = vmul.f32 %v4376, 0.5
    %v4393 = vmul.f32 %v4377, 0.5
    %v4394 = vmul.f32 %v4378, 0.5
    %v4395 = vmul.f32 %v4379, 0.5
    %v4396 = vmul.f32 %v4197, %v4380
    %v4397 = vmul.f32 %v4199, %v4381
    %v4398 = vmul.f32 %v4250, %v4382
    %v4399 = vmul.f32 %v4252, %v4383
    %v4400 = vmul.f32 %v4201, %v4384
    %v4401 = vmul.f32 %v4203, %v4385
    %v4402 = vmul.f32 %v4254, %v4386
    %v4403 = vmul.f32 %v4256, %v4387
    %v4404 = vmul.f32 %v4207, %v4388
    %v4405 = vmul.f32 %v4209, %v4389
    %v4406 = vmul.f32 %v4260, %v4390
    %v4407 = vmul.f32 %v4262, %v4391
    %v4408 = vmul.f32 %v4211, %v4392
    %v4409 = vmul.f32 %v4213, %v4393
    %v4410 = vmul.f32 %v4264, %v4394
    %v4411 = vmul.f32 %v4266, %v4395
    %s4412 = smul.u32 4, 64
    %s4413 = smul.u32 %s4412, 1
    %s4414 = sshll.u32 %s4413, 4
    %4415 = dma.done %s1163, %s4414
    %v4416 = vld [vmem:[#allocation4] sm:$0xff]
    %v4417 = vld [vmem:[#allocation4 + $0x8] sm:$0xff]
    %v4418 = vld [vmem:[#allocation4 + $0x10] sm:$0xff]
    %v4419 = vld [vmem:[#allocation4 + $0x18] sm:$0xff]
    %v4420 = vld [vmem:[#allocation4 + $0x20] sm:$0xff]
    %v4421 = vld [vmem:[#allocation4 + $0x28] sm:$0xff]
    %v4422 = vld [vmem:[#allocation4 + $0x30] sm:$0xff]
    %v4423 = vld [vmem:[#allocation4 + $0x38] sm:$0xff]
    %v4424 = vld [vmem:[#allocation4 + $0x40] sm:$0xff]
    %v4425 = vld [vmem:[#allocation4 + $0x48] sm:$0xff]
    %v4426 = vld [vmem:[#allocation4 + $0x50] sm:$0xff]
    %v4427 = vld [vmem:[#allocation4 + $0x58] sm:$0xff]
    %v4428 = vld [vmem:[#allocation4 + $0x60] sm:$0xff]
    %v4429 = vld [vmem:[#allocation4 + $0x68] sm:$0xff]
    %v4430 = vld [vmem:[#allocation4 + $0x70] sm:$0xff]
    %v4431 = vld [vmem:[#allocation4 + $0x78] sm:$0xff]
    %v4432 = vld [vmem:[#allocation4 + $0x80] sm:$0xff]
    %v4433 = vld [vmem:[#allocation4 + $0x88] sm:$0xff]
    %v4434 = vld [vmem:[#allocation4 + $0x90] sm:$0xff]
    %v4435 = vld [vmem:[#allocation4 + $0x98] sm:$0xff]
    %v4436 = vld [vmem:[#allocation4 + $0xa0] sm:$0xff]
    %v4437 = vld [vmem:[#allocation4 + $0xa8] sm:$0xff]
    %v4438 = vld [vmem:[#allocation4 + $0xb0] sm:$0xff]
    %v4439 = vld [vmem:[#allocation4 + $0xb8] sm:$0xff]
    %v4440 = vld [vmem:[#allocation4 + $0xc0] sm:$0xff]
    %v4441 = vld [vmem:[#allocation4 + $0xc8] sm:$0xff]
    %v4442 = vld [vmem:[#allocation4 + $0xd0] sm:$0xff]
    %v4443 = vld [vmem:[#allocation4 + $0xd8] sm:$0xff]
    %v4444 = vld [vmem:[#allocation4 + $0xe0] sm:$0xff]
    %v4445 = vld [vmem:[#allocation4 + $0xe8] sm:$0xff]
    %v4446 = vld [vmem:[#allocation4 + $0xf0] sm:$0xff]
    %v4447 = vld [vmem:[#allocation4 + $0xf8] sm:$0xff]
    %v4448 = vpack.c.bf16 %v4400, %v4396
    %v4449 = vpack.c.bf16 %v4401, %v4397
    %v4450 = vpack.c.bf16 %v4402, %v4398
    %v4451 = vpack.c.bf16 %v4403, %v4399
    %v4452 = vpack.c.bf16 %v4408, %v4404
    %v4453 = vpack.c.bf16 %v4409, %v4405
    %v4454 = vpack.c.bf16 %v4410, %v4406
    %v4455 = vpack.c.bf16 %v4411, %v4407
    %4456 = vmatprep.subr.bf16.mxu0 0
    %4457 = vmatpush1.bf16.msra.mxu0 %v4416
    %4458 = vmatprep.subr.bf16.mxu0 0
    %4459 = vmatpush1.bf16.msra.mxu0 %v4417
    %4460 = vmatprep.subr.bf16.mxu0 0
    %4461 = vmatpush1.bf16.msra.mxu0 %v4418
    %4462 = vmatprep.subr.bf16.mxu0 0
    %4463 = vmatpush1.bf16.msra.mxu0 %v4419
    %4464 = vmatprep.subr.bf16.mxu0 0
    %4465 = vmatpush1.bf16.msra.mxu0 %v4420
    %4466 = vmatprep.subr.bf16.mxu0 0
    %4467 = vmatpush1.bf16.msra.mxu0 %v4421
    %4468 = vmatprep.subr.bf16.mxu0 0
    %4469 = vmatpush1.bf16.msra.mxu0 %v4422
    %4470 = vmatprep.subr.bf16.mxu0 0
    %4471 = vmatpush1.bf16.msra.mxu0 %v4423
    %4472 = vmatprep.subr.bf16.mxu0 0
    %4473 = vmatpush1.bf16.msra.mxu0 %v4424
    %4474 = vmatprep.subr.bf16.mxu0 0
    %4475 = vmatpush1.bf16.msra.mxu0 %v4425
    %4476 = vmatprep.subr.bf16.mxu0 0
    %4477 = vmatpush1.bf16.msra.mxu0 %v4426
    %4478 = vmatprep.subr.bf16.mxu0 0
    %4479 = vmatpush1.bf16.msra.mxu0 %v4427
    %4480 = vmatprep.subr.bf16.mxu0 0
    %4481 = vmatpush1.bf16.msra.mxu0 %v4428
    %4482 = vmatprep.subr.bf16.mxu0 0
    %4483 = vmatpush1.bf16.msra.mxu0 %v4429
    %4484 = vmatprep.subr.bf16.mxu0 0
    %4485 = vmatpush1.bf16.msra.mxu0 %v4430
    %4486 = vmatprep.subr.bf16.mxu0 0
    %4487 = vmatpush1.bf16.msra.mxu0 %v4431
    %4488 = vmatprep.mubr.bf16.mxu0 %v4449
    %4489 = vmatmul.mubr.bf16.gmra.mrb[0].mxu0 %v4448
    %v4490 = vpop.f32.mrb[0].mxu0
    %v4491 = vpop.f32.mrb[0].mxu0
    %v4492 = vpop.f32.mrb[0].mxu0
    %v4493 = vpop.f32.mrb[0].mxu0
    %4494 = vmatprep.mubr.bf16.mxu0 %v4453
    %4495 = vmatmul.mubr.bf16.gmra.mrb[0].mxu0 %v4452
    %v4496 = vpop.f32.mrb[0].mxu0
    %v4497 = vadd.f32 0.0, %v4496
    %v4498 = vpop.f32.mrb[0].mxu0
    %v4499 = vpop.f32.mrb[0].mxu0
    %v4500 = vadd.f32 0.0, %v4499
    %v4501 = vpop.f32.mrb[0].mxu0
    %4502 = vdwg.mxu0
    %4503 = vmatprep.subr.bf16.mxu0 0
    %4504 = vmatpush1.bf16.msra.mxu0 %v4432
    %4505 = vmatprep.subr.bf16.mxu0 0
    %4506 = vmatpush1.bf16.msra.mxu0 %v4433
    %4507 = vmatprep.subr.bf16.mxu0 0
    %4508 = vmatpush1.bf16.msra.mxu0 %v4434
    %4509 = vmatprep.subr.bf16.mxu0 0
    %4510 = vmatpush1.bf16.msra.mxu0 %v4435
    %4511 = vmatprep.subr.bf16.mxu0 0
    %4512 = vmatpush1.bf16.msra.mxu0 %v4436
    %4513 = vmatprep.subr.bf16.mxu0 0
    %4514 = vmatpush1.bf16.msra.mxu0 %v4437
    %4515 = vmatprep.subr.bf16.mxu0 0
    %4516 = vmatpush1.bf16.msra.mxu0 %v4438
    %4517 = vmatprep.subr.bf16.mxu0 0
    %4518 = vmatpush1.bf16.msra.mxu0 %v4439
    %4519 = vmatprep.subr.bf16.mxu0 0
    %4520 = vmatpush1.bf16.msra.mxu0 %v4440
    %4521 = vmatprep.subr.bf16.mxu0 0
    %4522 = vmatpush1.bf16.msra.mxu0 %v4441
    %4523 = vmatprep.subr.bf16.mxu0 0
    %4524 = vmatpush1.bf16.msra.mxu0 %v4442
    %4525 = vmatprep.subr.bf16.mxu0 0
    %4526 = vmatpush1.bf16.msra.mxu0 %v4443
    %4527 = vmatprep.subr.bf16.mxu0 0
    %4528 = vmatpush1.bf16.msra.mxu0 %v4444
    %4529 = vmatprep.subr.bf16.mxu0 0
    %4530 = vmatpush1.bf16.msra.mxu0 %v4445
    %4531 = vmatprep.subr.bf16.mxu0 0
    %4532 = vmatpush1.bf16.msra.mxu0 %v4446
    %4533 = vmatprep.subr.bf16.mxu0 0
    %4534 = vmatpush1.bf16.msra.mxu0 %v4447
    %4535 = vmatprep.mubr.bf16.mxu0 %v4451
    %4536 = vmatmul.mubr.bf16.gmra.mrb[0].mxu0 %v4450
    %v4537 = vpop.f32.mrb[0].mxu0
    %v4538 = vpop.f32.mrb[0].mxu0
    %v4539 = vpop.f32.mrb[0].mxu0
    %v4540 = vpop.f32.mrb[0].mxu0
    %4541 = vmatprep.mubr.bf16.mxu0 %v4455
    %4542 = vmatmul.mubr.bf16.gmra.mrb[0].mxu0 %v4454
    %v4543 = vpop.f32.mrb[0].mxu0
    %v4544 = vadd.f32 %v4497, %v4543
    %v4545 = vpop.f32.mrb[0].mxu0
    %v4546 = vpop.f32.mrb[0].mxu0
    %v4547 = vadd.f32 %v4500, %v4546
    %v4548 = vpop.f32.mrb[0].mxu0
    %4549 = vdwg.mxu0
    %v4550 = vadd.f32 %v4034, %v4544
    %v4551 = vadd.f32 %v4035, %v4547
    %v4552 = vld [vmem:[%s22] sm:$0x1]
    %v4554 = vlaneseq
    %v4555 = vshrl.u32 %v4554, 7
    %v4556 = vsub.s32 0, %v4555
    %v4557 = vrot.slane %v4552, %v4556
    %v4559 = vadd.f32 %v4550, %v4557
    %v4560 = vadd.f32 %v4551, %v4557
    %4561 = vadd.xlane.f32.xlu0 %v4559
    %v4562 = vpop.xlane.xlu0 %4561
    %4563 = vadd.xlane.f32.xlu0 %v4560
    %v4564 = vpop.xlane.xlu0 %4563
    %v4565 = vmul.f32 %v4562, %v3397
    %v4566 = vmul.f32 %v4564, %v3397
    %v4567 = vsub.f32 %v4559, %v4565
    %v4568 = vsub.f32 %v4560, %v4566
    %v4569 = vmul.f32 %v4567, %v4567
    %v4570 = vmul.f32 %v4568, %v4568
    %4571 = vadd.xlane.f32.xlu0 %v4569
    %v4572 = vpop.xlane.xlu0 %4571
    %4573 = vadd.xlane.f32.xlu0 %v4570
    %v4574 = vpop.xlane.xlu0 %4573
    %v4575 = vmul.f32 %v4572, %v3397
    %v4576 = vmul.f32 %v4574, %v3397
    %v4577 = vadd.f32 %v4575, 1e-05
    %v4578 = vadd.f32 %v4576, 1e-05
    %v4579 = vrsqrt.pop %v4577
    %v4580 = vrsqrt.pop %v4578
    %v4581 = vmul.f32 %v4567, %v4579
    %v4582 = vmul.f32 %v4568, %v4580
    %v4583 = vld [vmem:[%s23] sm:$0x1]
    %v4585 = vlaneseq
    %v4586 = vshrl.u32 %v4585, 7
    %v4587 = vsub.s32 0, %v4586
    %v4588 = vrot.slane %v4583, %v4587
    %v4590 = vmul.f32 %v4581, %v4588
    %v4591 = vmul.f32 %v4582, %v4588
    %v4592 = vld [vmem:[%s24] sm:$0x1]
    %v4594 = vlaneseq
    %v4595 = vshrl.u32 %v4594, 7
    %v4596 = vsub.s32 0, %v4595
    %v4597 = vrot.slane %v4592, %v4596
    %v4599 = vadd.f32 %v4590, %v4597
    %v4600 = vadd.f32 %v4591, %v4597
    %s4601 = sshll.u32 %s4103, 4
    %4602 = dma.done %s1268, %s4601
    %v4603 = vld [vmem:[#allocation5] sm:$0xff]
    %v4604 = vld [vmem:[#allocation5 + $0x8] sm:$0xff]
    %v4605 = vld [vmem:[#allocation5 + $0x10] sm:$0xff]
    %v4606 = vld [vmem:[#allocation5 + $0x18] sm:$0xff]
    %v4607 = vld [vmem:[#allocation5 + $0x20] sm:$0xff]
    %v4608 = vld [vmem:[#allocation5 + $0x28] sm:$0xff]
    %v4609 = vld [vmem:[#allocation5 + $0x30] sm:$0xff]
    %v4610 = vld [vmem:[#allocation5 + $0x38] sm:$0xff]
    %v4611 = vld [vmem:[#allocation5 + $0x40] sm:$0xff]
    %v4612 = vld [vmem:[#allocation5 + $0x48] sm:$0xff]
    %v4613 = vld [vmem:[#allocation5 + $0x50] sm:$0xff]
    %v4614 = vld [vmem:[#allocation5 + $0x58] sm:$0xff]
    %v4615 = vld [vmem:[#allocation5 + $0x60] sm:$0xff]
    %v4616 = vld [vmem:[#allocation5 + $0x68] sm:$0xff]
    %v4617 = vld [vmem:[#allocation5 + $0x70] sm:$0xff]
    %v4618 = vld [vmem:[#allocation5 + $0x78] sm:$0xff]
    %v4619 = vld [vmem:[#allocation5 + $0x80] sm:$0xff]
    %v4620 = vld [vmem:[#allocation5 + $0x88] sm:$0xff]
    %v4621 = vld [vmem:[#allocation5 + $0x90] sm:$0xff]
    %v4622 = vld [vmem:[#allocation5 + $0x98] sm:$0xff]
    %v4623 = vld [vmem:[#allocation5 + $0xa0] sm:$0xff]
    %v4624 = vld [vmem:[#allocation5 + $0xa8] sm:$0xff]
    %v4625 = vld [vmem:[#allocation5 + $0xb0] sm:$0xff]
    %v4626 = vld [vmem:[#allocation5 + $0xb8] sm:$0xff]
    %v4627 = vld [vmem:[#allocation5 + $0xc0] sm:$0xff]
    %v4628 = vld [vmem:[#allocation5 + $0xc8] sm:$0xff]
    %v4629 = vld [vmem:[#allocation5 + $0xd0] sm:$0xff]
    %v4630 = vld [vmem:[#allocation5 + $0xd8] sm:$0xff]
    %v4631 = vld [vmem:[#allocation5 + $0xe0] sm:$0xff]
    %v4632 = vld [vmem:[#allocation5 + $0xe8] sm:$0xff]
    %v4633 = vld [vmem:[#allocation5 + $0xf0] sm:$0xff]
    %v4634 = vld [vmem:[#allocation5 + $0xf8] sm:$0xff]
    %v4635 = vpack.c.bf16 %v4600, %v4599
    %v4636 = vld [vmem:[%s26] sm:$0xf]
    %v4638 = vlaneseq
    %v4639 = vshrl.u32 %v4638, 7
    %v4640 = vsub.s32 0, %v4639
    %v4641 = vrot.slane %v4636, %v4640
    %v4642 = vlaneseq
    %v4643 = vshrl.u32 %v4642, 7
    %v4644 = vsub.s32 1, %v4643
    %v4645 = vrot.slane %v4636, %v4644
    %v4646 = vlaneseq
    %v4647 = vshrl.u32 %v4646, 7
    %v4648 = vsub.s32 2, %v4647
    %v4649 = vrot.slane %v4636, %v4648
    %v4650 = vlaneseq
    %v4651 = vshrl.u32 %v4650, 7
    %v4652 = vsub.s32 3, %v4651
    %v4653 = vrot.slane %v4636, %v4652
    %4658 = vmatprep.subr.bf16.mxu0 %v4604
    %4659 = vmatpush1.bf16.msra.mxu0 %v4603
    %4660 = vmatprep.subr.bf16.mxu0 %v4608
    %4661 = vmatpush1.bf16.msra.mxu0 %v4607
    %4662 = vmatprep.subr.bf16.mxu0 %v4612
    %4663 = vmatpush1.bf16.msra.mxu0 %v4611
    %4664 = vmatprep.subr.bf16.mxu0 %v4616
    %4665 = vmatpush1.bf16.msra.mxu0 %v4615
    %4666 = vmatprep.subr.bf16.mxu0 %v4620
    %4667 = vmatpush1.bf16.msra.mxu0 %v4619
    %4668 = vmatprep.subr.bf16.mxu0 %v4624
    %4669 = vmatpush1.bf16.msra.mxu0 %v4623
    %4670 = vmatprep.subr.bf16.mxu0 %v4628
    %4671 = vmatpush1.bf16.msra.mxu0 %v4627
    %4672 = vmatprep.subr.bf16.mxu0 %v4632
    %4673 = vmatpush1.bf16.msra.mxu0 %v4631
    %4674 = vmatprep.subr.bf16.mxu0 0
    %4675 = vmatpush1.bf16.msra.mxu0 0
    %4676 = vmatprep.subr.bf16.mxu0 0
    %4677 = vmatpush1.bf16.msra.mxu0 0
    %4678 = vmatprep.subr.bf16.mxu0 0
    %4679 = vmatpush1.bf16.msra.mxu0 0
    %4680 = vmatprep.subr.bf16.mxu0 0
    %4681 = vmatpush1.bf16.msra.mxu0 0
    %4682 = vmatprep.subr.bf16.mxu0 0
    %4683 = vmatpush1.bf16.msra.mxu0 0
    %4684 = vmatprep.subr.bf16.mxu0 0
    %4685 = vmatpush1.bf16.msra.mxu0 0
    %4686 = vmatprep.subr.bf16.mxu0 0
    %4687 = vmatpush1.bf16.msra.mxu0 0
    %4688 = vmatprep.subr.bf16.mxu0 0
    %4689 = vmatpush1.bf16.msra.mxu0 0
    %4690 = vmatprep.mubr.bf16.mxu0 0
    %4691 = vmatmul.mubr.bf16.gmra.mrb[0].mxu0 %v4635
    %v4692 = vpop.f32.mrb[0].mxu0
    %v4693 = vadd.f32 %v4641, %v4692
    %v4694 = vpop.f32.mrb[0].mxu0
    %v4695 = vadd.f32 %v4645, %v4694
    %v4696 = vpop.f32.mrb[0].mxu0
    %v4697 = vadd.f32 %v4641, %v4696
    %v4698 = vpop.f32.mrb[0].mxu0
    %v4699 = vadd.f32 %v4645, %v4698
    %4700 = vdwg.mxu0
    %4701 = vmatprep.subr.bf16.mxu0 %v4606
    %4702 = vmatpush1.bf16.msra.mxu0 %v4605
    %4703 = vmatprep.subr.bf16.mxu0 %v4610
    %4704 = vmatpush1.bf16.msra.mxu0 %v4609
    %4705 = vmatprep.subr.bf16.mxu0 %v4614
    %4706 = vmatpush1.bf16.msra.mxu0 %v4613
    %4707 = vmatprep.subr.bf16.mxu0 %v4618
    %4708 = vmatpush1.bf16.msra.mxu0 %v4617
    %4709 = vmatprep.subr.bf16.mxu0 %v4622
    %4710 = vmatpush1.bf16.msra.mxu0 %v4621
    %4711 = vmatprep.subr.bf16.mxu0 %v4626
    %4712 = vmatpush1.bf16.msra.mxu0 %v4625
    %4713 = vmatprep.subr.bf16.mxu0 %v4630
    %4714 = vmatpush1.bf16.msra.mxu0 %v4629
    %4715 = vmatprep.subr.bf16.mxu0 %v4634
    %4716 = vmatpush1.bf16.msra.mxu0 %v4633
    %4717 = vmatprep.subr.bf16.mxu0 0
    %4718 = vmatpush1.bf16.msra.mxu0 0
    %4719 = vmatprep.subr.bf16.mxu0 0
    %4720 = vmatpush1.bf16.msra.mxu0 0
    %4721 = vmatprep.subr.bf16.mxu0 0
    %4722 = vmatpush1.bf16.msra.mxu0 0
    %4723 = vmatprep.subr.bf16.mxu0 0
    %4724 = vmatpush1.bf16.msra.mxu0 0
    %4725 = vmatprep.subr.bf16.mxu0 0
    %4726 = vmatpush1.bf16.msra.mxu0 0
    %4727 = vmatprep.subr.bf16.mxu0 0
    %4728 = vmatpush1.bf16.msra.mxu0 0
    %4729 = vmatprep.subr.bf16.mxu0 0
    %4730 = vmatpush1.bf16.msra.mxu0 0
    %4731 = vmatprep.subr.bf16.mxu0 0
    %4732 = vmatpush1.bf16.msra.mxu0 0
    %4733 = vmatprep.mubr.bf16.mxu0 0
    %4734 = vmatmul.mubr.bf16.gmra.mrb[0].mxu0 %v4635
    %v4735 = vpop.f32.mrb[0].mxu0
    %v4736 = vadd.f32 %v4649, %v4735
    %v4737 = vpop.f32.mrb[0].mxu0
    %v4738 = vadd.f32 %v4653, %v4737
    %v4739 = vpop.f32.mrb[0].mxu0
    %v4740 = vadd.f32 %v4649, %v4739
    %v4741 = vpop.f32.mrb[0].mxu0
    %v4742 = vadd.f32 %v4653, %v4741
    %4743 = vdwg.mxu0
    %4744 = vst [vmem:[#allocation11] sm:$0xff] %v4693
    %4745 = vst [vmem:[#allocation11 + $0x8] sm:$0xff] %v4695
    %4746 = vst [vmem:[#allocation11 + $0x10] sm:$0xff] %v4736
    %4747 = vst [vmem:[#allocation11 + $0x18] sm:$0xff] %v4738
    %4748 = vst [vmem:[#allocation11 + $0x20] sm:$0xff] %v4697
    %4749 = vst [vmem:[#allocation11 + $0x28] sm:$0xff] %v4699
    %4750 = vst [vmem:[#allocation11 + $0x30] sm:$0xff] %v4740
    %4751 = vst [vmem:[#allocation11 + $0x38] sm:$0xff] %v4742
    // Predicated region
    $region686: #{prompt_model_forward.1} parent=1 // pred_check
      _
    $region687: #{prompt_model_forward.1} parent=1 // pred_check_branch
      %4753 = sbr.rel (0) target = $region689
    $region688: #{prompt_model_forward.1} parent=1 // pred_region
      %s4755 = ssub.s32 1024, 1024
      %4756 = vsyncadd [#allocation9], %s4755
      %s4757 = sshll.u32 [#allocation11], 4
      %s4758 = int_to_ptr.vmem [resolvable:$true] %s4757
      %4763 = dma.vmem_to_hbm [thread:$0]  %s4758, 1024, %s27, [#allocation9], 512, 512, 32
    $region689: #{prompt_model_forward.1} parent=1 // pred_fallthru
      _
    // Predicated region
    $region690: #{prompt_model_forward.1} parent=1 // pred_check
      _
    $region691: #{prompt_model_forward.1} parent=1 // pred_check_branch
      %4765 = sbr.rel (0) target = $region693
    $region692: #{prompt_model_forward.1} parent=1 // pred_region
      %4766 = dma.done [#allocation9], 1024
    $region693: #{prompt_model_forward.1} parent=1 // pred_fallthru
      _
    %4767 = vsyncpa [#allocation9], 1
    %4768 = vsyncpa [#allocation10], 1
  %4769 = vsyncmov [#allocation6]
  %s4770 = vpop.sfrf %4769
  %p4771 = scmp.eq.s32.totalorder %s4770, 0
  %p4772 = pneg %p4771
  %4774 = shalt.err (%p4772)
  %s4775 = scalar_lea.sflag [#allocation6], 1
  %4776 = vsyncmov %s4775
  %s4777 = vpop.sfrf %4776
  %p4778 = scmp.eq.s32.totalorder %s4777, 0
  %p4779 = pneg %p4778
  %4781 = shalt.err (%p4779)
  %s4782 = scalar_lea.sflag [#allocation6], 2
  %4783 = vsyncmov %s4782
  %s4784 = vpop.sfrf %4783
  %p4785 = scmp.eq.s32.totalorder %s4784, 0
  %p4786 = pneg %p4785
  %4788 = shalt.err (%p4786)
  %s4789 = scalar_lea.sflag [#allocation6], 3
  %4790 = vsyncmov %s4789
  %s4791 = vpop.sfrf %4790
  %p4792 = scmp.eq.s32.totalorder %s4791, 0
  %p4793 = pneg %p4792
  %4795 = shalt.err (%p4793)
  %s4796 = scalar_lea.sflag [#allocation6], 4
  %4797 = vsyncmov %s4796
  %s4798 = vpop.sfrf %4797
  %p4799 = scmp.eq.s32.totalorder %s4798, 0
  %p4800 = pneg %p4799
  %4802 = shalt.err (%p4800)
  %s4803 = scalar_lea.sflag [#allocation6], 5
  %4804 = vsyncmov %s4803
  %s4805 = vpop.sfrf %4804
  %p4806 = scmp.eq.s32.totalorder %s4805, 0
  %p4807 = pneg %p4806
  %4809 = shalt.err (%p4807)
  %s4810 = scalar_lea.sflag [#allocation6], 6
  %4811 = vsyncmov %s4810
  %s4812 = vpop.sfrf %4811
  %p4813 = scmp.eq.s32.totalorder %s4812, 0
  %p4814 = pneg %p4813
  %4816 = shalt.err (%p4814)
  %s4817 = scalar_lea.sflag [#allocation6], 7
  %4818 = vsyncmov %s4817
  %s4819 = vpop.sfrf %4818
  %p4820 = scmp.eq.s32.totalorder %s4819, 0
  %p4821 = pneg %p4820
  %4823 = shalt.err (%p4821)
  %s4824 = scalar_lea.sflag [#allocation6], 8
  %4825 = vsyncmov %s4824
  %s4826 = vpop.sfrf %4825
  %p4827 = scmp.eq.s32.totalorder %s4826, 0
  %p4828 = pneg %p4827
  %4830 = shalt.err (%p4828)
  %s4831 = scalar_lea.sflag [#allocation6], 9
  %4832 = vsyncmov %s4831
  %s4833 = vpop.sfrf %4832
  %p4834 = scmp.eq.s32.totalorder %s4833, 0
  %p4835 = pneg %p4834
  %4837 = shalt.err (%p4835)
  %s4838 = scalar_lea.sflag [#allocation6], 10
  %4839 = vsyncmov %s4838
  %s4840 = vpop.sfrf %4839
  %p4841 = scmp.eq.s32.totalorder %s4840, 0
  %p4842 = pneg %p4841
  %4844 = shalt.err (%p4842)
  %s4845 = scalar_lea.sflag [#allocation6], 11
  %4846 = vsyncmov %s4845
  %s4847 = vpop.sfrf %4846
  %p4848 = scmp.eq.s32.totalorder %s4847, 0
  %p4849 = pneg %p4848
  %4851 = shalt.err (%p4849)
  %s4852 = scalar_lea.sflag [#allocation6], 12
  %4853 = vsyncmov %s4852
  %s4854 = vpop.sfrf %4853
  %p4855 = scmp.eq.s32.totalorder %s4854, 0
  %p4856 = pneg %p4855
  %4858 = shalt.err (%p4856)
  %s4859 = scalar_lea.sflag [#allocation6], 13
  %4860 = vsyncmov %s4859
  %s4861 = vpop.sfrf %4860
  %p4862 = scmp.eq.s32.totalorder %s4861, 0
  %p4863 = pneg %p4862
  %4865 = shalt.err (%p4863)
  %s4866 = scalar_lea.sflag [#allocation6], 14
  %4867 = vsyncmov %s4866
  %s4868 = vpop.sfrf %4867
  %p4869 = scmp.eq.s32.totalorder %s4868, 0
  %p4870 = pneg %p4869
  %4872 = shalt.err (%p4870)
  %s4873 = scalar_lea.sflag [#allocation6], 15
  %4874 = vsyncmov %s4873
  %s4875 = vpop.sfrf %4874
  %p4876 = scmp.eq.s32.totalorder %s4875, 0
  %p4877 = pneg %p4876
  %4879 = shalt.err (%p4877)
  %4880 = vsyncmov [#allocation7]
  %s4881 = vpop.sfrf %4880
  %p4882 = scmp.eq.s32.totalorder %s4881, 0
  %p4883 = pneg %p4882
  %4885 = shalt.err (%p4883)
  %s4886 = scalar_lea.sflag [#allocation7], 1
  %4887 = vsyncmov %s4886
  %s4888 = vpop.sfrf %4887
  %p4889 = scmp.eq.s32.totalorder %s4888, 0
  %p4890 = pneg %p4889
  %4892 = shalt.err (%p4890)
  %s4893 = scalar_lea.sflag [#allocation7], 2
  %4894 = vsyncmov %s4893
  %s4895 = vpop.sfrf %4894
  %p4896 = scmp.eq.s32.totalorder %s4895, 0
  %p4897 = pneg %p4896
  %4899 = shalt.err (%p4897)

</llo_original>
